<compile_context>
chip_gen: v7x
topology: tpu7x:2x2x1
jax: 0.10.0
libtpu: 0.0.40
codegen_flags: <defaults>
</compile_context>

<pallas_src>
import functools
import math

import jax
import jax.numpy as jnp
from jax.experimental import pallas as pl
from jax.experimental.pallas import tpu as pltpu

TIME_EMBEDDING_SIZE = 13
LN_EPS = 1e-5
NEG_INF = -1e30
VMEM_LIMIT_BYTES = 32 * 1024 * 1024
ROW_TILE = 256  # M-tile for row-parallel kernels


def _cp(dim_sem):
    return pltpu.CompilerParams(dimension_semantics=dim_sem,
                                vmem_limit_bytes=VMEM_LIMIT_BYTES)


def _full_spec(shape):
    nd = len(shape)
    return pl.BlockSpec(shape, lambda *_: (0,) * nd)


def _row_tile(M):
    return M if M <= ROW_TILE else ROW_TILE


# ----------------------------------------------------------------------------
# Kernel bodies
# ----------------------------------------------------------------------------
def _ln(z, g, beta):
    mean = jnp.mean(z, axis=-1, keepdims=True)
    zc = z - mean
    var = jnp.mean(zc * zc, axis=-1, keepdims=True)
    return zc * jax.lax.rsqrt(var + LN_EPS) * g + beta


def _linear_kernel(x_ref, w_ref, b_ref, o_ref, *, relu):
    x = x_ref[...].astype(jnp.bfloat16)
    y = jnp.dot(x, w_ref[...], preferred_element_type=jnp.float32) + b_ref[...]
    if relu:
        y = jnp.maximum(y, 0.0)
    o_ref[...] = y


def _layernorm_kernel(x_ref, g_ref, b_ref, o_ref):
    o_ref[...] = _ln(x_ref[...], g_ref[...], b_ref[...])


def _ffn_res_ln_kernel(x_ref, w1_ref, b1_ref, w2_ref, b2_ref, g_ref, beta_ref, o_ref, *, relu):
    # out = LayerNorm(x + act(x@W1 + b1)@W2 + b2); intermediate stays in VMEM.
    x = x_ref[...]
    h = jnp.dot(x.astype(jnp.bfloat16), w1_ref[...],
                preferred_element_type=jnp.float32) + b1_ref[...]
    if relu:
        h = jnp.maximum(h, 0.0)
    y = jnp.dot(h.astype(jnp.bfloat16), w2_ref[...],
                preferred_element_type=jnp.float32) + b2_ref[...]
    o_ref[...] = _ln(x + y, g_ref[...], beta_ref[...])


def _softmax_attend(q, k, v, bias):
    # q: (Lq, dh) bf16, k/v: (Lk, dh) bf16, bias: (1, Lk) f32 or None
    dh = q.shape[-1]
    s = jax.lax.dot_general(q, k, (((1,), (1,)), ((), ())),
                            preferred_element_type=jnp.float32)
    s = s * (1.0 / math.sqrt(dh))
    if bias is not None:
        s = s + bias
    s = s - jnp.max(s, axis=-1, keepdims=True)
    p = jnp.exp(s)
    p = p * pl.reciprocal(jnp.sum(p, axis=-1, keepdims=True), approx=True)
    return jnp.dot(p.astype(jnp.bfloat16), v, preferred_element_type=jnp.float32)


def _enc_attn_kernel(sl_ref, qkv_ref, res_ref, wo_ref, bo_ref, g_ref, beta_ref, o_ref,
                     *, num_heads, hidden):
    # Fused: per-batch multi-head self-attention (key padding mask built in-kernel)
    #        + output projection + residual + LayerNorm.
    b = pl.program_id(0)
    T = qkv_ref.shape[0]
    dh = hidden // num_heads

    valid = sl_ref[b]
    kpos = jax.lax.broadcasted_iota(jnp.int32, (1, T), 1)
    bias = jnp.where(kpos < valid, 0.0, NEG_INF).astype(jnp.float32)  # (1, T)

    qkv = qkv_ref[...]                                   # (T, 3H) f32
    heads = []
    for h in range(num_heads):
        q = qkv[:, h * dh:(h + 1) * dh].astype(jnp.bfloat16)
        k = qkv[:, hidden + h * dh:hidden + (h + 1) * dh].astype(jnp.bfloat16)
        v = qkv[:, 2 * hidden + h * dh:2 * hidden + (h + 1) * dh].astype(jnp.bfloat16)
        heads.append(_softmax_attend(q, k, v, bias))
    attn = jnp.concatenate(heads, axis=-1)               # (T, H) f32
    y = jnp.dot(attn.astype(jnp.bfloat16), wo_ref[...],
                preferred_element_type=jnp.float32) + bo_ref[...]
    o_ref[...] = _ln(res_ref[...] + y, g_ref[...], beta_ref[...])


def _dec_cross_attn_kernel(tgt_ref, kv_ref, wq_ref, bq_ref, wo_ref, bo_ref, g_ref, beta_ref,
                           o_ref, *, num_heads, hidden):
    # Fused: q projection + multi-head cross-attention (Lq=1, unmasked memory)
    #        + output projection + residual + LayerNorm.
    dh = hidden // num_heads
    tgt = tgt_ref[...]                                   # (1, H) f32
    q_all = jnp.dot(tgt.astype(jnp.bfloat16), wq_ref[...],
                    preferred_element_type=jnp.float32) + bq_ref[...]
    kv = kv_ref[...]                                     # (T, 2H) f32
    heads = []
    for h in range(num_heads):
        q = q_all[:, h * dh:(h + 1) * dh].astype(jnp.bfloat16)
        k = kv[:, h * dh:(h + 1) * dh].astype(jnp.bfloat16)
        v = kv[:, hidden + h * dh:hidden + (h + 1) * dh].astype(jnp.bfloat16)
        heads.append(_softmax_attend(q, k, v, None))
    attn = jnp.concatenate(heads, axis=-1)               # (1, H)
    y = jnp.dot(attn.astype(jnp.bfloat16), wo_ref[...],
                preferred_element_type=jnp.float32) + bo_ref[...]
    o_ref[...] = _ln(tgt + y, g_ref[...], beta_ref[...])


def _head_kernel(u_ref, ie_ref, ib_ref, g_ref, beta_ref, logit_ref, norm_ref):
    # Fused: final decoder LayerNorm + logits + squared-norm reductions.
    u = _ln(u_ref[...], g_ref[...], beta_ref[...])
    ie = ie_ref[...]
    logit_ref[...] = ib_ref[...] + jnp.sum(u * ie, axis=1, keepdims=True)
    norm_ref[...] = jnp.sum(u * u, keepdims=True) + jnp.sum(ie * ie, keepdims=True)


# ----------------------------------------------------------------------------
# pallas_call wrappers
# ----------------------------------------------------------------------------
def linear(x, w, b, relu=False):
    """x: (M, K) f32, w: (K, N) bf16, b: (N,) f32 -> (M, N) f32 (row-tiled grid)."""
    M, K = x.shape
    N = w.shape[1]
    tm = _row_tile(M)
    return pl.pallas_call(
        functools.partial(_linear_kernel, relu=relu),
        out_shape=jax.ShapeDtypeStruct((M, N), jnp.float32),
        grid=(pl.cdiv(M, tm),),
        in_specs=[pl.BlockSpec((tm, K), lambda i: (i, 0)),
                  pl.BlockSpec((K, N), lambda i: (0, 0)),
                  pl.BlockSpec((1, N), lambda i: (0, 0))],
        out_specs=pl.BlockSpec((tm, N), lambda i: (i, 0)),
        compiler_params=_cp(("parallel",)),
    )(x, w, b.reshape(1, N))


def ffn_residual_ln(x, w1, b1, w2, b2, g, beta, relu):
    """out = LN(x + act(x@W1+b1)@W2+b2); x: (M, H), W1: (H, F), W2: (F, H)."""
    M, Hd = x.shape
    F = w1.shape[1]
    tm = _row_tile(M)
    return pl.pallas_call(
        functools.partial(_ffn_res_ln_kernel, relu=relu),
        out_shape=jax.ShapeDtypeStruct((M, Hd), jnp.float32),
        grid=(pl.cdiv(M, tm),),
        in_specs=[pl.BlockSpec((tm, Hd), lambda i: (i, 0)),
                  pl.BlockSpec((Hd, F), lambda i: (0, 0)),
                  pl.BlockSpec((1, F), lambda i: (0, 0)),
                  pl.BlockSpec((F, Hd), lambda i: (0, 0)),
                  pl.BlockSpec((1, Hd), lambda i: (0, 0)),
                  pl.BlockSpec((1, Hd), lambda i: (0, 0)),
                  pl.BlockSpec((1, Hd), lambda i: (0, 0))],
        out_specs=pl.BlockSpec((tm, Hd), lambda i: (i, 0)),
        compiler_params=_cp(("parallel",)),
    )(x, w1, b1.reshape(1, F), w2, b2.reshape(1, Hd), g.reshape(1, Hd), beta.reshape(1, Hd))


def layer_norm(x, g, b):
    """x: (M, H) f32 -> (M, H) f32."""
    M, Hd = x.shape
    tm = _row_tile(M)
    return pl.pallas_call(
        _layernorm_kernel,
        out_shape=jax.ShapeDtypeStruct((M, Hd), jnp.float32),
        grid=(pl.cdiv(M, tm),),
        in_specs=[pl.BlockSpec((tm, Hd), lambda i: (i, 0)),
                  pl.BlockSpec((1, Hd), lambda i: (0, 0)),
                  pl.BlockSpec((1, Hd), lambda i: (0, 0))],
        out_specs=pl.BlockSpec((tm, Hd), lambda i: (i, 0)),
        compiler_params=_cp(("parallel",)),
    )(x, g.reshape(1, Hd), b.reshape(1, Hd))


def encoder_attention(sl, qkv, x_res, wo, bo, g, beta, num_heads):
    """sl: (B,) int32 (scalar-prefetch); qkv: (B,T,3H); x_res: (B,T,H) -> (B,T,H)."""
    B, T, H3 = qkv.shape
    H = H3 // 3
    grid_spec = pltpu.PrefetchScalarGridSpec(
        num_scalar_prefetch=1,
        grid=(B,),
        in_specs=[pl.BlockSpec((None, T, H3), lambda b, sl_ref: (b, 0, 0)),
                  pl.BlockSpec((None, T, H), lambda b, sl_ref: (b, 0, 0)),
                  pl.BlockSpec((H, H), lambda b, sl_ref: (0, 0)),
                  pl.BlockSpec((1, H), lambda b, sl_ref: (0, 0)),
                  pl.BlockSpec((1, H), lambda b, sl_ref: (0, 0)),
                  pl.BlockSpec((1, H), lambda b, sl_ref: (0, 0))],
        out_specs=pl.BlockSpec((None, T, H), lambda b, sl_ref: (b, 0, 0)),
    )
    return pl.pallas_call(
        functools.partial(_enc_attn_kernel, num_heads=num_heads, hidden=H),
        grid_spec=grid_spec,
        out_shape=jax.ShapeDtypeStruct((B, T, H), jnp.float32),
        compiler_params=_cp(("parallel",)),
    )(sl, qkv, x_res, wo, bo.reshape(1, H), g.reshape(1, H), beta.reshape(1, H))


def cross_attention(tgt3, kv, wq, bq, wo, bo, g, beta, num_heads):
    """tgt3: (B,1,H); kv: (B,T,2H) -> (B,1,H) (q-proj + MHA + out-proj + res + LN)."""
    B, _, H = tgt3.shape
    T = kv.shape[1]
    return pl.pallas_call(
        functools.partial(_dec_cross_attn_kernel, num_heads=num_heads, hidden=H),
        out_shape=jax.ShapeDtypeStruct((B, 1, H), jnp.float32),
        grid=(B,),
        in_specs=[pl.BlockSpec((None, 1, H), lambda b: (b, 0, 0)),
                  pl.BlockSpec((None, T, 2 * H), lambda b: (b, 0, 0)),
                  pl.BlockSpec((H, H), lambda b: (0, 0)),
                  pl.BlockSpec((1, H), lambda b: (0, 0)),
                  pl.BlockSpec((H, H), lambda b: (0, 0)),
                  pl.BlockSpec((1, H), lambda b: (0, 0)),
                  pl.BlockSpec((1, H), lambda b: (0, 0)),
                  pl.BlockSpec((1, H), lambda b: (0, 0))],
        out_specs=pl.BlockSpec((None, 1, H), lambda b: (b, 0, 0)),
        compiler_params=_cp(("parallel",)),
    )(tgt3, kv, wq, bq.reshape(1, H), wo, bo.reshape(1, H), g.reshape(1, H), beta.reshape(1, H))


def head_logits(u, ie, ib, g, beta):
    B, H = u.shape
    return pl.pallas_call(
        _head_kernel,
        out_shape=(jax.ShapeDtypeStruct((B, 1), jnp.float32),
                   jax.ShapeDtypeStruct((1, 1), jnp.float32)),
        in_specs=[_full_spec((B, H)), _full_spec((B, H)), _full_spec((B, 1)),
                  _full_spec((1, H)), _full_spec((1, H))],
        out_specs=(_full_spec((B, 1)), _full_spec((1, 1))),
    )(u, ie, ib, g.reshape(1, H), beta.reshape(1, H))


# ----------------------------------------------------------------------------
# Parameter construction (deterministic, synthetic; fused/bf16 weight layout)
# ----------------------------------------------------------------------------
def init_params(key, cate_list, item_count, item_dim, cate_count, cate_dim,
                num_blocks, num_heads, dim_ff=2048, scale=0.05):
    H = item_dim + cate_dim
    C = H + TIME_EMBEDDING_SIZE
    keys = iter(jax.random.split(key, 256))
    nk = lambda: next(keys)
    rand = lambda shape: scale * jax.random.normal(nk(), shape, jnp.float32)
    zeros = lambda n: jnp.zeros((n,), jnp.float32)
    ones = lambda n: jnp.ones((n,), jnp.float32)

    def enc_block():
        wq, wk, wv, wo = rand((H, H)), rand((H, H)), rand((H, H)), rand((H, H))
        return {
            "attn": {"wqkv": jnp.concatenate([wq, wk, wv], axis=1).astype(jnp.bfloat16),
                     "bqkv": zeros(3 * H),
                     "wo": wo.astype(jnp.bfloat16), "bo": zeros(H)},
            "ln1_g": ones(H), "ln1_b": zeros(H),
            "ff_w1": rand((H, dim_ff)).astype(jnp.bfloat16), "ff_b1": zeros(dim_ff),
            "ff_w2": rand((dim_ff, H)).astype(jnp.bfloat16), "ff_b2": zeros(H),
            "ln2_g": ones(H), "ln2_b": zeros(H),
        }

    def dec_block():
        s_wv, s_wo = rand((H, H)), rand((H, H))
        c_wq, c_wk, c_wv, c_wo = rand((H, H)), rand((H, H)), rand((H, H)), rand((H, H))
        return {
            # length-1 target self-attention only needs V and O projections
            "self_attn": {"wv": s_wv.astype(jnp.bfloat16), "bv": zeros(H),
                          "wo": s_wo.astype(jnp.bfloat16), "bo": zeros(H)},
            "ln1_g": ones(H), "ln1_b": zeros(H),
            "cross_attn": {"wq": c_wq.astype(jnp.bfloat16), "bq": zeros(H),
                           "wkv": jnp.concatenate([c_wk, c_wv], axis=1).astype(jnp.bfloat16),
                           "bkv": zeros(2 * H),
                           "wo": c_wo.astype(jnp.bfloat16), "bo": zeros(H)},
            "ln2_g": ones(H), "ln2_b": zeros(H),
            "ff_w1": rand((H, dim_ff)).astype(jnp.bfloat16), "ff_b1": zeros(dim_ff),
            "ff_w2": rand((dim_ff, H)).astype(jnp.bfloat16), "ff_b2": zeros(H),
            "ln3_g": ones(H), "ln3_b": zeros(H),
        }

    return {
        "cate_list": jnp.asarray(cate_list, jnp.int32),
        "item_emb": rand((item_count, item_dim)),
        "cate_emb": rand((cate_count, cate_dim)),
        "item_b": rand((item_count, 1)),
        "dense_w": rand((C, H)).astype(jnp.bfloat16),
        "dense_b": zeros(H),
        "enc_norm_g": ones(H), "enc_norm_b": zeros(H),
        "dec_norm_g": ones(H), "dec_norm_b": zeros(H),
        "enc": [enc_block() for _ in range(num_blocks)],
        "dec": [dec_block() for _ in range(num_blocks)],
    }


# ----------------------------------------------------------------------------
# Forward pass (matches Model.forward semantics)
# ----------------------------------------------------------------------------
def model_forward(params, i, hist_i, hist_t, sl, *, num_heads):
    H = params["dense_w"].shape[1]
    cate_list = params["cate_list"]
    item_emb, cate_emb = params["item_emb"], params["cate_emb"]

    # embedding gathers + one-hot + concat stay in plain JAX (glue)
    i_emb = jnp.concatenate([item_emb[i], cate_emb[cate_list[i]]], axis=1)            # (B, H)
    h_emb = jnp.concatenate([item_emb[hist_i], cate_emb[cate_list[hist_i]]], axis=2)  # (B, T, H)
    t_emb = jax.nn.one_hot(hist_t, TIME_EMBEDDING_SIZE, dtype=jnp.float32)
    h_cat = jnp.concatenate([h_emb, t_emb], axis=-1)                                   # (B, T, H+13)
    B, T, C = h_cat.shape

    x = linear(h_cat.reshape(B * T, C), params["dense_w"], params["dense_b"]).reshape(B, T, H)
    sl32 = sl.astype(jnp.int32)   # padding mask is built in-kernel from sl (True where pos+1 > sl)

    # --- Transformer encoder (post-LN, ReLU FFN, dropout=0) ---
    for blk in params["enc"]:
        a = blk["attn"]
        qkv = linear(x.reshape(B * T, H), a["wqkv"], a["bqkv"]).reshape(B, T, 3 * H)
        x = encoder_attention(sl32, qkv, x, a["wo"], a["bo"], blk["ln1_g"], blk["ln1_b"], num_heads)
        x = ffn_residual_ln(x.reshape(B * T, H), blk["ff_w1"], blk["ff_b1"],
                            blk["ff_w2"], blk["ff_b2"], blk["ln2_g"], blk["ln2_b"],
                            relu=True).reshape(B, T, H)
    memory = layer_norm(x.reshape(B * T, H),
                        params["enc_norm_g"], params["enc_norm_b"]).reshape(B, T, H)

    # --- Transformer decoder: tgt = i_emb[None] (length-1 sequence); cross-attn unmasked
    #     (memory_key_padding_mask is None in the reference call) ---
    tgt = i_emb                                                                        # (B, H)
    for blk in params["dec"]:
        sa, ca = blk["self_attn"], blk["cross_attn"]
        # self-attention over a single position == out_proj(v_proj(x)); fused with res+LN
        tgt = ffn_residual_ln(tgt, sa["wv"], sa["bv"], sa["wo"], sa["bo"],
                              blk["ln1_g"], blk["ln1_b"], relu=False)
        kv = linear(memory.reshape(B * T, H), ca["wkv"], ca["bkv"]).reshape(B, T, 2 * H)
        tgt = cross_attention(tgt.reshape(B, 1, H), kv, ca["wq"], ca["bq"], ca["wo"], ca["bo"],
                              blk["ln2_g"], blk["ln2_b"], num_heads).reshape(B, H)
        tgt = ffn_residual_ln(tgt, blk["ff_w1"], blk["ff_b1"], blk["ff_w2"], blk["ff_b2"],
                              blk["ln3_g"], blk["ln3_b"], relu=True)

    # final decoder LayerNorm fused into the logits/norm head kernel
    ib = params["item_b"][i]                                                           # (B, 1)
    logits2, norm2 = head_logits(tgt, i_emb, ib, params["dec_norm_g"], params["dec_norm_b"])
    return logits2.reshape(-1), norm2[0, 0]


# ----------------------------------------------------------------------------
# Demo
# ----------------------------------------------------------------------------
if __name__ == "__main__":
    item_count, cate_count = 50, 10
    itemid_embedding_size, cateid_embedding_size = 16, 16   # hidden_units = 32
    num_blocks, num_heads = 1, 2
    B, T = 2, 8

    key = jax.random.PRNGKey(0)
    k_cl, k_i, k_hi, k_ht, k_par = jax.random.split(key, 5)

    cate_list = jax.random.randint(k_cl, (item_count,), 0, cate_count)
    i = jax.random.randint(k_i, (B,), 0, item_count)
    hist_i = jax.random.randint(k_hi, (B, T), 0, item_count)
    hist_t = jax.random.randint(k_ht, (B, T), 0, TIME_EMBEDDING_SIZE)
    sl = jnp.array([5, 8], dtype=jnp.int32)

    params = init_params(k_par, cate_list, item_count, itemid_embedding_size,
                         cate_count, cateid_embedding_size, num_blocks, num_heads)

    fwd = jax.jit(functools.partial(model_forward, num_heads=num_heads))
    logits, norm = fwd(params, i, hist_i, hist_t, sl)
    jax.block_until_ready((logits, norm))
    assert logits.shape == (B,) and norm.shape == ()
    assert bool(jnp.isfinite(logits).all()) and bool(jnp.isfinite(norm))
    print("KERNEL_OK")
</pallas_src>

<mosaic_0001>
module attributes {stable_mosaic.version = 11 : i64} {
  func.func @_ffn_res_ln_kernel(%arg0: i32, %arg1: memref<2x32xf32, #tpu.memory_space<vmem>>, %arg2: memref<32x32xbf16, #tpu.memory_space<vmem>>, %arg3: memref<1x32xf32, #tpu.memory_space<vmem>>, %arg4: memref<32x32xbf16, #tpu.memory_space<vmem>>, %arg5: memref<1x32xf32, #tpu.memory_space<vmem>>, %arg6: memref<1x32xf32, #tpu.memory_space<vmem>>, %arg7: memref<1x32xf32, #tpu.memory_space<vmem>>, %arg8: memref<2x32xf32, #tpu.memory_space<vmem>>) attributes {dimension_semantics = [#tpu.dimension_semantics<parallel>], iteration_bounds = array<i64: 1>, scalar_prefetch = 0 : i64, scratch_operands = 0 : i64, tpu.core_type = #tpu.core_type<tc>, window_params = [{transform_indices = @transform_0, window_bounds = array<i64: 2, 32>}, {pipeline_mode = #tpu.pipeline_mode<synchronous>, transform_indices = @transform_1, window_bounds = array<i64: 32, 32>}, {pipeline_mode = #tpu.pipeline_mode<synchronous>, transform_indices = @transform_2, window_bounds = array<i64: 1, 32>}, {pipeline_mode = #tpu.pipeline_mode<synchronous>, transform_indices = @transform_3, window_bounds = array<i64: 32, 32>}, {pipeline_mode = #tpu.pipeline_mode<synchronous>, transform_indices = @transform_4, window_bounds = array<i64: 1, 32>}, {pipeline_mode = #tpu.pipeline_mode<synchronous>, transform_indices = @transform_5, window_bounds = array<i64: 1, 32>}, {pipeline_mode = #tpu.pipeline_mode<synchronous>, transform_indices = @transform_6, window_bounds = array<i64: 1, 32>}, {transform_indices = @transform_7, window_bounds = array<i64: 2, 32>}]} {
    %c0 = arith.constant 0 : index
    %c0_0 = arith.constant 0 : index
    %0 = vector.load %arg1[%c0, %c0_0] : memref<2x32xf32, #tpu.memory_space<vmem>>, vector<2x32xf32>
    %1 = arith.truncf %0 : vector<2x32xf32> to vector<2x32xbf16>
    %c0_1 = arith.constant 0 : index
    %c0_2 = arith.constant 0 : index
    %2 = vector.load %arg2[%c0_1, %c0_2] : memref<32x32xbf16, #tpu.memory_space<vmem>>, vector<32x32xbf16>
    %cst = arith.constant dense<0.000000e+00> : vector<2x32xf32>
    %3 = tpu.matmul %1, %2, %cst {dimension_numbers = #tpu.dot_dimension_numbers<[1], [0], [0], [1], [0, 0, 1, 1], [], []>} : vector<2x32xbf16>, vector<32x32xbf16>, vector<2x32xf32> -> vector<2x32xf32>
    %c0_3 = arith.constant 0 : index
    %c0_4 = arith.constant 0 : index
    %4 = vector.load %arg3[%c0_3, %c0_4] : memref<1x32xf32, #tpu.memory_space<vmem>>, vector<1x32xf32>
    %5 = vector.broadcast %4 : vector<1x32xf32> to vector<2x32xf32>
    %6 = arith.addf %3, %5 : vector<2x32xf32>
    %7 = arith.truncf %6 : vector<2x32xf32> to vector<2x32xbf16>
    %c0_5 = arith.constant 0 : index
    %c0_6 = arith.constant 0 : index
    %8 = vector.load %arg4[%c0_5, %c0_6] : memref<32x32xbf16, #tpu.memory_space<vmem>>, vector<32x32xbf16>
    %cst_7 = arith.constant dense<0.000000e+00> : vector<2x32xf32>
    %9 = tpu.matmul %7, %8, %cst_7 {dimension_numbers = #tpu.dot_dimension_numbers<[1], [0], [0], [1], [0, 0, 1, 1], [], []>} : vector<2x32xbf16>, vector<32x32xbf16>, vector<2x32xf32> -> vector<2x32xf32>
    %c0_8 = arith.constant 0 : index
    %c0_9 = arith.constant 0 : index
    %10 = vector.load %arg5[%c0_8, %c0_9] : memref<1x32xf32, #tpu.memory_space<vmem>>, vector<1x32xf32>
    %11 = vector.broadcast %10 : vector<1x32xf32> to vector<2x32xf32>
    %12 = arith.addf %9, %11 : vector<2x32xf32>
    %13 = arith.addf %0, %12 : vector<2x32xf32>
    %c0_10 = arith.constant 0 : index
    %c0_11 = arith.constant 0 : index
    %14 = vector.load %arg6[%c0_10, %c0_11] : memref<1x32xf32, #tpu.memory_space<vmem>>, vector<1x32xf32>
    %c0_12 = arith.constant 0 : index
    %c0_13 = arith.constant 0 : index
    %15 = vector.load %arg7[%c0_12, %c0_13] : memref<1x32xf32, #tpu.memory_space<vmem>>, vector<1x32xf32>
    %cst_14 = arith.constant dense<0.000000e+00> : vector<2xf32>
    %16 = vector.multi_reduction <add>, %13, %cst_14 [1] : vector<2x32xf32> to vector<2xf32>
    %17 = vector.shape_cast %16 : vector<2xf32> to vector<2x1xf32>
    %cst_15 = arith.constant 3.200000e+01 : f32
    %18 = vector.broadcast %cst_15 : f32 to vector<2x1xf32>
    %19 = arith.divf %17, %18 : vector<2x1xf32>
    %20 = vector.broadcast %19 : vector<2x1xf32> to vector<2x32xf32>
    %21 = arith.subf %13, %20 : vector<2x32xf32>
    %22 = arith.mulf %21, %21 : vector<2x32xf32>
    %cst_16 = arith.constant dense<0.000000e+00> : vector<2xf32>
    %23 = vector.multi_reduction <add>, %22, %cst_16 [1] : vector<2x32xf32> to vector<2xf32>
    %24 = vector.shape_cast %23 : vector<2xf32> to vector<2x1xf32>
    %cst_17 = arith.constant 3.200000e+01 : f32
    %25 = vector.broadcast %cst_17 : f32 to vector<2x1xf32>
    %26 = arith.divf %24, %25 : vector<2x1xf32>
    %cst_18 = arith.constant 9.99999974E-6 : f32
    %27 = vector.broadcast %cst_18 : f32 to vector<2x1xf32>
    %28 = arith.addf %26, %27 : vector<2x1xf32>
    %29 = math.rsqrt %28 : vector<2x1xf32>
    %30 = vector.broadcast %29 : vector<2x1xf32> to vector<2x32xf32>
    %31 = arith.mulf %21, %30 : vector<2x32xf32>
    %32 = vector.broadcast %14 : vector<1x32xf32> to vector<2x32xf32>
    %33 = arith.mulf %31, %32 : vector<2x32xf32>
    %34 = vector.broadcast %15 : vector<1x32xf32> to vector<2x32xf32>
    %35 = arith.addf %33, %34 : vector<2x32xf32>
    %c0_19 = arith.constant 0 : index
    %c0_20 = arith.constant 0 : index
    %36 = vector.load %arg8[%c0_19, %c0_20] : memref<2x32xf32, #tpu.memory_space<vmem>>, vector<2x32xf32>
    tpu.vector_store %arg8[%c0_19, %c0_20], %35 {strides = array<i32>} : memref<2x32xf32, #tpu.memory_space<vmem>>, vector<2x32xf32>,
    return
  }
  func.func @transform_0(%arg0: i32) -> (i32, i32) {
    %c0_i32 = arith.constant 0 : i32
    %c0_i32_0 = arith.constant 0 : i32
    return %arg0, %c0_i32 : i32, i32
  }
  func.func @transform_1(%arg0: i32) -> (i32, i32) {
    %c0_i32 = arith.constant 0 : i32
    %c0_i32_0 = arith.constant 0 : i32
    %c0_i32_1 = arith.constant 0 : i32
    return %c0_i32, %c0_i32_0 : i32, i32
  }
  func.func @transform_2(%arg0: i32) -> (i32, i32) {
    %c0_i32 = arith.constant 0 : i32
    %c0_i32_0 = arith.constant 0 : i32
    %c0_i32_1 = arith.constant 0 : i32
    return %c0_i32, %c0_i32_0 : i32, i32
  }
  func.func @transform_3(%arg0: i32) -> (i32, i32) {
    %c0_i32 = arith.constant 0 : i32
    %c0_i32_0 = arith.constant 0 : i32
    %c0_i32_1 = arith.constant 0 : i32
    return %c0_i32, %c0_i32_0 : i32, i32
  }
  func.func @transform_4(%arg0: i32) -> (i32, i32) {
    %c0_i32 = arith.constant 0 : i32
    %c0_i32_0 = arith.constant 0 : i32
    %c0_i32_1 = arith.constant 0 : i32
    return %c0_i32, %c0_i32_0 : i32, i32
  }
  func.func @transform_5(%arg0: i32) -> (i32, i32) {
    %c0_i32 = arith.constant 0 : i32
    %c0_i32_0 = arith.constant 0 : i32
    %c0_i32_1 = arith.constant 0 : i32
    return %c0_i32, %c0_i32_0 : i32, i32
  }
  func.func @transform_6(%arg0: i32) -> (i32, i32) {
    %c0_i32 = arith.constant 0 : i32
    %c0_i32_0 = arith.constant 0 : i32
    %c0_i32_1 = arith.constant 0 : i32
    return %c0_i32, %c0_i32_0 : i32, i32
  }
  func.func @transform_7(%arg0: i32) -> (i32, i32) {
    %c0_i32 = arith.constant 0 : i32
    %c0_i32_0 = arith.constant 0 : i32
    return %arg0, %c0_i32 : i32, i32
  }
}

module attributes {stable_mosaic.version = 11 : i64} {
  func.func @_linear_kernel(%arg0: i32, %arg1: memref<16x45xf32, #tpu.memory_space<vmem>>, %arg2: memref<45x32xbf16, #tpu.memory_space<vmem>>, %arg3: memref<1x32xf32, #tpu.memory_space<vmem>>, %arg4: memref<16x32xf32, #tpu.memory_space<vmem>>) attributes {dimension_semantics = [#tpu.dimension_semantics<parallel>], iteration_bounds = array<i64: 1>, scalar_prefetch = 0 : i64, scratch_operands = 0 : i64, tpu.core_type = #tpu.core_type<tc>, window_params = [{transform_indices = @transform_0, window_bounds = array<i64: 16, 45>}, {pipeline_mode = #tpu.pipeline_mode<synchronous>, transform_indices = @transform_1, window_bounds = array<i64: 45, 32>}, {pipeline_mode = #tpu.pipeline_mode<synchronous>, transform_indices = @transform_2, window_bounds = array<i64: 1, 32>}, {transform_indices = @transform_3, window_bounds = array<i64: 16, 32>}]} {
    %c0 = arith.constant 0 : index
    %c0_0 = arith.constant 0 : index
    %0 = vector.load %arg1[%c0, %c0_0] : memref<16x45xf32, #tpu.memory_space<vmem>>, vector<16x45xf32>
    %1 = arith.truncf %0 : vector<16x45xf32> to vector<16x45xbf16>
    %c0_1 = arith.constant 0 : index
    %c0_2 = arith.constant 0 : index
    %2 = vector.load %arg2[%c0_1, %c0_2] : memref<45x32xbf16, #tpu.memory_space<vmem>>, vector<45x32xbf16>
    %cst = arith.constant dense<0.000000e+00> : vector<16x32xf32>
    %3 = tpu.matmul %1, %2, %cst {dimension_numbers = #tpu.dot_dimension_numbers<[1], [0], [0], [1], [0, 0, 1, 1], [], []>} : vector<16x45xbf16>, vector<45x32xbf16>, vector<16x32xf32> -> vector<16x32xf32>
    %c0_3 = arith.constant 0 : index
    %c0_4 = arith.constant 0 : index
    %4 = vector.load %arg3[%c0_3, %c0_4] : memref<1x32xf32, #tpu.memory_space<vmem>>, vector<1x32xf32>
    %5 = vector.broadcast %4 : vector<1x32xf32> to vector<16x32xf32>
    %6 = arith.addf %3, %5 : vector<16x32xf32>
    %c0_5 = arith.constant 0 : index
    %c0_6 = arith.constant 0 : index
    %7 = vector.load %arg4[%c0_5, %c0_6] : memref<16x32xf32, #tpu.memory_space<vmem>>, vector<16x32xf32>
    tpu.vector_store %arg4[%c0_5, %c0_6], %6 {strides = array<i32>} : memref<16x32xf32, #tpu.memory_space<vmem>>, vector<16x32xf32>,
    return
  }
  func.func @transform_0(%arg0: i32) -> (i32, i32) {
    %c0_i32 = arith.constant 0 : i32
    %c0_i32_0 = arith.constant 0 : i32
    return %arg0, %c0_i32 : i32, i32
  }
  func.func @transform_1(%arg0: i32) -> (i32, i32) {
    %c0_i32 = arith.constant 0 : i32
    %c0_i32_0 = arith.constant 0 : i32
    %c0_i32_1 = arith.constant 0 : i32
    return %c0_i32, %c0_i32_0 : i32, i32
  }
  func.func @transform_2(%arg0: i32) -> (i32, i32) {
    %c0_i32 = arith.constant 0 : i32
    %c0_i32_0 = arith.constant 0 : i32
    %c0_i32_1 = arith.constant 0 : i32
    return %c0_i32, %c0_i32_0 : i32, i32
  }
  func.func @transform_3(%arg0: i32) -> (i32, i32) {
    %c0_i32 = arith.constant 0 : i32
    %c0_i32_0 = arith.constant 0 : i32
    return %arg0, %c0_i32 : i32, i32
  }
}

module attributes {stable_mosaic.version = 11 : i64} {
  func.func @_linear_kernel(%arg0: i32, %arg1: memref<16x32xf32, #tpu.memory_space<vmem>>, %arg2: memref<32x96xbf16, #tpu.memory_space<vmem>>, %arg3: memref<1x96xf32, #tpu.memory_space<vmem>>, %arg4: memref<16x96xf32, #tpu.memory_space<vmem>>) attributes {dimension_semantics = [#tpu.dimension_semantics<parallel>], iteration_bounds = array<i64: 1>, scalar_prefetch = 0 : i64, scratch_operands = 0 : i64, tpu.core_type = #tpu.core_type<tc>, window_params = [{transform_indices = @transform_0, window_bounds = array<i64: 16, 32>}, {pipeline_mode = #tpu.pipeline_mode<synchronous>, transform_indices = @transform_1, window_bounds = array<i64: 32, 96>}, {pipeline_mode = #tpu.pipeline_mode<synchronous>, transform_indices = @transform_2, window_bounds = array<i64: 1, 96>}, {transform_indices = @transform_3, window_bounds = array<i64: 16, 96>}]} {
    %c0 = arith.constant 0 : index
    %c0_0 = arith.constant 0 : index
    %0 = vector.load %arg1[%c0, %c0_0] : memref<16x32xf32, #tpu.memory_space<vmem>>, vector<16x32xf32>
    %1 = arith.truncf %0 : vector<16x32xf32> to vector<16x32xbf16>
    %c0_1 = arith.constant 0 : index
    %c0_2 = arith.constant 0 : index
    %2 = vector.load %arg2[%c0_1, %c0_2] : memref<32x96xbf16, #tpu.memory_space<vmem>>, vector<32x96xbf16>
    %cst = arith.constant dense<0.000000e+00> : vector<16x96xf32>
    %3 = tpu.matmul %1, %2, %cst {dimension_numbers = #tpu.dot_dimension_numbers<[1], [0], [0], [1], [0, 0, 1, 1], [], []>} : vector<16x32xbf16>, vector<32x96xbf16>, vector<16x96xf32> -> vector<16x96xf32>
    %c0_3 = arith.constant 0 : index
    %c0_4 = arith.constant 0 : index
    %4 = vector.load %arg3[%c0_3, %c0_4] : memref<1x96xf32, #tpu.memory_space<vmem>>, vector<1x96xf32>
    %5 = vector.broadcast %4 : vector<1x96xf32> to vector<16x96xf32>
    %6 = arith.addf %3, %5 : vector<16x96xf32>
    %c0_5 = arith.constant 0 : index
    %c0_6 = arith.constant 0 : index
    %7 = vector.load %arg4[%c0_5, %c0_6] : memref<16x96xf32, #tpu.memory_space<vmem>>, vector<16x96xf32>
    tpu.vector_store %arg4[%c0_5, %c0_6], %6 {strides = array<i32>} : memref<16x96xf32, #tpu.memory_space<vmem>>, vector<16x96xf32>,
    return
  }
  func.func @transform_0(%arg0: i32) -> (i32, i32) {
    %c0_i32 = arith.constant 0 : i32
    %c0_i32_0 = arith.constant 0 : i32
    return %arg0, %c0_i32 : i32, i32
  }
  func.func @transform_1(%arg0: i32) -> (i32, i32) {
    %c0_i32 = arith.constant 0 : i32
    %c0_i32_0 = arith.constant 0 : i32
    %c0_i32_1 = arith.constant 0 : i32
    return %c0_i32, %c0_i32_0 : i32, i32
  }
  func.func @transform_2(%arg0: i32) -> (i32, i32) {
    %c0_i32 = arith.constant 0 : i32
    %c0_i32_0 = arith.constant 0 : i32
    %c0_i32_1 = arith.constant 0 : i32
    return %c0_i32, %c0_i32_0 : i32, i32
  }
  func.func @transform_3(%arg0: i32) -> (i32, i32) {
    %c0_i32 = arith.constant 0 : i32
    %c0_i32_0 = arith.constant 0 : i32
    return %arg0, %c0_i32 : i32, i32
  }
}

module attributes {stable_mosaic.version = 11 : i64} {
  func.func @_enc_attn_kernel(%arg0: i32, %arg1: memref<2xi32, #tpu.memory_space<smem>>, %arg2: memref<1x8x96xf32, #tpu.memory_space<vmem>>, %arg3: memref<1x8x32xf32, #tpu.memory_space<vmem>>, %arg4: memref<32x32xbf16, #tpu.memory_space<vmem>>, %arg5: memref<1x32xf32, #tpu.memory_space<vmem>>, %arg6: memref<1x32xf32, #tpu.memory_space<vmem>>, %arg7: memref<1x32xf32, #tpu.memory_space<vmem>>, %arg8: memref<1x8x32xf32, #tpu.memory_space<vmem>>) attributes {dimension_semantics = [#tpu.dimension_semantics<parallel>], iteration_bounds = array<i64: 2>, scalar_prefetch = 1 : i64, scratch_operands = 0 : i64, tpu.core_type = #tpu.core_type<tc>, window_params = [{transform_indices = @transform_0, window_bounds = array<i64: 1, 8, 96>}, {transform_indices = @transform_1, window_bounds = array<i64: 1, 8, 32>}, {pipeline_mode = #tpu.pipeline_mode<synchronous>, transform_indices = @transform_2, window_bounds = array<i64: 32, 32>}, {pipeline_mode = #tpu.pipeline_mode<synchronous>, transform_indices = @transform_3, window_bounds = array<i64: 1, 32>}, {pipeline_mode = #tpu.pipeline_mode<synchronous>, transform_indices = @transform_4, window_bounds = array<i64: 1, 32>}, {pipeline_mode = #tpu.pipeline_mode<synchronous>, transform_indices = @transform_5, window_bounds = array<i64: 1, 32>}, {transform_indices = @transform_6, window_bounds = array<i64: 1, 8, 32>}]} {
    %0 = arith.index_cast %arg0 : i32 to index
    %1 = memref.load %arg1[%0] : memref<2xi32, #tpu.memory_space<smem>>
    %2 = tpu.iota {dimensions = array<i32: 1>} : vector<1x8xi32>
    %3 = vector.broadcast %1 : i32 to vector<1x8xi32>
    %4 = arith.cmpi slt, %2, %3 : vector<1x8xi32>
    %cst = arith.constant 0.000000e+00 : f32
    %cst_0 = arith.constant -1.000000e+30 : f32
    %5 = vector.broadcast %cst : f32 to vector<1x8xf32>
    %6 = vector.broadcast %cst_0 : f32 to vector<1x8xf32>
    %7 = arith.select %4, %5, %6 : vector<1x8xi1>, vector<1x8xf32>
    %c0 = arith.constant 0 : index
    %c0_1 = arith.constant 0 : index
    %c0_2 = arith.constant 0 : index
    %8 = vector.load %arg2[%c0, %c0_1, %c0_2] : memref<1x8x96xf32, #tpu.memory_space<vmem>>, vector<1x8x96xf32>
    %9 = vector.shape_cast %8 : vector<1x8x96xf32> to vector<8x96xf32>
    %10 = vector.extract_strided_slice %9 {offsets = [0, 0], sizes = [8, 16], strides = [1, 1]} : vector<8x96xf32> to vector<8x16xf32>
    %11 = arith.truncf %10 : vector<8x16xf32> to vector<8x16xbf16>
    %12 = vector.extract_strided_slice %9 {offsets = [0, 32], sizes = [8, 16], strides = [1, 1]} : vector<8x96xf32> to vector<8x16xf32>
    %13 = arith.truncf %12 : vector<8x16xf32> to vector<8x16xbf16>
    %14 = vector.extract_strided_slice %9 {offsets = [0, 64], sizes = [8, 16], strides = [1, 1]} : vector<8x96xf32> to vector<8x16xf32>
    %15 = arith.truncf %14 : vector<8x16xf32> to vector<8x16xbf16>
    %cst_3 = arith.constant dense<0.000000e+00> : vector<8x8xf32>
    %16 = tpu.matmul %11, %13, %cst_3 {dimension_numbers = #tpu.dot_dimension_numbers<[1], [1], [0], [0], [0, 0, 1, 0], [], []>} : vector<8x16xbf16>, vector<8x16xbf16>, vector<8x8xf32> -> vector<8x8xf32>
    %cst_4 = arith.constant 2.500000e-01 : f32
    %17 = vector.broadcast %cst_4 : f32 to vector<8x8xf32>
    %18 = arith.mulf %16, %17 : vector<8x8xf32>
    %19 = vector.broadcast %7 : vector<1x8xf32> to vector<8x8xf32>
    %20 = arith.addf %18, %19 : vector<8x8xf32>
    %cst_5 = arith.constant dense<0xFF800000> : vector<8xf32>
    %21 = vector.multi_reduction <maximumf>, %20, %cst_5 [1] : vector<8x8xf32> to vector<8xf32>
    %22 = vector.shape_cast %21 : vector<8xf32> to vector<8x1xf32>
    %23 = vector.broadcast %22 : vector<8x1xf32> to vector<8x8xf32>
    %24 = arith.subf %20, %23 : vector<8x8xf32>
    %25 = math.exp %24 : vector<8x8xf32>
    %cst_6 = arith.constant dense<0.000000e+00> : vector<8xf32>
    %26 = vector.multi_reduction <add>, %25, %cst_6 [1] : vector<8x8xf32> to vector<8xf32>
    %27 = vector.shape_cast %26 : vector<8xf32> to vector<8x1xf32>
    %28 = tpu.reciprocal %27 {approx = true} : vector<8x1xf32> -> vector<8x1xf32>
    %29 = vector.broadcast %28 : vector<8x1xf32> to vector<8x8xf32>
    %30 = arith.mulf %25, %29 : vector<8x8xf32>
    %31 = arith.truncf %30 : vector<8x8xf32> to vector<8x8xbf16>
    %cst_7 = arith.constant dense<0.000000e+00> : vector<8x16xf32>
    %32 = tpu.matmul %31, %15, %cst_7 {dimension_numbers = #tpu.dot_dimension_numbers<[1], [0], [0], [1], [0, 0, 1, 1], [], []>} : vector<8x8xbf16>, vector<8x16xbf16>, vector<8x16xf32> -> vector<8x16xf32>
    %33 = vector.extract_strided_slice %9 {offsets = [0, 16], sizes = [8, 16], strides = [1, 1]} : vector<8x96xf32> to vector<8x16xf32>
    %34 = arith.truncf %33 : vector<8x16xf32> to vector<8x16xbf16>
    %35 = vector.extract_strided_slice %9 {offsets = [0, 48], sizes = [8, 16], strides = [1, 1]} : vector<8x96xf32> to vector<8x16xf32>
    %36 = arith.truncf %35 : vector<8x16xf32> to vector<8x16xbf16>
    %37 = vector.extract_strided_slice %9 {offsets = [0, 80], sizes = [8, 16], strides = [1, 1]} : vector<8x96xf32> to vector<8x16xf32>
    %38 = arith.truncf %37 : vector<8x16xf32> to vector<8x16xbf16>
    %cst_8 = arith.constant dense<0.000000e+00> : vector<8x8xf32>
    %39 = tpu.matmul %34, %36, %cst_8 {dimension_numbers = #tpu.dot_dimension_numbers<[1], [1], [0], [0], [0, 0, 1, 0], [], []>} : vector<8x16xbf16>, vector<8x16xbf16>, vector<8x8xf32> -> vector<8x8xf32>
    %cst_9 = arith.constant 2.500000e-01 : f32
    %40 = vector.broadcast %cst_9 : f32 to vector<8x8xf32>
    %41 = arith.mulf %39, %40 : vector<8x8xf32>
    %42 = vector.broadcast %7 : vector<1x8xf32> to vector<8x8xf32>
    %43 = arith.addf %41, %42 : vector<8x8xf32>
    %cst_10 = arith.constant dense<0xFF800000> : vector<8xf32>
    %44 = vector.multi_reduction <maximumf>, %43, %cst_10 [1] : vector<8x8xf32> to vector<8xf32>
    %45 = vector.shape_cast %44 : vector<8xf32> to vector<8x1xf32>
    %46 = vector.broadcast %45 : vector<8x1xf32> to vector<8x8xf32>
    %47 = arith.subf %43, %46 : vector<8x8xf32>
    %48 = math.exp %47 : vector<8x8xf32>
    %cst_11 = arith.constant dense<0.000000e+00> : vector<8xf32>
    %49 = vector.multi_reduction <add>, %48, %cst_11 [1] : vector<8x8xf32> to vector<8xf32>
    %50 = vector.shape_cast %49 : vector<8xf32> to vector<8x1xf32>
    %51 = tpu.reciprocal %50 {approx = true} : vector<8x1xf32> -> vector<8x1xf32>
    %52 = vector.broadcast %51 : vector<8x1xf32> to vector<8x8xf32>
    %53 = arith.mulf %48, %52 : vector<8x8xf32>
    %54 = arith.truncf %53 : vector<8x8xf32> to vector<8x8xbf16>
    %cst_12 = arith.constant dense<0.000000e+00> : vector<8x16xf32>
    %55 = tpu.matmul %54, %38, %cst_12 {dimension_numbers = #tpu.dot_dimension_numbers<[1], [0], [0], [1], [0, 0, 1, 1], [], []>} : vector<8x8xbf16>, vector<8x16xbf16>, vector<8x16xf32> -> vector<8x16xf32>
    %56 = tpu.concatenate %32, %55 in 1 : vector<8x16xf32>, vector<8x16xf32> -> vector<8x32xf32>
    %57 = arith.truncf %56 : vector<8x32xf32> to vector<8x32xbf16>
    %c0_13 = arith.constant 0 : index
    %c0_14 = arith.constant 0 : index
    %58 = vector.load %arg4[%c0_13, %c0_14] : memref<32x32xbf16, #tpu.memory_space<vmem>>, vector<32x32xbf16>
    %cst_15 = arith.constant dense<0.000000e+00> : vector<8x32xf32>
    %59 = tpu.matmul %57, %58, %cst_15 {dimension_numbers = #tpu.dot_dimension_numbers<[1], [0], [0], [1], [0, 0, 1, 1], [], []>} : vector<8x32xbf16>, vector<32x32xbf16>, vector<8x32xf32> -> vector<8x32xf32>
    %c0_16 = arith.constant 0 : index
    %c0_17 = arith.constant 0 : index
    %60 = vector.load %arg5[%c0_16, %c0_17] : memref<1x32xf32, #tpu.memory_space<vmem>>, vector<1x32xf32>
    %61 = vector.broadcast %60 : vector<1x32xf32> to vector<8x32xf32>
    %62 = arith.addf %59, %61 : vector<8x32xf32>
    %c0_18 = arith.constant 0 : index
    %c0_19 = arith.constant 0 : index
    %c0_20 = arith.constant 0 : index
    %63 = vector.load %arg3[%c0_18, %c0_19, %c0_20] : memref<1x8x32xf32, #tpu.memory_space<vmem>>, vector<1x8x32xf32>
    %64 = vector.shape_cast %63 : vector<1x8x32xf32> to vector<8x32xf32>
    %65 = arith.addf %64, %62 : vector<8x32xf32>
    %c0_21 = arith.constant 0 : index
    %c0_22 = arith.constant 0 : index
    %66 = vector.load %arg6[%c0_21, %c0_22] : memref<1x32xf32, #tpu.memory_space<vmem>>, vector<1x32xf32>
    %c0_23 = arith.constant 0 : index
    %c0_24 = arith.constant 0 : index
    %67 = vector.load %arg7[%c0_23, %c0_24] : memref<1x32xf32, #tpu.memory_space<vmem>>, vector<1x32xf32>
    %cst_25 = arith.constant dense<0.000000e+00> : vector<8xf32>
    %68 = vector.multi_reduction <add>, %65, %cst_25 [1] : vector<8x32xf32> to vector<8xf32>
    %69 = vector.shape_cast %68 : vector<8xf32> to vector<8x1xf32>
    %cst_26 = arith.constant 3.200000e+01 : f32
    %70 = vector.broadcast %cst_26 : f32 to vector<8x1xf32>
    %71 = arith.divf %69, %70 : vector<8x1xf32>
    %72 = vector.broadcast %71 : vector<8x1xf32> to vector<8x32xf32>
    %73 = arith.subf %65, %72 : vector<8x32xf32>
    %74 = arith.mulf %73, %73 : vector<8x32xf32>
    %cst_27 = arith.constant dense<0.000000e+00> : vector<8xf32>
    %75 = vector.multi_reduction <add>, %74, %cst_27 [1] : vector<8x32xf32> to vector<8xf32>
    %76 = vector.shape_cast %75 : vector<8xf32> to vector<8x1xf32>
    %cst_28 = arith.constant 3.200000e+01 : f32
    %77 = vector.broadcast %cst_28 : f32 to vector<8x1xf32>
    %78 = arith.divf %76, %77 : vector<8x1xf32>
    %cst_29 = arith.constant 9.99999974E-6 : f32
    %79 = vector.broadcast %cst_29 : f32 to vector<8x1xf32>
    %80 = arith.addf %78, %79 : vector<8x1xf32>
    %81 = math.rsqrt %80 : vector<8x1xf32>
    %82 = vector.broadcast %81 : vector<8x1xf32> to vector<8x32xf32>
    %83 = arith.mulf %73, %82 : vector<8x32xf32>
    %84 = vector.broadcast %66 : vector<1x32xf32> to vector<8x32xf32>
    %85 = arith.mulf %83, %84 : vector<8x32xf32>
    %86 = vector.broadcast %67 : vector<1x32xf32> to vector<8x32xf32>
    %87 = arith.addf %85, %86 : vector<8x32xf32>
    %c0_30 = arith.constant 0 : index
    %c0_31 = arith.constant 0 : index
    %c0_32 = arith.constant 0 : index
    %88 = vector.load %arg8[%c0_30, %c0_31, %c0_32] : memref<1x8x32xf32, #tpu.memory_space<vmem>>, vector<1x8x32xf32>
    %89 = vector.shape_cast %88 : vector<1x8x32xf32> to vector<8x32xf32>
    %90 = vector.shape_cast %87 : vector<8x32xf32> to vector<1x8x32xf32>
    tpu.vector_store %arg8[%c0_30, %c0_31, %c0_32], %90 {strides = array<i32>} : memref<1x8x32xf32, #tpu.memory_space<vmem>>, vector<1x8x32xf32>,
    return
  }
  func.func @transform_0(%arg0: i32, %arg1: memref<2xi32, #tpu.memory_space<smem>>) -> (i32, i32, i32) {
    %c0_i32 = arith.constant 0 : i32
    %c0_i32_0 = arith.constant 0 : i32
    %c0_i32_1 = arith.constant 0 : i32
    return %arg0, %c0_i32, %c0_i32_0 : i32, i32, i32
  }
  func.func @transform_1(%arg0: i32, %arg1: memref<2xi32, #tpu.memory_space<smem>>) -> (i32, i32, i32) {
    %c0_i32 = arith.constant 0 : i32
    %c0_i32_0 = arith.constant 0 : i32
    %c0_i32_1 = arith.constant 0 : i32
    return %arg0, %c0_i32, %c0_i32_0 : i32, i32, i32
  }
  func.func @transform_2(%arg0: i32, %arg1: memref<2xi32, #tpu.memory_space<smem>>) -> (i32, i32) {
    %c0_i32 = arith.constant 0 : i32
    %c0_i32_0 = arith.constant 0 : i32
    %c0_i32_1 = arith.constant 0 : i32
    return %c0_i32, %c0_i32_0 : i32, i32
  }
  func.func @transform_3(%arg0: i32, %arg1: memref<2xi32, #tpu.memory_space<smem>>) -> (i32, i32) {
    %c0_i32 = arith.constant 0 : i32
    %c0_i32_0 = arith.constant 0 : i32
    %c0_i32_1 = arith.constant 0 : i32
    return %c0_i32, %c0_i32_0 : i32, i32
  }
  func.func @transform_4(%arg0: i32, %arg1: memref<2xi32, #tpu.memory_space<smem>>) -> (i32, i32) {
    %c0_i32 = arith.constant 0 : i32
    %c0_i32_0 = arith.constant 0 : i32
    %c0_i32_1 = arith.constant 0 : i32
    return %c0_i32, %c0_i32_0 : i32, i32
  }
  func.func @transform_5(%arg0: i32, %arg1: memref<2xi32, #tpu.memory_space<smem>>) -> (i32, i32) {
    %c0_i32 = arith.constant 0 : i32
    %c0_i32_0 = arith.constant 0 : i32
    %c0_i32_1 = arith.constant 0 : i32
    return %c0_i32, %c0_i32_0 : i32, i32
  }
  func.func @transform_6(%arg0: i32, %arg1: memref<2xi32, #tpu.memory_space<smem>>) -> (i32, i32, i32) {
    %c0_i32 = arith.constant 0 : i32
    %c0_i32_0 = arith.constant 0 : i32
    %c0_i32_1 = arith.constant 0 : i32
    return %arg0, %c0_i32, %c0_i32_0 : i32, i32, i32
  }
}

module attributes {stable_mosaic.version = 11 : i64} {
  func.func @_layernorm_kernel(%arg0: i32, %arg1: memref<16x32xf32, #tpu.memory_space<vmem>>, %arg2: memref<1x32xf32, #tpu.memory_space<vmem>>, %arg3: memref<1x32xf32, #tpu.memory_space<vmem>>, %arg4: memref<16x32xf32, #tpu.memory_space<vmem>>) attributes {dimension_semantics = [#tpu.dimension_semantics<parallel>], iteration_bounds = array<i64: 1>, scalar_prefetch = 0 : i64, scratch_operands = 0 : i64, tpu.core_type = #tpu.core_type<tc>, window_params = [{transform_indices = @transform_0, window_bounds = array<i64: 16, 32>}, {pipeline_mode = #tpu.pipeline_mode<synchronous>, transform_indices = @transform_1, window_bounds = array<i64: 1, 32>}, {pipeline_mode = #tpu.pipeline_mode<synchronous>, transform_indices = @transform_2, window_bounds = array<i64: 1, 32>}, {transform_indices = @transform_3, window_bounds = array<i64: 16, 32>}]} {
    %c0 = arith.constant 0 : index
    %c0_0 = arith.constant 0 : index
    %0 = vector.load %arg1[%c0, %c0_0] : memref<16x32xf32, #tpu.memory_space<vmem>>, vector<16x32xf32>
    %c0_1 = arith.constant 0 : index
    %c0_2 = arith.constant 0 : index
    %1 = vector.load %arg2[%c0_1, %c0_2] : memref<1x32xf32, #tpu.memory_space<vmem>>, vector<1x32xf32>
    %c0_3 = arith.constant 0 : index
    %c0_4 = arith.constant 0 : index
    %2 = vector.load %arg3[%c0_3, %c0_4] : memref<1x32xf32, #tpu.memory_space<vmem>>, vector<1x32xf32>
    %cst = arith.constant dense<0.000000e+00> : vector<16xf32>
    %3 = vector.multi_reduction <add>, %0, %cst [1] : vector<16x32xf32> to vector<16xf32>
    %4 = vector.shape_cast %3 : vector<16xf32> to vector<16x1xf32>
    %cst_5 = arith.constant 3.200000e+01 : f32
    %5 = vector.broadcast %cst_5 : f32 to vector<16x1xf32>
    %6 = arith.divf %4, %5 : vector<16x1xf32>
    %7 = vector.broadcast %6 : vector<16x1xf32> to vector<16x32xf32>
    %8 = arith.subf %0, %7 : vector<16x32xf32>
    %9 = arith.mulf %8, %8 : vector<16x32xf32>
    %cst_6 = arith.constant dense<0.000000e+00> : vector<16xf32>
    %10 = vector.multi_reduction <add>, %9, %cst_6 [1] : vector<16x32xf32> to vector<16xf32>
    %11 = vector.shape_cast %10 : vector<16xf32> to vector<16x1xf32>
    %cst_7 = arith.constant 3.200000e+01 : f32
    %12 = vector.broadcast %cst_7 : f32 to vector<16x1xf32>
    %13 = arith.divf %11, %12 : vector<16x1xf32>
    %cst_8 = arith.constant 9.99999974E-6 : f32
    %14 = vector.broadcast %cst_8 : f32 to vector<16x1xf32>
    %15 = arith.addf %13, %14 : vector<16x1xf32>
    %16 = math.rsqrt %15 : vector<16x1xf32>
    %17 = vector.broadcast %16 : vector<16x1xf32> to vector<16x32xf32>
    %18 = arith.mulf %8, %17 : vector<16x32xf32>
    %19 = vector.broadcast %1 : vector<1x32xf32> to vector<16x32xf32>
    %20 = arith.mulf %18, %19 : vector<16x32xf32>
    %21 = vector.broadcast %2 : vector<1x32xf32> to vector<16x32xf32>
    %22 = arith.addf %20, %21 : vector<16x32xf32>
    %c0_9 = arith.constant 0 : index
    %c0_10 = arith.constant 0 : index
    %23 = vector.load %arg4[%c0_9, %c0_10] : memref<16x32xf32, #tpu.memory_space<vmem>>, vector<16x32xf32>
    tpu.vector_store %arg4[%c0_9, %c0_10], %22 {strides = array<i32>} : memref<16x32xf32, #tpu.memory_space<vmem>>, vector<16x32xf32>,
    return
  }
  func.func @transform_0(%arg0: i32) -> (i32, i32) {
    %c0_i32 = arith.constant 0 : i32
    %c0_i32_0 = arith.constant 0 : i32
    return %arg0, %c0_i32 : i32, i32
  }
  func.func @transform_1(%arg0: i32) -> (i32, i32) {
    %c0_i32 = arith.constant 0 : i32
    %c0_i32_0 = arith.constant 0 : i32
    %c0_i32_1 = arith.constant 0 : i32
    return %c0_i32, %c0_i32_0 : i32, i32
  }
  func.func @transform_2(%arg0: i32) -> (i32, i32) {
    %c0_i32 = arith.constant 0 : i32
    %c0_i32_0 = arith.constant 0 : i32
    %c0_i32_1 = arith.constant 0 : i32
    return %c0_i32, %c0_i32_0 : i32, i32
  }
  func.func @transform_3(%arg0: i32) -> (i32, i32) {
    %c0_i32 = arith.constant 0 : i32
    %c0_i32_0 = arith.constant 0 : i32
    return %arg0, %c0_i32 : i32, i32
  }
}

module attributes {stable_mosaic.version = 11 : i64} {
  func.func @_ffn_res_ln_kernel(%arg0: i32, %arg1: memref<16x32xf32, #tpu.memory_space<vmem>>, %arg2: memref<32x2048xbf16, #tpu.memory_space<vmem>>, %arg3: memref<1x2048xf32, #tpu.memory_space<vmem>>, %arg4: memref<2048x32xbf16, #tpu.memory_space<vmem>>, %arg5: memref<1x32xf32, #tpu.memory_space<vmem>>, %arg6: memref<1x32xf32, #tpu.memory_space<vmem>>, %arg7: memref<1x32xf32, #tpu.memory_space<vmem>>, %arg8: memref<16x32xf32, #tpu.memory_space<vmem>>) attributes {dimension_semantics = [#tpu.dimension_semantics<parallel>], iteration_bounds = array<i64: 1>, scalar_prefetch = 0 : i64, scratch_operands = 0 : i64, tpu.core_type = #tpu.core_type<tc>, window_params = [{transform_indices = @transform_0, window_bounds = array<i64: 16, 32>}, {pipeline_mode = #tpu.pipeline_mode<synchronous>, transform_indices = @transform_1, window_bounds = array<i64: 32, 2048>}, {pipeline_mode = #tpu.pipeline_mode<synchronous>, transform_indices = @transform_2, window_bounds = array<i64: 1, 2048>}, {pipeline_mode = #tpu.pipeline_mode<synchronous>, transform_indices = @transform_3, window_bounds = array<i64: 2048, 32>}, {pipeline_mode = #tpu.pipeline_mode<synchronous>, transform_indices = @transform_4, window_bounds = array<i64: 1, 32>}, {pipeline_mode = #tpu.pipeline_mode<synchronous>, transform_indices = @transform_5, window_bounds = array<i64: 1, 32>}, {pipeline_mode = #tpu.pipeline_mode<synchronous>, transform_indices = @transform_6, window_bounds = array<i64: 1, 32>}, {transform_indices = @transform_7, window_bounds = array<i64: 16, 32>}]} {
    %c0 = arith.constant 0 : index
    %c0_0 = arith.constant 0 : index
    %0 = vector.load %arg1[%c0, %c0_0] : memref<16x32xf32, #tpu.memory_space<vmem>>, vector<16x32xf32>
    %1 = arith.truncf %0 : vector<16x32xf32> to vector<16x32xbf16>
    %c0_1 = arith.constant 0 : index
    %c0_2 = arith.constant 0 : index
    %2 = vector.load %arg2[%c0_1, %c0_2] : memref<32x2048xbf16, #tpu.memory_space<vmem>>, vector<32x2048xbf16>
    %cst = arith.constant dense<0.000000e+00> : vector<16x2048xf32>
    %3 = tpu.matmul %1, %2, %cst {dimension_numbers = #tpu.dot_dimension_numbers<[1], [0], [0], [1], [0, 0, 1, 1], [], []>} : vector<16x32xbf16>, vector<32x2048xbf16>, vector<16x2048xf32> -> vector<16x2048xf32>
    %c0_3 = arith.constant 0 : index
    %c0_4 = arith.constant 0 : index
    %4 = vector.load %arg3[%c0_3, %c0_4] : memref<1x2048xf32, #tpu.memory_space<vmem>>, vector<1x2048xf32>
    %5 = vector.broadcast %4 : vector<1x2048xf32> to vector<16x2048xf32>
    %6 = arith.addf %3, %5 : vector<16x2048xf32>
    %cst_5 = arith.constant 0.000000e+00 : f32
    %7 = vector.broadcast %cst_5 : f32 to vector<16x2048xf32>
    %8 = arith.maximumf %6, %7 : vector<16x2048xf32>
    %9 = arith.truncf %8 : vector<16x2048xf32> to vector<16x2048xbf16>
    %c0_6 = arith.constant 0 : index
    %c0_7 = arith.constant 0 : index
    %10 = vector.load %arg4[%c0_6, %c0_7] : memref<2048x32xbf16, #tpu.memory_space<vmem>>, vector<2048x32xbf16>
    %cst_8 = arith.constant dense<0.000000e+00> : vector<16x32xf32>
    %11 = tpu.matmul %9, %10, %cst_8 {dimension_numbers = #tpu.dot_dimension_numbers<[1], [0], [0], [1], [0, 0, 1, 1], [], []>} : vector<16x2048xbf16>, vector<2048x32xbf16>, vector<16x32xf32> -> vector<16x32xf32>
    %c0_9 = arith.constant 0 : index
    %c0_10 = arith.constant 0 : index
    %12 = vector.load %arg5[%c0_9, %c0_10] : memref<1x32xf32, #tpu.memory_space<vmem>>, vector<1x32xf32>
    %13 = vector.broadcast %12 : vector<1x32xf32> to vector<16x32xf32>
    %14 = arith.addf %11, %13 : vector<16x32xf32>
    %15 = arith.addf %0, %14 : vector<16x32xf32>
    %c0_11 = arith.constant 0 : index
    %c0_12 = arith.constant 0 : index
    %16 = vector.load %arg6[%c0_11, %c0_12] : memref<1x32xf32, #tpu.memory_space<vmem>>, vector<1x32xf32>
    %c0_13 = arith.constant 0 : index
    %c0_14 = arith.constant 0 : index
    %17 = vector.load %arg7[%c0_13, %c0_14] : memref<1x32xf32, #tpu.memory_space<vmem>>, vector<1x32xf32>
    %cst_15 = arith.constant dense<0.000000e+00> : vector<16xf32>
    %18 = vector.multi_reduction <add>, %15, %cst_15 [1] : vector<16x32xf32> to vector<16xf32>
    %19 = vector.shape_cast %18 : vector<16xf32> to vector<16x1xf32>
    %cst_16 = arith.constant 3.200000e+01 : f32
    %20 = vector.broadcast %cst_16 : f32 to vector<16x1xf32>
    %21 = arith.divf %19, %20 : vector<16x1xf32>
    %22 = vector.broadcast %21 : vector<16x1xf32> to vector<16x32xf32>
    %23 = arith.subf %15, %22 : vector<16x32xf32>
    %24 = arith.mulf %23, %23 : vector<16x32xf32>
    %cst_17 = arith.constant dense<0.000000e+00> : vector<16xf32>
    %25 = vector.multi_reduction <add>, %24, %cst_17 [1] : vector<16x32xf32> to vector<16xf32>
    %26 = vector.shape_cast %25 : vector<16xf32> to vector<16x1xf32>
    %cst_18 = arith.constant 3.200000e+01 : f32
    %27 = vector.broadcast %cst_18 : f32 to vector<16x1xf32>
    %28 = arith.divf %26, %27 : vector<16x1xf32>
    %cst_19 = arith.constant 9.99999974E-6 : f32
    %29 = vector.broadcast %cst_19 : f32 to vector<16x1xf32>
    %30 = arith.addf %28, %29 : vector<16x1xf32>
    %31 = math.rsqrt %30 : vector<16x1xf32>
    %32 = vector.broadcast %31 : vector<16x1xf32> to vector<16x32xf32>
    %33 = arith.mulf %23, %32 : vector<16x32xf32>
    %34 = vector.broadcast %16 : vector<1x32xf32> to vector<16x32xf32>
    %35 = arith.mulf %33, %34 : vector<16x32xf32>
    %36 = vector.broadcast %17 : vector<1x32xf32> to vector<16x32xf32>
    %37 = arith.addf %35, %36 : vector<16x32xf32>
    %c0_20 = arith.constant 0 : index
    %c0_21 = arith.constant 0 : index
    %38 = vector.load %arg8[%c0_20, %c0_21] : memref<16x32xf32, #tpu.memory_space<vmem>>, vector<16x32xf32>
    tpu.vector_store %arg8[%c0_20, %c0_21], %37 {strides = array<i32>} : memref<16x32xf32, #tpu.memory_space<vmem>>, vector<16x32xf32>,
    return
  }
  func.func @transform_0(%arg0: i32) -> (i32, i32) {
    %c0_i32 = arith.constant 0 : i32
    %c0_i32_0 = arith.constant 0 : i32
    return %arg0, %c0_i32 : i32, i32
  }
  func.func @transform_1(%arg0: i32) -> (i32, i32) {
    %c0_i32 = arith.constant 0 : i32
    %c0_i32_0 = arith.constant 0 : i32
    %c0_i32_1 = arith.constant 0 : i32
    return %c0_i32, %c0_i32_0 : i32, i32
  }
  func.func @transform_2(%arg0: i32) -> (i32, i32) {
    %c0_i32 = arith.constant 0 : i32
    %c0_i32_0 = arith.constant 0 : i32
    %c0_i32_1 = arith.constant 0 : i32
    return %c0_i32, %c0_i32_0 : i32, i32
  }
  func.func @transform_3(%arg0: i32) -> (i32, i32) {
    %c0_i32 = arith.constant 0 : i32
    %c0_i32_0 = arith.constant 0 : i32
    %c0_i32_1 = arith.constant 0 : i32
    return %c0_i32, %c0_i32_0 : i32, i32
  }
  func.func @transform_4(%arg0: i32) -> (i32, i32) {
    %c0_i32 = arith.constant 0 : i32
    %c0_i32_0 = arith.constant 0 : i32
    %c0_i32_1 = arith.constant 0 : i32
    return %c0_i32, %c0_i32_0 : i32, i32
  }
  func.func @transform_5(%arg0: i32) -> (i32, i32) {
    %c0_i32 = arith.constant 0 : i32
    %c0_i32_0 = arith.constant 0 : i32
    %c0_i32_1 = arith.constant 0 : i32
    return %c0_i32, %c0_i32_0 : i32, i32
  }
  func.func @transform_6(%arg0: i32) -> (i32, i32) {
    %c0_i32 = arith.constant 0 : i32
    %c0_i32_0 = arith.constant 0 : i32
    %c0_i32_1 = arith.constant 0 : i32
    return %c0_i32, %c0_i32_0 : i32, i32
  }
  func.func @transform_7(%arg0: i32) -> (i32, i32) {
    %c0_i32 = arith.constant 0 : i32
    %c0_i32_0 = arith.constant 0 : i32
    return %arg0, %c0_i32 : i32, i32
  }
}

module attributes {stable_mosaic.version = 11 : i64} {
  func.func @_dec_cross_attn_kernel(%arg0: i32, %arg1: memref<1x1x32xf32, #tpu.memory_space<vmem>>, %arg2: memref<1x8x64xf32, #tpu.memory_space<vmem>>, %arg3: memref<32x32xbf16, #tpu.memory_space<vmem>>, %arg4: memref<1x32xf32, #tpu.memory_space<vmem>>, %arg5: memref<32x32xbf16, #tpu.memory_space<vmem>>, %arg6: memref<1x32xf32, #tpu.memory_space<vmem>>, %arg7: memref<1x32xf32, #tpu.memory_space<vmem>>, %arg8: memref<1x32xf32, #tpu.memory_space<vmem>>, %arg9: memref<1x1x32xf32, #tpu.memory_space<vmem>>) attributes {dimension_semantics = [#tpu.dimension_semantics<parallel>], iteration_bounds = array<i64: 2>, scalar_prefetch = 0 : i64, scratch_operands = 0 : i64, tpu.core_type = #tpu.core_type<tc>, window_params = [{transform_indices = @transform_0, window_bounds = array<i64: 1, 1, 32>}, {transform_indices = @transform_1, window_bounds = array<i64: 1, 8, 64>}, {pipeline_mode = #tpu.pipeline_mode<synchronous>, transform_indices = @transform_2, window_bounds = array<i64: 32, 32>}, {pipeline_mode = #tpu.pipeline_mode<synchronous>, transform_indices = @transform_3, window_bounds = array<i64: 1, 32>}, {pipeline_mode = #tpu.pipeline_mode<synchronous>, transform_indices = @transform_4, window_bounds = array<i64: 32, 32>}, {pipeline_mode = #tpu.pipeline_mode<synchronous>, transform_indices = @transform_5, window_bounds = array<i64: 1, 32>}, {pipeline_mode = #tpu.pipeline_mode<synchronous>, transform_indices = @transform_6, window_bounds = array<i64: 1, 32>}, {pipeline_mode = #tpu.pipeline_mode<synchronous>, transform_indices = @transform_7, window_bounds = array<i64: 1, 32>}, {transform_indices = @transform_8, window_bounds = array<i64: 1, 1, 32>}]} {
    %c0 = arith.constant 0 : index
    %c0_0 = arith.constant 0 : index
    %c0_1 = arith.constant 0 : index
    %0 = vector.load %arg1[%c0, %c0_0, %c0_1] : memref<1x1x32xf32, #tpu.memory_space<vmem>>, vector<1x1x32xf32>
    %1 = vector.shape_cast %0 : vector<1x1x32xf32> to vector<1x32xf32>
    %2 = arith.truncf %1 : vector<1x32xf32> to vector<1x32xbf16>
    %c0_2 = arith.constant 0 : index
    %c0_3 = arith.constant 0 : index
    %3 = vector.load %arg3[%c0_2, %c0_3] : memref<32x32xbf16, #tpu.memory_space<vmem>>, vector<32x32xbf16>
    %cst = arith.constant dense<0.000000e+00> : vector<1x32xf32>
    %4 = tpu.matmul %2, %3, %cst {dimension_numbers = #tpu.dot_dimension_numbers<[1], [0], [0], [1], [0, 0, 1, 1], [], []>} : vector<1x32xbf16>, vector<32x32xbf16>, vector<1x32xf32> -> vector<1x32xf32>
    %c0_4 = arith.constant 0 : index
    %c0_5 = arith.constant 0 : index
    %5 = vector.load %arg4[%c0_4, %c0_5] : memref<1x32xf32, #tpu.memory_space<vmem>>, vector<1x32xf32>
    %6 = arith.addf %4, %5 : vector<1x32xf32>
    %c0_6 = arith.constant 0 : index
    %c0_7 = arith.constant 0 : index
    %c0_8 = arith.constant 0 : index
    %7 = vector.load %arg2[%c0_6, %c0_7, %c0_8] : memref<1x8x64xf32, #tpu.memory_space<vmem>>, vector<1x8x64xf32>
    %8 = vector.shape_cast %7 : vector<1x8x64xf32> to vector<8x64xf32>
    %9 = vector.extract_strided_slice %6 {offsets = [0, 0], sizes = [1, 16], strides = [1, 1]} : vector<1x32xf32> to vector<1x16xf32>
    %10 = arith.truncf %9 : vector<1x16xf32> to vector<1x16xbf16>
    %11 = vector.extract_strided_slice %8 {offsets = [0, 0], sizes = [8, 16], strides = [1, 1]} : vector<8x64xf32> to vector<8x16xf32>
    %12 = arith.truncf %11 : vector<8x16xf32> to vector<8x16xbf16>
    %13 = vector.extract_strided_slice %8 {offsets = [0, 32], sizes = [8, 16], strides = [1, 1]} : vector<8x64xf32> to vector<8x16xf32>
    %14 = arith.truncf %13 : vector<8x16xf32> to vector<8x16xbf16>
    %cst_9 = arith.constant dense<0.000000e+00> : vector<1x8xf32>
    %15 = tpu.matmul %10, %12, %cst_9 {dimension_numbers = #tpu.dot_dimension_numbers<[1], [1], [0], [0], [0, 0, 1, 0], [], []>} : vector<1x16xbf16>, vector<8x16xbf16>, vector<1x8xf32> -> vector<1x8xf32>
    %cst_10 = arith.constant 2.500000e-01 : f32
    %16 = vector.broadcast %cst_10 : f32 to vector<1x8xf32>
    %17 = arith.mulf %15, %16 : vector<1x8xf32>
    %cst_11 = arith.constant dense<0xFF800000> : vector<1xf32>
    %18 = vector.multi_reduction <maximumf>, %17, %cst_11 [1] : vector<1x8xf32> to vector<1xf32>
    %19 = vector.shape_cast %18 : vector<1xf32> to vector<1x1xf32>
    %20 = vector.broadcast %19 : vector<1x1xf32> to vector<1x8xf32>
    %21 = arith.subf %17, %20 : vector<1x8xf32>
    %22 = math.exp %21 : vector<1x8xf32>
    %cst_12 = arith.constant dense<0.000000e+00> : vector<1xf32>
    %23 = vector.multi_reduction <add>, %22, %cst_12 [1] : vector<1x8xf32> to vector<1xf32>
    %24 = vector.shape_cast %23 : vector<1xf32> to vector<1x1xf32>
    %25 = tpu.reciprocal %24 {approx = true} : vector<1x1xf32> -> vector<1x1xf32>
    %26 = vector.broadcast %25 : vector<1x1xf32> to vector<1x8xf32>
    %27 = arith.mulf %22, %26 : vector<1x8xf32>
    %28 = arith.truncf %27 : vector<1x8xf32> to vector<1x8xbf16>
    %cst_13 = arith.constant dense<0.000000e+00> : vector<1x16xf32>
    %29 = tpu.matmul %28, %14, %cst_13 {dimension_numbers = #tpu.dot_dimension_numbers<[1], [0], [0], [1], [0, 0, 1, 1], [], []>} : vector<1x8xbf16>, vector<8x16xbf16>, vector<1x16xf32> -> vector<1x16xf32>
    %30 = vector.extract_strided_slice %6 {offsets = [0, 16], sizes = [1, 16], strides = [1, 1]} : vector<1x32xf32> to vector<1x16xf32>
    %31 = arith.truncf %30 : vector<1x16xf32> to vector<1x16xbf16>
    %32 = vector.extract_strided_slice %8 {offsets = [0, 16], sizes = [8, 16], strides = [1, 1]} : vector<8x64xf32> to vector<8x16xf32>
    %33 = arith.truncf %32 : vector<8x16xf32> to vector<8x16xbf16>
    %34 = vector.extract_strided_slice %8 {offsets = [0, 48], sizes = [8, 16], strides = [1, 1]} : vector<8x64xf32> to vector<8x16xf32>
    %35 = arith.truncf %34 : vector<8x16xf32> to vector<8x16xbf16>
    %cst_14 = arith.constant dense<0.000000e+00> : vector<1x8xf32>
    %36 = tpu.matmul %31, %33, %cst_14 {dimension_numbers = #tpu.dot_dimension_numbers<[1], [1], [0], [0], [0, 0, 1, 0], [], []>} : vector<1x16xbf16>, vector<8x16xbf16>, vector<1x8xf32> -> vector<1x8xf32>
    %cst_15 = arith.constant 2.500000e-01 : f32
    %37 = vector.broadcast %cst_15 : f32 to vector<1x8xf32>
    %38 = arith.mulf %36, %37 : vector<1x8xf32>
    %cst_16 = arith.constant dense<0xFF800000> : vector<1xf32>
    %39 = vector.multi_reduction <maximumf>, %38, %cst_16 [1] : vector<1x8xf32> to vector<1xf32>
    %40 = vector.shape_cast %39 : vector<1xf32> to vector<1x1xf32>
    %41 = vector.broadcast %40 : vector<1x1xf32> to vector<1x8xf32>
    %42 = arith.subf %38, %41 : vector<1x8xf32>
    %43 = math.exp %42 : vector<1x8xf32>
    %cst_17 = arith.constant dense<0.000000e+00> : vector<1xf32>
    %44 = vector.multi_reduction <add>, %43, %cst_17 [1] : vector<1x8xf32> to vector<1xf32>
    %45 = vector.shape_cast %44 : vector<1xf32> to vector<1x1xf32>
    %46 = tpu.reciprocal %45 {approx = true} : vector<1x1xf32> -> vector<1x1xf32>
    %47 = vector.broadcast %46 : vector<1x1xf32> to vector<1x8xf32>
    %48 = arith.mulf %43, %47 : vector<1x8xf32>
    %49 = arith.truncf %48 : vector<1x8xf32> to vector<1x8xbf16>
    %cst_18 = arith.constant dense<0.000000e+00> : vector<1x16xf32>
    %50 = tpu.matmul %49, %35, %cst_18 {dimension_numbers = #tpu.dot_dimension_numbers<[1], [0], [0], [1], [0, 0, 1, 1], [], []>} : vector<1x8xbf16>, vector<8x16xbf16>, vector<1x16xf32> -> vector<1x16xf32>
    %51 = tpu.concatenate %29, %50 in 1 : vector<1x16xf32>, vector<1x16xf32> -> vector<1x32xf32>
    %52 = arith.truncf %51 : vector<1x32xf32> to vector<1x32xbf16>
    %c0_19 = arith.constant 0 : index
    %c0_20 = arith.constant 0 : index
    %53 = vector.load %arg5[%c0_19, %c0_20] : memref<32x32xbf16, #tpu.memory_space<vmem>>, vector<32x32xbf16>
    %cst_21 = arith.constant dense<0.000000e+00> : vector<1x32xf32>
    %54 = tpu.matmul %52, %53, %cst_21 {dimension_numbers = #tpu.dot_dimension_numbers<[1], [0], [0], [1], [0, 0, 1, 1], [], []>} : vector<1x32xbf16>, vector<32x32xbf16>, vector<1x32xf32> -> vector<1x32xf32>
    %c0_22 = arith.constant 0 : index
    %c0_23 = arith.constant 0 : index
    %55 = vector.load %arg6[%c0_22, %c0_23] : memref<1x32xf32, #tpu.memory_space<vmem>>, vector<1x32xf32>
    %56 = arith.addf %54, %55 : vector<1x32xf32>
    %57 = arith.addf %1, %56 : vector<1x32xf32>
    %c0_24 = arith.constant 0 : index
    %c0_25 = arith.constant 0 : index
    %58 = vector.load %arg7[%c0_24, %c0_25] : memref<1x32xf32, #tpu.memory_space<vmem>>, vector<1x32xf32>
    %c0_26 = arith.constant 0 : index
    %c0_27 = arith.constant 0 : index
    %59 = vector.load %arg8[%c0_26, %c0_27] : memref<1x32xf32, #tpu.memory_space<vmem>>, vector<1x32xf32>
    %cst_28 = arith.constant dense<0.000000e+00> : vector<1xf32>
    %60 = vector.multi_reduction <add>, %57, %cst_28 [1] : vector<1x32xf32> to vector<1xf32>
    %61 = vector.shape_cast %60 : vector<1xf32> to vector<1x1xf32>
    %cst_29 = arith.constant 3.200000e+01 : f32
    %62 = vector.broadcast %cst_29 : f32 to vector<1x1xf32>
    %63 = arith.divf %61, %62 : vector<1x1xf32>
    %64 = vector.broadcast %63 : vector<1x1xf32> to vector<1x32xf32>
    %65 = arith.subf %57, %64 : vector<1x32xf32>
    %66 = arith.mulf %65, %65 : vector<1x32xf32>
    %cst_30 = arith.constant dense<0.000000e+00> : vector<1xf32>
    %67 = vector.multi_reduction <add>, %66, %cst_30 [1] : vector<1x32xf32> to vector<1xf32>
    %68 = vector.shape_cast %67 : vector<1xf32> to vector<1x1xf32>
    %cst_31 = arith.constant 3.200000e+01 : f32
    %69 = vector.broadcast %cst_31 : f32 to vector<1x1xf32>
    %70 = arith.divf %68, %69 : vector<1x1xf32>
    %cst_32 = arith.constant 9.99999974E-6 : f32
    %71 = vector.broadcast %cst_32 : f32 to vector<1x1xf32>
    %72 = arith.addf %70, %71 : vector<1x1xf32>
    %73 = math.rsqrt %72 : vector<1x1xf32>
    %74 = vector.broadcast %73 : vector<1x1xf32> to vector<1x32xf32>
    %75 = arith.mulf %65, %74 : vector<1x32xf32>
    %76 = arith.mulf %75, %58 : vector<1x32xf32>
    %77 = arith.addf %76, %59 : vector<1x32xf32>
    %c0_33 = arith.constant 0 : index
    %c0_34 = arith.constant 0 : index
    %c0_35 = arith.constant 0 : index
    %78 = vector.load %arg9[%c0_33, %c0_34, %c0_35] : memref<1x1x32xf32, #tpu.memory_space<vmem>>, vector<1x1x32xf32>
    %79 = vector.shape_cast %78 : vector<1x1x32xf32> to vector<1x32xf32>
    %80 = vector.shape_cast %77 : vector<1x32xf32> to vector<1x1x32xf32>
    tpu.vector_store %arg9[%c0_33, %c0_34, %c0_35], %80 {strides = array<i32>} : memref<1x1x32xf32, #tpu.memory_space<vmem>>, vector<1x1x32xf32>,
    return
  }
  func.func @transform_0(%arg0: i32) -> (i32, i32, i32) {
    %c0_i32 = arith.constant 0 : i32
    %c0_i32_0 = arith.constant 0 : i32
    %c0_i32_1 = arith.constant 0 : i32
    return %arg0, %c0_i32, %c0_i32_0 : i32, i32, i32
  }
  func.func @transform_1(%arg0: i32) -> (i32, i32, i32) {
    %c0_i32 = arith.constant 0 : i32
    %c0_i32_0 = arith.constant 0 : i32
    %c0_i32_1 = arith.constant 0 : i32
    return %arg0, %c0_i32, %c0_i32_0 : i32, i32, i32
  }
  func.func @transform_2(%arg0: i32) -> (i32, i32) {
    %c0_i32 = arith.constant 0 : i32
    %c0_i32_0 = arith.constant 0 : i32
    %c0_i32_1 = arith.constant 0 : i32
    return %c0_i32, %c0_i32_0 : i32, i32
  }
  func.func @transform_3(%arg0: i32) -> (i32, i32) {
    %c0_i32 = arith.constant 0 : i32
    %c0_i32_0 = arith.constant 0 : i32
    %c0_i32_1 = arith.constant 0 : i32
    return %c0_i32, %c0_i32_0 : i32, i32
  }
  func.func @transform_4(%arg0: i32) -> (i32, i32) {
    %c0_i32 = arith.constant 0 : i32
    %c0_i32_0 = arith.constant 0 : i32
    %c0_i32_1 = arith.constant 0 : i32
    return %c0_i32, %c0_i32_0 : i32, i32
  }
  func.func @transform_5(%arg0: i32) -> (i32, i32) {
    %c0_i32 = arith.constant 0 : i32
    %c0_i32_0 = arith.constant 0 : i32
    %c0_i32_1 = arith.constant 0 : i32
    return %c0_i32, %c0_i32_0 : i32, i32
  }
  func.func @transform_6(%arg0: i32) -> (i32, i32) {
    %c0_i32 = arith.constant 0 : i32
    %c0_i32_0 = arith.constant 0 : i32
    %c0_i32_1 = arith.constant 0 : i32
    return %c0_i32, %c0_i32_0 : i32, i32
  }
  func.func @transform_7(%arg0: i32) -> (i32, i32) {
    %c0_i32 = arith.constant 0 : i32
    %c0_i32_0 = arith.constant 0 : i32
    %c0_i32_1 = arith.constant 0 : i32
    return %c0_i32, %c0_i32_0 : i32, i32
  }
  func.func @transform_8(%arg0: i32) -> (i32, i32, i32) {
    %c0_i32 = arith.constant 0 : i32
    %c0_i32_0 = arith.constant 0 : i32
    %c0_i32_1 = arith.constant 0 : i32
    return %arg0, %c0_i32, %c0_i32_0 : i32, i32, i32
  }
}

module attributes {stable_mosaic.version = 11 : i64} {
  func.func @_linear_kernel(%arg0: i32, %arg1: memref<16x32xf32, #tpu.memory_space<vmem>>, %arg2: memref<32x64xbf16, #tpu.memory_space<vmem>>, %arg3: memref<1x64xf32, #tpu.memory_space<vmem>>, %arg4: memref<16x64xf32, #tpu.memory_space<vmem>>) attributes {dimension_semantics = [#tpu.dimension_semantics<parallel>], iteration_bounds = array<i64: 1>, scalar_prefetch = 0 : i64, scratch_operands = 0 : i64, tpu.core_type = #tpu.core_type<tc>, window_params = [{transform_indices = @transform_0, window_bounds = array<i64: 16, 32>}, {pipeline_mode = #tpu.pipeline_mode<synchronous>, transform_indices = @transform_1, window_bounds = array<i64: 32, 64>}, {pipeline_mode = #tpu.pipeline_mode<synchronous>, transform_indices = @transform_2, window_bounds = array<i64: 1, 64>}, {transform_indices = @transform_3, window_bounds = array<i64: 16, 64>}]} {
    %c0 = arith.constant 0 : index
    %c0_0 = arith.constant 0 : index
    %0 = vector.load %arg1[%c0, %c0_0] : memref<16x32xf32, #tpu.memory_space<vmem>>, vector<16x32xf32>
    %1 = arith.truncf %0 : vector<16x32xf32> to vector<16x32xbf16>
    %c0_1 = arith.constant 0 : index
    %c0_2 = arith.constant 0 : index
    %2 = vector.load %arg2[%c0_1, %c0_2] : memref<32x64xbf16, #tpu.memory_space<vmem>>, vector<32x64xbf16>
    %cst = arith.constant dense<0.000000e+00> : vector<16x64xf32>
    %3 = tpu.matmul %1, %2, %cst {dimension_numbers = #tpu.dot_dimension_numbers<[1], [0], [0], [1], [0, 0, 1, 1], [], []>} : vector<16x32xbf16>, vector<32x64xbf16>, vector<16x64xf32> -> vector<16x64xf32>
    %c0_3 = arith.constant 0 : index
    %c0_4 = arith.constant 0 : index
    %4 = vector.load %arg3[%c0_3, %c0_4] : memref<1x64xf32, #tpu.memory_space<vmem>>, vector<1x64xf32>
    %5 = vector.broadcast %4 : vector<1x64xf32> to vector<16x64xf32>
    %6 = arith.addf %3, %5 : vector<16x64xf32>
    %c0_5 = arith.constant 0 : index
    %c0_6 = arith.constant 0 : index
    %7 = vector.load %arg4[%c0_5, %c0_6] : memref<16x64xf32, #tpu.memory_space<vmem>>, vector<16x64xf32>
    tpu.vector_store %arg4[%c0_5, %c0_6], %6 {strides = array<i32>} : memref<16x64xf32, #tpu.memory_space<vmem>>, vector<16x64xf32>,
    return
  }
  func.func @transform_0(%arg0: i32) -> (i32, i32) {
    %c0_i32 = arith.constant 0 : i32
    %c0_i32_0 = arith.constant 0 : i32
    return %arg0, %c0_i32 : i32, i32
  }
  func.func @transform_1(%arg0: i32) -> (i32, i32) {
    %c0_i32 = arith.constant 0 : i32
    %c0_i32_0 = arith.constant 0 : i32
    %c0_i32_1 = arith.constant 0 : i32
    return %c0_i32, %c0_i32_0 : i32, i32
  }
  func.func @transform_2(%arg0: i32) -> (i32, i32) {
    %c0_i32 = arith.constant 0 : i32
    %c0_i32_0 = arith.constant 0 : i32
    %c0_i32_1 = arith.constant 0 : i32
    return %c0_i32, %c0_i32_0 : i32, i32
  }
  func.func @transform_3(%arg0: i32) -> (i32, i32) {
    %c0_i32 = arith.constant 0 : i32
    %c0_i32_0 = arith.constant 0 : i32
    return %arg0, %c0_i32 : i32, i32
  }
}

module attributes {stable_mosaic.version = 11 : i64} {
  func.func @_ffn_res_ln_kernel(%arg0: i32, %arg1: memref<2x32xf32, #tpu.memory_space<vmem>>, %arg2: memref<32x2048xbf16, #tpu.memory_space<vmem>>, %arg3: memref<1x2048xf32, #tpu.memory_space<vmem>>, %arg4: memref<2048x32xbf16, #tpu.memory_space<vmem>>, %arg5: memref<1x32xf32, #tpu.memory_space<vmem>>, %arg6: memref<1x32xf32, #tpu.memory_space<vmem>>, %arg7: memref<1x32xf32, #tpu.memory_space<vmem>>, %arg8: memref<2x32xf32, #tpu.memory_space<vmem>>) attributes {dimension_semantics = [#tpu.dimension_semantics<parallel>], iteration_bounds = array<i64: 1>, scalar_prefetch = 0 : i64, scratch_operands = 0 : i64, tpu.core_type = #tpu.core_type<tc>, window_params = [{transform_indices = @transform_0, window_bounds = array<i64: 2, 32>}, {pipeline_mode = #tpu.pipeline_mode<synchronous>, transform_indices = @transform_1, window_bounds = array<i64: 32, 2048>}, {pipeline_mode = #tpu.pipeline_mode<synchronous>, transform_indices = @transform_2, window_bounds = array<i64: 1, 2048>}, {pipeline_mode = #tpu.pipeline_mode<synchronous>, transform_indices = @transform_3, window_bounds = array<i64: 2048, 32>}, {pipeline_mode = #tpu.pipeline_mode<synchronous>, transform_indices = @transform_4, window_bounds = array<i64: 1, 32>}, {pipeline_mode = #tpu.pipeline_mode<synchronous>, transform_indices = @transform_5, window_bounds = array<i64: 1, 32>}, {pipeline_mode = #tpu.pipeline_mode<synchronous>, transform_indices = @transform_6, window_bounds = array<i64: 1, 32>}, {transform_indices = @transform_7, window_bounds = array<i64: 2, 32>}]} {
    %c0 = arith.constant 0 : index
    %c0_0 = arith.constant 0 : index
    %0 = vector.load %arg1[%c0, %c0_0] : memref<2x32xf32, #tpu.memory_space<vmem>>, vector<2x32xf32>
    %1 = arith.truncf %0 : vector<2x32xf32> to vector<2x32xbf16>
    %c0_1 = arith.constant 0 : index
    %c0_2 = arith.constant 0 : index
    %2 = vector.load %arg2[%c0_1, %c0_2] : memref<32x2048xbf16, #tpu.memory_space<vmem>>, vector<32x2048xbf16>
    %cst = arith.constant dense<0.000000e+00> : vector<2x2048xf32>
    %3 = tpu.matmul %1, %2, %cst {dimension_numbers = #tpu.dot_dimension_numbers<[1], [0], [0], [1], [0, 0, 1, 1], [], []>} : vector<2x32xbf16>, vector<32x2048xbf16>, vector<2x2048xf32> -> vector<2x2048xf32>
    %c0_3 = arith.constant 0 : index
    %c0_4 = arith.constant 0 : index
    %4 = vector.load %arg3[%c0_3, %c0_4] : memref<1x2048xf32, #tpu.memory_space<vmem>>, vector<1x2048xf32>
    %5 = vector.broadcast %4 : vector<1x2048xf32> to vector<2x2048xf32>
    %6 = arith.addf %3, %5 : vector<2x2048xf32>
    %cst_5 = arith.constant 0.000000e+00 : f32
    %7 = vector.broadcast %cst_5 : f32 to vector<2x2048xf32>
    %8 = arith.maximumf %6, %7 : vector<2x2048xf32>
    %9 = arith.truncf %8 : vector<2x2048xf32> to vector<2x2048xbf16>
    %c0_6 = arith.constant 0 : index
    %c0_7 = arith.constant 0 : index
    %10 = vector.load %arg4[%c0_6, %c0_7] : memref<2048x32xbf16, #tpu.memory_space<vmem>>, vector<2048x32xbf16>
    %cst_8 = arith.constant dense<0.000000e+00> : vector<2x32xf32>
    %11 = tpu.matmul %9, %10, %cst_8 {dimension_numbers = #tpu.dot_dimension_numbers<[1], [0], [0], [1], [0, 0, 1, 1], [], []>} : vector<2x2048xbf16>, vector<2048x32xbf16>, vector<2x32xf32> -> vector<2x32xf32>
    %c0_9 = arith.constant 0 : index
    %c0_10 = arith.constant 0 : index
    %12 = vector.load %arg5[%c0_9, %c0_10] : memref<1x32xf32, #tpu.memory_space<vmem>>, vector<1x32xf32>
    %13 = vector.broadcast %12 : vector<1x32xf32> to vector<2x32xf32>
    %14 = arith.addf %11, %13 : vector<2x32xf32>
    %15 = arith.addf %0, %14 : vector<2x32xf32>
    %c0_11 = arith.constant 0 : index
    %c0_12 = arith.constant 0 : index
    %16 = vector.load %arg6[%c0_11, %c0_12] : memref<1x32xf32, #tpu.memory_space<vmem>>, vector<1x32xf32>
    %c0_13 = arith.constant 0 : index
    %c0_14 = arith.constant 0 : index
    %17 = vector.load %arg7[%c0_13, %c0_14] : memref<1x32xf32, #tpu.memory_space<vmem>>, vector<1x32xf32>
    %cst_15 = arith.constant dense<0.000000e+00> : vector<2xf32>
    %18 = vector.multi_reduction <add>, %15, %cst_15 [1] : vector<2x32xf32> to vector<2xf32>
    %19 = vector.shape_cast %18 : vector<2xf32> to vector<2x1xf32>
    %cst_16 = arith.constant 3.200000e+01 : f32
    %20 = vector.broadcast %cst_16 : f32 to vector<2x1xf32>
    %21 = arith.divf %19, %20 : vector<2x1xf32>
    %22 = vector.broadcast %21 : vector<2x1xf32> to vector<2x32xf32>
    %23 = arith.subf %15, %22 : vector<2x32xf32>
    %24 = arith.mulf %23, %23 : vector<2x32xf32>
    %cst_17 = arith.constant dense<0.000000e+00> : vector<2xf32>
    %25 = vector.multi_reduction <add>, %24, %cst_17 [1] : vector<2x32xf32> to vector<2xf32>
    %26 = vector.shape_cast %25 : vector<2xf32> to vector<2x1xf32>
    %cst_18 = arith.constant 3.200000e+01 : f32
    %27 = vector.broadcast %cst_18 : f32 to vector<2x1xf32>
    %28 = arith.divf %26, %27 : vector<2x1xf32>
    %cst_19 = arith.constant 9.99999974E-6 : f32
    %29 = vector.broadcast %cst_19 : f32 to vector<2x1xf32>
    %30 = arith.addf %28, %29 : vector<2x1xf32>
    %31 = math.rsqrt %30 : vector<2x1xf32>
    %32 = vector.broadcast %31 : vector<2x1xf32> to vector<2x32xf32>
    %33 = arith.mulf %23, %32 : vector<2x32xf32>
    %34 = vector.broadcast %16 : vector<1x32xf32> to vector<2x32xf32>
    %35 = arith.mulf %33, %34 : vector<2x32xf32>
    %36 = vector.broadcast %17 : vector<1x32xf32> to vector<2x32xf32>
    %37 = arith.addf %35, %36 : vector<2x32xf32>
    %c0_20 = arith.constant 0 : index
    %c0_21 = arith.constant 0 : index
    %38 = vector.load %arg8[%c0_20, %c0_21] : memref<2x32xf32, #tpu.memory_space<vmem>>, vector<2x32xf32>
    tpu.vector_store %arg8[%c0_20, %c0_21], %37 {strides = array<i32>} : memref<2x32xf32, #tpu.memory_space<vmem>>, vector<2x32xf32>,
    return
  }
  func.func @transform_0(%arg0: i32) -> (i32, i32) {
    %c0_i32 = arith.constant 0 : i32
    %c0_i32_0 = arith.constant 0 : i32
    return %arg0, %c0_i32 : i32, i32
  }
  func.func @transform_1(%arg0: i32) -> (i32, i32) {
    %c0_i32 = arith.constant 0 : i32
    %c0_i32_0 = arith.constant 0 : i32
    %c0_i32_1 = arith.constant 0 : i32
    return %c0_i32, %c0_i32_0 : i32, i32
  }
  func.func @transform_2(%arg0: i32) -> (i32, i32) {
    %c0_i32 = arith.constant 0 : i32
    %c0_i32_0 = arith.constant 0 : i32
    %c0_i32_1 = arith.constant 0 : i32
    return %c0_i32, %c0_i32_0 : i32, i32
  }
  func.func @transform_3(%arg0: i32) -> (i32, i32) {
    %c0_i32 = arith.constant 0 : i32
    %c0_i32_0 = arith.constant 0 : i32
    %c0_i32_1 = arith.constant 0 : i32
    return %c0_i32, %c0_i32_0 : i32, i32
  }
  func.func @transform_4(%arg0: i32) -> (i32, i32) {
    %c0_i32 = arith.constant 0 : i32
    %c0_i32_0 = arith.constant 0 : i32
    %c0_i32_1 = arith.constant 0 : i32
    return %c0_i32, %c0_i32_0 : i32, i32
  }
  func.func @transform_5(%arg0: i32) -> (i32, i32) {
    %c0_i32 = arith.constant 0 : i32
    %c0_i32_0 = arith.constant 0 : i32
    %c0_i32_1 = arith.constant 0 : i32
    return %c0_i32, %c0_i32_0 : i32, i32
  }
  func.func @transform_6(%arg0: i32) -> (i32, i32) {
    %c0_i32 = arith.constant 0 : i32
    %c0_i32_0 = arith.constant 0 : i32
    %c0_i32_1 = arith.constant 0 : i32
    return %c0_i32, %c0_i32_0 : i32, i32
  }
  func.func @transform_7(%arg0: i32) -> (i32, i32) {
    %c0_i32 = arith.constant 0 : i32
    %c0_i32_0 = arith.constant 0 : i32
    return %arg0, %c0_i32 : i32, i32
  }
}

module attributes {stable_mosaic.version = 11 : i64} {
  func.func @_head_kernel(%arg0: memref<2x32xf32, #tpu.memory_space<vmem>>, %arg1: memref<2x32xf32, #tpu.memory_space<vmem>>, %arg2: memref<2x1xf32, #tpu.memory_space<vmem>>, %arg3: memref<1x32xf32, #tpu.memory_space<vmem>>, %arg4: memref<1x32xf32, #tpu.memory_space<vmem>>, %arg5: memref<2x1xf32, #tpu.memory_space<vmem>>, %arg6: memref<1x1xf32, #tpu.memory_space<vmem>>) attributes {dimension_semantics = [], scalar_prefetch = 0 : i64, scratch_operands = 0 : i64, tpu.core_type = #tpu.core_type<tc>} {
    %c0 = arith.constant 0 : index
    %c0_0 = arith.constant 0 : index
    %0 = vector.load %arg0[%c0, %c0_0] : memref<2x32xf32, #tpu.memory_space<vmem>>, vector<2x32xf32>
    %c0_1 = arith.constant 0 : index
    %c0_2 = arith.constant 0 : index
    %1 = vector.load %arg3[%c0_1, %c0_2] : memref<1x32xf32, #tpu.memory_space<vmem>>, vector<1x32xf32>
    %c0_3 = arith.constant 0 : index
    %c0_4 = arith.constant 0 : index
    %2 = vector.load %arg4[%c0_3, %c0_4] : memref<1x32xf32, #tpu.memory_space<vmem>>, vector<1x32xf32>
    %cst = arith.constant dense<0.000000e+00> : vector<2xf32>
    %3 = vector.multi_reduction <add>, %0, %cst [1] : vector<2x32xf32> to vector<2xf32>
    %4 = vector.shape_cast %3 : vector<2xf32> to vector<2x1xf32>
    %cst_5 = arith.constant 3.200000e+01 : f32
    %5 = vector.broadcast %cst_5 : f32 to vector<2x1xf32>
    %6 = arith.divf %4, %5 : vector<2x1xf32>
    %7 = vector.broadcast %6 : vector<2x1xf32> to vector<2x32xf32>
    %8 = arith.subf %0, %7 : vector<2x32xf32>
    %9 = arith.mulf %8, %8 : vector<2x32xf32>
    %cst_6 = arith.constant dense<0.000000e+00> : vector<2xf32>
    %10 = vector.multi_reduction <add>, %9, %cst_6 [1] : vector<2x32xf32> to vector<2xf32>
    %11 = vector.shape_cast %10 : vector<2xf32> to vector<2x1xf32>
    %cst_7 = arith.constant 3.200000e+01 : f32
    %12 = vector.broadcast %cst_7 : f32 to vector<2x1xf32>
    %13 = arith.divf %11, %12 : vector<2x1xf32>
    %cst_8 = arith.constant 9.99999974E-6 : f32
    %14 = vector.broadcast %cst_8 : f32 to vector<2x1xf32>
    %15 = arith.addf %13, %14 : vector<2x1xf32>
    %16 = math.rsqrt %15 : vector<2x1xf32>
    %17 = vector.broadcast %16 : vector<2x1xf32> to vector<2x32xf32>
    %18 = arith.mulf %8, %17 : vector<2x32xf32>
    %19 = vector.broadcast %1 : vector<1x32xf32> to vector<2x32xf32>
    %20 = arith.mulf %18, %19 : vector<2x32xf32>
    %21 = vector.broadcast %2 : vector<1x32xf32> to vector<2x32xf32>
    %22 = arith.addf %20, %21 : vector<2x32xf32>
    %c0_9 = arith.constant 0 : index
    %c0_10 = arith.constant 0 : index
    %23 = vector.load %arg1[%c0_9, %c0_10] : memref<2x32xf32, #tpu.memory_space<vmem>>, vector<2x32xf32>
    %c0_11 = arith.constant 0 : index
    %c0_12 = arith.constant 0 : index
    %24 = vector.load %arg2[%c0_11, %c0_12] : memref<2x1xf32, #tpu.memory_space<vmem>>, vector<2x1xf32>
    %25 = arith.mulf %22, %23 : vector<2x32xf32>
    %cst_13 = arith.constant dense<0.000000e+00> : vector<2xf32>
    %26 = vector.multi_reduction <add>, %25, %cst_13 [1] : vector<2x32xf32> to vector<2xf32>
    %27 = vector.shape_cast %26 : vector<2xf32> to vector<2x1xf32>
    %28 = arith.addf %24, %27 : vector<2x1xf32>
    %c0_14 = arith.constant 0 : index
    %c0_15 = arith.constant 0 : index
    %29 = vector.load %arg5[%c0_14, %c0_15] : memref<2x1xf32, #tpu.memory_space<vmem>>, vector<2x1xf32>
    tpu.vector_store %arg5[%c0_14, %c0_15], %28 {strides = array<i32>} : memref<2x1xf32, #tpu.memory_space<vmem>>, vector<2x1xf32>,
    %30 = arith.mulf %22, %22 : vector<2x32xf32>
    %31 = vector.shape_cast %30 : vector<2x32xf32> to vector<1x2x32xf32>
    %cst_16 = arith.constant dense<0.000000e+00> : vector<1xf32>
    %32 = vector.multi_reduction <add>, %31, %cst_16 [1, 2] : vector<1x2x32xf32> to vector<1xf32>
    %33 = vector.shape_cast %32 : vector<1xf32> to vector<1x1x1xf32>
    %34 = vector.extract %33[0, 0, 0] : f32 from vector<1x1x1xf32>
    %35 = vector.broadcast %34 : f32 to vector<1x1xf32>
    %36 = arith.mulf %23, %23 : vector<2x32xf32>
    %37 = vector.shape_cast %36 : vector<2x32xf32> to vector<1x2x32xf32>
    %cst_17 = arith.constant dense<0.000000e+00> : vector<1xf32>
    %38 = vector.multi_reduction <add>, %37, %cst_17 [1, 2] : vector<1x2x32xf32> to vector<1xf32>
    %39 = vector.shape_cast %38 : vector<1xf32> to vector<1x1x1xf32>
    %40 = vector.extract %39[0, 0, 0] : f32 from vector<1x1x1xf32>
    %41 = vector.broadcast %40 : f32 to vector<1x1xf32>
    %42 = arith.addf %35, %41 : vector<1x1xf32>
    %c0_18 = arith.constant 0 : index
    %c0_19 = arith.constant 0 : index
    %43 = vector.load %arg6[%c0_18, %c0_19] : memref<1x1xf32, #tpu.memory_space<vmem>>, vector<1x1xf32>
    tpu.vector_store %arg6[%c0_18, %c0_19], %42 {strides = array<i32>} : memref<1x1xf32, #tpu.memory_space<vmem>>, vector<1x1xf32>,
    return
  }
}

</mosaic_0001>

<llo_original>
// kernel: model_forward.15
$region0: #{model_forward.15}
  #allocation0 [shape = 'u32[]', space=smem, size = 0x4, offset = 0x4, fixed_abs, tag = 'smem constant byte address 0x4 - core index']
  #allocation1 [shape = 'u32[144,128]{1,0:T(1,128)}', space=vmem, size = 0x12000, scoped, tag = 'internal scratch']
  %s0 = inlined_call_operand.vmem [shape: f32[2,32], index: 0, kind: input, shape index: {}]
  %s1 = inlined_call_operand.vmem [shape: bf16[32,32], index: 1, kind: input, shape index: {}]
  %s2 = inlined_call_operand.vmem [shape: f32[1,32], index: 2, kind: input, shape index: {}]
  %s3 = inlined_call_operand.vmem [shape: bf16[32,32], index: 3, kind: input, shape index: {}]
  %s4 = inlined_call_operand.vmem [shape: f32[1,32], index: 4, kind: input, shape index: {}]
  %s5 = inlined_call_operand.vmem [shape: f32[1,32], index: 5, kind: input, shape index: {}]
  %s6 = inlined_call_operand.vmem [shape: f32[1,32], index: 6, kind: input, shape index: {}]
  %s7 = inlined_call_operand.vmem [shape: f32[2,32], index: 7, kind: output, shape index: {}]
  %s8 = sld [smem:[#allocation0]]
  $region38: #{model_forward.15} parent=0
    _
  %s10 = ssub.s32 1, %s8
  %s11 = scalar_select 0, %s10, %s8
  // Predicated region
  $region2: #{model_forward.15} parent=0 // pred_check
    _
  $region3: #{model_forward.15} parent=0 // pred_check_branch
    %13 = sbr.rel (0) target = $region5
  $region4: #{model_forward.15} parent=0 // pred_region
    _
  $region5: #{model_forward.15} parent=0 // pred_fallthru
    _
  // Predicated region
  $region6: #{model_forward.15} parent=0 // pred_check
    _
  $region7: #{model_forward.15} parent=0 // pred_check_branch
    %15 = sbr.rel (0) target = $region9
  $region8: #{model_forward.15} parent=0 // pred_region
    _
  $region9: #{model_forward.15} parent=0 // pred_fallthru
    _
  // Predicated region
  $region10: #{model_forward.15} parent=0 // pred_check
    _
  $region11: #{model_forward.15} parent=0 // pred_check_branch
    %17 = sbr.rel (0) target = $region13
  $region12: #{model_forward.15} parent=0 // pred_region
    _
  $region13: #{model_forward.15} parent=0 // pred_fallthru
    _
  // Predicated region
  $region14: #{model_forward.15} parent=0 // pred_check
    _
  $region15: #{model_forward.15} parent=0 // pred_check_branch
    %19 = sbr.rel (0) target = $region17
  $region16: #{model_forward.15} parent=0 // pred_region
    _
  $region17: #{model_forward.15} parent=0 // pred_fallthru
    _
  // Predicated region
  $region18: #{model_forward.15} parent=0 // pred_check
    _
  $region19: #{model_forward.15} parent=0 // pred_check_branch
    %21 = sbr.rel (0) target = $region21
  $region20: #{model_forward.15} parent=0 // pred_region
    _
  $region21: #{model_forward.15} parent=0 // pred_fallthru
    _
  // Predicated region
  $region22: #{model_forward.15} parent=0 // pred_check
    _
  $region23: #{model_forward.15} parent=0 // pred_check_branch
    %23 = sbr.rel (0) target = $region25
  $region24: #{model_forward.15} parent=0 // pred_region
    _
  $region25: #{model_forward.15} parent=0 // pred_fallthru
    _
  // Predicated region
  $region26: #{model_forward.15} parent=0 // pred_check
    _
  $region27: #{model_forward.15} parent=0 // pred_check_branch
    %25 = sbr.rel (0) target = $region29
  $region28: #{model_forward.15} parent=0 // pred_region
    _
  $region29: #{model_forward.15} parent=0 // pred_fallthru
    _
  %v27 = vld [vmem:[%s0] sm:$0x3]
  %v28 = vpack.c.bf16 %v27, %v27
  %v29 = vld [vmem:[%s1] sm:$0xf]
  %v30 = vld [vmem:[%s1 + $0x4] sm:$0xf]
  %v31 = vld [vmem:[%s1 + $0x8] sm:$0xf]
  %v32 = vld [vmem:[%s1 + $0xc] sm:$0xf]
  %v33 = vld [vmem:[%s2] sm:$0x1]
  %v35 = vlaneseq
  %v36 = vshrl.u32 %v35, 7
  %v37 = vsub.s32 0, %v36
  %v38 = vrot.slane %v33, %v37
  %v44 = vunpack.c.l.b16 %v29
  %v45 = vunpack.c.l.b16 %v30
  %v46 = vunpack.c.l.b16 %v31
  %v47 = vunpack.c.l.b16 %v32
  %v48 = vpack.c.b16 %v45, %v44
  %v49 = vpack.c.b16 %v47, %v46
  %vm52 = vcmask 261120
  %v54 = vsel %vm52, %v28, 0
  %56 = vmatprep.subr.bf16.mxu0 0
  %57 = vmatpush1.bf16.msra.mxu0 %v48
  %58 = vmatprep.subr.bf16.mxu0 0
  %59 = vmatpush1.bf16.msra.mxu0 %v49
  %60 = vmatprep.subr.bf16.mxu0 0
  %61 = vmatpush1.bf16.msra.mxu0 0
  %62 = vmatprep.subr.bf16.mxu0 0
  %63 = vmatpush1.bf16.msra.mxu0 0
  %64 = vmatprep.subr.bf16.mxu0 0
  %65 = vmatpush1.bf16.msra.mxu0 0
  %66 = vmatprep.subr.bf16.mxu0 0
  %67 = vmatpush1.bf16.msra.mxu0 0
  %68 = vmatprep.subr.bf16.mxu0 0
  %69 = vmatpush1.bf16.msra.mxu0 0
  %70 = vmatprep.subr.bf16.mxu0 0
  %71 = vmatpush1.bf16.msra.mxu0 0
  %72 = vmatprep.subr.bf16.mxu0 0
  %73 = vmatpush1.bf16.msra.mxu0 0
  %74 = vmatprep.subr.bf16.mxu0 0
  %75 = vmatpush1.bf16.msra.mxu0 0
  %76 = vmatprep.subr.bf16.mxu0 0
  %77 = vmatpush1.bf16.msra.mxu0 0
  %78 = vmatprep.subr.bf16.mxu0 0
  %79 = vmatpush1.bf16.msra.mxu0 0
  %80 = vmatprep.subr.bf16.mxu0 0
  %81 = vmatpush1.bf16.msra.mxu0 0
  %82 = vmatprep.subr.bf16.mxu0 0
  %83 = vmatpush1.bf16.msra.mxu0 0
  %84 = vmatprep.subr.bf16.mxu0 0
  %85 = vmatpush1.bf16.msra.mxu0 0
  %86 = vmatprep.subr.bf16.mxu0 0
  %87 = vmatpush1.bf16.msra.mxu0 0
  %88 = vmatprep.mubr.bf16.mxu0 0
  %89 = vmatmul.mubr.bf16.gmra.mrb[0].mxu0 %v54
  %v90 = vpop.f32.mrb[0].mxu0
  %v91 = vadd.f32 %v38, %v90
  %v92 = vpop.f32.mrb[0].mxu0
  %v93 = vpop.f32.mrb[0].mxu0
  %v94 = vpop.f32.mrb[0].mxu0
  %95 = vdwg.mxu0
  %v96 = vpack.c.bf16 %v91, %v91
  %v97 = vld [vmem:[%s3] sm:$0xf]
  %v98 = vld [vmem:[%s3 + $0x4] sm:$0xf]
  %v99 = vld [vmem:[%s3 + $0x8] sm:$0xf]
  %v100 = vld [vmem:[%s3 + $0xc] sm:$0xf]
  %v101 = vld [vmem:[%s4] sm:$0x1]
  %v103 = vlaneseq
  %v104 = vshrl.u32 %v103, 7
  %v105 = vsub.s32 0, %v104
  %v106 = vrot.slane %v101, %v105
  %v112 = vunpack.c.l.b16 %v97
  %v113 = vunpack.c.l.b16 %v98
  %v114 = vunpack.c.l.b16 %v99
  %v115 = vunpack.c.l.b16 %v100
  %v116 = vpack.c.b16 %v113, %v112
  %v117 = vpack.c.b16 %v115, %v114
  %v121 = vsel %vm52, %v96, 0
  %123 = vmatprep.subr.bf16.mxu0 0
  %124 = vmatpush1.bf16.msra.mxu0 %v116
  %125 = vmatprep.subr.bf16.mxu0 0
  %126 = vmatpush1.bf16.msra.mxu0 %v117
  %127 = vmatprep.subr.bf16.mxu0 0
  %128 = vmatpush1.bf16.msra.mxu0 0
  %129 = vmatprep.subr.bf16.mxu0 0
  %130 = vmatpush1.bf16.msra.mxu0 0
  %131 = vmatprep.subr.bf16.mxu0 0
  %132 = vmatpush1.bf16.msra.mxu0 0
  %133 = vmatprep.subr.bf16.mxu0 0
  %134 = vmatpush1.bf16.msra.mxu0 0
  %135 = vmatprep.subr.bf16.mxu0 0
  %136 = vmatpush1.bf16.msra.mxu0 0
  %137 = vmatprep.subr.bf16.mxu0 0
  %138 = vmatpush1.bf16.msra.mxu0 0
  %139 = vmatprep.subr.bf16.mxu0 0
  %140 = vmatpush1.bf16.msra.mxu0 0
  %141 = vmatprep.subr.bf16.mxu0 0
  %142 = vmatpush1.bf16.msra.mxu0 0
  %143 = vmatprep.subr.bf16.mxu0 0
  %144 = vmatpush1.bf16.msra.mxu0 0
  %145 = vmatprep.subr.bf16.mxu0 0
  %146 = vmatpush1.bf16.msra.mxu0 0
  %147 = vmatprep.subr.bf16.mxu0 0
  %148 = vmatpush1.bf16.msra.mxu0 0
  %149 = vmatprep.subr.bf16.mxu0 0
  %150 = vmatpush1.bf16.msra.mxu0 0
  %151 = vmatprep.subr.bf16.mxu0 0
  %152 = vmatpush1.bf16.msra.mxu0 0
  %153 = vmatprep.subr.bf16.mxu0 0
  %154 = vmatpush1.bf16.msra.mxu0 0
  %155 = vmatprep.mubr.bf16.mxu0 0
  %156 = vmatmul.mubr.bf16.gmra.mrb[0].mxu0 %v121
  %v157 = vpop.f32.mrb[0].mxu0
  %v158 = vadd.f32 %v106, %v157
  %v159 = vpop.f32.mrb[0].mxu0
  %v160 = vpop.f32.mrb[0].mxu0
  %v161 = vpop.f32.mrb[0].mxu0
  %162 = vdwg.mxu0
  %v163 = vadd.f32 %v27, %v158
  %v164 = vld [vmem:[%s5] sm:$0x1]
  %v165 = vld [vmem:[%s6] sm:$0x1]
  %vm166 = vcmask 254976
  %v167 = vsel %vm166, %v163, 0.0
  %168 = vadd.xlane.f32.xlu0 %v167
  %v169 = vpop.xlane.xlu0 %168
  %v170 = vrcp.pop 32.0
  %v171 = vmul.f32 %v169, %v170
  %v172 = vsub.f32 %v163, %v171
  %v173 = vmul.f32 %v172, %v172
  %v174 = vsel %vm166, %v173, 0.0
  %175 = vadd.xlane.f32.xlu0 %v174
  %v176 = vpop.xlane.xlu0 %175
  %v177 = vmul.f32 %v176, %v170
  %v178 = vadd.f32 %v177, 1e-05
  %v179 = vrsqrt.pop %v178
  %v180 = vmul.f32 %v172, %v179
  %v182 = vlaneseq
  %v183 = vshrl.u32 %v182, 7
  %v184 = vsub.s32 0, %v183
  %v185 = vrot.slane %v164, %v184
  %v187 = vmul.f32 %v180, %v185
  %v189 = vlaneseq
  %v190 = vshrl.u32 %v189, 7
  %v191 = vsub.s32 0, %v190
  %v192 = vrot.slane %v165, %v191
  %v194 = vadd.f32 %v187, %v192
  %195 = vst.msk [vmem:[%s7] sm:$0x3] %vm166, %v194
  // Predicated region
  $region30: #{model_forward.15} parent=0 // pred_check
    _
  $region31: #{model_forward.15} parent=0 // pred_check_branch
    %197 = sbr.rel (0) target = $region33
  $region32: #{model_forward.15} parent=0 // pred_region
    _
  $region33: #{model_forward.15} parent=0 // pred_fallthru
    _
  // Predicated region
  $region34: #{model_forward.15} parent=0 // pred_check
    _
  $region35: #{model_forward.15} parent=0 // pred_check_branch
    %199 = sbr.rel (0) target = $region37
  $region36: #{model_forward.15} parent=0 // pred_region
    _
  $region37: #{model_forward.15} parent=0 // pred_fallthru
    _

// kernel: model_forward.11
$region0: #{model_forward.11}
  #allocation0 [shape = 'u32[]', space=smem, size = 0x4, offset = 0x4, fixed_abs, tag = 'smem constant byte address 0x4 - core index']
  #allocation1 [shape = 'u32[144,128]{1,0:T(1,128)}', space=vmem, size = 0x12000, scoped, tag = 'internal scratch']
  %s0 = inlined_call_operand.vmem [shape: f32[16,32], index: 0, kind: input, shape index: {}]
  %s1 = inlined_call_operand.vmem [shape: bf16[32,96], index: 1, kind: input, shape index: {}]
  %s2 = inlined_call_operand.vmem [shape: f32[1,96], index: 2, kind: input, shape index: {}]
  %s3 = inlined_call_operand.vmem [shape: f32[16,96], index: 3, kind: output, shape index: {}]
  %s4 = sld [smem:[#allocation0]]
  $region22: #{model_forward.11} parent=0
    _
  %s6 = ssub.s32 1, %s4
  %s7 = scalar_select 0, %s6, %s4
  // Predicated region
  $region2: #{model_forward.11} parent=0 // pred_check
    _
  $region3: #{model_forward.11} parent=0 // pred_check_branch
    %9 = sbr.rel (0) target = $region5
  $region4: #{model_forward.11} parent=0 // pred_region
    _
  $region5: #{model_forward.11} parent=0 // pred_fallthru
    _
  // Predicated region
  $region6: #{model_forward.11} parent=0 // pred_check
    _
  $region7: #{model_forward.11} parent=0 // pred_check_branch
    %11 = sbr.rel (0) target = $region9
  $region8: #{model_forward.11} parent=0 // pred_region
    _
  $region9: #{model_forward.11} parent=0 // pred_fallthru
    _
  // Predicated region
  $region10: #{model_forward.11} parent=0 // pred_check
    _
  $region11: #{model_forward.11} parent=0 // pred_check_branch
    %13 = sbr.rel (0) target = $region13
  $region12: #{model_forward.11} parent=0 // pred_region
    _
  $region13: #{model_forward.11} parent=0 // pred_fallthru
    _
  %v15 = vld [vmem:[%s0] sm:$0xff]
  %v16 = vld [vmem:[%s0 + $0x8] sm:$0xff]
  %v17 = vpack.c.bf16 %v16, %v15
  %v18 = vld [vmem:[%s1] sm:$0xf]
  %v19 = vld [vmem:[%s1 + $0x4] sm:$0xf]
  %v20 = vld [vmem:[%s1 + $0x8] sm:$0xf]
  %v21 = vld [vmem:[%s1 + $0xc] sm:$0xf]
  %v22 = vld [vmem:[%s2] sm:$0x1]
  %v24 = vlaneseq
  %v25 = vshrl.u32 %v24, 7
  %v26 = vsub.s32 0, %v25
  %v27 = vrot.slane %v22, %v26
  %v33 = vunpack.c.l.b16 %v18
  %v34 = vunpack.c.l.b16 %v19
  %v35 = vunpack.c.l.b16 %v20
  %v36 = vunpack.c.l.b16 %v21
  %v37 = vpack.c.b16 %v34, %v33
  %v38 = vpack.c.b16 %v36, %v35
  %vm41 = vcmask 261120
  %v43 = vsel %vm41, %v17, 0
  %45 = vmatprep.subr.bf16.mxu0 0
  %46 = vmatpush1.bf16.msra.mxu0 %v37
  %47 = vmatprep.subr.bf16.mxu0 0
  %48 = vmatpush1.bf16.msra.mxu0 %v38
  %49 = vmatprep.subr.bf16.mxu0 0
  %50 = vmatpush1.bf16.msra.mxu0 0
  %51 = vmatprep.subr.bf16.mxu0 0
  %52 = vmatpush1.bf16.msra.mxu0 0
  %53 = vmatprep.subr.bf16.mxu0 0
  %54 = vmatpush1.bf16.msra.mxu0 0
  %55 = vmatprep.subr.bf16.mxu0 0
  %56 = vmatpush1.bf16.msra.mxu0 0
  %57 = vmatprep.subr.bf16.mxu0 0
  %58 = vmatpush1.bf16.msra.mxu0 0
  %59 = vmatprep.subr.bf16.mxu0 0
  %60 = vmatpush1.bf16.msra.mxu0 0
  %61 = vmatprep.subr.bf16.mxu0 0
  %62 = vmatpush1.bf16.msra.mxu0 0
  %63 = vmatprep.subr.bf16.mxu0 0
  %64 = vmatpush1.bf16.msra.mxu0 0
  %65 = vmatprep.subr.bf16.mxu0 0
  %66 = vmatpush1.bf16.msra.mxu0 0
  %67 = vmatprep.subr.bf16.mxu0 0
  %68 = vmatpush1.bf16.msra.mxu0 0
  %69 = vmatprep.subr.bf16.mxu0 0
  %70 = vmatpush1.bf16.msra.mxu0 0
  %71 = vmatprep.subr.bf16.mxu0 0
  %72 = vmatpush1.bf16.msra.mxu0 0
  %73 = vmatprep.subr.bf16.mxu0 0
  %74 = vmatpush1.bf16.msra.mxu0 0
  %75 = vmatprep.subr.bf16.mxu0 0
  %76 = vmatpush1.bf16.msra.mxu0 0
  %77 = vmatprep.mubr.bf16.mxu0 0
  %78 = vmatmul.mubr.bf16.gmra.mrb[0].mxu0 %v43
  %v79 = vpop.f32.mrb[0].mxu0
  %v80 = vadd.f32 %v27, %v79
  %v81 = vpop.f32.mrb[0].mxu0
  %v82 = vpop.f32.mrb[0].mxu0
  %v83 = vadd.f32 %v27, %v82
  %v84 = vpop.f32.mrb[0].mxu0
  %85 = vdwg.mxu0
  %vm86 = vcmask 785408
  %87 = vst.msk [vmem:[%s3] sm:$0xff] %vm86, %v80
  %88 = vst.msk [vmem:[%s3 + $0x8] sm:$0xff] %vm86, %v83
  // Predicated region
  $region14: #{model_forward.11} parent=0 // pred_check
    _
  $region15: #{model_forward.11} parent=0 // pred_check_branch
    %90 = sbr.rel (0) target = $region17
  $region16: #{model_forward.11} parent=0 // pred_region
    _
  $region17: #{model_forward.11} parent=0 // pred_fallthru
    _
  // Predicated region
  $region18: #{model_forward.11} parent=0 // pred_check
    _
  $region19: #{model_forward.11} parent=0 // pred_check_branch
    %92 = sbr.rel (0) target = $region21
  $region20: #{model_forward.11} parent=0 // pred_region
    _
  $region21: #{model_forward.11} parent=0 // pred_fallthru
    _

// kernel: model_forward.10
$region0: #{model_forward.10}
  #allocation0 [shape = 'u32[]', space=smem, size = 0x4, offset = 0x4, fixed_abs, tag = 'smem constant byte address 0x4 - core index']
  #allocation1 [shape = 'u32[144,128]{1,0:T(1,128)}', space=vmem, size = 0x12000, scoped, tag = 'internal scratch']
  %s0 = inlined_call_operand.vmem [shape: f32[16,45], index: 0, kind: input, shape index: {}]
  %s1 = inlined_call_operand.vmem [shape: bf16[45,32], index: 1, kind: input, shape index: {}]
  %s2 = inlined_call_operand.vmem [shape: f32[1,32], index: 2, kind: input, shape index: {}]
  %s3 = inlined_call_operand.vmem [shape: f32[16,32], index: 3, kind: output, shape index: {}]
  %s4 = sld [smem:[#allocation0]]
  $region22: #{model_forward.10} parent=0
    _
  %s6 = ssub.s32 1, %s4
  %s7 = scalar_select 0, %s6, %s4
  // Predicated region
  $region2: #{model_forward.10} parent=0 // pred_check
    _
  $region3: #{model_forward.10} parent=0 // pred_check_branch
    %9 = sbr.rel (0) target = $region5
  $region4: #{model_forward.10} parent=0 // pred_region
    _
  $region5: #{model_forward.10} parent=0 // pred_fallthru
    _
  // Predicated region
  $region6: #{model_forward.10} parent=0 // pred_check
    _
  $region7: #{model_forward.10} parent=0 // pred_check_branch
    %11 = sbr.rel (0) target = $region9
  $region8: #{model_forward.10} parent=0 // pred_region
    _
  $region9: #{model_forward.10} parent=0 // pred_fallthru
    _
  // Predicated region
  $region10: #{model_forward.10} parent=0 // pred_check
    _
  $region11: #{model_forward.10} parent=0 // pred_check_branch
    %13 = sbr.rel (0) target = $region13
  $region12: #{model_forward.10} parent=0 // pred_region
    _
  $region13: #{model_forward.10} parent=0 // pred_fallthru
    _
  %v15 = vld [vmem:[%s0] sm:$0xff]
  %v16 = vld [vmem:[%s0 + $0x8] sm:$0xff]
  %v17 = vpack.c.bf16 %v16, %v15
  %v18 = vld [vmem:[%s1] sm:$0xf]
  %v19 = vld [vmem:[%s1 + $0x4] sm:$0xf]
  %v20 = vld [vmem:[%s1 + $0x8] sm:$0xf]
  %v21 = vld [vmem:[%s1 + $0xc] sm:$0xf]
  %v22 = vld [vmem:[%s1 + $0x10] sm:$0xf]
  %v23 = vld [vmem:[%s1 + $0x14] sm:$0x7]
  %v24 = vld [vmem:[%s2] sm:$0x1]
  %v26 = vlaneseq
  %v27 = vshrl.u32 %v26, 7
  %v28 = vsub.s32 0, %v27
  %v29 = vrot.slane %v24, %v28
  %v37 = vunpack.c.l.b16 %v18
  %v38 = vunpack.c.l.b16 %v19
  %v39 = vunpack.c.l.b16 %v20
  %v40 = vunpack.c.l.b16 %v21
  %v41 = vunpack.c.l.b16 %v22
  %v42 = vunpack.c.l.b16 %v23
  %v43 = vpack.c.b16 %v38, %v37
  %v44 = vpack.c.b16 %v40, %v39
  %v45 = vpack.c.b16 %v42, %v41
  %vm48 = vcmask 367616
  %v50 = vsel %vm48, %v17, 0
  %vm52 = vcmask 1045504
  %vm53 = vcmask 1046528
  %v54 = vsel %vm52, 4294967295, 65535
  %v55 = vsel %vm53, %v54, 0
  %v57 = vand.u32 %v45, %v55
  %59 = vmatprep.subr.bf16.mxu0 0
  %60 = vmatpush1.bf16.msra.mxu0 %v43
  %61 = vmatprep.subr.bf16.mxu0 0
  %62 = vmatpush1.bf16.msra.mxu0 %v44
  %63 = vmatprep.subr.bf16.mxu0 0
  %64 = vmatpush1.bf16.msra.mxu0 %v57
  %65 = vmatprep.subr.bf16.mxu0 0
  %66 = vmatpush1.bf16.msra.mxu0 0
  %67 = vmatprep.subr.bf16.mxu0 0
  %68 = vmatpush1.bf16.msra.mxu0 0
  %69 = vmatprep.subr.bf16.mxu0 0
  %70 = vmatpush1.bf16.msra.mxu0 0
  %71 = vmatprep.subr.bf16.mxu0 0
  %72 = vmatpush1.bf16.msra.mxu0 0
  %73 = vmatprep.subr.bf16.mxu0 0
  %74 = vmatpush1.bf16.msra.mxu0 0
  %75 = vmatprep.subr.bf16.mxu0 0
  %76 = vmatpush1.bf16.msra.mxu0 0
  %77 = vmatprep.subr.bf16.mxu0 0
  %78 = vmatpush1.bf16.msra.mxu0 0
  %79 = vmatprep.subr.bf16.mxu0 0
  %80 = vmatpush1.bf16.msra.mxu0 0
  %81 = vmatprep.subr.bf16.mxu0 0
  %82 = vmatpush1.bf16.msra.mxu0 0
  %83 = vmatprep.subr.bf16.mxu0 0
  %84 = vmatpush1.bf16.msra.mxu0 0
  %85 = vmatprep.subr.bf16.mxu0 0
  %86 = vmatpush1.bf16.msra.mxu0 0
  %87 = vmatprep.subr.bf16.mxu0 0
  %88 = vmatpush1.bf16.msra.mxu0 0
  %89 = vmatprep.subr.bf16.mxu0 0
  %90 = vmatpush1.bf16.msra.mxu0 0
  %91 = vmatprep.mubr.bf16.mxu0 0
  %92 = vmatmul.mubr.bf16.gmra.mrb[0].mxu0 %v50
  %v93 = vpop.f32.mrb[0].mxu0
  %v94 = vadd.f32 %v29, %v93
  %v95 = vpop.f32.mrb[0].mxu0
  %v96 = vpop.f32.mrb[0].mxu0
  %v97 = vadd.f32 %v29, %v96
  %v98 = vpop.f32.mrb[0].mxu0
  %99 = vdwg.mxu0
  %vm100 = vcmask 261120
  %101 = vst.msk [vmem:[%s3] sm:$0xff] %vm100, %v94
  %102 = vst.msk [vmem:[%s3 + $0x8] sm:$0xff] %vm100, %v97
  // Predicated region
  $region14: #{model_forward.10} parent=0 // pred_check
    _
  $region15: #{model_forward.10} parent=0 // pred_check_branch
    %104 = sbr.rel (0) target = $region17
  $region16: #{model_forward.10} parent=0 // pred_region
    _
  $region17: #{model_forward.10} parent=0 // pred_fallthru
    _
  // Predicated region
  $region18: #{model_forward.10} parent=0 // pred_check
    _
  $region19: #{model_forward.10} parent=0 // pred_check_branch
    %106 = sbr.rel (0) target = $region21
  $region20: #{model_forward.10} parent=0 // pred_region
    _
  $region21: #{model_forward.10} parent=0 // pred_fallthru
    _

// kernel: model_forward.12
$region0: #{model_forward.12}
  #allocation0 [shape = 'u32[]', space=smem, size = 0x4, offset = 0x4, fixed_abs, tag = 'smem constant byte address 0x4 - core index']
  #allocation1 [shape = 'u32[144,128]{1,0:T(1,128)}', space=vmem, size = 0x12000, scoped, tag = 'internal scratch']
  #allocation2 [shape = 's32[1]{0}', space=sflag, size = 0x4, scoped, tag = 'scoped memory for model_forward.12']
  #allocation3 [shape = 'u8[512]{0}', space=smem, size = 0x200, scoped, tag = 'prefetched SMEM operand 0']
  %s0 = inlined_call_operand.vmem [shape: s32[2], index: 0, kind: input, shape index: {}]
  %s1 = inlined_call_operand.vmem [shape: f32[2,8,96], index: 1, kind: input, shape index: {}]
  %s2 = inlined_call_operand.vmem [shape: f32[2,8,32], index: 2, kind: input, shape index: {}]
  %s3 = inlined_call_operand.vmem [shape: bf16[32,32], index: 3, kind: input, shape index: {}]
  %s4 = inlined_call_operand.vmem [shape: f32[1,32], index: 4, kind: input, shape index: {}]
  %s5 = inlined_call_operand.vmem [shape: f32[1,32], index: 5, kind: input, shape index: {}]
  %s6 = inlined_call_operand.vmem [shape: f32[1,32], index: 6, kind: input, shape index: {}]
  %s7 = inlined_call_operand.vmem [shape: f32[2,8,32], index: 7, kind: output, shape index: {}]
  %s8 = sld [smem:[#allocation0]]
  $region57: #{model_forward.12} parent=0
    _
  %s10 = ssub.s32 1, %s8
  %s11 = scalar_select 0, %s10, %s8
  %s12 = sshll.u32 %s0, 4
  %s13 = int_to_ptr.vmem [resolvable:$true] %s12
  %15 = dma.vmem_to_smem %s13, 16, [#allocation3], [#allocation2]
  %16 = dma.done [#allocation2], 16
  %17 = sfence
  loop: start=0, step=1, limit=4
  $region2: #{model_forward.12} parent=0 // loop_pre_header
    _
  $region3: #{model_forward.12} parent=0 // loop_header
    %s19 = sphi 0, %s23
    %p20 = scmp.ge.s32.totalorder %s19, 4
    %s29 = sphi 0, %s31
    %s32 = sphi 0, %s29
    %s33 = sphi 0, %s32
    %s49 = sphi 0, %s33
    %s55 = sphi 0, %s57
    %s58 = sphi 0, %s55
    %s59 = sphi 0, %s58
    %s75 = sphi 0, %s59
    %s79 = sphi 0, %s79
    %s81 = sphi 0, %s79
    %s82 = sphi 0, %s81
    %s96 = sphi 0, %s82
    %s100 = sphi 0, %s100
    %s102 = sphi 0, %s100
    %s103 = sphi 0, %s102
    %s117 = sphi 0, %s103
    %s121 = sphi 0, %s121
    %s123 = sphi 0, %s121
    %s124 = sphi 0, %s123
    %s138 = sphi 0, %s124
    %s142 = sphi 0, %s142
    %s144 = sphi 0, %s142
    %s145 = sphi 0, %s144
    %s159 = sphi 0, %s145
    %s165 = sphi 0, %s167
    %s168 = sphi 0, %s165
    %s169 = sphi 0, %s168
    %s185 = sphi 0, %s169
  $region4: #{model_forward.12} parent=0 // loop_header_branch
    %22 = sbr.rel (%p20) target = $region8
  $region5: #{model_forward.12} parent=0 // loop_body
    %s24 = ssub.s32 %s19, 1
    %s25 = ssub.s32 %s19, 2
    %s26 = sadd.s32 %s19, 1
    %s27 = ssub.s32 %s19, %s26
    %p28 = scmp.eq.s32.totalorder %s27, 0
    %s30 = sadd.s32 %s29, 1
    %s31 = scalar_select %p28, %s29, %s30
    %p34 = pneg %p28
    %p35 = scmp.eq.s32.totalorder %s19, 1
    %p36 = por %p34, %p35
    %p37 = scmp.ne.s32.totalorder %s29, %s32
    %p38 = scmp.eq.s32.totalorder %s19, 0
    %p39 = por %p37, %p38
    %p40 = scmp.ne.s32.totalorder %s29, %s32
    %p41 = scmp.eq.s32.totalorder %s24, 1
    %p42 = por %p40, %p41
    %p43 = scmp.ne.s32.totalorder %s32, %s33
    %p44 = scmp.eq.s32.totalorder %s24, 0
    %p45 = por %p43, %p44
    %p46 = scmp.ne.s32.totalorder %s32, %s33
    %p47 = scmp.eq.s32.totalorder %s25, 1
    %p48 = por %p46, %p47
    %p50 = scmp.ne.s32.totalorder %s33, %s49
    %p51 = scmp.eq.s32.totalorder %s25, 0
    %p52 = por %p50, %p51
    %s53 = ssub.s32 %s19, %s26
    %p54 = scmp.eq.s32.totalorder %s53, 0
    %s56 = sadd.s32 %s55, 1
    %s57 = scalar_select %p54, %s55, %s56
    %p60 = pneg %p54
    %p61 = scmp.eq.s32.totalorder %s19, 1
    %p62 = por %p60, %p61
    %p63 = scmp.ne.s32.totalorder %s55, %s58
    %p64 = scmp.eq.s32.totalorder %s19, 0
    %p65 = por %p63, %p64
    %p66 = scmp.ne.s32.totalorder %s55, %s58
    %p67 = scmp.eq.s32.totalorder %s24, 1
    %p68 = por %p66, %p67
    %p69 = scmp.ne.s32.totalorder %s58, %s59
    %p70 = scmp.eq.s32.totalorder %s24, 0
    %p71 = por %p69, %p70
    %p72 = scmp.ne.s32.totalorder %s58, %s59
    %p73 = scmp.eq.s32.totalorder %s25, 1
    %p74 = por %p72, %p73
    %p76 = scmp.ne.s32.totalorder %s59, %s75
    %p77 = scmp.eq.s32.totalorder %s25, 0
    %p78 = por %p76, %p77
    %s80 = sadd.s32 %s79, 1
    %p83 = scmp.eq.s32.totalorder %s19, 1
    %p84 = scmp.ne.s32.totalorder %s79, %s81
    %p85 = scmp.eq.s32.totalorder %s19, 0
    %p86 = por %p84, %p85
    %p87 = scmp.ne.s32.totalorder %s79, %s81
    %p88 = scmp.eq.s32.totalorder %s24, 1
    %p89 = por %p87, %p88
    %p90 = scmp.ne.s32.totalorder %s81, %s82
    %p91 = scmp.eq.s32.totalorder %s24, 0
    %p92 = por %p90, %p91
    %p93 = scmp.ne.s32.totalorder %s81, %s82
    %p94 = scmp.eq.s32.totalorder %s25, 1
    %p95 = por %p93, %p94
    %p97 = scmp.ne.s32.totalorder %s82, %s96
    %p98 = scmp.eq.s32.totalorder %s25, 0
    %p99 = por %p97, %p98
    %s101 = sadd.s32 %s100, 1
    %p104 = scmp.eq.s32.totalorder %s19, 1
    %p105 = scmp.ne.s32.totalorder %s100, %s102
    %p106 = scmp.eq.s32.totalorder %s19, 0
    %p107 = por %p105, %p106
    %p108 = scmp.ne.s32.totalorder %s100, %s102
    %p109 = scmp.eq.s32.totalorder %s24, 1
    %p110 = por %p108, %p109
    %p111 = scmp.ne.s32.totalorder %s102, %s103
    %p112 = scmp.eq.s32.totalorder %s24, 0
    %p113 = por %p111, %p112
    %p114 = scmp.ne.s32.totalorder %s102, %s103
    %p115 = scmp.eq.s32.totalorder %s25, 1
    %p116 = por %p114, %p115
    %p118 = scmp.ne.s32.totalorder %s103, %s117
    %p119 = scmp.eq.s32.totalorder %s25, 0
    %p120 = por %p118, %p119
    %s122 = sadd.s32 %s121, 1
    %p125 = scmp.eq.s32.totalorder %s19, 1
    %p126 = scmp.ne.s32.totalorder %s121, %s123
    %p127 = scmp.eq.s32.totalorder %s19, 0
    %p128 = por %p126, %p127
    %p129 = scmp.ne.s32.totalorder %s121, %s123
    %p130 = scmp.eq.s32.totalorder %s24, 1
    %p131 = por %p129, %p130
    %p132 = scmp.ne.s32.totalorder %s123, %s124
    %p133 = scmp.eq.s32.totalorder %s24, 0
    %p134 = por %p132, %p133
    %p135 = scmp.ne.s32.totalorder %s123, %s124
    %p136 = scmp.eq.s32.totalorder %s25, 1
    %p137 = por %p135, %p136
    %p139 = scmp.ne.s32.totalorder %s124, %s138
    %p140 = scmp.eq.s32.totalorder %s25, 0
    %p141 = por %p139, %p140
    %s143 = sadd.s32 %s142, 1
    %p146 = scmp.eq.s32.totalorder %s19, 1
    %p147 = scmp.ne.s32.totalorder %s142, %s144
    %p148 = scmp.eq.s32.totalorder %s19, 0
    %p149 = por %p147, %p148
    %p150 = scmp.ne.s32.totalorder %s142, %s144
    %p151 = scmp.eq.s32.totalorder %s24, 1
    %p152 = por %p150, %p151
    %p153 = scmp.ne.s32.totalorder %s144, %s145
    %p154 = scmp.eq.s32.totalorder %s24, 0
    %p155 = por %p153, %p154
    %p156 = scmp.ne.s32.totalorder %s144, %s145
    %p157 = scmp.eq.s32.totalorder %s25, 1
    %p158 = por %p156, %p157
    %p160 = scmp.ne.s32.totalorder %s145, %s159
    %p161 = scmp.eq.s32.totalorder %s25, 0
    %p162 = por %p160, %p161
    %s163 = ssub.s32 %s19, %s26
    %p164 = scmp.eq.s32.totalorder %s163, 0
    %s166 = sadd.s32 %s165, 1
    %s167 = scalar_select %p164, %s165, %s166
    %p170 = pneg %p164
    %p171 = scmp.eq.s32.totalorder %s19, 1
    %p172 = por %p170, %p171
    %p173 = scmp.ne.s32.totalorder %s165, %s168
    %p174 = scmp.eq.s32.totalorder %s19, 0
    %p175 = por %p173, %p174
    %p176 = scmp.ne.s32.totalorder %s165, %s168
    %p177 = scmp.eq.s32.totalorder %s24, 1
    %p178 = por %p176, %p177
    %p179 = scmp.ne.s32.totalorder %s168, %s169
    %p180 = scmp.eq.s32.totalorder %s24, 0
    %p181 = por %p179, %p180
    %p182 = scmp.ne.s32.totalorder %s168, %s169
    %p183 = scmp.eq.s32.totalorder %s25, 1
    %p184 = por %p182, %p183
    %p186 = scmp.ne.s32.totalorder %s169, %s185
    %p187 = scmp.eq.s32.totalorder %s25, 0
    %p188 = por %p186, %p187
    %p189 = scmp.le.s32.totalorder 1, %s19
    %p190 = scmp.lt.s32.totalorder %s19, 3
    %p191 = pnand %p189, %p190
    %p192 = pneg %p191
    // Predicated region
    $region9: #{model_forward.12} parent=5 // pred_check
      _
    $region10: #{model_forward.12} parent=5 // pred_check_branch
      %194 = sbr.rel (%p191) target = $region12
    $region11: #{model_forward.12} parent=5 // pred_region
      %s195 = ssub.s32 %s19, 1
      // Predicated region
      $region13: #{model_forward.12} parent=11 // pred_check
        %p196 = pneg %p92
      $region14: #{model_forward.12} parent=11 // pred_check_branch
        %198 = sbr.rel (%p196) target = $region16
      $region15: #{model_forward.12} parent=11 // pred_region
        _
      $region16: #{model_forward.12} parent=11 // pred_fallthru
        _
      // Predicated region
      $region17: #{model_forward.12} parent=11 // pred_check
        %p199 = pneg %p113
      $region18: #{model_forward.12} parent=11 // pred_check_branch
        %201 = sbr.rel (%p199) target = $region20
      $region19: #{model_forward.12} parent=11 // pred_region
        _
      $region20: #{model_forward.12} parent=11 // pred_fallthru
        _
      // Predicated region
      $region21: #{model_forward.12} parent=11 // pred_check
        %p202 = pneg %p134
      $region22: #{model_forward.12} parent=11 // pred_check_branch
        %204 = sbr.rel (%p202) target = $region24
      $region23: #{model_forward.12} parent=11 // pred_region
        _
      $region24: #{model_forward.12} parent=11 // pred_fallthru
        _
      // Predicated region
      $region25: #{model_forward.12} parent=11 // pred_check
        %p205 = pneg %p155
      $region26: #{model_forward.12} parent=11 // pred_check_branch
        %207 = sbr.rel (%p205) target = $region28
      $region27: #{model_forward.12} parent=11 // pred_region
        _
      $region28: #{model_forward.12} parent=11 // pred_fallthru
        _
    $region12: #{model_forward.12} parent=5 // pred_fallthru
      _
    %p208 = scmp.lt.s32.totalorder %s19, 2
    // Predicated region
    $region29: #{model_forward.12} parent=5 // pred_check
      %p209 = pneg %p208
    $region30: #{model_forward.12} parent=5 // pred_check_branch
      %211 = sbr.rel (%p209) target = $region32
    $region31: #{model_forward.12} parent=5 // pred_region
      // Predicated region
      $region33: #{model_forward.12} parent=31 // pred_check
        %p212 = pneg %p39
      $region34: #{model_forward.12} parent=31 // pred_check_branch
        %214 = sbr.rel (%p212) target = $region36
      $region35: #{model_forward.12} parent=31 // pred_region
        %p215 = scmp.lt.s32.totalorder %s19, 1
        %s216 = scalar_select %p215, %s19, 1
        %s217 = smul.addr %s216, 8
        %s218 = scalar_lea.vmem %s1, %s217
      $region36: #{model_forward.12} parent=31 // pred_fallthru
        _
      // Predicated region
      $region37: #{model_forward.12} parent=31 // pred_check
        %p219 = pneg %p65
      $region38: #{model_forward.12} parent=31 // pred_check_branch
        %221 = sbr.rel (%p219) target = $region40
      $region39: #{model_forward.12} parent=31 // pred_region
        %p222 = scmp.lt.s32.totalorder %s19, 1
        %s223 = scalar_select %p222, %s19, 1
        %s224 = smul.addr %s223, 8
        %s225 = scalar_lea.vmem %s2, %s224
      $region40: #{model_forward.12} parent=31 // pred_fallthru
        _
    $region32: #{model_forward.12} parent=5 // pred_fallthru
      _
    %p226 = scmp.le.s32.totalorder 1, %s19
    %p227 = scmp.lt.s32.totalorder %s19, 3
    %p228 = pnand %p226, %p227
    %p229 = pneg %p228
    // Predicated region
    $region41: #{model_forward.12} parent=5 // pred_check
      _
    $region42: #{model_forward.12} parent=5 // pred_check_branch
      %231 = sbr.rel (%p228) target = $region44
    $region43: #{model_forward.12} parent=5 // pred_region
      %s232 = ssub.s32 %s19, 1
      %p233 = scmp.lt.s32.totalorder %s24, 1
      %s234 = scalar_select %p233, %s24, 1
      %s235 = smul.addr %s234, 8
      %s236 = scalar_lea.vmem %s1, %s235
      %p237 = pneg %p45
      %p238 = pneg %p42
      %p239 = scmp.lt.s32.totalorder %s24, 1
      %s240 = scalar_select %p239, %s24, 1
      %s241 = smul.addr %s240, 8
      %s242 = scalar_lea.vmem %s2, %s241
      %p243 = pneg %p71
      %p244 = pneg %p68
      %p245 = pneg %p92
      %p246 = pneg %p89
      %p247 = pneg %p113
      %p248 = pneg %p110
      %p249 = pneg %p134
      %p250 = pneg %p131
      %p251 = pneg %p155
      %p252 = pneg %p152
      %p253 = pneg %p181
      %p254 = pneg %p178
      %p255 = scmp.lt.s32.totalorder %s24, 1
      %s256 = scalar_select %p255, %s24, 1
      %s257 = smul.addr %s256, 8
      %s258 = scalar_lea.vmem %s7, %s257
      %p259 = scmp.lt.s32.totalorder %s24, 1
      %s260 = scalar_select %p259, %s24, 1
      %s261 = smul.addr %s260, 8
      %s262 = scalar_lea.vmem %s1, %s261
      %p263 = scmp.lt.s32.totalorder %s24, 1
      %s264 = scalar_select %p263, %s24, 1
      %s265 = smul.addr %s264, 8
      %s266 = scalar_lea.vmem %s2, %s265
      %p267 = scmp.lt.s32.totalorder %s24, 1
      %s268 = scalar_select %p267, %s24, 1
      %s269 = smul.addr %s268, 8
      %s270 = scalar_lea.vmem %s7, %s269
      %s272 = sld [smem:[#allocation3 + %s24]]
      %v273 = vlaneseq
      %v274 = vand.u32 %v273, 127
      %v275 = vstv %s272
      %vm276 = vcmp.lt.s32.totalorder %v274, %v275
      %v277 = vsel %vm276, 0.0, -1e+30
      %v278 = vld [vmem:[%s262] sm:$0xff]
      %v279 = vpack.c.bf16 %v278, %v278
      %281 = vrot.lane.b32.xlu0 %v279, 96
      %v282 = vpop.permute.xlu0 %281
      %vm283 = vcmask 130048
      %v285 = vsel %vm283, %v279, 0
      %v288 = vsel %vm283, %v282, 0
      %290 = vmatprep.subr.bf16.mxu0 0
      %291 = vmatpush1.bf16.xpose.msra.mxu0 %v288
      %292 = vmatprep.subr.bf16.mxu0 0
      %293 = vmatpush1.bf16.xpose.msra.mxu0 0
      %294 = vmatprep.subr.bf16.mxu0 0
      %295 = vmatpush1.bf16.xpose.msra.mxu0 0
      %296 = vmatprep.subr.bf16.mxu0 0
      %297 = vmatpush1.bf16.xpose.msra.mxu0 0
      %298 = vmatprep.subr.bf16.mxu0 0
      %299 = vmatpush1.bf16.xpose.msra.mxu0 0
      %300 = vmatprep.subr.bf16.mxu0 0
      %301 = vmatpush1.bf16.xpose.msra.mxu0 0
      %302 = vmatprep.subr.bf16.mxu0 0
      %303 = vmatpush1.bf16.xpose.msra.mxu0 0
      %304 = vmatprep.subr.bf16.mxu0 0
      %305 = vmatpush1.bf16.xpose.msra.mxu0 0
      %306 = vmatprep.subr.bf16.mxu0 0
      %307 = vmatpush1.bf16.xpose.msra.mxu0 0
      %308 = vmatprep.subr.bf16.mxu0 0
      %309 = vmatpush1.bf16.xpose.msra.mxu0 0
      %310 = vmatprep.subr.bf16.mxu0 0
      %311 = vmatpush1.bf16.xpose.msra.mxu0 0
      %312 = vmatprep.subr.bf16.mxu0 0
      %313 = vmatpush1.bf16.xpose.msra.mxu0 0
      %314 = vmatprep.subr.bf16.mxu0 0
      %315 = vmatpush1.bf16.xpose.msra.mxu0 0
      %316 = vmatprep.subr.bf16.mxu0 0
      %317 = vmatpush1.bf16.xpose.msra.mxu0 0
      %318 = vmatprep.subr.bf16.mxu0 0
      %319 = vmatpush1.bf16.xpose.msra.mxu0 0
      %320 = vmatprep.subr.bf16.mxu0 0
      %321 = vmatpush1.bf16.xpose.msra.mxu0 0
      %322 = vmatprep.mubr.bf16.mxu0 0
      %323 = vmatmul.mubr.bf16.gmra.mrb[0].mxu0 %v285
      %v324 = vpop.f32.mrb[0].mxu0
      %v325 = vadd.f32 0.0, %v324
      %v326 = vpop.f32.mrb[0].mxu0
      %v327 = vpop.f32.mrb[0].mxu0
      %v328 = vpop.f32.mrb[0].mxu0
      %329 = vdwg.mxu0
      %v330 = vmul.f32 %v325, 0.25
      %v331 = vadd.f32 %v330, %v277
      %vm332 = vcmask 64512
      %v333 = vsel %vm332, %v331, -inf
      %334 = vmax.xlane.f32.xlu0 %v333
      %v335 = vpop.xlane.xlu0 %334
      %v336 = vsub.f32 %v331, %v335
      %v337 = vmul.f32 %v336, 1.442695
      %v338 = vpow.pop %v337
      %v339 = vsel %vm332, %v338, 0.0
      %340 = vadd.xlane.f32.xlu0 %v339
      %v341 = vpop.xlane.xlu0 %340
      %v342 = vrcp.pop %v341
      %v343 = vmul.f32 %v338, %v342
      %v344 = vpack.c.bf16 %v343, %v343
      %345 = vrot.lane.b32.xlu0 %v279, 64
      %v346 = vpop.permute.xlu0 %345
      %v348 = vsel %vm332, %v344, 0
      %vm350 = vcmask 1043456
      %v352 = vsel %vm350, %v346, 0
      %354 = vmatprep.subr.bf16.mxu0 0
      %355 = vmatpush1.bf16.msra.mxu0 %v352
      %356 = vmatprep.subr.bf16.mxu0 0
      %357 = vmatpush1.bf16.msra.mxu0 0
      %358 = vmatprep.subr.bf16.mxu0 0
      %359 = vmatpush1.bf16.msra.mxu0 0
      %360 = vmatprep.subr.bf16.mxu0 0
      %361 = vmatpush1.bf16.msra.mxu0 0
      %362 = vmatprep.subr.bf16.mxu0 0
      %363 = vmatpush1.bf16.msra.mxu0 0
      %364 = vmatprep.subr.bf16.mxu0 0
      %365 = vmatpush1.bf16.msra.mxu0 0
      %366 = vmatprep.subr.bf16.mxu0 0
      %367 = vmatpush1.bf16.msra.mxu0 0
      %368 = vmatprep.subr.bf16.mxu0 0
      %369 = vmatpush1.bf16.msra.mxu0 0
      %370 = vmatprep.subr.bf16.mxu0 0
      %371 = vmatpush1.bf16.msra.mxu0 0
      %372 = vmatprep.subr.bf16.mxu0 0
      %373 = vmatpush1.bf16.msra.mxu0 0
      %374 = vmatprep.subr.bf16.mxu0 0
      %375 = vmatpush1.bf16.msra.mxu0 0
      %376 = vmatprep.subr.bf16.mxu0 0
      %377 = vmatpush1.bf16.msra.mxu0 0
      %378 = vmatprep.subr.bf16.mxu0 0
      %379 = vmatpush1.bf16.msra.mxu0 0
      %380 = vmatprep.subr.bf16.mxu0 0
      %381 = vmatpush1.bf16.msra.mxu0 0
      %382 = vmatprep.subr.bf16.mxu0 0
      %383 = vmatpush1.bf16.msra.mxu0 0
      %384 = vmatprep.subr.bf16.mxu0 0
      %385 = vmatpush1.bf16.msra.mxu0 0
      %386 = vmatprep.mubr.bf16.mxu0 0
      %387 = vmatmul.mubr.bf16.gmra.mrb[0].mxu0 %v348
      %v388 = vpop.f32.mrb[0].mxu0
      %v389 = vadd.f32 0.0, %v388
      %v390 = vpop.f32.mrb[0].mxu0
      %v391 = vpop.f32.mrb[0].mxu0
      %v392 = vpop.f32.mrb[0].mxu0
      %393 = vdwg.mxu0
      %394 = vrot.lane.b32.xlu0 %v279, 112
      %v395 = vpop.permute.xlu0 %394
      %396 = vrot.lane.b32.xlu0 %v279, 80
      %v397 = vpop.permute.xlu0 %396
      %v399 = vsel %vm283, %v395, 0
      %v402 = vsel %vm283, %v397, 0
      %404 = vmatprep.subr.bf16.mxu0 0
      %405 = vmatpush1.bf16.xpose.msra.mxu0 %v402
      %406 = vmatprep.subr.bf16.mxu0 0
      %407 = vmatpush1.bf16.xpose.msra.mxu0 0
      %408 = vmatprep.subr.bf16.mxu0 0
      %409 = vmatpush1.bf16.xpose.msra.mxu0 0
      %410 = vmatprep.subr.bf16.mxu0 0
      %411 = vmatpush1.bf16.xpose.msra.mxu0 0
      %412 = vmatprep.subr.bf16.mxu0 0
      %413 = vmatpush1.bf16.xpose.msra.mxu0 0
      %414 = vmatprep.subr.bf16.mxu0 0
      %415 = vmatpush1.bf16.xpose.msra.mxu0 0
      %416 = vmatprep.subr.bf16.mxu0 0
      %417 = vmatpush1.bf16.xpose.msra.mxu0 0
      %418 = vmatprep.subr.bf16.mxu0 0
      %419 = vmatpush1.bf16.xpose.msra.mxu0 0
      %420 = vmatprep.subr.bf16.mxu0 0
      %421 = vmatpush1.bf16.xpose.msra.mxu0 0
      %422 = vmatprep.subr.bf16.mxu0 0
      %423 = vmatpush1.bf16.xpose.msra.mxu0 0
      %424 = vmatprep.subr.bf16.mxu0 0
      %425 = vmatpush1.bf16.xpose.msra.mxu0 0
      %426 = vmatprep.subr.bf16.mxu0 0
      %427 = vmatpush1.bf16.xpose.msra.mxu0 0
      %428 = vmatprep.subr.bf16.mxu0 0
      %429 = vmatpush1.bf16.xpose.msra.mxu0 0
      %430 = vmatprep.subr.bf16.mxu0 0
      %431 = vmatpush1.bf16.xpose.msra.mxu0 0
      %432 = vmatprep.subr.bf16.mxu0 0
      %433 = vmatpush1.bf16.xpose.msra.mxu0 0
      %434 = vmatprep.subr.bf16.mxu0 0
      %435 = vmatpush1.bf16.xpose.msra.mxu0 0
      %436 = vmatprep.mubr.bf16.mxu0 0
      %437 = vmatmul.mubr.bf16.gmra.mrb[0].mxu0 %v399
      %v438 = vpop.f32.mrb[0].mxu0
      %v439 = vadd.f32 0.0, %v438
      %v440 = vpop.f32.mrb[0].mxu0
      %v441 = vpop.f32.mrb[0].mxu0
      %v442 = vpop.f32.mrb[0].mxu0
      %443 = vdwg.mxu0
      %v444 = vmul.f32 %v439, 0.25
      %v445 = vadd.f32 %v444, %v277
      %v446 = vsel %vm332, %v445, -inf
      %447 = vmax.xlane.f32.xlu0 %v446
      %v448 = vpop.xlane.xlu0 %447
      %v449 = vsub.f32 %v445, %v448
      %v450 = vmul.f32 %v449, 1.442695
      %v451 = vpow.pop %v450
      %v452 = vsel %vm332, %v451, 0.0
      %453 = vadd.xlane.f32.xlu0 %v452
      %v454 = vpop.xlane.xlu0 %453
      %v455 = vrcp.pop %v454
      %v456 = vmul.f32 %v451, %v455
      %v457 = vpack.c.bf16 %v456, %v456
      %458 = vrot.lane.b32.xlu0 %v279, 48
      %v459 = vpop.permute.xlu0 %458
      %v461 = vsel %vm332, %v457, 0
      %v464 = vsel %vm350, %v459, 0
      %466 = vmatprep.subr.bf16.mxu0 0
      %467 = vmatpush1.bf16.msra.mxu0 %v464
      %468 = vmatprep.subr.bf16.mxu0 0
      %469 = vmatpush1.bf16.msra.mxu0 0
      %470 = vmatprep.subr.bf16.mxu0 0
      %471 = vmatpush1.bf16.msra.mxu0 0
      %472 = vmatprep.subr.bf16.mxu0 0
      %473 = vmatpush1.bf16.msra.mxu0 0
      %474 = vmatprep.subr.bf16.mxu0 0
      %475 = vmatpush1.bf16.msra.mxu0 0
      %476 = vmatprep.subr.bf16.mxu0 0
      %477 = vmatpush1.bf16.msra.mxu0 0
      %478 = vmatprep.subr.bf16.mxu0 0
      %479 = vmatpush1.bf16.msra.mxu0 0
      %480 = vmatprep.subr.bf16.mxu0 0
      %481 = vmatpush1.bf16.msra.mxu0 0
      %482 = vmatprep.subr.bf16.mxu0 0
      %483 = vmatpush1.bf16.msra.mxu0 0
      %484 = vmatprep.subr.bf16.mxu0 0
      %485 = vmatpush1.bf16.msra.mxu0 0
      %486 = vmatprep.subr.bf16.mxu0 0
      %487 = vmatpush1.bf16.msra.mxu0 0
      %488 = vmatprep.subr.bf16.mxu0 0
      %489 = vmatpush1.bf16.msra.mxu0 0
      %490 = vmatprep.subr.bf16.mxu0 0
      %491 = vmatpush1.bf16.msra.mxu0 0
      %492 = vmatprep.subr.bf16.mxu0 0
      %493 = vmatpush1.bf16.msra.mxu0 0
      %494 = vmatprep.subr.bf16.mxu0 0
      %495 = vmatpush1.bf16.msra.mxu0 0
      %496 = vmatprep.subr.bf16.mxu0 0
      %497 = vmatpush1.bf16.msra.mxu0 0
      %498 = vmatprep.mubr.bf16.mxu0 0
      %499 = vmatmul.mubr.bf16.gmra.mrb[0].mxu0 %v461
      %v500 = vpop.f32.mrb[0].mxu0
      %v501 = vadd.f32 0.0, %v500
      %v502 = vpop.f32.mrb[0].mxu0
      %v503 = vpop.f32.mrb[0].mxu0
      %v504 = vpop.f32.mrb[0].mxu0
      %505 = vdwg.mxu0
      %507 = vrot.lane.b32.xlu0 %v501, 16
      %v508 = vpop.permute.xlu0 %507
      %v510 = vsel %vm283, %v389, %v508
      %v511 = vpack.c.bf16 %v510, %v510
      %v512 = vld [vmem:[%s3] sm:$0xf]
      %v513 = vld [vmem:[%s3 + $0x4] sm:$0xf]
      %v514 = vld [vmem:[%s3 + $0x8] sm:$0xf]
      %v515 = vld [vmem:[%s3 + $0xc] sm:$0xf]
      %v516 = vld [vmem:[%s4] sm:$0x1]
      %v518 = vlaneseq
      %v519 = vshrl.u32 %v518, 7
      %v520 = vsub.s32 0, %v519
      %v521 = vrot.slane %v516, %v520
      %v527 = vunpack.c.l.b16 %v512
      %v528 = vunpack.c.l.b16 %v513
      %v529 = vunpack.c.l.b16 %v514
      %v530 = vunpack.c.l.b16 %v515
      %v531 = vpack.c.b16 %v528, %v527
      %v532 = vpack.c.b16 %v530, %v529
      %vm535 = vcmask 261120
      %v537 = vsel %vm535, %v511, 0
      %539 = vmatprep.subr.bf16.mxu0 0
      %540 = vmatpush1.bf16.msra.mxu0 %v531
      %541 = vmatprep.subr.bf16.mxu0 0
      %542 = vmatpush1.bf16.msra.mxu0 %v532
      %543 = vmatprep.subr.bf16.mxu0 0
      %544 = vmatpush1.bf16.msra.mxu0 0
      %545 = vmatprep.subr.bf16.mxu0 0
      %546 = vmatpush1.bf16.msra.mxu0 0
      %547 = vmatprep.subr.bf16.mxu0 0
      %548 = vmatpush1.bf16.msra.mxu0 0
      %549 = vmatprep.subr.bf16.mxu0 0
      %550 = vmatpush1.bf16.msra.mxu0 0
      %551 = vmatprep.subr.bf16.mxu0 0
      %552 = vmatpush1.bf16.msra.mxu0 0
      %553 = vmatprep.subr.bf16.mxu0 0
      %554 = vmatpush1.bf16.msra.mxu0 0
      %555 = vmatprep.subr.bf16.mxu0 0
      %556 = vmatpush1.bf16.msra.mxu0 0
      %557 = vmatprep.subr.bf16.mxu0 0
      %558 = vmatpush1.bf16.msra.mxu0 0
      %559 = vmatprep.subr.bf16.mxu0 0
      %560 = vmatpush1.bf16.msra.mxu0 0
      %561 = vmatprep.subr.bf16.mxu0 0
      %562 = vmatpush1.bf16.msra.mxu0 0
      %563 = vmatprep.subr.bf16.mxu0 0
      %564 = vmatpush1.bf16.msra.mxu0 0
      %565 = vmatprep.subr.bf16.mxu0 0
      %566 = vmatpush1.bf16.msra.mxu0 0
      %567 = vmatprep.subr.bf16.mxu0 0
      %568 = vmatpush1.bf16.msra.mxu0 0
      %569 = vmatprep.subr.bf16.mxu0 0
      %570 = vmatpush1.bf16.msra.mxu0 0
      %571 = vmatprep.mubr.bf16.mxu0 0
      %572 = vmatmul.mubr.bf16.gmra.mrb[0].mxu0 %v537
      %v573 = vpop.f32.mrb[0].mxu0
      %v574 = vadd.f32 %v521, %v573
      %v575 = vpop.f32.mrb[0].mxu0
      %v576 = vpop.f32.mrb[0].mxu0
      %v577 = vpop.f32.mrb[0].mxu0
      %578 = vdwg.mxu0
      %v579 = vld [vmem:[%s266] sm:$0xff]
      %v580 = vadd.f32 %v579, %v574
      %v581 = vld [vmem:[%s5] sm:$0x1]
      %v582 = vld [vmem:[%s6] sm:$0x1]
      %v583 = vsel %vm535, %v580, 0.0
      %584 = vadd.xlane.f32.xlu0 %v583
      %v585 = vpop.xlane.xlu0 %584
      %v586 = vrcp.pop 32.0
      %v587 = vmul.f32 %v585, %v586
      %v588 = vsub.f32 %v580, %v587
      %v589 = vmul.f32 %v588, %v588
      %v590 = vsel %vm535, %v589, 0.0
      %591 = vadd.xlane.f32.xlu0 %v590
      %v592 = vpop.xlane.xlu0 %591
      %v593 = vmul.f32 %v592, %v586
      %v594 = vadd.f32 %v593, 1e-05
      %v595 = vrsqrt.pop %v594
      %v596 = vmul.f32 %v588, %v595
      %v598 = vlaneseq
      %v599 = vshrl.u32 %v598, 7
      %v600 = vsub.s32 0, %v599
      %v601 = vrot.slane %v581, %v600
      %v603 = vmul.f32 %v596, %v601
      %v605 = vlaneseq
      %v606 = vshrl.u32 %v605, 7
      %v607 = vsub.s32 0, %v606
      %v608 = vrot.slane %v582, %v607
      %v610 = vadd.f32 %v603, %v608
      %611 = vst.msk [vmem:[%s270] sm:$0xff] %vm535, %v610
      %p612 = scmp.lt.s32.totalorder %s24, 1
      %s613 = scalar_select %p612, %s24, 1
      %s614 = smul.addr %s613, 8
      %s615 = scalar_lea.vmem %s7, %s614
      // Predicated region
      $region45: #{model_forward.12} parent=43 // pred_check
        %p616 = pneg %p178
      $region46: #{model_forward.12} parent=43 // pred_check_branch
        %618 = sbr.rel (%p616) target = $region48
      $region47: #{model_forward.12} parent=43 // pred_region
        _
      $region48: #{model_forward.12} parent=43 // pred_fallthru
        _
    $region44: #{model_forward.12} parent=5 // pred_fallthru
      _
    %p619 = scmp.le.s32.totalorder 2, %s19
    // Predicated region
    $region49: #{model_forward.12} parent=5 // pred_check
      %p620 = pneg %p619
    $region50: #{model_forward.12} parent=5 // pred_check_branch
      %622 = sbr.rel (%p620) target = $region52
    $region51: #{model_forward.12} parent=5 // pred_region
      %s623 = ssub.s32 %s19, 2
      // Predicated region
      $region53: #{model_forward.12} parent=51 // pred_check
        %p624 = pneg %p184
      $region54: #{model_forward.12} parent=51 // pred_check_branch
        %626 = sbr.rel (%p624) target = $region56
      $region55: #{model_forward.12} parent=51 // pred_region
        %p627 = scmp.lt.s32.totalorder %s25, 1
        %s628 = scalar_select %p627, %s25, 1
        %s629 = smul.addr %s628, 8
        %s630 = scalar_lea.vmem %s7, %s629
      $region56: #{model_forward.12} parent=51 // pred_fallthru
        _
    $region52: #{model_forward.12} parent=5 // pred_fallthru
      _
  $region6: #{model_forward.12} parent=0 // loop_footer
    %s23 = sadd.s32 1, %s19
  $region7: #{model_forward.12} parent=0 // loop_footer_branch
    %18 = sbr.rel target = $region3
  $region8: #{model_forward.12} parent=0 // loop_exit
    _

// kernel: model_forward.14
$region0: #{model_forward.14}
  #allocation0 [shape = 'u32[]', space=smem, size = 0x4, offset = 0x4, fixed_abs, tag = 'smem constant byte address 0x4 - core index']
  #allocation1 [shape = 'u32[144,128]{1,0:T(1,128)}', space=vmem, size = 0x12000, scoped, tag = 'internal scratch']
  %s0 = inlined_call_operand.vmem [shape: f32[16,32], index: 0, kind: input, shape index: {}]
  %s1 = inlined_call_operand.vmem [shape: f32[1,32], index: 1, kind: input, shape index: {}]
  %s2 = inlined_call_operand.vmem [shape: f32[1,32], index: 2, kind: input, shape index: {}]
  %s3 = inlined_call_operand.vmem [shape: f32[16,32], index: 3, kind: output, shape index: {}]
  %s4 = sld [smem:[#allocation0]]
  $region22: #{model_forward.14} parent=0
    _
  %s6 = ssub.s32 1, %s4
  %s7 = scalar_select 0, %s6, %s4
  // Predicated region
  $region2: #{model_forward.14} parent=0 // pred_check
    _
  $region3: #{model_forward.14} parent=0 // pred_check_branch
    %9 = sbr.rel (0) target = $region5
  $region4: #{model_forward.14} parent=0 // pred_region
    _
  $region5: #{model_forward.14} parent=0 // pred_fallthru
    _
  // Predicated region
  $region6: #{model_forward.14} parent=0 // pred_check
    _
  $region7: #{model_forward.14} parent=0 // pred_check_branch
    %11 = sbr.rel (0) target = $region9
  $region8: #{model_forward.14} parent=0 // pred_region
    _
  $region9: #{model_forward.14} parent=0 // pred_fallthru
    _
  // Predicated region
  $region10: #{model_forward.14} parent=0 // pred_check
    _
  $region11: #{model_forward.14} parent=0 // pred_check_branch
    %13 = sbr.rel (0) target = $region13
  $region12: #{model_forward.14} parent=0 // pred_region
    _
  $region13: #{model_forward.14} parent=0 // pred_fallthru
    _
  %v14 = vld [vmem:[%s0] sm:$0xff]
  %v15 = vld [vmem:[%s0 + $0x8] sm:$0xff]
  %v16 = vld [vmem:[%s1] sm:$0x1]
  %v17 = vld [vmem:[%s2] sm:$0x1]
  %vm18 = vcmask 261120
  %v19 = vsel %vm18, %v14, 0.0
  %20 = vadd.xlane.f32.xlu0 %v19
  %v21 = vpop.xlane.xlu0 %20
  %v22 = vsel %vm18, %v15, 0.0
  %23 = vadd.xlane.f32.xlu0 %v22
  %v24 = vpop.xlane.xlu0 %23
  %v25 = vrcp.pop 32.0
  %v26 = vmul.f32 %v21, %v25
  %v27 = vmul.f32 %v24, %v25
  %v28 = vsub.f32 %v14, %v26
  %v29 = vsub.f32 %v15, %v27
  %v30 = vmul.f32 %v28, %v28
  %v31 = vmul.f32 %v29, %v29
  %v32 = vsel %vm18, %v30, 0.0
  %33 = vadd.xlane.f32.xlu0 %v32
  %v34 = vpop.xlane.xlu0 %33
  %v35 = vsel %vm18, %v31, 0.0
  %36 = vadd.xlane.f32.xlu0 %v35
  %v37 = vpop.xlane.xlu0 %36
  %v38 = vmul.f32 %v34, %v25
  %v39 = vmul.f32 %v37, %v25
  %v40 = vadd.f32 %v38, 1e-05
  %v41 = vadd.f32 %v39, 1e-05
  %v42 = vrsqrt.pop %v40
  %v43 = vrsqrt.pop %v41
  %v44 = vmul.f32 %v28, %v42
  %v45 = vmul.f32 %v29, %v43
  %v47 = vlaneseq
  %v48 = vshrl.u32 %v47, 7
  %v49 = vsub.s32 0, %v48
  %v50 = vrot.slane %v16, %v49
  %v52 = vmul.f32 %v44, %v50
  %v53 = vmul.f32 %v45, %v50
  %v55 = vlaneseq
  %v56 = vshrl.u32 %v55, 7
  %v57 = vsub.s32 0, %v56
  %v58 = vrot.slane %v17, %v57
  %v60 = vadd.f32 %v52, %v58
  %v61 = vadd.f32 %v53, %v58
  %62 = vst.msk [vmem:[%s3] sm:$0xff] %vm18, %v60
  %63 = vst.msk [vmem:[%s3 + $0x8] sm:$0xff] %vm18, %v61
  // Predicated region
  $region14: #{model_forward.14} parent=0 // pred_check
    _
  $region15: #{model_forward.14} parent=0 // pred_check_branch
    %65 = sbr.rel (0) target = $region17
  $region16: #{model_forward.14} parent=0 // pred_region
    _
  $region17: #{model_forward.14} parent=0 // pred_fallthru
    _
  // Predicated region
  $region18: #{model_forward.14} parent=0 // pred_check
    _
  $region19: #{model_forward.14} parent=0 // pred_check_branch
    %67 = sbr.rel (0) target = $region21
  $region20: #{model_forward.14} parent=0 // pred_region
    _
  $region21: #{model_forward.14} parent=0 // pred_fallthru
    _

// kernel: model_forward.16
$region0: #{model_forward.16}
  #allocation0 [shape = 'u32[]', space=smem, size = 0x4, offset = 0x4, fixed_abs, tag = 'smem constant byte address 0x4 - core index']
  #allocation1 [shape = 'u32[144,128]{1,0:T(1,128)}', space=vmem, size = 0x12000, scoped, tag = 'internal scratch']
  %s0 = inlined_call_operand.vmem [shape: f32[16,32], index: 0, kind: input, shape index: {}]
  %s1 = inlined_call_operand.vmem [shape: bf16[32,64], index: 1, kind: input, shape index: {}]
  %s2 = inlined_call_operand.vmem [shape: f32[1,64], index: 2, kind: input, shape index: {}]
  %s3 = inlined_call_operand.vmem [shape: f32[16,64], index: 3, kind: output, shape index: {}]
  %s4 = sld [smem:[#allocation0]]
  $region22: #{model_forward.16} parent=0
    _
  %s6 = ssub.s32 1, %s4
  %s7 = scalar_select 0, %s6, %s4
  // Predicated region
  $region2: #{model_forward.16} parent=0 // pred_check
    _
  $region3: #{model_forward.16} parent=0 // pred_check_branch
    %9 = sbr.rel (0) target = $region5
  $region4: #{model_forward.16} parent=0 // pred_region
    _
  $region5: #{model_forward.16} parent=0 // pred_fallthru
    _
  // Predicated region
  $region6: #{model_forward.16} parent=0 // pred_check
    _
  $region7: #{model_forward.16} parent=0 // pred_check_branch
    %11 = sbr.rel (0) target = $region9
  $region8: #{model_forward.16} parent=0 // pred_region
    _
  $region9: #{model_forward.16} parent=0 // pred_fallthru
    _
  // Predicated region
  $region10: #{model_forward.16} parent=0 // pred_check
    _
  $region11: #{model_forward.16} parent=0 // pred_check_branch
    %13 = sbr.rel (0) target = $region13
  $region12: #{model_forward.16} parent=0 // pred_region
    _
  $region13: #{model_forward.16} parent=0 // pred_fallthru
    _
  %v15 = vld [vmem:[%s0] sm:$0xff]
  %v16 = vld [vmem:[%s0 + $0x8] sm:$0xff]
  %v17 = vpack.c.bf16 %v16, %v15
  %v18 = vld [vmem:[%s1] sm:$0xf]
  %v19 = vld [vmem:[%s1 + $0x4] sm:$0xf]
  %v20 = vld [vmem:[%s1 + $0x8] sm:$0xf]
  %v21 = vld [vmem:[%s1 + $0xc] sm:$0xf]
  %v22 = vld [vmem:[%s2] sm:$0x1]
  %v24 = vlaneseq
  %v25 = vshrl.u32 %v24, 7
  %v26 = vsub.s32 0, %v25
  %v27 = vrot.slane %v22, %v26
  %v33 = vunpack.c.l.b16 %v18
  %v34 = vunpack.c.l.b16 %v19
  %v35 = vunpack.c.l.b16 %v20
  %v36 = vunpack.c.l.b16 %v21
  %v37 = vpack.c.b16 %v34, %v33
  %v38 = vpack.c.b16 %v36, %v35
  %vm41 = vcmask 261120
  %v43 = vsel %vm41, %v17, 0
  %45 = vmatprep.subr.bf16.mxu0 0
  %46 = vmatpush1.bf16.msra.mxu0 %v37
  %47 = vmatprep.subr.bf16.mxu0 0
  %48 = vmatpush1.bf16.msra.mxu0 %v38
  %49 = vmatprep.subr.bf16.mxu0 0
  %50 = vmatpush1.bf16.msra.mxu0 0
  %51 = vmatprep.subr.bf16.mxu0 0
  %52 = vmatpush1.bf16.msra.mxu0 0
  %53 = vmatprep.subr.bf16.mxu0 0
  %54 = vmatpush1.bf16.msra.mxu0 0
  %55 = vmatprep.subr.bf16.mxu0 0
  %56 = vmatpush1.bf16.msra.mxu0 0
  %57 = vmatprep.subr.bf16.mxu0 0
  %58 = vmatpush1.bf16.msra.mxu0 0
  %59 = vmatprep.subr.bf16.mxu0 0
  %60 = vmatpush1.bf16.msra.mxu0 0
  %61 = vmatprep.subr.bf16.mxu0 0
  %62 = vmatpush1.bf16.msra.mxu0 0
  %63 = vmatprep.subr.bf16.mxu0 0
  %64 = vmatpush1.bf16.msra.mxu0 0
  %65 = vmatprep.subr.bf16.mxu0 0
  %66 = vmatpush1.bf16.msra.mxu0 0
  %67 = vmatprep.subr.bf16.mxu0 0
  %68 = vmatpush1.bf16.msra.mxu0 0
  %69 = vmatprep.subr.bf16.mxu0 0
  %70 = vmatpush1.bf16.msra.mxu0 0
  %71 = vmatprep.subr.bf16.mxu0 0
  %72 = vmatpush1.bf16.msra.mxu0 0
  %73 = vmatprep.subr.bf16.mxu0 0
  %74 = vmatpush1.bf16.msra.mxu0 0
  %75 = vmatprep.subr.bf16.mxu0 0
  %76 = vmatpush1.bf16.msra.mxu0 0
  %77 = vmatprep.mubr.bf16.mxu0 0
  %78 = vmatmul.mubr.bf16.gmra.mrb[0].mxu0 %v43
  %v79 = vpop.f32.mrb[0].mxu0
  %v80 = vadd.f32 %v27, %v79
  %v81 = vpop.f32.mrb[0].mxu0
  %v82 = vpop.f32.mrb[0].mxu0
  %v83 = vadd.f32 %v27, %v82
  %v84 = vpop.f32.mrb[0].mxu0
  %85 = vdwg.mxu0
  %vm86 = vcmask 523264
  %87 = vst.msk [vmem:[%s3] sm:$0xff] %vm86, %v80
  %88 = vst.msk [vmem:[%s3 + $0x8] sm:$0xff] %vm86, %v83
  // Predicated region
  $region14: #{model_forward.16} parent=0 // pred_check
    _
  $region15: #{model_forward.16} parent=0 // pred_check_branch
    %90 = sbr.rel (0) target = $region17
  $region16: #{model_forward.16} parent=0 // pred_region
    _
  $region17: #{model_forward.16} parent=0 // pred_fallthru
    _
  // Predicated region
  $region18: #{model_forward.16} parent=0 // pred_check
    _
  $region19: #{model_forward.16} parent=0 // pred_check_branch
    %92 = sbr.rel (0) target = $region21
  $region20: #{model_forward.16} parent=0 // pred_region
    _
  $region21: #{model_forward.16} parent=0 // pred_fallthru
    _

// kernel: model_forward.17
$region0: #{model_forward.17}
  #allocation0 [shape = 'u32[]', space=smem, size = 0x4, offset = 0x4, fixed_abs, tag = 'smem constant byte address 0x4 - core index']
  #allocation1 [shape = 'u32[144,128]{1,0:T(1,128)}', space=vmem, size = 0x12000, scoped, tag = 'internal scratch']
  %s0 = inlined_call_operand.vmem [shape: f32[2,1,32], index: 0, kind: input, shape index: {}]
  %s1 = inlined_call_operand.vmem [shape: f32[2,8,64], index: 1, kind: input, shape index: {}]
  %s2 = inlined_call_operand.vmem [shape: bf16[32,32], index: 2, kind: input, shape index: {}]
  %s3 = inlined_call_operand.vmem [shape: f32[1,32], index: 3, kind: input, shape index: {}]
  %s4 = inlined_call_operand.vmem [shape: bf16[32,32], index: 4, kind: input, shape index: {}]
  %s5 = inlined_call_operand.vmem [shape: f32[1,32], index: 5, kind: input, shape index: {}]
  %s6 = inlined_call_operand.vmem [shape: f32[1,32], index: 6, kind: input, shape index: {}]
  %s7 = inlined_call_operand.vmem [shape: f32[1,32], index: 7, kind: input, shape index: {}]
  %s8 = inlined_call_operand.vmem [shape: f32[2,1,32], index: 8, kind: output, shape index: {}]
  %s9 = sld [smem:[#allocation0]]
  $region65: #{model_forward.17} parent=0
    _
  %s11 = ssub.s32 1, %s9
  %s12 = scalar_select 0, %s11, %s9
  loop: start=0, step=1, limit=4
  $region2: #{model_forward.17} parent=0 // loop_pre_header
    _
  $region3: #{model_forward.17} parent=0 // loop_header
    %s14 = sphi 0, %s18
    %p15 = scmp.ge.s32.totalorder %s14, 4
    %s24 = sphi 0, %s26
    %s27 = sphi 0, %s24
    %s28 = sphi 0, %s27
    %s44 = sphi 0, %s28
    %s50 = sphi 0, %s52
    %s53 = sphi 0, %s50
    %s54 = sphi 0, %s53
    %s70 = sphi 0, %s54
    %s74 = sphi 0, %s74
    %s76 = sphi 0, %s74
    %s77 = sphi 0, %s76
    %s91 = sphi 0, %s77
    %s95 = sphi 0, %s95
    %s97 = sphi 0, %s95
    %s98 = sphi 0, %s97
    %s112 = sphi 0, %s98
    %s116 = sphi 0, %s116
    %s118 = sphi 0, %s116
    %s119 = sphi 0, %s118
    %s133 = sphi 0, %s119
    %s137 = sphi 0, %s137
    %s139 = sphi 0, %s137
    %s140 = sphi 0, %s139
    %s154 = sphi 0, %s140
    %s158 = sphi 0, %s158
    %s160 = sphi 0, %s158
    %s161 = sphi 0, %s160
    %s175 = sphi 0, %s161
    %s179 = sphi 0, %s179
    %s181 = sphi 0, %s179
    %s182 = sphi 0, %s181
    %s196 = sphi 0, %s182
    %s202 = sphi 0, %s204
    %s205 = sphi 0, %s202
    %s206 = sphi 0, %s205
    %s222 = sphi 0, %s206
  $region4: #{model_forward.17} parent=0 // loop_header_branch
    %17 = sbr.rel (%p15) target = $region8
  $region5: #{model_forward.17} parent=0 // loop_body
    %s19 = ssub.s32 %s14, 1
    %s20 = ssub.s32 %s14, 2
    %s21 = sadd.s32 %s14, 1
    %s22 = ssub.s32 %s14, %s21
    %p23 = scmp.eq.s32.totalorder %s22, 0
    %s25 = sadd.s32 %s24, 1
    %s26 = scalar_select %p23, %s24, %s25
    %p29 = pneg %p23
    %p30 = scmp.eq.s32.totalorder %s14, 1
    %p31 = por %p29, %p30
    %p32 = scmp.ne.s32.totalorder %s24, %s27
    %p33 = scmp.eq.s32.totalorder %s14, 0
    %p34 = por %p32, %p33
    %p35 = scmp.ne.s32.totalorder %s24, %s27
    %p36 = scmp.eq.s32.totalorder %s19, 1
    %p37 = por %p35, %p36
    %p38 = scmp.ne.s32.totalorder %s27, %s28
    %p39 = scmp.eq.s32.totalorder %s19, 0
    %p40 = por %p38, %p39
    %p41 = scmp.ne.s32.totalorder %s27, %s28
    %p42 = scmp.eq.s32.totalorder %s20, 1
    %p43 = por %p41, %p42
    %p45 = scmp.ne.s32.totalorder %s28, %s44
    %p46 = scmp.eq.s32.totalorder %s20, 0
    %p47 = por %p45, %p46
    %s48 = ssub.s32 %s14, %s21
    %p49 = scmp.eq.s32.totalorder %s48, 0
    %s51 = sadd.s32 %s50, 1
    %s52 = scalar_select %p49, %s50, %s51
    %p55 = pneg %p49
    %p56 = scmp.eq.s32.totalorder %s14, 1
    %p57 = por %p55, %p56
    %p58 = scmp.ne.s32.totalorder %s50, %s53
    %p59 = scmp.eq.s32.totalorder %s14, 0
    %p60 = por %p58, %p59
    %p61 = scmp.ne.s32.totalorder %s50, %s53
    %p62 = scmp.eq.s32.totalorder %s19, 1
    %p63 = por %p61, %p62
    %p64 = scmp.ne.s32.totalorder %s53, %s54
    %p65 = scmp.eq.s32.totalorder %s19, 0
    %p66 = por %p64, %p65
    %p67 = scmp.ne.s32.totalorder %s53, %s54
    %p68 = scmp.eq.s32.totalorder %s20, 1
    %p69 = por %p67, %p68
    %p71 = scmp.ne.s32.totalorder %s54, %s70
    %p72 = scmp.eq.s32.totalorder %s20, 0
    %p73 = por %p71, %p72
    %s75 = sadd.s32 %s74, 1
    %p78 = scmp.eq.s32.totalorder %s14, 1
    %p79 = scmp.ne.s32.totalorder %s74, %s76
    %p80 = scmp.eq.s32.totalorder %s14, 0
    %p81 = por %p79, %p80
    %p82 = scmp.ne.s32.totalorder %s74, %s76
    %p83 = scmp.eq.s32.totalorder %s19, 1
    %p84 = por %p82, %p83
    %p85 = scmp.ne.s32.totalorder %s76, %s77
    %p86 = scmp.eq.s32.totalorder %s19, 0
    %p87 = por %p85, %p86
    %p88 = scmp.ne.s32.totalorder %s76, %s77
    %p89 = scmp.eq.s32.totalorder %s20, 1
    %p90 = por %p88, %p89
    %p92 = scmp.ne.s32.totalorder %s77, %s91
    %p93 = scmp.eq.s32.totalorder %s20, 0
    %p94 = por %p92, %p93
    %s96 = sadd.s32 %s95, 1
    %p99 = scmp.eq.s32.totalorder %s14, 1
    %p100 = scmp.ne.s32.totalorder %s95, %s97
    %p101 = scmp.eq.s32.totalorder %s14, 0
    %p102 = por %p100, %p101
    %p103 = scmp.ne.s32.totalorder %s95, %s97
    %p104 = scmp.eq.s32.totalorder %s19, 1
    %p105 = por %p103, %p104
    %p106 = scmp.ne.s32.totalorder %s97, %s98
    %p107 = scmp.eq.s32.totalorder %s19, 0
    %p108 = por %p106, %p107
    %p109 = scmp.ne.s32.totalorder %s97, %s98
    %p110 = scmp.eq.s32.totalorder %s20, 1
    %p111 = por %p109, %p110
    %p113 = scmp.ne.s32.totalorder %s98, %s112
    %p114 = scmp.eq.s32.totalorder %s20, 0
    %p115 = por %p113, %p114
    %s117 = sadd.s32 %s116, 1
    %p120 = scmp.eq.s32.totalorder %s14, 1
    %p121 = scmp.ne.s32.totalorder %s116, %s118
    %p122 = scmp.eq.s32.totalorder %s14, 0
    %p123 = por %p121, %p122
    %p124 = scmp.ne.s32.totalorder %s116, %s118
    %p125 = scmp.eq.s32.totalorder %s19, 1
    %p126 = por %p124, %p125
    %p127 = scmp.ne.s32.totalorder %s118, %s119
    %p128 = scmp.eq.s32.totalorder %s19, 0
    %p129 = por %p127, %p128
    %p130 = scmp.ne.s32.totalorder %s118, %s119
    %p131 = scmp.eq.s32.totalorder %s20, 1
    %p132 = por %p130, %p131
    %p134 = scmp.ne.s32.totalorder %s119, %s133
    %p135 = scmp.eq.s32.totalorder %s20, 0
    %p136 = por %p134, %p135
    %s138 = sadd.s32 %s137, 1
    %p141 = scmp.eq.s32.totalorder %s14, 1
    %p142 = scmp.ne.s32.totalorder %s137, %s139
    %p143 = scmp.eq.s32.totalorder %s14, 0
    %p144 = por %p142, %p143
    %p145 = scmp.ne.s32.totalorder %s137, %s139
    %p146 = scmp.eq.s32.totalorder %s19, 1
    %p147 = por %p145, %p146
    %p148 = scmp.ne.s32.totalorder %s139, %s140
    %p149 = scmp.eq.s32.totalorder %s19, 0
    %p150 = por %p148, %p149
    %p151 = scmp.ne.s32.totalorder %s139, %s140
    %p152 = scmp.eq.s32.totalorder %s20, 1
    %p153 = por %p151, %p152
    %p155 = scmp.ne.s32.totalorder %s140, %s154
    %p156 = scmp.eq.s32.totalorder %s20, 0
    %p157 = por %p155, %p156
    %s159 = sadd.s32 %s158, 1
    %p162 = scmp.eq.s32.totalorder %s14, 1
    %p163 = scmp.ne.s32.totalorder %s158, %s160
    %p164 = scmp.eq.s32.totalorder %s14, 0
    %p165 = por %p163, %p164
    %p166 = scmp.ne.s32.totalorder %s158, %s160
    %p167 = scmp.eq.s32.totalorder %s19, 1
    %p168 = por %p166, %p167
    %p169 = scmp.ne.s32.totalorder %s160, %s161
    %p170 = scmp.eq.s32.totalorder %s19, 0
    %p171 = por %p169, %p170
    %p172 = scmp.ne.s32.totalorder %s160, %s161
    %p173 = scmp.eq.s32.totalorder %s20, 1
    %p174 = por %p172, %p173
    %p176 = scmp.ne.s32.totalorder %s161, %s175
    %p177 = scmp.eq.s32.totalorder %s20, 0
    %p178 = por %p176, %p177
    %s180 = sadd.s32 %s179, 1
    %p183 = scmp.eq.s32.totalorder %s14, 1
    %p184 = scmp.ne.s32.totalorder %s179, %s181
    %p185 = scmp.eq.s32.totalorder %s14, 0
    %p186 = por %p184, %p185
    %p187 = scmp.ne.s32.totalorder %s179, %s181
    %p188 = scmp.eq.s32.totalorder %s19, 1
    %p189 = por %p187, %p188
    %p190 = scmp.ne.s32.totalorder %s181, %s182
    %p191 = scmp.eq.s32.totalorder %s19, 0
    %p192 = por %p190, %p191
    %p193 = scmp.ne.s32.totalorder %s181, %s182
    %p194 = scmp.eq.s32.totalorder %s20, 1
    %p195 = por %p193, %p194
    %p197 = scmp.ne.s32.totalorder %s182, %s196
    %p198 = scmp.eq.s32.totalorder %s20, 0
    %p199 = por %p197, %p198
    %s200 = ssub.s32 %s14, %s21
    %p201 = scmp.eq.s32.totalorder %s200, 0
    %s203 = sadd.s32 %s202, 1
    %s204 = scalar_select %p201, %s202, %s203
    %p207 = pneg %p201
    %p208 = scmp.eq.s32.totalorder %s14, 1
    %p209 = por %p207, %p208
    %p210 = scmp.ne.s32.totalorder %s202, %s205
    %p211 = scmp.eq.s32.totalorder %s14, 0
    %p212 = por %p210, %p211
    %p213 = scmp.ne.s32.totalorder %s202, %s205
    %p214 = scmp.eq.s32.totalorder %s19, 1
    %p215 = por %p213, %p214
    %p216 = scmp.ne.s32.totalorder %s205, %s206
    %p217 = scmp.eq.s32.totalorder %s19, 0
    %p218 = por %p216, %p217
    %p219 = scmp.ne.s32.totalorder %s205, %s206
    %p220 = scmp.eq.s32.totalorder %s20, 1
    %p221 = por %p219, %p220
    %p223 = scmp.ne.s32.totalorder %s206, %s222
    %p224 = scmp.eq.s32.totalorder %s20, 0
    %p225 = por %p223, %p224
    %p226 = scmp.le.s32.totalorder 1, %s14
    %p227 = scmp.lt.s32.totalorder %s14, 3
    %p228 = pnand %p226, %p227
    %p229 = pneg %p228
    // Predicated region
    $region9: #{model_forward.17} parent=5 // pred_check
      _
    $region10: #{model_forward.17} parent=5 // pred_check_branch
      %231 = sbr.rel (%p228) target = $region12
    $region11: #{model_forward.17} parent=5 // pred_region
      %s232 = ssub.s32 %s14, 1
      // Predicated region
      $region13: #{model_forward.17} parent=11 // pred_check
        %p233 = pneg %p87
      $region14: #{model_forward.17} parent=11 // pred_check_branch
        %235 = sbr.rel (%p233) target = $region16
      $region15: #{model_forward.17} parent=11 // pred_region
        _
      $region16: #{model_forward.17} parent=11 // pred_fallthru
        _
      // Predicated region
      $region17: #{model_forward.17} parent=11 // pred_check
        %p236 = pneg %p108
      $region18: #{model_forward.17} parent=11 // pred_check_branch
        %238 = sbr.rel (%p236) target = $region20
      $region19: #{model_forward.17} parent=11 // pred_region
        _
      $region20: #{model_forward.17} parent=11 // pred_fallthru
        _
      // Predicated region
      $region21: #{model_forward.17} parent=11 // pred_check
        %p239 = pneg %p129
      $region22: #{model_forward.17} parent=11 // pred_check_branch
        %241 = sbr.rel (%p239) target = $region24
      $region23: #{model_forward.17} parent=11 // pred_region
        _
      $region24: #{model_forward.17} parent=11 // pred_fallthru
        _
      // Predicated region
      $region25: #{model_forward.17} parent=11 // pred_check
        %p242 = pneg %p150
      $region26: #{model_forward.17} parent=11 // pred_check_branch
        %244 = sbr.rel (%p242) target = $region28
      $region27: #{model_forward.17} parent=11 // pred_region
        _
      $region28: #{model_forward.17} parent=11 // pred_fallthru
        _
      // Predicated region
      $region29: #{model_forward.17} parent=11 // pred_check
        %p245 = pneg %p171
      $region30: #{model_forward.17} parent=11 // pred_check_branch
        %247 = sbr.rel (%p245) target = $region32
      $region31: #{model_forward.17} parent=11 // pred_region
        _
      $region32: #{model_forward.17} parent=11 // pred_fallthru
        _
      // Predicated region
      $region33: #{model_forward.17} parent=11 // pred_check
        %p248 = pneg %p192
      $region34: #{model_forward.17} parent=11 // pred_check_branch
        %250 = sbr.rel (%p248) target = $region36
      $region35: #{model_forward.17} parent=11 // pred_region
        _
      $region36: #{model_forward.17} parent=11 // pred_fallthru
        _
    $region12: #{model_forward.17} parent=5 // pred_fallthru
      _
    %p251 = scmp.lt.s32.totalorder %s14, 2
    // Predicated region
    $region37: #{model_forward.17} parent=5 // pred_check
      %p252 = pneg %p251
    $region38: #{model_forward.17} parent=5 // pred_check_branch
      %254 = sbr.rel (%p252) target = $region40
    $region39: #{model_forward.17} parent=5 // pred_region
      // Predicated region
      $region41: #{model_forward.17} parent=39 // pred_check
        %p255 = pneg %p34
      $region42: #{model_forward.17} parent=39 // pred_check_branch
        %257 = sbr.rel (%p255) target = $region44
      $region43: #{model_forward.17} parent=39 // pred_region
        %p258 = scmp.lt.s32.totalorder %s14, 1
        %s259 = scalar_select %p258, %s14, 1
        %s260 = scalar_lea.vmem %s0, %s259
      $region44: #{model_forward.17} parent=39 // pred_fallthru
        _
      // Predicated region
      $region45: #{model_forward.17} parent=39 // pred_check
        %p261 = pneg %p60
      $region46: #{model_forward.17} parent=39 // pred_check_branch
        %263 = sbr.rel (%p261) target = $region48
      $region47: #{model_forward.17} parent=39 // pred_region
        %p264 = scmp.lt.s32.totalorder %s14, 1
        %s265 = scalar_select %p264, %s14, 1
        %s266 = smul.addr %s265, 8
        %s267 = scalar_lea.vmem %s1, %s266
      $region48: #{model_forward.17} parent=39 // pred_fallthru
        _
    $region40: #{model_forward.17} parent=5 // pred_fallthru
      _
    %p268 = scmp.le.s32.totalorder 1, %s14
    %p269 = scmp.lt.s32.totalorder %s14, 3
    %p270 = pnand %p268, %p269
    %p271 = pneg %p270
    // Predicated region
    $region49: #{model_forward.17} parent=5 // pred_check
      _
    $region50: #{model_forward.17} parent=5 // pred_check_branch
      %273 = sbr.rel (%p270) target = $region52
    $region51: #{model_forward.17} parent=5 // pred_region
      %s274 = ssub.s32 %s14, 1
      %p275 = scmp.lt.s32.totalorder %s19, 1
      %s276 = scalar_select %p275, %s19, 1
      %s277 = scalar_lea.vmem %s0, %s276
      %p278 = pneg %p40
      %p279 = pneg %p37
      %p280 = scmp.lt.s32.totalorder %s19, 1
      %s281 = scalar_select %p280, %s19, 1
      %s282 = smul.addr %s281, 8
      %s283 = scalar_lea.vmem %s1, %s282
      %p284 = pneg %p66
      %p285 = pneg %p63
      %p286 = pneg %p87
      %p287 = pneg %p84
      %p288 = pneg %p108
      %p289 = pneg %p105
      %p290 = pneg %p129
      %p291 = pneg %p126
      %p292 = pneg %p150
      %p293 = pneg %p147
      %p294 = pneg %p171
      %p295 = pneg %p168
      %p296 = pneg %p192
      %p297 = pneg %p189
      %p298 = pneg %p218
      %p299 = pneg %p215
      %p300 = scmp.lt.s32.totalorder %s19, 1
      %s301 = scalar_select %p300, %s19, 1
      %s302 = scalar_lea.vmem %s8, %s301
      %p303 = scmp.lt.s32.totalorder %s19, 1
      %s304 = scalar_select %p303, %s19, 1
      %s305 = scalar_lea.vmem %s0, %s304
      %p306 = scmp.lt.s32.totalorder %s19, 1
      %s307 = scalar_select %p306, %s19, 1
      %s308 = smul.addr %s307, 8
      %s309 = scalar_lea.vmem %s1, %s308
      %p310 = scmp.lt.s32.totalorder %s19, 1
      %s311 = scalar_select %p310, %s19, 1
      %s312 = scalar_lea.vmem %s8, %s311
      %v314 = vld [vmem:[%s305] sm:$0x1]
      %v315 = vpack.c.bf16 %v314, %v314
      %v316 = vld [vmem:[%s2] sm:$0xf]
      %v317 = vld [vmem:[%s2 + $0x4] sm:$0xf]
      %v318 = vld [vmem:[%s2 + $0x8] sm:$0xf]
      %v319 = vld [vmem:[%s2 + $0xc] sm:$0xf]
      %v320 = vld [vmem:[%s3] sm:$0x1]
      %v325 = vunpack.c.l.b16 %v316
      %v326 = vunpack.c.l.b16 %v317
      %v327 = vunpack.c.l.b16 %v318
      %v328 = vunpack.c.l.b16 %v319
      %v329 = vpack.c.b16 %v326, %v325
      %v330 = vpack.c.b16 %v328, %v327
      %vm333 = vcmask 261120
      %v335 = vsel %vm333, %v315, 0
      %337 = vmatprep.subr.bf16.mxu0 0
      %338 = vmatpush1.bf16.msra.mxu0 %v329
      %339 = vmatprep.subr.bf16.mxu0 0
      %340 = vmatpush1.bf16.msra.mxu0 %v330
      %341 = vmatprep.subr.bf16.mxu0 0
      %342 = vmatpush1.bf16.msra.mxu0 0
      %343 = vmatprep.subr.bf16.mxu0 0
      %344 = vmatpush1.bf16.msra.mxu0 0
      %345 = vmatprep.subr.bf16.mxu0 0
      %346 = vmatpush1.bf16.msra.mxu0 0
      %347 = vmatprep.subr.bf16.mxu0 0
      %348 = vmatpush1.bf16.msra.mxu0 0
      %349 = vmatprep.subr.bf16.mxu0 0
      %350 = vmatpush1.bf16.msra.mxu0 0
      %351 = vmatprep.subr.bf16.mxu0 0
      %352 = vmatpush1.bf16.msra.mxu0 0
      %353 = vmatprep.subr.bf16.mxu0 0
      %354 = vmatpush1.bf16.msra.mxu0 0
      %355 = vmatprep.subr.bf16.mxu0 0
      %356 = vmatpush1.bf16.msra.mxu0 0
      %357 = vmatprep.subr.bf16.mxu0 0
      %358 = vmatpush1.bf16.msra.mxu0 0
      %359 = vmatprep.subr.bf16.mxu0 0
      %360 = vmatpush1.bf16.msra.mxu0 0
      %361 = vmatprep.subr.bf16.mxu0 0
      %362 = vmatpush1.bf16.msra.mxu0 0
      %363 = vmatprep.subr.bf16.mxu0 0
      %364 = vmatpush1.bf16.msra.mxu0 0
      %365 = vmatprep.subr.bf16.mxu0 0
      %366 = vmatpush1.bf16.msra.mxu0 0
      %367 = vmatprep.subr.bf16.mxu0 0
      %368 = vmatpush1.bf16.msra.mxu0 0
      %369 = vmatprep.mubr.bf16.mxu0 0
      %370 = vmatmul.mubr.bf16.gmra.mrb[0].mxu0 %v335
      %v371 = vpop.f32.mrb[0].mxu0
      %v372 = vadd.f32 %v320, %v371
      %v373 = vpop.f32.mrb[0].mxu0
      %v374 = vpop.f32.mrb[0].mxu0
      %v375 = vpop.f32.mrb[0].mxu0
      %376 = vdwg.mxu0
      %v377 = vld [vmem:[%s309] sm:$0xff]
      %v378 = vpack.c.bf16 %v372, %v372
      %v379 = vpack.c.bf16 %v377, %v377
      %vm380 = vcmask 130048
      %v382 = vsel %vm380, %v378, 0
      %v385 = vsel %vm380, %v379, 0
      %387 = vmatprep.subr.bf16.mxu0 0
      %388 = vmatpush1.bf16.xpose.msra.mxu0 %v385
      %389 = vmatprep.subr.bf16.mxu0 0
      %390 = vmatpush1.bf16.xpose.msra.mxu0 0
      %391 = vmatprep.subr.bf16.mxu0 0
      %392 = vmatpush1.bf16.xpose.msra.mxu0 0
      %393 = vmatprep.subr.bf16.mxu0 0
      %394 = vmatpush1.bf16.xpose.msra.mxu0 0
      %395 = vmatprep.subr.bf16.mxu0 0
      %396 = vmatpush1.bf16.xpose.msra.mxu0 0
      %397 = vmatprep.subr.bf16.mxu0 0
      %398 = vmatpush1.bf16.xpose.msra.mxu0 0
      %399 = vmatprep.subr.bf16.mxu0 0
      %400 = vmatpush1.bf16.xpose.msra.mxu0 0
      %401 = vmatprep.subr.bf16.mxu0 0
      %402 = vmatpush1.bf16.xpose.msra.mxu0 0
      %403 = vmatprep.subr.bf16.mxu0 0
      %404 = vmatpush1.bf16.xpose.msra.mxu0 0
      %405 = vmatprep.subr.bf16.mxu0 0
      %406 = vmatpush1.bf16.xpose.msra.mxu0 0
      %407 = vmatprep.subr.bf16.mxu0 0
      %408 = vmatpush1.bf16.xpose.msra.mxu0 0
      %409 = vmatprep.subr.bf16.mxu0 0
      %410 = vmatpush1.bf16.xpose.msra.mxu0 0
      %411 = vmatprep.subr.bf16.mxu0 0
      %412 = vmatpush1.bf16.xpose.msra.mxu0 0
      %413 = vmatprep.subr.bf16.mxu0 0
      %414 = vmatpush1.bf16.xpose.msra.mxu0 0
      %415 = vmatprep.subr.bf16.mxu0 0
      %416 = vmatpush1.bf16.xpose.msra.mxu0 0
      %417 = vmatprep.subr.bf16.mxu0 0
      %418 = vmatpush1.bf16.xpose.msra.mxu0 0
      %419 = vmatprep.mubr.bf16.mxu0 0
      %420 = vmatmul.mubr.bf16.gmra.mrb[0].mxu0 %v382
      %v421 = vpop.f32.mrb[0].mxu0
      %v422 = vadd.f32 0.0, %v421
      %v423 = vpop.f32.mrb[0].mxu0
      %v424 = vpop.f32.mrb[0].mxu0
      %v425 = vpop.f32.mrb[0].mxu0
      %426 = vdwg.mxu0
      %v427 = vmul.f32 %v422, 0.25
      %vm428 = vcmask 57344
      %v429 = vsel %vm428, %v427, -inf
      %430 = vmax.xlane.f32.xlu0 %v429
      %v431 = vpop.xlane.xlu0 %430
      %v432 = vsub.f32 %v427, %v431
      %v433 = vmul.f32 %v432, 1.442695
      %v434 = vpow.pop %v433
      %v435 = vsel %vm428, %v434, 0.0
      %436 = vadd.xlane.f32.xlu0 %v435
      %v437 = vpop.xlane.xlu0 %436
      %v438 = vrcp.pop %v437
      %v439 = vmul.f32 %v434, %v438
      %v440 = vpack.c.bf16 %v439, %v439
      %442 = vrot.lane.b32.xlu0 %v379, 96
      %v443 = vpop.permute.xlu0 %442
      %vm444 = vcmask 64512
      %v446 = vsel %vm444, %v440, 0
      %vm448 = vcmask 1043456
      %v450 = vsel %vm448, %v443, 0
      %452 = vmatprep.subr.bf16.mxu0 0
      %453 = vmatpush1.bf16.msra.mxu0 %v450
      %454 = vmatprep.subr.bf16.mxu0 0
      %455 = vmatpush1.bf16.msra.mxu0 0
      %456 = vmatprep.subr.bf16.mxu0 0
      %457 = vmatpush1.bf16.msra.mxu0 0
      %458 = vmatprep.subr.bf16.mxu0 0
      %459 = vmatpush1.bf16.msra.mxu0 0
      %460 = vmatprep.subr.bf16.mxu0 0
      %461 = vmatpush1.bf16.msra.mxu0 0
      %462 = vmatprep.subr.bf16.mxu0 0
      %463 = vmatpush1.bf16.msra.mxu0 0
      %464 = vmatprep.subr.bf16.mxu0 0
      %465 = vmatpush1.bf16.msra.mxu0 0
      %466 = vmatprep.subr.bf16.mxu0 0
      %467 = vmatpush1.bf16.msra.mxu0 0
      %468 = vmatprep.subr.bf16.mxu0 0
      %469 = vmatpush1.bf16.msra.mxu0 0
      %470 = vmatprep.subr.bf16.mxu0 0
      %471 = vmatpush1.bf16.msra.mxu0 0
      %472 = vmatprep.subr.bf16.mxu0 0
      %473 = vmatpush1.bf16.msra.mxu0 0
      %474 = vmatprep.subr.bf16.mxu0 0
      %475 = vmatpush1.bf16.msra.mxu0 0
      %476 = vmatprep.subr.bf16.mxu0 0
      %477 = vmatpush1.bf16.msra.mxu0 0
      %478 = vmatprep.subr.bf16.mxu0 0
      %479 = vmatpush1.bf16.msra.mxu0 0
      %480 = vmatprep.subr.bf16.mxu0 0
      %481 = vmatpush1.bf16.msra.mxu0 0
      %482 = vmatprep.subr.bf16.mxu0 0
      %483 = vmatpush1.bf16.msra.mxu0 0
      %484 = vmatprep.mubr.bf16.mxu0 0
      %485 = vmatmul.mubr.bf16.gmra.mrb[0].mxu0 %v446
      %v486 = vpop.f32.mrb[0].mxu0
      %v487 = vadd.f32 0.0, %v486
      %v488 = vpop.f32.mrb[0].mxu0
      %v489 = vpop.f32.mrb[0].mxu0
      %v490 = vpop.f32.mrb[0].mxu0
      %491 = vdwg.mxu0
      %493 = vrot.lane.b32.xlu0 %v378, 112
      %v494 = vpop.permute.xlu0 %493
      %495 = vrot.lane.b32.xlu0 %v379, 112
      %v496 = vpop.permute.xlu0 %495
      %v498 = vsel %vm380, %v494, 0
      %v501 = vsel %vm380, %v496, 0
      %503 = vmatprep.subr.bf16.mxu0 0
      %504 = vmatpush1.bf16.xpose.msra.mxu0 %v501
      %505 = vmatprep.subr.bf16.mxu0 0
      %506 = vmatpush1.bf16.xpose.msra.mxu0 0
      %507 = vmatprep.subr.bf16.mxu0 0
      %508 = vmatpush1.bf16.xpose.msra.mxu0 0
      %509 = vmatprep.subr.bf16.mxu0 0
      %510 = vmatpush1.bf16.xpose.msra.mxu0 0
      %511 = vmatprep.subr.bf16.mxu0 0
      %512 = vmatpush1.bf16.xpose.msra.mxu0 0
      %513 = vmatprep.subr.bf16.mxu0 0
      %514 = vmatpush1.bf16.xpose.msra.mxu0 0
      %515 = vmatprep.subr.bf16.mxu0 0
      %516 = vmatpush1.bf16.xpose.msra.mxu0 0
      %517 = vmatprep.subr.bf16.mxu0 0
      %518 = vmatpush1.bf16.xpose.msra.mxu0 0
      %519 = vmatprep.subr.bf16.mxu0 0
      %520 = vmatpush1.bf16.xpose.msra.mxu0 0
      %521 = vmatprep.subr.bf16.mxu0 0
      %522 = vmatpush1.bf16.xpose.msra.mxu0 0
      %523 = vmatprep.subr.bf16.mxu0 0
      %524 = vmatpush1.bf16.xpose.msra.mxu0 0
      %525 = vmatprep.subr.bf16.mxu0 0
      %526 = vmatpush1.bf16.xpose.msra.mxu0 0
      %527 = vmatprep.subr.bf16.mxu0 0
      %528 = vmatpush1.bf16.xpose.msra.mxu0 0
      %529 = vmatprep.subr.bf16.mxu0 0
      %530 = vmatpush1.bf16.xpose.msra.mxu0 0
      %531 = vmatprep.subr.bf16.mxu0 0
      %532 = vmatpush1.bf16.xpose.msra.mxu0 0
      %533 = vmatprep.subr.bf16.mxu0 0
      %534 = vmatpush1.bf16.xpose.msra.mxu0 0
      %535 = vmatprep.mubr.bf16.mxu0 0
      %536 = vmatmul.mubr.bf16.gmra.mrb[0].mxu0 %v498
      %v537 = vpop.f32.mrb[0].mxu0
      %v538 = vadd.f32 0.0, %v537
      %v539 = vpop.f32.mrb[0].mxu0
      %v540 = vpop.f32.mrb[0].mxu0
      %v541 = vpop.f32.mrb[0].mxu0
      %542 = vdwg.mxu0
      %v543 = vmul.f32 %v538, 0.25
      %v544 = vsel %vm428, %v543, -inf
      %545 = vmax.xlane.f32.xlu0 %v544
      %v546 = vpop.xlane.xlu0 %545
      %v547 = vsub.f32 %v543, %v546
      %v548 = vmul.f32 %v547, 1.442695
      %v549 = vpow.pop %v548
      %v550 = vsel %vm428, %v549, 0.0
      %551 = vadd.xlane.f32.xlu0 %v550
      %v552 = vpop.xlane.xlu0 %551
      %v553 = vrcp.pop %v552
      %v554 = vmul.f32 %v549, %v553
      %v555 = vpack.c.bf16 %v554, %v554
      %556 = vrot.lane.b32.xlu0 %v379, 80
      %v557 = vpop.permute.xlu0 %556
      %v559 = vsel %vm444, %v555, 0
      %v562 = vsel %vm448, %v557, 0
      %564 = vmatprep.subr.bf16.mxu0 0
      %565 = vmatpush1.bf16.msra.mxu0 %v562
      %566 = vmatprep.subr.bf16.mxu0 0
      %567 = vmatpush1.bf16.msra.mxu0 0
      %568 = vmatprep.subr.bf16.mxu0 0
      %569 = vmatpush1.bf16.msra.mxu0 0
      %570 = vmatprep.subr.bf16.mxu0 0
      %571 = vmatpush1.bf16.msra.mxu0 0
      %572 = vmatprep.subr.bf16.mxu0 0
      %573 = vmatpush1.bf16.msra.mxu0 0
      %574 = vmatprep.subr.bf16.mxu0 0
      %575 = vmatpush1.bf16.msra.mxu0 0
      %576 = vmatprep.subr.bf16.mxu0 0
      %577 = vmatpush1.bf16.msra.mxu0 0
      %578 = vmatprep.subr.bf16.mxu0 0
      %579 = vmatpush1.bf16.msra.mxu0 0
      %580 = vmatprep.subr.bf16.mxu0 0
      %581 = vmatpush1.bf16.msra.mxu0 0
      %582 = vmatprep.subr.bf16.mxu0 0
      %583 = vmatpush1.bf16.msra.mxu0 0
      %584 = vmatprep.subr.bf16.mxu0 0
      %585 = vmatpush1.bf16.msra.mxu0 0
      %586 = vmatprep.subr.bf16.mxu0 0
      %587 = vmatpush1.bf16.msra.mxu0 0
      %588 = vmatprep.subr.bf16.mxu0 0
      %589 = vmatpush1.bf16.msra.mxu0 0
      %590 = vmatprep.subr.bf16.mxu0 0
      %591 = vmatpush1.bf16.msra.mxu0 0
      %592 = vmatprep.subr.bf16.mxu0 0
      %593 = vmatpush1.bf16.msra.mxu0 0
      %594 = vmatprep.subr.bf16.mxu0 0
      %595 = vmatpush1.bf16.msra.mxu0 0
      %596 = vmatprep.mubr.bf16.mxu0 0
      %597 = vmatmul.mubr.bf16.gmra.mrb[0].mxu0 %v559
      %v598 = vpop.f32.mrb[0].mxu0
      %v599 = vadd.f32 0.0, %v598
      %v600 = vpop.f32.mrb[0].mxu0
      %v601 = vpop.f32.mrb[0].mxu0
      %v602 = vpop.f32.mrb[0].mxu0
      %603 = vdwg.mxu0
      %605 = vrot.lane.b32.xlu0 %v599, 16
      %v606 = vpop.permute.xlu0 %605
      %v608 = vsel %vm380, %v487, %v606
      %v609 = vpack.c.bf16 %v608, %v608
      %v610 = vld [vmem:[%s4] sm:$0xf]
      %v611 = vld [vmem:[%s4 + $0x4] sm:$0xf]
      %v612 = vld [vmem:[%s4 + $0x8] sm:$0xf]
      %v613 = vld [vmem:[%s4 + $0xc] sm:$0xf]
      %v614 = vld [vmem:[%s5] sm:$0x1]
      %v619 = vunpack.c.l.b16 %v610
      %v620 = vunpack.c.l.b16 %v611
      %v621 = vunpack.c.l.b16 %v612
      %v622 = vunpack.c.l.b16 %v613
      %v623 = vpack.c.b16 %v620, %v619
      %v624 = vpack.c.b16 %v622, %v621
      %v628 = vsel %vm333, %v609, 0
      %630 = vmatprep.subr.bf16.mxu0 0
      %631 = vmatpush1.bf16.msra.mxu0 %v623
      %632 = vmatprep.subr.bf16.mxu0 0
      %633 = vmatpush1.bf16.msra.mxu0 %v624
      %634 = vmatprep.subr.bf16.mxu0 0
      %635 = vmatpush1.bf16.msra.mxu0 0
      %636 = vmatprep.subr.bf16.mxu0 0
      %637 = vmatpush1.bf16.msra.mxu0 0
      %638 = vmatprep.subr.bf16.mxu0 0
      %639 = vmatpush1.bf16.msra.mxu0 0
      %640 = vmatprep.subr.bf16.mxu0 0
      %641 = vmatpush1.bf16.msra.mxu0 0
      %642 = vmatprep.subr.bf16.mxu0 0
      %643 = vmatpush1.bf16.msra.mxu0 0
      %644 = vmatprep.subr.bf16.mxu0 0
      %645 = vmatpush1.bf16.msra.mxu0 0
      %646 = vmatprep.subr.bf16.mxu0 0
      %647 = vmatpush1.bf16.msra.mxu0 0
      %648 = vmatprep.subr.bf16.mxu0 0
      %649 = vmatpush1.bf16.msra.mxu0 0
      %650 = vmatprep.subr.bf16.mxu0 0
      %651 = vmatpush1.bf16.msra.mxu0 0
      %652 = vmatprep.subr.bf16.mxu0 0
      %653 = vmatpush1.bf16.msra.mxu0 0
      %654 = vmatprep.subr.bf16.mxu0 0
      %655 = vmatpush1.bf16.msra.mxu0 0
      %656 = vmatprep.subr.bf16.mxu0 0
      %657 = vmatpush1.bf16.msra.mxu0 0
      %658 = vmatprep.subr.bf16.mxu0 0
      %659 = vmatpush1.bf16.msra.mxu0 0
      %660 = vmatprep.subr.bf16.mxu0 0
      %661 = vmatpush1.bf16.msra.mxu0 0
      %662 = vmatprep.mubr.bf16.mxu0 0
      %663 = vmatmul.mubr.bf16.gmra.mrb[0].mxu0 %v628
      %v664 = vpop.f32.mrb[0].mxu0
      %v665 = vadd.f32 %v614, %v664
      %v666 = vpop.f32.mrb[0].mxu0
      %v667 = vpop.f32.mrb[0].mxu0
      %v668 = vpop.f32.mrb[0].mxu0
      %669 = vdwg.mxu0
      %v670 = vadd.f32 %v314, %v665
      %v671 = vld [vmem:[%s6] sm:$0x1]
      %v672 = vld [vmem:[%s7] sm:$0x1]
      %vm673 = vcmask 253952
      %v674 = vsel %vm673, %v670, 0.0
      %675 = vadd.xlane.f32.xlu0 %v674
      %v676 = vpop.xlane.xlu0 %675
      %v677 = vrcp.pop 32.0
      %v678 = vmul.f32 %v676, %v677
      %v679 = vsub.f32 %v670, %v678
      %v680 = vmul.f32 %v679, %v679
      %v681 = vsel %vm673, %v680, 0.0
      %682 = vadd.xlane.f32.xlu0 %v681
      %v683 = vpop.xlane.xlu0 %682
      %v684 = vmul.f32 %v683, %v677
      %v685 = vadd.f32 %v684, 1e-05
      %v686 = vrsqrt.pop %v685
      %v687 = vmul.f32 %v679, %v686
      %v688 = vmul.f32 %v687, %v671
      %v689 = vadd.f32 %v688, %v672
      %690 = vst.msk [vmem:[%s312] sm:$0x1] %vm673, %v689
      %p691 = scmp.lt.s32.totalorder %s19, 1
      %s692 = scalar_select %p691, %s19, 1
      %s693 = scalar_lea.vmem %s8, %s692
      // Predicated region
      $region53: #{model_forward.17} parent=51 // pred_check
        %p694 = pneg %p215
      $region54: #{model_forward.17} parent=51 // pred_check_branch
        %696 = sbr.rel (%p694) target = $region56
      $region55: #{model_forward.17} parent=51 // pred_region
        _
      $region56: #{model_forward.17} parent=51 // pred_fallthru
        _
    $region52: #{model_forward.17} parent=5 // pred_fallthru
      _
    %p697 = scmp.le.s32.totalorder 2, %s14
    // Predicated region
    $region57: #{model_forward.17} parent=5 // pred_check
      %p698 = pneg %p697
    $region58: #{model_forward.17} parent=5 // pred_check_branch
      %700 = sbr.rel (%p698) target = $region60
    $region59: #{model_forward.17} parent=5 // pred_region
      %s701 = ssub.s32 %s14, 2
      // Predicated region
      $region61: #{model_forward.17} parent=59 // pred_check
        %p702 = pneg %p221
      $region62: #{model_forward.17} parent=59 // pred_check_branch
        %704 = sbr.rel (%p702) target = $region64
      $region63: #{model_forward.17} parent=59 // pred_region
        %p705 = scmp.lt.s32.totalorder %s20, 1
        %s706 = scalar_select %p705, %s20, 1
        %s707 = scalar_lea.vmem %s8, %s706
      $region64: #{model_forward.17} parent=59 // pred_fallthru
        _
    $region60: #{model_forward.17} parent=5 // pred_fallthru
      _
  $region6: #{model_forward.17} parent=0 // loop_footer
    %s18 = sadd.s32 1, %s14
  $region7: #{model_forward.17} parent=0 // loop_footer_branch
    %13 = sbr.rel target = $region3
  $region8: #{model_forward.17} parent=0 // loop_exit
    _

// kernel: model_forward.19
$region0: #{model_forward.19}
  #allocation0 [shape = 'u32[]', space=smem, size = 0x4, offset = 0x4, fixed_abs, tag = 'smem constant byte address 0x4 - core index']
  #allocation1 [shape = 'u32[144,128]{1,0:T(1,128)}', space=vmem, size = 0x12000, scoped, tag = 'internal scratch']
  %s0 = inlined_call_operand.vmem [shape: f32[2,32], index: 0, kind: input, shape index: {}]
  %s1 = inlined_call_operand.vmem [shape: f32[2,32], index: 1, kind: input, shape index: {}]
  %s2 = inlined_call_operand.vmem [shape: f32[2,1], index: 2, kind: input, shape index: {}]
  %s3 = inlined_call_operand.vmem [shape: f32[1,32], index: 3, kind: input, shape index: {}]
  %s4 = inlined_call_operand.vmem [shape: f32[1,32], index: 4, kind: input, shape index: {}]
  %s5 = inlined_call_operand.vmem [shape: f32[2,1], index: 5, kind: output, shape index: {0}]
  %s6 = inlined_call_operand.hbm [shape: f32[1,1], index: 6, kind: output, shape index: {1}]
  %7 = xla_tuple %s5, %s6
  %s8 = sld [smem:[#allocation0]]
  $region38: #{model_forward.19} parent=0
    _
  %s10 = ssub.s32 1, %s8
  %s11 = scalar_select 0, %s10, %s8
  $region1: #{model_forward.19} parent=0
    #allocation2 [shape = 'u8[512]{0}', space=vmem, size = 0x400, scoped, tag = 'output window, operand 1, single buffered']
    #allocation3 [shape = 's32[1]{0}', space=sflag, size = 0x4, scoped, tag = 'scoped memory for model_forward.19']
    %12 = vsyncpa [#allocation3], 0
    // Predicated region
    $region2: #{model_forward.19} parent=1 // pred_check
      _
    $region3: #{model_forward.19} parent=1 // pred_check_branch
      %14 = sbr.rel (0) target = $region5
    $region4: #{model_forward.19} parent=1 // pred_region
      _
    $region5: #{model_forward.19} parent=1 // pred_fallthru
      _
    // Predicated region
    $region6: #{model_forward.19} parent=1 // pred_check
      _
    $region7: #{model_forward.19} parent=1 // pred_check_branch
      %16 = sbr.rel (0) target = $region9
    $region8: #{model_forward.19} parent=1 // pred_region
      _
    $region9: #{model_forward.19} parent=1 // pred_fallthru
      _
    // Predicated region
    $region10: #{model_forward.19} parent=1 // pred_check
      _
    $region11: #{model_forward.19} parent=1 // pred_check_branch
      %18 = sbr.rel (0) target = $region13
    $region12: #{model_forward.19} parent=1 // pred_region
      _
    $region13: #{model_forward.19} parent=1 // pred_fallthru
      _
    // Predicated region
    $region14: #{model_forward.19} parent=1 // pred_check
      _
    $region15: #{model_forward.19} parent=1 // pred_check_branch
      %20 = sbr.rel (0) target = $region17
    $region16: #{model_forward.19} parent=1 // pred_region
      _
    $region17: #{model_forward.19} parent=1 // pred_fallthru
      _
    // Predicated region
    $region18: #{model_forward.19} parent=1 // pred_check
      _
    $region19: #{model_forward.19} parent=1 // pred_check_branch
      %22 = sbr.rel (0) target = $region21
    $region20: #{model_forward.19} parent=1 // pred_region
      _
    $region21: #{model_forward.19} parent=1 // pred_fallthru
      _
    %v23 = vld [vmem:[%s0] sm:$0x3]
    %v24 = vld [vmem:[%s3] sm:$0x1]
    %v25 = vld [vmem:[%s4] sm:$0x1]
    %vm26 = vcmask 254976
    %v27 = vsel %vm26, %v23, 0.0
    %28 = vadd.xlane.f32.xlu0 %v27
    %v29 = vpop.xlane.xlu0 %28
    %v30 = vrcp.pop 32.0
    %v31 = vmul.f32 %v29, %v30
    %v32 = vsub.f32 %v23, %v31
    %v33 = vmul.f32 %v32, %v32
    %v34 = vsel %vm26, %v33, 0.0
    %35 = vadd.xlane.f32.xlu0 %v34
    %v36 = vpop.xlane.xlu0 %35
    %v37 = vmul.f32 %v36, %v30
    %v38 = vadd.f32 %v37, 1e-05
    %v39 = vrsqrt.pop %v38
    %v40 = vmul.f32 %v32, %v39
    %v42 = vlaneseq
    %v43 = vshrl.u32 %v42, 7
    %v44 = vsub.s32 0, %v43
    %v45 = vrot.slane %v24, %v44
    %v47 = vmul.f32 %v40, %v45
    %v49 = vlaneseq
    %v50 = vshrl.u32 %v49, 7
    %v51 = vsub.s32 0, %v50
    %v52 = vrot.slane %v25, %v51
    %v54 = vadd.f32 %v47, %v52
    %v55 = vld [vmem:[%s1] sm:$0x3]
    %v56 = vld [vmem:[%s2] sm:$0x3]
    %v57 = vmul.f32 %v54, %v55
    %v58 = vsel %vm26, %v57, 0.0
    %59 = vadd.xlane.f32.xlu0 %v58
    %v60 = vpop.xlane.xlu0 %59
    %v61 = vadd.f32 %v56, %v60
    %vm62 = vcmask 1024
    %63 = vst.msk [vmem:[%s5] sm:$0x3] %vm62, %v61
    %v64 = vmul.f32 %v54, %v54
    %v65 = vsel %vm26, %v64, 0.0
    %66 = vadd.xlane.f32.xlu0 %v65
    %v67 = vpop.xlane.xlu0 %66
    %v68 = vrot.slane %v67, 4
    %v69 = vadd.f32 %v67, %v68
    %v70 = vrot.slane %v69, 2
    %v71 = vadd.f32 %v69, %v70
    %v72 = vrot.slane %v71, 1
    %v73 = vadd.f32 %v71, %v72
    %s74 = vtos %v73
    %v75 = vstv %s74
    %v76 = vmul.f32 %v55, %v55
    %v77 = vsel %vm26, %v76, 0.0
    %78 = vadd.xlane.f32.xlu0 %v77
    %v79 = vpop.xlane.xlu0 %78
    %v80 = vrot.slane %v79, 4
    %v81 = vadd.f32 %v79, %v80
    %v82 = vrot.slane %v81, 2
    %v83 = vadd.f32 %v81, %v82
    %v84 = vrot.slane %v83, 1
    %v85 = vadd.f32 %v83, %v84
    %s86 = vtos %v85
    %v87 = vstv %s86
    %v88 = vadd.f32 %v75, %v87
    %vm89 = vcmask 0
    %90 = vst.msk [vmem:[#allocation2] sm:$0x1] %vm89, %v88
    // Predicated region
    $region22: #{model_forward.19} parent=1 // pred_check
      _
    $region23: #{model_forward.19} parent=1 // pred_check_branch
      %92 = sbr.rel (0) target = $region25
    $region24: #{model_forward.19} parent=1 // pred_region
      _
    $region25: #{model_forward.19} parent=1 // pred_fallthru
      _
    // Predicated region
    $region26: #{model_forward.19} parent=1 // pred_check
      _
    $region27: #{model_forward.19} parent=1 // pred_check_branch
      %94 = sbr.rel (0) target = $region29
    $region28: #{model_forward.19} parent=1 // pred_region
      %s96 = ssub.s32 16, 16
      %97 = vsyncadd [#allocation3], %s96
      %s99 = sshll.u32 [#allocation2], 4
      %s100 = int_to_ptr.vmem [resolvable:$true] %s99
      %102 = dma.vmem_to_hbm [thread:$0]  %s100, 16, %s6, [#allocation3]
    $region29: #{model_forward.19} parent=1 // pred_fallthru
      _
    // Predicated region
    $region30: #{model_forward.19} parent=1 // pred_check
      _
    $region31: #{model_forward.19} parent=1 // pred_check_branch
      %104 = sbr.rel (0) target = $region33
    $region32: #{model_forward.19} parent=1 // pred_region
      _
    $region33: #{model_forward.19} parent=1 // pred_fallthru
      _
    // Predicated region
    $region34: #{model_forward.19} parent=1 // pred_check
      _
    $region35: #{model_forward.19} parent=1 // pred_check_branch
      %106 = sbr.rel (0) target = $region37
    $region36: #{model_forward.19} parent=1 // pred_region
      %107 = dma.done [#allocation3], 16
    $region37: #{model_forward.19} parent=1 // pred_fallthru
      _
    %108 = vsyncpa [#allocation3], 1

// kernel: model_forward.13
$region0: #{model_forward.13}
  #allocation0 [shape = 'u32[]', space=smem, size = 0x4, offset = 0x4, fixed_abs, tag = 'smem constant byte address 0x4 - core index']
  #allocation1 [shape = 'u32[144,128]{1,0:T(1,128)}', space=vmem, size = 0x12000, scoped, tag = 'internal scratch']
  %s0 = inlined_call_operand.vmem [shape: f32[16,32], index: 0, kind: input, shape index: {}]
  %s1 = inlined_call_operand.vmem [shape: bf16[32,2048], index: 1, kind: input, shape index: {}]
  %s2 = inlined_call_operand.vmem [shape: f32[1,2048], index: 2, kind: input, shape index: {}]
  %s3 = inlined_call_operand.vmem [shape: bf16[2048,32], index: 3, kind: input, shape index: {}]
  %s4 = inlined_call_operand.vmem [shape: f32[1,32], index: 4, kind: input, shape index: {}]
  %s5 = inlined_call_operand.vmem [shape: f32[1,32], index: 5, kind: input, shape index: {}]
  %s6 = inlined_call_operand.vmem [shape: f32[1,32], index: 6, kind: input, shape index: {}]
  %s7 = inlined_call_operand.vmem [shape: f32[16,32], index: 7, kind: output, shape index: {}]
  %s8 = sld [smem:[#allocation0]]
  $region38: #{model_forward.13} parent=0
    _
  %s10 = ssub.s32 1, %s8
  %s11 = scalar_select 0, %s10, %s8
  // Predicated region
  $region2: #{model_forward.13} parent=0 // pred_check
    _
  $region3: #{model_forward.13} parent=0 // pred_check_branch
    %13 = sbr.rel (0) target = $region5
  $region4: #{model_forward.13} parent=0 // pred_region
    _
  $region5: #{model_forward.13} parent=0 // pred_fallthru
    _
  // Predicated region
  $region6: #{model_forward.13} parent=0 // pred_check
    _
  $region7: #{model_forward.13} parent=0 // pred_check_branch
    %15 = sbr.rel (0) target = $region9
  $region8: #{model_forward.13} parent=0 // pred_region
    _
  $region9: #{model_forward.13} parent=0 // pred_fallthru
    _
  // Predicated region
  $region10: #{model_forward.13} parent=0 // pred_check
    _
  $region11: #{model_forward.13} parent=0 // pred_check_branch
    %17 = sbr.rel (0) target = $region13
  $region12: #{model_forward.13} parent=0 // pred_region
    _
  $region13: #{model_forward.13} parent=0 // pred_fallthru
    _
  // Predicated region
  $region14: #{model_forward.13} parent=0 // pred_check
    _
  $region15: #{model_forward.13} parent=0 // pred_check_branch
    %19 = sbr.rel (0) target = $region17
  $region16: #{model_forward.13} parent=0 // pred_region
    _
  $region17: #{model_forward.13} parent=0 // pred_fallthru
    _
  // Predicated region
  $region18: #{model_forward.13} parent=0 // pred_check
    _
  $region19: #{model_forward.13} parent=0 // pred_check_branch
    %21 = sbr.rel (0) target = $region21
  $region20: #{model_forward.13} parent=0 // pred_region
    _
  $region21: #{model_forward.13} parent=0 // pred_fallthru
    _
  // Predicated region
  $region22: #{model_forward.13} parent=0 // pred_check
    _
  $region23: #{model_forward.13} parent=0 // pred_check_branch
    %23 = sbr.rel (0) target = $region25
  $region24: #{model_forward.13} parent=0 // pred_region
    _
  $region25: #{model_forward.13} parent=0 // pred_fallthru
    _
  // Predicated region
  $region26: #{model_forward.13} parent=0 // pred_check
    _
  $region27: #{model_forward.13} parent=0 // pred_check_branch
    %25 = sbr.rel (0) target = $region29
  $region28: #{model_forward.13} parent=0 // pred_region
    _
  $region29: #{model_forward.13} parent=0 // pred_fallthru
    _
  %v27 = vld [vmem:[%s0] sm:$0xff]
  %v28 = vld [vmem:[%s0 + $0x8] sm:$0xff]
  %v29 = vpack.c.bf16 %v28, %v27
  %v30 = vld [vmem:[%s1] sm:$0xff]
  %v31 = vld [vmem:[%s1 + $0x8] sm:$0xff]
  %v32 = vld [vmem:[%s1 + $0x10] sm:$0xff]
  %v33 = vld [vmem:[%s1 + $0x18] sm:$0xff]
  %v34 = vld [vmem:[%s1 + $0x20] sm:$0xff]
  %v35 = vld [vmem:[%s1 + $0x28] sm:$0xff]
  %v36 = vld [vmem:[%s1 + $0x30] sm:$0xff]
  %v37 = vld [vmem:[%s1 + $0x38] sm:$0xff]
  %v38 = vld [vmem:[%s1 + $0x40] sm:$0xff]
  %v39 = vld [vmem:[%s1 + $0x48] sm:$0xff]
  %v40 = vld [vmem:[%s1 + $0x50] sm:$0xff]
  %v41 = vld [vmem:[%s1 + $0x58] sm:$0xff]
  %v42 = vld [vmem:[%s1 + $0x60] sm:$0xff]
  %v43 = vld [vmem:[%s1 + $0x68] sm:$0xff]
  %v44 = vld [vmem:[%s1 + $0x70] sm:$0xff]
  %v45 = vld [vmem:[%s1 + $0x78] sm:$0xff]
  %v46 = vld [vmem:[%s1 + $0x80] sm:$0xff]
  %v47 = vld [vmem:[%s1 + $0x88] sm:$0xff]
  %v48 = vld [vmem:[%s1 + $0x90] sm:$0xff]
  %v49 = vld [vmem:[%s1 + $0x98] sm:$0xff]
  %v50 = vld [vmem:[%s1 + $0xa0] sm:$0xff]
  %v51 = vld [vmem:[%s1 + $0xa8] sm:$0xff]
  %v52 = vld [vmem:[%s1 + $0xb0] sm:$0xff]
  %v53 = vld [vmem:[%s1 + $0xb8] sm:$0xff]
  %v54 = vld [vmem:[%s1 + $0xc0] sm:$0xff]
  %v55 = vld [vmem:[%s1 + $0xc8] sm:$0xff]
  %v56 = vld [vmem:[%s1 + $0xd0] sm:$0xff]
  %v57 = vld [vmem:[%s1 + $0xd8] sm:$0xff]
  %v58 = vld [vmem:[%s1 + $0xe0] sm:$0xff]
  %v59 = vld [vmem:[%s1 + $0xe8] sm:$0xff]
  %v60 = vld [vmem:[%s1 + $0xf0] sm:$0xff]
  %v61 = vld [vmem:[%s1 + $0xf8] sm:$0xff]
  %v62 = vld [vmem:[%s2] sm:$0xff]
  %v63 = vld [vmem:[%s2 + $0x8] sm:$0xff]
  %v66 = vlaneseq
  %v67 = vshrl.u32 %v66, 7
  %v68 = vsub.s32 0, %v67
  %v69 = vrot.slane %v62, %v68
  %v70 = vlaneseq
  %v71 = vshrl.u32 %v70, 7
  %v72 = vsub.s32 1, %v71
  %v73 = vrot.slane %v62, %v72
  %v74 = vlaneseq
  %v75 = vshrl.u32 %v74, 7
  %v76 = vsub.s32 2, %v75
  %v77 = vrot.slane %v62, %v76
  %v78 = vlaneseq
  %v79 = vshrl.u32 %v78, 7
  %v80 = vsub.s32 3, %v79
  %v81 = vrot.slane %v62, %v80
  %v82 = vlaneseq
  %v83 = vshrl.u32 %v82, 7
  %v84 = vsub.s32 4, %v83
  %v85 = vrot.slane %v62, %v84
  %v86 = vlaneseq
  %v87 = vshrl.u32 %v86, 7
  %v88 = vsub.s32 5, %v87
  %v89 = vrot.slane %v62, %v88
  %v90 = vlaneseq
  %v91 = vshrl.u32 %v90, 7
  %v92 = vsub.s32 6, %v91
  %v93 = vrot.slane %v62, %v92
  %v94 = vlaneseq
  %v95 = vshrl.u32 %v94, 7
  %v96 = vsub.s32 7, %v95
  %v97 = vrot.slane %v62, %v96
  %v98 = vlaneseq
  %v99 = vshrl.u32 %v98, 7
  %v100 = vsub.s32 0, %v99
  %v101 = vrot.slane %v63, %v100
  %v102 = vlaneseq
  %v103 = vshrl.u32 %v102, 7
  %v104 = vsub.s32 1, %v103
  %v105 = vrot.slane %v63, %v104
  %v106 = vlaneseq
  %v107 = vshrl.u32 %v106, 7
  %v108 = vsub.s32 2, %v107
  %v109 = vrot.slane %v63, %v108
  %v110 = vlaneseq
  %v111 = vshrl.u32 %v110, 7
  %v112 = vsub.s32 3, %v111
  %v113 = vrot.slane %v63, %v112
  %v114 = vlaneseq
  %v115 = vshrl.u32 %v114, 7
  %v116 = vsub.s32 4, %v115
  %v117 = vrot.slane %v63, %v116
  %v118 = vlaneseq
  %v119 = vshrl.u32 %v118, 7
  %v120 = vsub.s32 5, %v119
  %v121 = vrot.slane %v63, %v120
  %v122 = vlaneseq
  %v123 = vshrl.u32 %v122, 7
  %v124 = vsub.s32 6, %v123
  %v125 = vrot.slane %v63, %v124
  %v126 = vlaneseq
  %v127 = vshrl.u32 %v126, 7
  %v128 = vsub.s32 7, %v127
  %v129 = vrot.slane %v63, %v128
  %v178 = vunpack.c.l.b16 %v30
  %v179 = vunpack.c.h.b16 %v30
  %v180 = vunpack.c.l.b16 %v31
  %v181 = vunpack.c.h.b16 %v31
  %v182 = vunpack.c.l.b16 %v32
  %v183 = vunpack.c.h.b16 %v32
  %v184 = vunpack.c.l.b16 %v33
  %v185 = vunpack.c.h.b16 %v33
  %v186 = vunpack.c.l.b16 %v34
  %v187 = vunpack.c.h.b16 %v34
  %v188 = vunpack.c.l.b16 %v35
  %v189 = vunpack.c.h.b16 %v35
  %v190 = vunpack.c.l.b16 %v36
  %v191 = vunpack.c.h.b16 %v36
  %v192 = vunpack.c.l.b16 %v37
  %v193 = vunpack.c.h.b16 %v37
  %v194 = vunpack.c.l.b16 %v38
  %v195 = vunpack.c.h.b16 %v38
  %v196 = vunpack.c.l.b16 %v39
  %v197 = vunpack.c.h.b16 %v39
  %v198 = vunpack.c.l.b16 %v40
  %v199 = vunpack.c.h.b16 %v40
  %v200 = vunpack.c.l.b16 %v41
  %v201 = vunpack.c.h.b16 %v41
  %v202 = vunpack.c.l.b16 %v42
  %v203 = vunpack.c.h.b16 %v42
  %v204 = vunpack.c.l.b16 %v43
  %v205 = vunpack.c.h.b16 %v43
  %v206 = vunpack.c.l.b16 %v44
  %v207 = vunpack.c.h.b16 %v44
  %v208 = vunpack.c.l.b16 %v45
  %v209 = vunpack.c.h.b16 %v45
  %v210 = vunpack.c.l.b16 %v46
  %v211 = vunpack.c.h.b16 %v46
  %v212 = vunpack.c.l.b16 %v47
  %v213 = vunpack.c.h.b16 %v47
  %v214 = vunpack.c.l.b16 %v48
  %v215 = vunpack.c.h.b16 %v48
  %v216 = vunpack.c.l.b16 %v49
  %v217 = vunpack.c.h.b16 %v49
  %v218 = vunpack.c.l.b16 %v50
  %v219 = vunpack.c.h.b16 %v50
  %v220 = vunpack.c.l.b16 %v51
  %v221 = vunpack.c.h.b16 %v51
  %v222 = vunpack.c.l.b16 %v52
  %v223 = vunpack.c.h.b16 %v52
  %v224 = vunpack.c.l.b16 %v53
  %v225 = vunpack.c.h.b16 %v53
  %v226 = vunpack.c.l.b16 %v54
  %v227 = vunpack.c.h.b16 %v54
  %v228 = vunpack.c.l.b16 %v55
  %v229 = vunpack.c.h.b16 %v55
  %v230 = vunpack.c.l.b16 %v56
  %v231 = vunpack.c.h.b16 %v56
  %v232 = vunpack.c.l.b16 %v57
  %v233 = vunpack.c.h.b16 %v57
  %v234 = vunpack.c.l.b16 %v58
  %v235 = vunpack.c.h.b16 %v58
  %v236 = vunpack.c.l.b16 %v59
  %v237 = vunpack.c.h.b16 %v59
  %v238 = vunpack.c.l.b16 %v60
  %v239 = vunpack.c.h.b16 %v60
  %v240 = vunpack.c.l.b16 %v61
  %v241 = vunpack.c.h.b16 %v61
  %v242 = vpack.c.b16 %v194, %v178
  %v243 = vpack.c.b16 %v195, %v179
  %v244 = vpack.c.b16 %v196, %v180
  %v245 = vpack.c.b16 %v197, %v181
  %v246 = vpack.c.b16 %v198, %v182
  %v247 = vpack.c.b16 %v199, %v183
  %v248 = vpack.c.b16 %v200, %v184
  %v249 = vpack.c.b16 %v201, %v185
  %v250 = vpack.c.b16 %v202, %v186
  %v251 = vpack.c.b16 %v203, %v187
  %v252 = vpack.c.b16 %v204, %v188
  %v253 = vpack.c.b16 %v205, %v189
  %v254 = vpack.c.b16 %v206, %v190
  %v255 = vpack.c.b16 %v207, %v191
  %v256 = vpack.c.b16 %v208, %v192
  %v257 = vpack.c.b16 %v209, %v193
  %v258 = vpack.c.b16 %v226, %v210
  %v259 = vpack.c.b16 %v227, %v211
  %v260 = vpack.c.b16 %v228, %v212
  %v261 = vpack.c.b16 %v229, %v213
  %v262 = vpack.c.b16 %v230, %v214
  %v263 = vpack.c.b16 %v231, %v215
  %v264 = vpack.c.b16 %v232, %v216
  %v265 = vpack.c.b16 %v233, %v217
  %v266 = vpack.c.b16 %v234, %v218
  %v267 = vpack.c.b16 %v235, %v219
  %v268 = vpack.c.b16 %v236, %v220
  %v269 = vpack.c.b16 %v237, %v221
  %v270 = vpack.c.b16 %v238, %v222
  %v271 = vpack.c.b16 %v239, %v223
  %v272 = vpack.c.b16 %v240, %v224
  %v273 = vpack.c.b16 %v241, %v225
  %vm306 = vcmask 261120
  %v308 = vsel %vm306, %v29, 0
  %310 = vmatprep.subr.bf16.mxu0 %v243
  %311 = vmatpush1.bf16.msra.mxu0 %v242
  %312 = vmatprep.subr.bf16.mxu0 %v259
  %313 = vmatpush1.bf16.msra.mxu0 %v258
  %314 = vmatprep.subr.bf16.mxu0 0
  %315 = vmatpush1.bf16.msra.mxu0 0
  %316 = vmatprep.subr.bf16.mxu0 0
  %317 = vmatpush1.bf16.msra.mxu0 0
  %318 = vmatprep.subr.bf16.mxu0 0
  %319 = vmatpush1.bf16.msra.mxu0 0
  %320 = vmatprep.subr.bf16.mxu0 0
  %321 = vmatpush1.bf16.msra.mxu0 0
  %322 = vmatprep.subr.bf16.mxu0 0
  %323 = vmatpush1.bf16.msra.mxu0 0
  %324 = vmatprep.subr.bf16.mxu0 0
  %325 = vmatpush1.bf16.msra.mxu0 0
  %326 = vmatprep.subr.bf16.mxu0 0
  %327 = vmatpush1.bf16.msra.mxu0 0
  %328 = vmatprep.subr.bf16.mxu0 0
  %329 = vmatpush1.bf16.msra.mxu0 0
  %330 = vmatprep.subr.bf16.mxu0 0
  %331 = vmatpush1.bf16.msra.mxu0 0
  %332 = vmatprep.subr.bf16.mxu0 0
  %333 = vmatpush1.bf16.msra.mxu0 0
  %334 = vmatprep.subr.bf16.mxu0 0
  %335 = vmatpush1.bf16.msra.mxu0 0
  %336 = vmatprep.subr.bf16.mxu0 0
  %337 = vmatpush1.bf16.msra.mxu0 0
  %338 = vmatprep.subr.bf16.mxu0 0
  %339 = vmatpush1.bf16.msra.mxu0 0
  %340 = vmatprep.subr.bf16.mxu0 0
  %341 = vmatpush1.bf16.msra.mxu0 0
  %342 = vmatprep.mubr.bf16.mxu0 0
  %343 = vmatmul.mubr.bf16.gmra.mrb[0].mxu0 %v308
  %v344 = vpop.f32.mrb[0].mxu0
  %v345 = vadd.f32 %v69, %v344
  %v346 = vpop.f32.mrb[0].mxu0
  %v347 = vadd.f32 %v73, %v346
  %v348 = vpop.f32.mrb[0].mxu0
  %v349 = vadd.f32 %v69, %v348
  %v350 = vpop.f32.mrb[0].mxu0
  %v351 = vadd.f32 %v73, %v350
  %352 = vdwg.mxu0
  %353 = vmatprep.subr.bf16.mxu0 %v245
  %354 = vmatpush1.bf16.msra.mxu0 %v244
  %355 = vmatprep.subr.bf16.mxu0 %v261
  %356 = vmatpush1.bf16.msra.mxu0 %v260
  %357 = vmatprep.subr.bf16.mxu0 0
  %358 = vmatpush1.bf16.msra.mxu0 0
  %359 = vmatprep.subr.bf16.mxu0 0
  %360 = vmatpush1.bf16.msra.mxu0 0
  %361 = vmatprep.subr.bf16.mxu0 0
  %362 = vmatpush1.bf16.msra.mxu0 0
  %363 = vmatprep.subr.bf16.mxu0 0
  %364 = vmatpush1.bf16.msra.mxu0 0
  %365 = vmatprep.subr.bf16.mxu0 0
  %366 = vmatpush1.bf16.msra.mxu0 0
  %367 = vmatprep.subr.bf16.mxu0 0
  %368 = vmatpush1.bf16.msra.mxu0 0
  %369 = vmatprep.subr.bf16.mxu0 0
  %370 = vmatpush1.bf16.msra.mxu0 0
  %371 = vmatprep.subr.bf16.mxu0 0
  %372 = vmatpush1.bf16.msra.mxu0 0
  %373 = vmatprep.subr.bf16.mxu0 0
  %374 = vmatpush1.bf16.msra.mxu0 0
  %375 = vmatprep.subr.bf16.mxu0 0
  %376 = vmatpush1.bf16.msra.mxu0 0
  %377 = vmatprep.subr.bf16.mxu0 0
  %378 = vmatpush1.bf16.msra.mxu0 0
  %379 = vmatprep.subr.bf16.mxu0 0
  %380 = vmatpush1.bf16.msra.mxu0 0
  %381 = vmatprep.subr.bf16.mxu0 0
  %382 = vmatpush1.bf16.msra.mxu0 0
  %383 = vmatprep.subr.bf16.mxu0 0
  %384 = vmatpush1.bf16.msra.mxu0 0
  %385 = vmatprep.mubr.bf16.mxu0 0
  %386 = vmatmul.mubr.bf16.gmra.mrb[0].mxu0 %v308
  %v387 = vpop.f32.mrb[0].mxu0
  %v388 = vadd.f32 %v77, %v387
  %v389 = vpop.f32.mrb[0].mxu0
  %v390 = vadd.f32 %v81, %v389
  %v391 = vpop.f32.mrb[0].mxu0
  %v392 = vadd.f32 %v77, %v391
  %v393 = vpop.f32.mrb[0].mxu0
  %v394 = vadd.f32 %v81, %v393
  %395 = vdwg.mxu0
  %396 = vmatprep.subr.bf16.mxu0 %v247
  %397 = vmatpush1.bf16.msra.mxu0 %v246
  %398 = vmatprep.subr.bf16.mxu0 %v263
  %399 = vmatpush1.bf16.msra.mxu0 %v262
  %400 = vmatprep.subr.bf16.mxu0 0
  %401 = vmatpush1.bf16.msra.mxu0 0
  %402 = vmatprep.subr.bf16.mxu0 0
  %403 = vmatpush1.bf16.msra.mxu0 0
  %404 = vmatprep.subr.bf16.mxu0 0
  %405 = vmatpush1.bf16.msra.mxu0 0
  %406 = vmatprep.subr.bf16.mxu0 0
  %407 = vmatpush1.bf16.msra.mxu0 0
  %408 = vmatprep.subr.bf16.mxu0 0
  %409 = vmatpush1.bf16.msra.mxu0 0
  %410 = vmatprep.subr.bf16.mxu0 0
  %411 = vmatpush1.bf16.msra.mxu0 0
  %412 = vmatprep.subr.bf16.mxu0 0
  %413 = vmatpush1.bf16.msra.mxu0 0
  %414 = vmatprep.subr.bf16.mxu0 0
  %415 = vmatpush1.bf16.msra.mxu0 0
  %416 = vmatprep.subr.bf16.mxu0 0
  %417 = vmatpush1.bf16.msra.mxu0 0
  %418 = vmatprep.subr.bf16.mxu0 0
  %419 = vmatpush1.bf16.msra.mxu0 0
  %420 = vmatprep.subr.bf16.mxu0 0
  %421 = vmatpush1.bf16.msra.mxu0 0
  %422 = vmatprep.subr.bf16.mxu0 0
  %423 = vmatpush1.bf16.msra.mxu0 0
  %424 = vmatprep.subr.bf16.mxu0 0
  %425 = vmatpush1.bf16.msra.mxu0 0
  %426 = vmatprep.subr.bf16.mxu0 0
  %427 = vmatpush1.bf16.msra.mxu0 0
  %428 = vmatprep.mubr.bf16.mxu0 0
  %429 = vmatmul.mubr.bf16.gmra.mrb[0].mxu0 %v308
  %v430 = vpop.f32.mrb[0].mxu0
  %v431 = vadd.f32 %v85, %v430
  %v432 = vpop.f32.mrb[0].mxu0
  %v433 = vadd.f32 %v89, %v432
  %v434 = vpop.f32.mrb[0].mxu0
  %v435 = vadd.f32 %v85, %v434
  %v436 = vpop.f32.mrb[0].mxu0
  %v437 = vadd.f32 %v89, %v436
  %438 = vdwg.mxu0
  %439 = vmatprep.subr.bf16.mxu0 %v249
  %440 = vmatpush1.bf16.msra.mxu0 %v248
  %441 = vmatprep.subr.bf16.mxu0 %v265
  %442 = vmatpush1.bf16.msra.mxu0 %v264
  %443 = vmatprep.subr.bf16.mxu0 0
  %444 = vmatpush1.bf16.msra.mxu0 0
  %445 = vmatprep.subr.bf16.mxu0 0
  %446 = vmatpush1.bf16.msra.mxu0 0
  %447 = vmatprep.subr.bf16.mxu0 0
  %448 = vmatpush1.bf16.msra.mxu0 0
  %449 = vmatprep.subr.bf16.mxu0 0
  %450 = vmatpush1.bf16.msra.mxu0 0
  %451 = vmatprep.subr.bf16.mxu0 0
  %452 = vmatpush1.bf16.msra.mxu0 0
  %453 = vmatprep.subr.bf16.mxu0 0
  %454 = vmatpush1.bf16.msra.mxu0 0
  %455 = vmatprep.subr.bf16.mxu0 0
  %456 = vmatpush1.bf16.msra.mxu0 0
  %457 = vmatprep.subr.bf16.mxu0 0
  %458 = vmatpush1.bf16.msra.mxu0 0
  %459 = vmatprep.subr.bf16.mxu0 0
  %460 = vmatpush1.bf16.msra.mxu0 0
  %461 = vmatprep.subr.bf16.mxu0 0
  %462 = vmatpush1.bf16.msra.mxu0 0
  %463 = vmatprep.subr.bf16.mxu0 0
  %464 = vmatpush1.bf16.msra.mxu0 0
  %465 = vmatprep.subr.bf16.mxu0 0
  %466 = vmatpush1.bf16.msra.mxu0 0
  %467 = vmatprep.subr.bf16.mxu0 0
  %468 = vmatpush1.bf16.msra.mxu0 0
  %469 = vmatprep.subr.bf16.mxu0 0
  %470 = vmatpush1.bf16.msra.mxu0 0
  %471 = vmatprep.mubr.bf16.mxu0 0
  %472 = vmatmul.mubr.bf16.gmra.mrb[0].mxu0 %v308
  %v473 = vpop.f32.mrb[0].mxu0
  %v474 = vadd.f32 %v93, %v473
  %v475 = vpop.f32.mrb[0].mxu0
  %v476 = vadd.f32 %v97, %v475
  %v477 = vpop.f32.mrb[0].mxu0
  %v478 = vadd.f32 %v93, %v477
  %v479 = vpop.f32.mrb[0].mxu0
  %v480 = vadd.f32 %v97, %v479
  %481 = vdwg.mxu0
  %482 = vmatprep.subr.bf16.mxu0 %v251
  %483 = vmatpush1.bf16.msra.mxu0 %v250
  %484 = vmatprep.subr.bf16.mxu0 %v267
  %485 = vmatpush1.bf16.msra.mxu0 %v266
  %486 = vmatprep.subr.bf16.mxu0 0
  %487 = vmatpush1.bf16.msra.mxu0 0
  %488 = vmatprep.subr.bf16.mxu0 0
  %489 = vmatpush1.bf16.msra.mxu0 0
  %490 = vmatprep.subr.bf16.mxu0 0
  %491 = vmatpush1.bf16.msra.mxu0 0
  %492 = vmatprep.subr.bf16.mxu0 0
  %493 = vmatpush1.bf16.msra.mxu0 0
  %494 = vmatprep.subr.bf16.mxu0 0
  %495 = vmatpush1.bf16.msra.mxu0 0
  %496 = vmatprep.subr.bf16.mxu0 0
  %497 = vmatpush1.bf16.msra.mxu0 0
  %498 = vmatprep.subr.bf16.mxu0 0
  %499 = vmatpush1.bf16.msra.mxu0 0
  %500 = vmatprep.subr.bf16.mxu0 0
  %501 = vmatpush1.bf16.msra.mxu0 0
  %502 = vmatprep.subr.bf16.mxu0 0
  %503 = vmatpush1.bf16.msra.mxu0 0
  %504 = vmatprep.subr.bf16.mxu0 0
  %505 = vmatpush1.bf16.msra.mxu0 0
  %506 = vmatprep.subr.bf16.mxu0 0
  %507 = vmatpush1.bf16.msra.mxu0 0
  %508 = vmatprep.subr.bf16.mxu0 0
  %509 = vmatpush1.bf16.msra.mxu0 0
  %510 = vmatprep.subr.bf16.mxu0 0
  %511 = vmatpush1.bf16.msra.mxu0 0
  %512 = vmatprep.subr.bf16.mxu0 0
  %513 = vmatpush1.bf16.msra.mxu0 0
  %514 = vmatprep.mubr.bf16.mxu0 0
  %515 = vmatmul.mubr.bf16.gmra.mrb[0].mxu0 %v308
  %v516 = vpop.f32.mrb[0].mxu0
  %v517 = vadd.f32 %v101, %v516
  %v518 = vpop.f32.mrb[0].mxu0
  %v519 = vadd.f32 %v105, %v518
  %v520 = vpop.f32.mrb[0].mxu0
  %v521 = vadd.f32 %v101, %v520
  %v522 = vpop.f32.mrb[0].mxu0
  %v523 = vadd.f32 %v105, %v522
  %524 = vdwg.mxu0
  %525 = vmatprep.subr.bf16.mxu0 %v253
  %526 = vmatpush1.bf16.msra.mxu0 %v252
  %527 = vmatprep.subr.bf16.mxu0 %v269
  %528 = vmatpush1.bf16.msra.mxu0 %v268
  %529 = vmatprep.subr.bf16.mxu0 0
  %530 = vmatpush1.bf16.msra.mxu0 0
  %531 = vmatprep.subr.bf16.mxu0 0
  %532 = vmatpush1.bf16.msra.mxu0 0
  %533 = vmatprep.subr.bf16.mxu0 0
  %534 = vmatpush1.bf16.msra.mxu0 0
  %535 = vmatprep.subr.bf16.mxu0 0
  %536 = vmatpush1.bf16.msra.mxu0 0
  %537 = vmatprep.subr.bf16.mxu0 0
  %538 = vmatpush1.bf16.msra.mxu0 0
  %539 = vmatprep.subr.bf16.mxu0 0
  %540 = vmatpush1.bf16.msra.mxu0 0
  %541 = vmatprep.subr.bf16.mxu0 0
  %542 = vmatpush1.bf16.msra.mxu0 0
  %543 = vmatprep.subr.bf16.mxu0 0
  %544 = vmatpush1.bf16.msra.mxu0 0
  %545 = vmatprep.subr.bf16.mxu0 0
  %546 = vmatpush1.bf16.msra.mxu0 0
  %547 = vmatprep.subr.bf16.mxu0 0
  %548 = vmatpush1.bf16.msra.mxu0 0
  %549 = vmatprep.subr.bf16.mxu0 0
  %550 = vmatpush1.bf16.msra.mxu0 0
  %551 = vmatprep.subr.bf16.mxu0 0
  %552 = vmatpush1.bf16.msra.mxu0 0
  %553 = vmatprep.subr.bf16.mxu0 0
  %554 = vmatpush1.bf16.msra.mxu0 0
  %555 = vmatprep.subr.bf16.mxu0 0
  %556 = vmatpush1.bf16.msra.mxu0 0
  %557 = vmatprep.mubr.bf16.mxu0 0
  %558 = vmatmul.mubr.bf16.gmra.mrb[0].mxu0 %v308
  %v559 = vpop.f32.mrb[0].mxu0
  %v560 = vadd.f32 %v109, %v559
  %v561 = vpop.f32.mrb[0].mxu0
  %v562 = vadd.f32 %v113, %v561
  %v563 = vpop.f32.mrb[0].mxu0
  %v564 = vadd.f32 %v109, %v563
  %v565 = vpop.f32.mrb[0].mxu0
  %v566 = vadd.f32 %v113, %v565
  %567 = vdwg.mxu0
  %568 = vmatprep.subr.bf16.mxu0 %v255
  %569 = vmatpush1.bf16.msra.mxu0 %v254
  %570 = vmatprep.subr.bf16.mxu0 %v271
  %571 = vmatpush1.bf16.msra.mxu0 %v270
  %572 = vmatprep.subr.bf16.mxu0 0
  %573 = vmatpush1.bf16.msra.mxu0 0
  %574 = vmatprep.subr.bf16.mxu0 0
  %575 = vmatpush1.bf16.msra.mxu0 0
  %576 = vmatprep.subr.bf16.mxu0 0
  %577 = vmatpush1.bf16.msra.mxu0 0
  %578 = vmatprep.subr.bf16.mxu0 0
  %579 = vmatpush1.bf16.msra.mxu0 0
  %580 = vmatprep.subr.bf16.mxu0 0
  %581 = vmatpush1.bf16.msra.mxu0 0
  %582 = vmatprep.subr.bf16.mxu0 0
  %583 = vmatpush1.bf16.msra.mxu0 0
  %584 = vmatprep.subr.bf16.mxu0 0
  %585 = vmatpush1.bf16.msra.mxu0 0
  %586 = vmatprep.subr.bf16.mxu0 0
  %587 = vmatpush1.bf16.msra.mxu0 0
  %588 = vmatprep.subr.bf16.mxu0 0
  %589 = vmatpush1.bf16.msra.mxu0 0
  %590 = vmatprep.subr.bf16.mxu0 0
  %591 = vmatpush1.bf16.msra.mxu0 0
  %592 = vmatprep.subr.bf16.mxu0 0
  %593 = vmatpush1.bf16.msra.mxu0 0
  %594 = vmatprep.subr.bf16.mxu0 0
  %595 = vmatpush1.bf16.msra.mxu0 0
  %596 = vmatprep.subr.bf16.mxu0 0
  %597 = vmatpush1.bf16.msra.mxu0 0
  %598 = vmatprep.subr.bf16.mxu0 0
  %599 = vmatpush1.bf16.msra.mxu0 0
  %600 = vmatprep.mubr.bf16.mxu0 0
  %601 = vmatmul.mubr.bf16.gmra.mrb[0].mxu0 %v308
  %v602 = vpop.f32.mrb[0].mxu0
  %v603 = vadd.f32 %v117, %v602
  %v604 = vpop.f32.mrb[0].mxu0
  %v605 = vadd.f32 %v121, %v604
  %v606 = vpop.f32.mrb[0].mxu0
  %v607 = vadd.f32 %v117, %v606
  %v608 = vpop.f32.mrb[0].mxu0
  %v609 = vadd.f32 %v121, %v608
  %610 = vdwg.mxu0
  %611 = vmatprep.subr.bf16.mxu0 %v257
  %612 = vmatpush1.bf16.msra.mxu0 %v256
  %613 = vmatprep.subr.bf16.mxu0 %v273
  %614 = vmatpush1.bf16.msra.mxu0 %v272
  %615 = vmatprep.subr.bf16.mxu0 0
  %616 = vmatpush1.bf16.msra.mxu0 0
  %617 = vmatprep.subr.bf16.mxu0 0
  %618 = vmatpush1.bf16.msra.mxu0 0
  %619 = vmatprep.subr.bf16.mxu0 0
  %620 = vmatpush1.bf16.msra.mxu0 0
  %621 = vmatprep.subr.bf16.mxu0 0
  %622 = vmatpush1.bf16.msra.mxu0 0
  %623 = vmatprep.subr.bf16.mxu0 0
  %624 = vmatpush1.bf16.msra.mxu0 0
  %625 = vmatprep.subr.bf16.mxu0 0
  %626 = vmatpush1.bf16.msra.mxu0 0
  %627 = vmatprep.subr.bf16.mxu0 0
  %628 = vmatpush1.bf16.msra.mxu0 0
  %629 = vmatprep.subr.bf16.mxu0 0
  %630 = vmatpush1.bf16.msra.mxu0 0
  %631 = vmatprep.subr.bf16.mxu0 0
  %632 = vmatpush1.bf16.msra.mxu0 0
  %633 = vmatprep.subr.bf16.mxu0 0
  %634 = vmatpush1.bf16.msra.mxu0 0
  %635 = vmatprep.subr.bf16.mxu0 0
  %636 = vmatpush1.bf16.msra.mxu0 0
  %637 = vmatprep.subr.bf16.mxu0 0
  %638 = vmatpush1.bf16.msra.mxu0 0
  %639 = vmatprep.subr.bf16.mxu0 0
  %640 = vmatpush1.bf16.msra.mxu0 0
  %641 = vmatprep.subr.bf16.mxu0 0
  %642 = vmatpush1.bf16.msra.mxu0 0
  %643 = vmatprep.mubr.bf16.mxu0 0
  %644 = vmatmul.mubr.bf16.gmra.mrb[0].mxu0 %v308
  %v645 = vpop.f32.mrb[0].mxu0
  %v646 = vadd.f32 %v125, %v645
  %v647 = vpop.f32.mrb[0].mxu0
  %v648 = vadd.f32 %v129, %v647
  %v649 = vpop.f32.mrb[0].mxu0
  %v650 = vadd.f32 %v125, %v649
  %v651 = vpop.f32.mrb[0].mxu0
  %v652 = vadd.f32 %v129, %v651
  %653 = vdwg.mxu0
  %v654 = vmax.f32 %v345, 0.0
  %v655 = vmax.f32 %v347, 0.0
  %v656 = vmax.f32 %v388, 0.0
  %v657 = vmax.f32 %v390, 0.0
  %v658 = vmax.f32 %v431, 0.0
  %v659 = vmax.f32 %v433, 0.0
  %v660 = vmax.f32 %v474, 0.0
  %v661 = vmax.f32 %v476, 0.0
  %v662 = vmax.f32 %v517, 0.0
  %v663 = vmax.f32 %v519, 0.0
  %v664 = vmax.f32 %v560, 0.0
  %v665 = vmax.f32 %v562, 0.0
  %v666 = vmax.f32 %v603, 0.0
  %v667 = vmax.f32 %v605, 0.0
  %v668 = vmax.f32 %v646, 0.0
  %v669 = vmax.f32 %v648, 0.0
  %v670 = vmax.f32 %v349, 0.0
  %v671 = vmax.f32 %v351, 0.0
  %v672 = vmax.f32 %v392, 0.0
  %v673 = vmax.f32 %v394, 0.0
  %v674 = vmax.f32 %v435, 0.0
  %v675 = vmax.f32 %v437, 0.0
  %v676 = vmax.f32 %v478, 0.0
  %v677 = vmax.f32 %v480, 0.0
  %v678 = vmax.f32 %v521, 0.0
  %v679 = vmax.f32 %v523, 0.0
  %v680 = vmax.f32 %v564, 0.0
  %v681 = vmax.f32 %v566, 0.0
  %v682 = vmax.f32 %v607, 0.0
  %v683 = vmax.f32 %v609, 0.0
  %v684 = vmax.f32 %v650, 0.0
  %v685 = vmax.f32 %v652, 0.0
  %v686 = vpack.c.bf16 %v670, %v654
  %v687 = vpack.c.bf16 %v671, %v655
  %v688 = vpack.c.bf16 %v672, %v656
  %v689 = vpack.c.bf16 %v673, %v657
  %v690 = vpack.c.bf16 %v674, %v658
  %v691 = vpack.c.bf16 %v675, %v659
  %v692 = vpack.c.bf16 %v676, %v660
  %v693 = vpack.c.bf16 %v677, %v661
  %v694 = vpack.c.bf16 %v678, %v662
  %v695 = vpack.c.bf16 %v679, %v663
  %v696 = vpack.c.bf16 %v680, %v664
  %v697 = vpack.c.bf16 %v681, %v665
  %v698 = vpack.c.bf16 %v682, %v666
  %v699 = vpack.c.bf16 %v683, %v667
  %v700 = vpack.c.bf16 %v684, %v668
  %v701 = vpack.c.bf16 %v685, %v669
  %v702 = vld [vmem:[%s3] sm:$0xf]
  %v703 = vld [vmem:[%s3 + $0x4] sm:$0xf]
  %v704 = vld [vmem:[%s3 + $0x8] sm:$0xf]
  %v705 = vld [vmem:[%s3 + $0xc] sm:$0xf]
  %v706 = vld [vmem:[%s3 + $0x10] sm:$0xf]
  %v707 = vld [vmem:[%s3 + $0x14] sm:$0xf]
  %v708 = vld [vmem:[%s3 + $0x18] sm:$0xf]
  %v709 = vld [vmem:[%s3 + $0x1c] sm:$0xf]
  %v710 = vld [vmem:[%s3 + $0x20] sm:$0xf]
  %v711 = vld [vmem:[%s3 + $0x24] sm:$0xf]
  %v712 = vld [vmem:[%s3 + $0x28] sm:$0xf]
  %v713 = vld [vmem:[%s3 + $0x2c] sm:$0xf]
  %v714 = vld [vmem:[%s3 + $0x30] sm:$0xf]
  %v715 = vld [vmem:[%s3 + $0x34] sm:$0xf]
  %v716 = vld [vmem:[%s3 + $0x38] sm:$0xf]
  %v717 = vld [vmem:[%s3 + $0x3c] sm:$0xf]
  %v718 = vld [vmem:[%s3 + $0x40] sm:$0xf]
  %v719 = vld [vmem:[%s3 + $0x44] sm:$0xf]
  %v720 = vld [vmem:[%s3 + $0x48] sm:$0xf]
  %v721 = vld [vmem:[%s3 + $0x4c] sm:$0xf]
  %v722 = vld [vmem:[%s3 + $0x50] sm:$0xf]
  %v723 = vld [vmem:[%s3 + $0x54] sm:$0xf]
  %v724 = vld [vmem:[%s3 + $0x58] sm:$0xf]
  %v725 = vld [vmem:[%s3 + $0x5c] sm:$0xf]
  %v726 = vld [vmem:[%s3 + $0x60] sm:$0xf]
  %v727 = vld [vmem:[%s3 + $0x64] sm:$0xf]
  %v728 = vld [vmem:[%s3 + $0x68] sm:$0xf]
  %v729 = vld [vmem:[%s3 + $0x6c] sm:$0xf]
  %v730 = vld [vmem:[%s3 + $0x70] sm:$0xf]
  %v731 = vld [vmem:[%s3 + $0x74] sm:$0xf]
  %v732 = vld [vmem:[%s3 + $0x78] sm:$0xf]
  %v733 = vld [vmem:[%s3 + $0x7c] sm:$0xf]
  %v734 = vld [vmem:[%s3 + $0x80] sm:$0xf]
  %v735 = vld [vmem:[%s3 + $0x84] sm:$0xf]
  %v736 = vld [vmem:[%s3 + $0x88] sm:$0xf]
  %v737 = vld [vmem:[%s3 + $0x8c] sm:$0xf]
  %v738 = vld [vmem:[%s3 + $0x90] sm:$0xf]
  %v739 = vld [vmem:[%s3 + $0x94] sm:$0xf]
  %v740 = vld [vmem:[%s3 + $0x98] sm:$0xf]
  %v741 = vld [vmem:[%s3 + $0x9c] sm:$0xf]
  %v742 = vld [vmem:[%s3 + $0xa0] sm:$0xf]
  %v743 = vld [vmem:[%s3 + $0xa4] sm:$0xf]
  %v744 = vld [vmem:[%s3 + $0xa8] sm:$0xf]
  %v745 = vld [vmem:[%s3 + $0xac] sm:$0xf]
  %v746 = vld [vmem:[%s3 + $0xb0] sm:$0xf]
  %v747 = vld [vmem:[%s3 + $0xb4] sm:$0xf]
  %v748 = vld [vmem:[%s3 + $0xb8] sm:$0xf]
  %v749 = vld [vmem:[%s3 + $0xbc] sm:$0xf]
  %v750 = vld [vmem:[%s3 + $0xc0] sm:$0xf]
  %v751 = vld [vmem:[%s3 + $0xc4] sm:$0xf]
  %v752 = vld [vmem:[%s3 + $0xc8] sm:$0xf]
  %v753 = vld [vmem:[%s3 + $0xcc] sm:$0xf]
  %v754 = vld [vmem:[%s3 + $0xd0] sm:$0xf]
  %v755 = vld [vmem:[%s3 + $0xd4] sm:$0xf]
  %v756 = vld [vmem:[%s3 + $0xd8] sm:$0xf]
  %v757 = vld [vmem:[%s3 + $0xdc] sm:$0xf]
  %v758 = vld [vmem:[%s3 + $0xe0] sm:$0xf]
  %v759 = vld [vmem:[%s3 + $0xe4] sm:$0xf]
  %v760 = vld [vmem:[%s3 + $0xe8] sm:$0xf]
  %v761 = vld [vmem:[%s3 + $0xec] sm:$0xf]
  %v762 = vld [vmem:[%s3 + $0xf0] sm:$0xf]
  %v763 = vld [vmem:[%s3 + $0xf4] sm:$0xf]
  %v764 = vld [vmem:[%s3 + $0xf8] sm:$0xf]
  %v765 = vld [vmem:[%s3 + $0xfc] sm:$0xf]
  %v766 = vld [vmem:[%s3 + $0x100] sm:$0xf]
  %v767 = vld [vmem:[%s3 + $0x104] sm:$0xf]
  %v768 = vld [vmem:[%s3 + $0x108] sm:$0xf]
  %v769 = vld [vmem:[%s3 + $0x10c] sm:$0xf]
  %v770 = vld [vmem:[%s3 + $0x110] sm:$0xf]
  %v771 = vld [vmem:[%s3 + $0x114] sm:$0xf]
  %v772 = vld [vmem:[%s3 + $0x118] sm:$0xf]
  %v773 = vld [vmem:[%s3 + $0x11c] sm:$0xf]
  %v774 = vld [vmem:[%s3 + $0x120] sm:$0xf]
  %v775 = vld [vmem:[%s3 + $0x124] sm:$0xf]
  %v776 = vld [vmem:[%s3 + $0x128] sm:$0xf]
  %v777 = vld [vmem:[%s3 + $0x12c] sm:$0xf]
  %v778 = vld [vmem:[%s3 + $0x130] sm:$0xf]
  %v779 = vld [vmem:[%s3 + $0x134] sm:$0xf]
  %v780 = vld [vmem:[%s3 + $0x138] sm:$0xf]
  %v781 = vld [vmem:[%s3 + $0x13c] sm:$0xf]
  %v782 = vld [vmem:[%s3 + $0x140] sm:$0xf]
  %v783 = vld [vmem:[%s3 + $0x144] sm:$0xf]
  %v784 = vld [vmem:[%s3 + $0x148] sm:$0xf]
  %v785 = vld [vmem:[%s3 + $0x14c] sm:$0xf]
  %v786 = vld [vmem:[%s3 + $0x150] sm:$0xf]
  %v787 = vld [vmem:[%s3 + $0x154] sm:$0xf]
  %v788 = vld [vmem:[%s3 + $0x158] sm:$0xf]
  %v789 = vld [vmem:[%s3 + $0x15c] sm:$0xf]
  %v790 = vld [vmem:[%s3 + $0x160] sm:$0xf]
  %v791 = vld [vmem:[%s3 + $0x164] sm:$0xf]
  %v792 = vld [vmem:[%s3 + $0x168] sm:$0xf]
  %v793 = vld [vmem:[%s3 + $0x16c] sm:$0xf]
  %v794 = vld [vmem:[%s3 + $0x170] sm:$0xf]
  %v795 = vld [vmem:[%s3 + $0x174] sm:$0xf]
  %v796 = vld [vmem:[%s3 + $0x178] sm:$0xf]
  %v797 = vld [vmem:[%s3 + $0x17c] sm:$0xf]
  %v798 = vld [vmem:[%s3 + $0x180] sm:$0xf]
  %v799 = vld [vmem:[%s3 + $0x184] sm:$0xf]
  %v800 = vld [vmem:[%s3 + $0x188] sm:$0xf]
  %v801 = vld [vmem:[%s3 + $0x18c] sm:$0xf]
  %v802 = vld [vmem:[%s3 + $0x190] sm:$0xf]
  %v803 = vld [vmem:[%s3 + $0x194] sm:$0xf]
  %v804 = vld [vmem:[%s3 + $0x198] sm:$0xf]
  %v805 = vld [vmem:[%s3 + $0x19c] sm:$0xf]
  %v806 = vld [vmem:[%s3 + $0x1a0] sm:$0xf]
  %v807 = vld [vmem:[%s3 + $0x1a4] sm:$0xf]
  %v808 = vld [vmem:[%s3 + $0x1a8] sm:$0xf]
  %v809 = vld [vmem:[%s3 + $0x1ac] sm:$0xf]
  %v810 = vld [vmem:[%s3 + $0x1b0] sm:$0xf]
  %v811 = vld [vmem:[%s3 + $0x1b4] sm:$0xf]
  %v812 = vld [vmem:[%s3 + $0x1b8] sm:$0xf]
  %v813 = vld [vmem:[%s3 + $0x1bc] sm:$0xf]
  %v814 = vld [vmem:[%s3 + $0x1c0] sm:$0xf]
  %v815 = vld [vmem:[%s3 + $0x1c4] sm:$0xf]
  %v816 = vld [vmem:[%s3 + $0x1c8] sm:$0xf]
  %v817 = vld [vmem:[%s3 + $0x1cc] sm:$0xf]
  %v818 = vld [vmem:[%s3 + $0x1d0] sm:$0xf]
  %v819 = vld [vmem:[%s3 + $0x1d4] sm:$0xf]
  %v820 = vld [vmem:[%s3 + $0x1d8] sm:$0xf]
  %v821 = vld [vmem:[%s3 + $0x1dc] sm:$0xf]
  %v822 = vld [vmem:[%s3 + $0x1e0] sm:$0xf]
  %v823 = vld [vmem:[%s3 + $0x1e4] sm:$0xf]
  %v824 = vld [vmem:[%s3 + $0x1e8] sm:$0xf]
  %v825 = vld [vmem:[%s3 + $0x1ec] sm:$0xf]
  %v826 = vld [vmem:[%s3 + $0x1f0] sm:$0xf]
  %v827 = vld [vmem:[%s3 + $0x1f4] sm:$0xf]
  %v828 = vld [vmem:[%s3 + $0x1f8] sm:$0xf]
  %v829 = vld [vmem:[%s3 + $0x1fc] sm:$0xf]
  %v830 = vld [vmem:[%s3 + $0x200] sm:$0xf]
  %v831 = vld [vmem:[%s3 + $0x204] sm:$0xf]
  %v832 = vld [vmem:[%s3 + $0x208] sm:$0xf]
  %v833 = vld [vmem:[%s3 + $0x20c] sm:$0xf]
  %v834 = vld [vmem:[%s3 + $0x210] sm:$0xf]
  %v835 = vld [vmem:[%s3 + $0x214] sm:$0xf]
  %v836 = vld [vmem:[%s3 + $0x218] sm:$0xf]
  %v837 = vld [vmem:[%s3 + $0x21c] sm:$0xf]
  %v838 = vld [vmem:[%s3 + $0x220] sm:$0xf]
  %v839 = vld [vmem:[%s3 + $0x224] sm:$0xf]
  %v840 = vld [vmem:[%s3 + $0x228] sm:$0xf]
  %v841 = vld [vmem:[%s3 + $0x22c] sm:$0xf]
  %v842 = vld [vmem:[%s3 + $0x230] sm:$0xf]
  %v843 = vld [vmem:[%s3 + $0x234] sm:$0xf]
  %v844 = vld [vmem:[%s3 + $0x238] sm:$0xf]
  %v845 = vld [vmem:[%s3 + $0x23c] sm:$0xf]
  %v846 = vld [vmem:[%s3 + $0x240] sm:$0xf]
  %v847 = vld [vmem:[%s3 + $0x244] sm:$0xf]
  %v848 = vld [vmem:[%s3 + $0x248] sm:$0xf]
  %v849 = vld [vmem:[%s3 + $0x24c] sm:$0xf]
  %v850 = vld [vmem:[%s3 + $0x250] sm:$0xf]
  %v851 = vld [vmem:[%s3 + $0x254] sm:$0xf]
  %v852 = vld [vmem:[%s3 + $0x258] sm:$0xf]
  %v853 = vld [vmem:[%s3 + $0x25c] sm:$0xf]
  %v854 = vld [vmem:[%s3 + $0x260] sm:$0xf]
  %v855 = vld [vmem:[%s3 + $0x264] sm:$0xf]
  %v856 = vld [vmem:[%s3 + $0x268] sm:$0xf]
  %v857 = vld [vmem:[%s3 + $0x26c] sm:$0xf]
  %v858 = vld [vmem:[%s3 + $0x270] sm:$0xf]
  %v859 = vld [vmem:[%s3 + $0x274] sm:$0xf]
  %v860 = vld [vmem:[%s3 + $0x278] sm:$0xf]
  %v861 = vld [vmem:[%s3 + $0x27c] sm:$0xf]
  %v862 = vld [vmem:[%s3 + $0x280] sm:$0xf]
  %v863 = vld [vmem:[%s3 + $0x284] sm:$0xf]
  %v864 = vld [vmem:[%s3 + $0x288] sm:$0xf]
  %v865 = vld [vmem:[%s3 + $0x28c] sm:$0xf]
  %v866 = vld [vmem:[%s3 + $0x290] sm:$0xf]
  %v867 = vld [vmem:[%s3 + $0x294] sm:$0xf]
  %v868 = vld [vmem:[%s3 + $0x298] sm:$0xf]
  %v869 = vld [vmem:[%s3 + $0x29c] sm:$0xf]
  %v870 = vld [vmem:[%s3 + $0x2a0] sm:$0xf]
  %v871 = vld [vmem:[%s3 + $0x2a4] sm:$0xf]
  %v872 = vld [vmem:[%s3 + $0x2a8] sm:$0xf]
  %v873 = vld [vmem:[%s3 + $0x2ac] sm:$0xf]
  %v874 = vld [vmem:[%s3 + $0x2b0] sm:$0xf]
  %v875 = vld [vmem:[%s3 + $0x2b4] sm:$0xf]
  %v876 = vld [vmem:[%s3 + $0x2b8] sm:$0xf]
  %v877 = vld [vmem:[%s3 + $0x2bc] sm:$0xf]
  %v878 = vld [vmem:[%s3 + $0x2c0] sm:$0xf]
  %v879 = vld [vmem:[%s3 + $0x2c4] sm:$0xf]
  %v880 = vld [vmem:[%s3 + $0x2c8] sm:$0xf]
  %v881 = vld [vmem:[%s3 + $0x2cc] sm:$0xf]
  %v882 = vld [vmem:[%s3 + $0x2d0] sm:$0xf]
  %v883 = vld [vmem:[%s3 + $0x2d4] sm:$0xf]
  %v884 = vld [vmem:[%s3 + $0x2d8] sm:$0xf]
  %v885 = vld [vmem:[%s3 + $0x2dc] sm:$0xf]
  %v886 = vld [vmem:[%s3 + $0x2e0] sm:$0xf]
  %v887 = vld [vmem:[%s3 + $0x2e4] sm:$0xf]
  %v888 = vld [vmem:[%s3 + $0x2e8] sm:$0xf]
  %v889 = vld [vmem:[%s3 + $0x2ec] sm:$0xf]
  %v890 = vld [vmem:[%s3 + $0x2f0] sm:$0xf]
  %v891 = vld [vmem:[%s3 + $0x2f4] sm:$0xf]
  %v892 = vld [vmem:[%s3 + $0x2f8] sm:$0xf]
  %v893 = vld [vmem:[%s3 + $0x2fc] sm:$0xf]
  %v894 = vld [vmem:[%s3 + $0x300] sm:$0xf]
  %v895 = vld [vmem:[%s3 + $0x304] sm:$0xf]
  %v896 = vld [vmem:[%s3 + $0x308] sm:$0xf]
  %v897 = vld [vmem:[%s3 + $0x30c] sm:$0xf]
  %v898 = vld [vmem:[%s3 + $0x310] sm:$0xf]
  %v899 = vld [vmem:[%s3 + $0x314] sm:$0xf]
  %v900 = vld [vmem:[%s3 + $0x318] sm:$0xf]
  %v901 = vld [vmem:[%s3 + $0x31c] sm:$0xf]
  %v902 = vld [vmem:[%s3 + $0x320] sm:$0xf]
  %v903 = vld [vmem:[%s3 + $0x324] sm:$0xf]
  %v904 = vld [vmem:[%s3 + $0x328] sm:$0xf]
  %v905 = vld [vmem:[%s3 + $0x32c] sm:$0xf]
  %v906 = vld [vmem:[%s3 + $0x330] sm:$0xf]
  %v907 = vld [vmem:[%s3 + $0x334] sm:$0xf]
  %v908 = vld [vmem:[%s3 + $0x338] sm:$0xf]
  %v909 = vld [vmem:[%s3 + $0x33c] sm:$0xf]
  %v910 = vld [vmem:[%s3 + $0x340] sm:$0xf]
  %v911 = vld [vmem:[%s3 + $0x344] sm:$0xf]
  %v912 = vld [vmem:[%s3 + $0x348] sm:$0xf]
  %v913 = vld [vmem:[%s3 + $0x34c] sm:$0xf]
  %v914 = vld [vmem:[%s3 + $0x350] sm:$0xf]
  %v915 = vld [vmem:[%s3 + $0x354] sm:$0xf]
  %v916 = vld [vmem:[%s3 + $0x358] sm:$0xf]
  %v917 = vld [vmem:[%s3 + $0x35c] sm:$0xf]
  %v918 = vld [vmem:[%s3 + $0x360] sm:$0xf]
  %v919 = vld [vmem:[%s3 + $0x364] sm:$0xf]
  %v920 = vld [vmem:[%s3 + $0x368] sm:$0xf]
  %v921 = vld [vmem:[%s3 + $0x36c] sm:$0xf]
  %v922 = vld [vmem:[%s3 + $0x370] sm:$0xf]
  %v923 = vld [vmem:[%s3 + $0x374] sm:$0xf]
  %v924 = vld [vmem:[%s3 + $0x378] sm:$0xf]
  %v925 = vld [vmem:[%s3 + $0x37c] sm:$0xf]
  %v926 = vld [vmem:[%s3 + $0x380] sm:$0xf]
  %v927 = vld [vmem:[%s3 + $0x384] sm:$0xf]
  %v928 = vld [vmem:[%s3 + $0x388] sm:$0xf]
  %v929 = vld [vmem:[%s3 + $0x38c] sm:$0xf]
  %v930 = vld [vmem:[%s3 + $0x390] sm:$0xf]
  %v931 = vld [vmem:[%s3 + $0x394] sm:$0xf]
  %v932 = vld [vmem:[%s3 + $0x398] sm:$0xf]
  %v933 = vld [vmem:[%s3 + $0x39c] sm:$0xf]
  %v934 = vld [vmem:[%s3 + $0x3a0] sm:$0xf]
  %v935 = vld [vmem:[%s3 + $0x3a4] sm:$0xf]
  %v936 = vld [vmem:[%s3 + $0x3a8] sm:$0xf]
  %v937 = vld [vmem:[%s3 + $0x3ac] sm:$0xf]
  %v938 = vld [vmem:[%s3 + $0x3b0] sm:$0xf]
  %v939 = vld [vmem:[%s3 + $0x3b4] sm:$0xf]
  %v940 = vld [vmem:[%s3 + $0x3b8] sm:$0xf]
  %v941 = vld [vmem:[%s3 + $0x3bc] sm:$0xf]
  %v942 = vld [vmem:[%s3 + $0x3c0] sm:$0xf]
  %v943 = vld [vmem:[%s3 + $0x3c4] sm:$0xf]
  %v944 = vld [vmem:[%s3 + $0x3c8] sm:$0xf]
  %v945 = vld [vmem:[%s3 + $0x3cc] sm:$0xf]
  %v946 = vld [vmem:[%s3 + $0x3d0] sm:$0xf]
  %v947 = vld [vmem:[%s3 + $0x3d4] sm:$0xf]
  %v948 = vld [vmem:[%s3 + $0x3d8] sm:$0xf]
  %v949 = vld [vmem:[%s3 + $0x3dc] sm:$0xf]
  %v950 = vld [vmem:[%s3 + $0x3e0] sm:$0xf]
  %v951 = vld [vmem:[%s3 + $0x3e4] sm:$0xf]
  %v952 = vld [vmem:[%s3 + $0x3e8] sm:$0xf]
  %v953 = vld [vmem:[%s3 + $0x3ec] sm:$0xf]
  %v954 = vld [vmem:[%s3 + $0x3f0] sm:$0xf]
  %v955 = vld [vmem:[%s3 + $0x3f4] sm:$0xf]
  %v956 = vld [vmem:[%s3 + $0x3f8] sm:$0xf]
  %v957 = vld [vmem:[%s3 + $0x3fc] sm:$0xf]
  %v958 = vld [vmem:[%s4] sm:$0x1]
  %v960 = vlaneseq
  %v961 = vshrl.u32 %v960, 7
  %v962 = vsub.s32 0, %v961
  %v963 = vrot.slane %v958, %v962
  %v1221 = vunpack.c.l.b16 %v702
  %v1222 = vunpack.c.l.b16 %v703
  %v1223 = vunpack.c.l.b16 %v704
  %v1224 = vunpack.c.l.b16 %v705
  %v1225 = vunpack.c.l.b16 %v706
  %v1226 = vunpack.c.l.b16 %v707
  %v1227 = vunpack.c.l.b16 %v708
  %v1228 = vunpack.c.l.b16 %v709
  %v1229 = vunpack.c.l.b16 %v710
  %v1230 = vunpack.c.l.b16 %v711
  %v1231 = vunpack.c.l.b16 %v712
  %v1232 = vunpack.c.l.b16 %v713
  %v1233 = vunpack.c.l.b16 %v714
  %v1234 = vunpack.c.l.b16 %v715
  %v1235 = vunpack.c.l.b16 %v716
  %v1236 = vunpack.c.l.b16 %v717
  %v1237 = vunpack.c.l.b16 %v718
  %v1238 = vunpack.c.l.b16 %v719
  %v1239 = vunpack.c.l.b16 %v720
  %v1240 = vunpack.c.l.b16 %v721
  %v1241 = vunpack.c.l.b16 %v722
  %v1242 = vunpack.c.l.b16 %v723
  %v1243 = vunpack.c.l.b16 %v724
  %v1244 = vunpack.c.l.b16 %v725
  %v1245 = vunpack.c.l.b16 %v726
  %v1246 = vunpack.c.l.b16 %v727
  %v1247 = vunpack.c.l.b16 %v728
  %v1248 = vunpack.c.l.b16 %v729
  %v1249 = vunpack.c.l.b16 %v730
  %v1250 = vunpack.c.l.b16 %v731
  %v1251 = vunpack.c.l.b16 %v732
  %v1252 = vunpack.c.l.b16 %v733
  %v1253 = vunpack.c.l.b16 %v734
  %v1254 = vunpack.c.l.b16 %v735
  %v1255 = vunpack.c.l.b16 %v736
  %v1256 = vunpack.c.l.b16 %v737
  %v1257 = vunpack.c.l.b16 %v738
  %v1258 = vunpack.c.l.b16 %v739
  %v1259 = vunpack.c.l.b16 %v740
  %v1260 = vunpack.c.l.b16 %v741
  %v1261 = vunpack.c.l.b16 %v742
  %v1262 = vunpack.c.l.b16 %v743
  %v1263 = vunpack.c.l.b16 %v744
  %v1264 = vunpack.c.l.b16 %v745
  %v1265 = vunpack.c.l.b16 %v746
  %v1266 = vunpack.c.l.b16 %v747
  %v1267 = vunpack.c.l.b16 %v748
  %v1268 = vunpack.c.l.b16 %v749
  %v1269 = vunpack.c.l.b16 %v750
  %v1270 = vunpack.c.l.b16 %v751
  %v1271 = vunpack.c.l.b16 %v752
  %v1272 = vunpack.c.l.b16 %v753
  %v1273 = vunpack.c.l.b16 %v754
  %v1274 = vunpack.c.l.b16 %v755
  %v1275 = vunpack.c.l.b16 %v756
  %v1276 = vunpack.c.l.b16 %v757
  %v1277 = vunpack.c.l.b16 %v758
  %v1278 = vunpack.c.l.b16 %v759
  %v1279 = vunpack.c.l.b16 %v760
  %v1280 = vunpack.c.l.b16 %v761
  %v1281 = vunpack.c.l.b16 %v762
  %v1282 = vunpack.c.l.b16 %v763
  %v1283 = vunpack.c.l.b16 %v764
  %v1284 = vunpack.c.l.b16 %v765
  %v1285 = vunpack.c.l.b16 %v766
  %v1286 = vunpack.c.l.b16 %v767
  %v1287 = vunpack.c.l.b16 %v768
  %v1288 = vunpack.c.l.b16 %v769
  %v1289 = vunpack.c.l.b16 %v770
  %v1290 = vunpack.c.l.b16 %v771
  %v1291 = vunpack.c.l.b16 %v772
  %v1292 = vunpack.c.l.b16 %v773
  %v1293 = vunpack.c.l.b16 %v774
  %v1294 = vunpack.c.l.b16 %v775
  %v1295 = vunpack.c.l.b16 %v776
  %v1296 = vunpack.c.l.b16 %v777
  %v1297 = vunpack.c.l.b16 %v778
  %v1298 = vunpack.c.l.b16 %v779
  %v1299 = vunpack.c.l.b16 %v780
  %v1300 = vunpack.c.l.b16 %v781
  %v1301 = vunpack.c.l.b16 %v782
  %v1302 = vunpack.c.l.b16 %v783
  %v1303 = vunpack.c.l.b16 %v784
  %v1304 = vunpack.c.l.b16 %v785
  %v1305 = vunpack.c.l.b16 %v786
  %v1306 = vunpack.c.l.b16 %v787
  %v1307 = vunpack.c.l.b16 %v788
  %v1308 = vunpack.c.l.b16 %v789
  %v1309 = vunpack.c.l.b16 %v790
  %v1310 = vunpack.c.l.b16 %v791
  %v1311 = vunpack.c.l.b16 %v792
  %v1312 = vunpack.c.l.b16 %v793
  %v1313 = vunpack.c.l.b16 %v794
  %v1314 = vunpack.c.l.b16 %v795
  %v1315 = vunpack.c.l.b16 %v796
  %v1316 = vunpack.c.l.b16 %v797
  %v1317 = vunpack.c.l.b16 %v798
  %v1318 = vunpack.c.l.b16 %v799
  %v1319 = vunpack.c.l.b16 %v800
  %v1320 = vunpack.c.l.b16 %v801
  %v1321 = vunpack.c.l.b16 %v802
  %v1322 = vunpack.c.l.b16 %v803
  %v1323 = vunpack.c.l.b16 %v804
  %v1324 = vunpack.c.l.b16 %v805
  %v1325 = vunpack.c.l.b16 %v806
  %v1326 = vunpack.c.l.b16 %v807
  %v1327 = vunpack.c.l.b16 %v808
  %v1328 = vunpack.c.l.b16 %v809
  %v1329 = vunpack.c.l.b16 %v810
  %v1330 = vunpack.c.l.b16 %v811
  %v1331 = vunpack.c.l.b16 %v812
  %v1332 = vunpack.c.l.b16 %v813
  %v1333 = vunpack.c.l.b16 %v814
  %v1334 = vunpack.c.l.b16 %v815
  %v1335 = vunpack.c.l.b16 %v816
  %v1336 = vunpack.c.l.b16 %v817
  %v1337 = vunpack.c.l.b16 %v818
  %v1338 = vunpack.c.l.b16 %v819
  %v1339 = vunpack.c.l.b16 %v820
  %v1340 = vunpack.c.l.b16 %v821
  %v1341 = vunpack.c.l.b16 %v822
  %v1342 = vunpack.c.l.b16 %v823
  %v1343 = vunpack.c.l.b16 %v824
  %v1344 = vunpack.c.l.b16 %v825
  %v1345 = vunpack.c.l.b16 %v826
  %v1346 = vunpack.c.l.b16 %v827
  %v1347 = vunpack.c.l.b16 %v828
  %v1348 = vunpack.c.l.b16 %v829
  %v1349 = vunpack.c.l.b16 %v830
  %v1350 = vunpack.c.l.b16 %v831
  %v1351 = vunpack.c.l.b16 %v832
  %v1352 = vunpack.c.l.b16 %v833
  %v1353 = vunpack.c.l.b16 %v834
  %v1354 = vunpack.c.l.b16 %v835
  %v1355 = vunpack.c.l.b16 %v836
  %v1356 = vunpack.c.l.b16 %v837
  %v1357 = vunpack.c.l.b16 %v838
  %v1358 = vunpack.c.l.b16 %v839
  %v1359 = vunpack.c.l.b16 %v840
  %v1360 = vunpack.c.l.b16 %v841
  %v1361 = vunpack.c.l.b16 %v842
  %v1362 = vunpack.c.l.b16 %v843
  %v1363 = vunpack.c.l.b16 %v844
  %v1364 = vunpack.c.l.b16 %v845
  %v1365 = vunpack.c.l.b16 %v846
  %v1366 = vunpack.c.l.b16 %v847
  %v1367 = vunpack.c.l.b16 %v848
  %v1368 = vunpack.c.l.b16 %v849
  %v1369 = vunpack.c.l.b16 %v850
  %v1370 = vunpack.c.l.b16 %v851
  %v1371 = vunpack.c.l.b16 %v852
  %v1372 = vunpack.c.l.b16 %v853
  %v1373 = vunpack.c.l.b16 %v854
  %v1374 = vunpack.c.l.b16 %v855
  %v1375 = vunpack.c.l.b16 %v856
  %v1376 = vunpack.c.l.b16 %v857
  %v1377 = vunpack.c.l.b16 %v858
  %v1378 = vunpack.c.l.b16 %v859
  %v1379 = vunpack.c.l.b16 %v860
  %v1380 = vunpack.c.l.b16 %v861
  %v1381 = vunpack.c.l.b16 %v862
  %v1382 = vunpack.c.l.b16 %v863
  %v1383 = vunpack.c.l.b16 %v864
  %v1384 = vunpack.c.l.b16 %v865
  %v1385 = vunpack.c.l.b16 %v866
  %v1386 = vunpack.c.l.b16 %v867
  %v1387 = vunpack.c.l.b16 %v868
  %v1388 = vunpack.c.l.b16 %v869
  %v1389 = vunpack.c.l.b16 %v870
  %v1390 = vunpack.c.l.b16 %v871
  %v1391 = vunpack.c.l.b16 %v872
  %v1392 = vunpack.c.l.b16 %v873
  %v1393 = vunpack.c.l.b16 %v874
  %v1394 = vunpack.c.l.b16 %v875
  %v1395 = vunpack.c.l.b16 %v876
  %v1396 = vunpack.c.l.b16 %v877
  %v1397 = vunpack.c.l.b16 %v878
  %v1398 = vunpack.c.l.b16 %v879
  %v1399 = vunpack.c.l.b16 %v880
  %v1400 = vunpack.c.l.b16 %v881
  %v1401 = vunpack.c.l.b16 %v882
  %v1402 = vunpack.c.l.b16 %v883
  %v1403 = vunpack.c.l.b16 %v884
  %v1404 = vunpack.c.l.b16 %v885
  %v1405 = vunpack.c.l.b16 %v886
  %v1406 = vunpack.c.l.b16 %v887
  %v1407 = vunpack.c.l.b16 %v888
  %v1408 = vunpack.c.l.b16 %v889
  %v1409 = vunpack.c.l.b16 %v890
  %v1410 = vunpack.c.l.b16 %v891
  %v1411 = vunpack.c.l.b16 %v892
  %v1412 = vunpack.c.l.b16 %v893
  %v1413 = vunpack.c.l.b16 %v894
  %v1414 = vunpack.c.l.b16 %v895
  %v1415 = vunpack.c.l.b16 %v896
  %v1416 = vunpack.c.l.b16 %v897
  %v1417 = vunpack.c.l.b16 %v898
  %v1418 = vunpack.c.l.b16 %v899
  %v1419 = vunpack.c.l.b16 %v900
  %v1420 = vunpack.c.l.b16 %v901
  %v1421 = vunpack.c.l.b16 %v902
  %v1422 = vunpack.c.l.b16 %v903
  %v1423 = vunpack.c.l.b16 %v904
  %v1424 = vunpack.c.l.b16 %v905
  %v1425 = vunpack.c.l.b16 %v906
  %v1426 = vunpack.c.l.b16 %v907
  %v1427 = vunpack.c.l.b16 %v908
  %v1428 = vunpack.c.l.b16 %v909
  %v1429 = vunpack.c.l.b16 %v910
  %v1430 = vunpack.c.l.b16 %v911
  %v1431 = vunpack.c.l.b16 %v912
  %v1432 = vunpack.c.l.b16 %v913
  %v1433 = vunpack.c.l.b16 %v914
  %v1434 = vunpack.c.l.b16 %v915
  %v1435 = vunpack.c.l.b16 %v916
  %v1436 = vunpack.c.l.b16 %v917
  %v1437 = vunpack.c.l.b16 %v918
  %v1438 = vunpack.c.l.b16 %v919
  %v1439 = vunpack.c.l.b16 %v920
  %v1440 = vunpack.c.l.b16 %v921
  %v1441 = vunpack.c.l.b16 %v922
  %v1442 = vunpack.c.l.b16 %v923
  %v1443 = vunpack.c.l.b16 %v924
  %v1444 = vunpack.c.l.b16 %v925
  %v1445 = vunpack.c.l.b16 %v926
  %v1446 = vunpack.c.l.b16 %v927
  %v1447 = vunpack.c.l.b16 %v928
  %v1448 = vunpack.c.l.b16 %v929
  %v1449 = vunpack.c.l.b16 %v930
  %v1450 = vunpack.c.l.b16 %v931
  %v1451 = vunpack.c.l.b16 %v932
  %v1452 = vunpack.c.l.b16 %v933
  %v1453 = vunpack.c.l.b16 %v934
  %v1454 = vunpack.c.l.b16 %v935
  %v1455 = vunpack.c.l.b16 %v936
  %v1456 = vunpack.c.l.b16 %v937
  %v1457 = vunpack.c.l.b16 %v938
  %v1458 = vunpack.c.l.b16 %v939
  %v1459 = vunpack.c.l.b16 %v940
  %v1460 = vunpack.c.l.b16 %v941
  %v1461 = vunpack.c.l.b16 %v942
  %v1462 = vunpack.c.l.b16 %v943
  %v1463 = vunpack.c.l.b16 %v944
  %v1464 = vunpack.c.l.b16 %v945
  %v1465 = vunpack.c.l.b16 %v946
  %v1466 = vunpack.c.l.b16 %v947
  %v1467 = vunpack.c.l.b16 %v948
  %v1468 = vunpack.c.l.b16 %v949
  %v1469 = vunpack.c.l.b16 %v950
  %v1470 = vunpack.c.l.b16 %v951
  %v1471 = vunpack.c.l.b16 %v952
  %v1472 = vunpack.c.l.b16 %v953
  %v1473 = vunpack.c.l.b16 %v954
  %v1474 = vunpack.c.l.b16 %v955
  %v1475 = vunpack.c.l.b16 %v956
  %v1476 = vunpack.c.l.b16 %v957
  %v1477 = vpack.c.b16 %v1222, %v1221
  %v1478 = vpack.c.b16 %v1224, %v1223
  %v1479 = vpack.c.b16 %v1226, %v1225
  %v1480 = vpack.c.b16 %v1228, %v1227
  %v1481 = vpack.c.b16 %v1230, %v1229
  %v1482 = vpack.c.b16 %v1232, %v1231
  %v1483 = vpack.c.b16 %v1234, %v1233
  %v1484 = vpack.c.b16 %v1236, %v1235
  %v1485 = vpack.c.b16 %v1238, %v1237
  %v1486 = vpack.c.b16 %v1240, %v1239
  %v1487 = vpack.c.b16 %v1242, %v1241
  %v1488 = vpack.c.b16 %v1244, %v1243
  %v1489 = vpack.c.b16 %v1246, %v1245
  %v1490 = vpack.c.b16 %v1248, %v1247
  %v1491 = vpack.c.b16 %v1250, %v1249
  %v1492 = vpack.c.b16 %v1252, %v1251
  %v1493 = vpack.c.b16 %v1254, %v1253
  %v1494 = vpack.c.b16 %v1256, %v1255
  %v1495 = vpack.c.b16 %v1258, %v1257
  %v1496 = vpack.c.b16 %v1260, %v1259
  %v1497 = vpack.c.b16 %v1262, %v1261
  %v1498 = vpack.c.b16 %v1264, %v1263
  %v1499 = vpack.c.b16 %v1266, %v1265
  %v1500 = vpack.c.b16 %v1268, %v1267
  %v1501 = vpack.c.b16 %v1270, %v1269
  %v1502 = vpack.c.b16 %v1272, %v1271
  %v1503 = vpack.c.b16 %v1274, %v1273
  %v1504 = vpack.c.b16 %v1276, %v1275
  %v1505 = vpack.c.b16 %v1278, %v1277
  %v1506 = vpack.c.b16 %v1280, %v1279
  %v1507 = vpack.c.b16 %v1282, %v1281
  %v1508 = vpack.c.b16 %v1284, %v1283
  %v1509 = vpack.c.b16 %v1286, %v1285
  %v1510 = vpack.c.b16 %v1288, %v1287
  %v1511 = vpack.c.b16 %v1290, %v1289
  %v1512 = vpack.c.b16 %v1292, %v1291
  %v1513 = vpack.c.b16 %v1294, %v1293
  %v1514 = vpack.c.b16 %v1296, %v1295
  %v1515 = vpack.c.b16 %v1298, %v1297
  %v1516 = vpack.c.b16 %v1300, %v1299
  %v1517 = vpack.c.b16 %v1302, %v1301
  %v1518 = vpack.c.b16 %v1304, %v1303
  %v1519 = vpack.c.b16 %v1306, %v1305
  %v1520 = vpack.c.b16 %v1308, %v1307
  %v1521 = vpack.c.b16 %v1310, %v1309
  %v1522 = vpack.c.b16 %v1312, %v1311
  %v1523 = vpack.c.b16 %v1314, %v1313
  %v1524 = vpack.c.b16 %v1316, %v1315
  %v1525 = vpack.c.b16 %v1318, %v1317
  %v1526 = vpack.c.b16 %v1320, %v1319
  %v1527 = vpack.c.b16 %v1322, %v1321
  %v1528 = vpack.c.b16 %v1324, %v1323
  %v1529 = vpack.c.b16 %v1326, %v1325
  %v1530 = vpack.c.b16 %v1328, %v1327
  %v1531 = vpack.c.b16 %v1330, %v1329
  %v1532 = vpack.c.b16 %v1332, %v1331
  %v1533 = vpack.c.b16 %v1334, %v1333
  %v1534 = vpack.c.b16 %v1336, %v1335
  %v1535 = vpack.c.b16 %v1338, %v1337
  %v1536 = vpack.c.b16 %v1340, %v1339
  %v1537 = vpack.c.b16 %v1342, %v1341
  %v1538 = vpack.c.b16 %v1344, %v1343
  %v1539 = vpack.c.b16 %v1346, %v1345
  %v1540 = vpack.c.b16 %v1348, %v1347
  %v1541 = vpack.c.b16 %v1350, %v1349
  %v1542 = vpack.c.b16 %v1352, %v1351
  %v1543 = vpack.c.b16 %v1354, %v1353
  %v1544 = vpack.c.b16 %v1356, %v1355
  %v1545 = vpack.c.b16 %v1358, %v1357
  %v1546 = vpack.c.b16 %v1360, %v1359
  %v1547 = vpack.c.b16 %v1362, %v1361
  %v1548 = vpack.c.b16 %v1364, %v1363
  %v1549 = vpack.c.b16 %v1366, %v1365
  %v1550 = vpack.c.b16 %v1368, %v1367
  %v1551 = vpack.c.b16 %v1370, %v1369
  %v1552 = vpack.c.b16 %v1372, %v1371
  %v1553 = vpack.c.b16 %v1374, %v1373
  %v1554 = vpack.c.b16 %v1376, %v1375
  %v1555 = vpack.c.b16 %v1378, %v1377
  %v1556 = vpack.c.b16 %v1380, %v1379
  %v1557 = vpack.c.b16 %v1382, %v1381
  %v1558 = vpack.c.b16 %v1384, %v1383
  %v1559 = vpack.c.b16 %v1386, %v1385
  %v1560 = vpack.c.b16 %v1388, %v1387
  %v1561 = vpack.c.b16 %v1390, %v1389
  %v1562 = vpack.c.b16 %v1392, %v1391
  %v1563 = vpack.c.b16 %v1394, %v1393
  %v1564 = vpack.c.b16 %v1396, %v1395
  %v1565 = vpack.c.b16 %v1398, %v1397
  %v1566 = vpack.c.b16 %v1400, %v1399
  %v1567 = vpack.c.b16 %v1402, %v1401
  %v1568 = vpack.c.b16 %v1404, %v1403
  %v1569 = vpack.c.b16 %v1406, %v1405
  %v1570 = vpack.c.b16 %v1408, %v1407
  %v1571 = vpack.c.b16 %v1410, %v1409
  %v1572 = vpack.c.b16 %v1412, %v1411
  %v1573 = vpack.c.b16 %v1414, %v1413
  %v1574 = vpack.c.b16 %v1416, %v1415
  %v1575 = vpack.c.b16 %v1418, %v1417
  %v1576 = vpack.c.b16 %v1420, %v1419
  %v1577 = vpack.c.b16 %v1422, %v1421
  %v1578 = vpack.c.b16 %v1424, %v1423
  %v1579 = vpack.c.b16 %v1426, %v1425
  %v1580 = vpack.c.b16 %v1428, %v1427
  %v1581 = vpack.c.b16 %v1430, %v1429
  %v1582 = vpack.c.b16 %v1432, %v1431
  %v1583 = vpack.c.b16 %v1434, %v1433
  %v1584 = vpack.c.b16 %v1436, %v1435
  %v1585 = vpack.c.b16 %v1438, %v1437
  %v1586 = vpack.c.b16 %v1440, %v1439
  %v1587 = vpack.c.b16 %v1442, %v1441
  %v1588 = vpack.c.b16 %v1444, %v1443
  %v1589 = vpack.c.b16 %v1446, %v1445
  %v1590 = vpack.c.b16 %v1448, %v1447
  %v1591 = vpack.c.b16 %v1450, %v1449
  %v1592 = vpack.c.b16 %v1452, %v1451
  %v1593 = vpack.c.b16 %v1454, %v1453
  %v1594 = vpack.c.b16 %v1456, %v1455
  %v1595 = vpack.c.b16 %v1458, %v1457
  %v1596 = vpack.c.b16 %v1460, %v1459
  %v1597 = vpack.c.b16 %v1462, %v1461
  %v1598 = vpack.c.b16 %v1464, %v1463
  %v1599 = vpack.c.b16 %v1466, %v1465
  %v1600 = vpack.c.b16 %v1468, %v1467
  %v1601 = vpack.c.b16 %v1470, %v1469
  %v1602 = vpack.c.b16 %v1472, %v1471
  %v1603 = vpack.c.b16 %v1474, %v1473
  %v1604 = vpack.c.b16 %v1476, %v1475
  %1733 = vmatprep.subr.bf16.mxu0 0
  %1734 = vmatpush1.bf16.msra.mxu0 %v1477
  %1735 = vmatprep.subr.bf16.mxu0 0
  %1736 = vmatpush1.bf16.msra.mxu0 %v1478
  %1737 = vmatprep.subr.bf16.mxu0 0
  %1738 = vmatpush1.bf16.msra.mxu0 %v1479
  %1739 = vmatprep.subr.bf16.mxu0 0
  %1740 = vmatpush1.bf16.msra.mxu0 %v1480
  %1741 = vmatprep.subr.bf16.mxu0 0
  %1742 = vmatpush1.bf16.msra.mxu0 %v1481
  %1743 = vmatprep.subr.bf16.mxu0 0
  %1744 = vmatpush1.bf16.msra.mxu0 %v1482
  %1745 = vmatprep.subr.bf16.mxu0 0
  %1746 = vmatpush1.bf16.msra.mxu0 %v1483
  %1747 = vmatprep.subr.bf16.mxu0 0
  %1748 = vmatpush1.bf16.msra.mxu0 %v1484
  %1749 = vmatprep.subr.bf16.mxu0 0
  %1750 = vmatpush1.bf16.msra.mxu0 %v1485
  %1751 = vmatprep.subr.bf16.mxu0 0
  %1752 = vmatpush1.bf16.msra.mxu0 %v1486
  %1753 = vmatprep.subr.bf16.mxu0 0
  %1754 = vmatpush1.bf16.msra.mxu0 %v1487
  %1755 = vmatprep.subr.bf16.mxu0 0
  %1756 = vmatpush1.bf16.msra.mxu0 %v1488
  %1757 = vmatprep.subr.bf16.mxu0 0
  %1758 = vmatpush1.bf16.msra.mxu0 %v1489
  %1759 = vmatprep.subr.bf16.mxu0 0
  %1760 = vmatpush1.bf16.msra.mxu0 %v1490
  %1761 = vmatprep.subr.bf16.mxu0 0
  %1762 = vmatpush1.bf16.msra.mxu0 %v1491
  %1763 = vmatprep.subr.bf16.mxu0 0
  %1764 = vmatpush1.bf16.msra.mxu0 %v1492
  %1765 = vmatprep.mubr.bf16.mxu0 %v687
  %1766 = vmatmul.mubr.bf16.gmra.mrb[0].mxu0 %v686
  %v1767 = vpop.f32.mrb[0].mxu0
  %v1768 = vadd.f32 %v963, %v1767
  %v1769 = vpop.f32.mrb[0].mxu0
  %v1770 = vpop.f32.mrb[0].mxu0
  %v1771 = vadd.f32 %v963, %v1770
  %v1772 = vpop.f32.mrb[0].mxu0
  %1773 = vdwg.mxu0
  %1774 = vmatprep.subr.bf16.mxu0 0
  %1775 = vmatpush1.bf16.msra.mxu0 %v1493
  %1776 = vmatprep.subr.bf16.mxu0 0
  %1777 = vmatpush1.bf16.msra.mxu0 %v1494
  %1778 = vmatprep.subr.bf16.mxu0 0
  %1779 = vmatpush1.bf16.msra.mxu0 %v1495
  %1780 = vmatprep.subr.bf16.mxu0 0
  %1781 = vmatpush1.bf16.msra.mxu0 %v1496
  %1782 = vmatprep.subr.bf16.mxu0 0
  %1783 = vmatpush1.bf16.msra.mxu0 %v1497
  %1784 = vmatprep.subr.bf16.mxu0 0
  %1785 = vmatpush1.bf16.msra.mxu0 %v1498
  %1786 = vmatprep.subr.bf16.mxu0 0
  %1787 = vmatpush1.bf16.msra.mxu0 %v1499
  %1788 = vmatprep.subr.bf16.mxu0 0
  %1789 = vmatpush1.bf16.msra.mxu0 %v1500
  %1790 = vmatprep.subr.bf16.mxu0 0
  %1791 = vmatpush1.bf16.msra.mxu0 %v1501
  %1792 = vmatprep.subr.bf16.mxu0 0
  %1793 = vmatpush1.bf16.msra.mxu0 %v1502
  %1794 = vmatprep.subr.bf16.mxu0 0
  %1795 = vmatpush1.bf16.msra.mxu0 %v1503
  %1796 = vmatprep.subr.bf16.mxu0 0
  %1797 = vmatpush1.bf16.msra.mxu0 %v1504
  %1798 = vmatprep.subr.bf16.mxu0 0
  %1799 = vmatpush1.bf16.msra.mxu0 %v1505
  %1800 = vmatprep.subr.bf16.mxu0 0
  %1801 = vmatpush1.bf16.msra.mxu0 %v1506
  %1802 = vmatprep.subr.bf16.mxu0 0
  %1803 = vmatpush1.bf16.msra.mxu0 %v1507
  %1804 = vmatprep.subr.bf16.mxu0 0
  %1805 = vmatpush1.bf16.msra.mxu0 %v1508
  %1806 = vmatprep.mubr.bf16.mxu0 %v689
  %1807 = vmatmul.mubr.bf16.gmra.mrb[0].mxu0 %v688
  %v1808 = vpop.f32.mrb[0].mxu0
  %v1809 = vadd.f32 %v1768, %v1808
  %v1810 = vpop.f32.mrb[0].mxu0
  %v1811 = vpop.f32.mrb[0].mxu0
  %v1812 = vadd.f32 %v1771, %v1811
  %v1813 = vpop.f32.mrb[0].mxu0
  %1814 = vdwg.mxu0
  %1815 = vmatprep.subr.bf16.mxu0 0
  %1816 = vmatpush1.bf16.msra.mxu0 %v1509
  %1817 = vmatprep.subr.bf16.mxu0 0
  %1818 = vmatpush1.bf16.msra.mxu0 %v1510
  %1819 = vmatprep.subr.bf16.mxu0 0
  %1820 = vmatpush1.bf16.msra.mxu0 %v1511
  %1821 = vmatprep.subr.bf16.mxu0 0
  %1822 = vmatpush1.bf16.msra.mxu0 %v1512
  %1823 = vmatprep.subr.bf16.mxu0 0
  %1824 = vmatpush1.bf16.msra.mxu0 %v1513
  %1825 = vmatprep.subr.bf16.mxu0 0
  %1826 = vmatpush1.bf16.msra.mxu0 %v1514
  %1827 = vmatprep.subr.bf16.mxu0 0
  %1828 = vmatpush1.bf16.msra.mxu0 %v1515
  %1829 = vmatprep.subr.bf16.mxu0 0
  %1830 = vmatpush1.bf16.msra.mxu0 %v1516
  %1831 = vmatprep.subr.bf16.mxu0 0
  %1832 = vmatpush1.bf16.msra.mxu0 %v1517
  %1833 = vmatprep.subr.bf16.mxu0 0
  %1834 = vmatpush1.bf16.msra.mxu0 %v1518
  %1835 = vmatprep.subr.bf16.mxu0 0
  %1836 = vmatpush1.bf16.msra.mxu0 %v1519
  %1837 = vmatprep.subr.bf16.mxu0 0
  %1838 = vmatpush1.bf16.msra.mxu0 %v1520
  %1839 = vmatprep.subr.bf16.mxu0 0
  %1840 = vmatpush1.bf16.msra.mxu0 %v1521
  %1841 = vmatprep.subr.bf16.mxu0 0
  %1842 = vmatpush1.bf16.msra.mxu0 %v1522
  %1843 = vmatprep.subr.bf16.mxu0 0
  %1844 = vmatpush1.bf16.msra.mxu0 %v1523
  %1845 = vmatprep.subr.bf16.mxu0 0
  %1846 = vmatpush1.bf16.msra.mxu0 %v1524
  %1847 = vmatprep.mubr.bf16.mxu0 %v691
  %1848 = vmatmul.mubr.bf16.gmra.mrb[0].mxu0 %v690
  %v1849 = vpop.f32.mrb[0].mxu0
  %v1850 = vadd.f32 %v1809, %v1849
  %v1851 = vpop.f32.mrb[0].mxu0
  %v1852 = vpop.f32.mrb[0].mxu0
  %v1853 = vadd.f32 %v1812, %v1852
  %v1854 = vpop.f32.mrb[0].mxu0
  %1855 = vdwg.mxu0
  %1856 = vmatprep.subr.bf16.mxu0 0
  %1857 = vmatpush1.bf16.msra.mxu0 %v1525
  %1858 = vmatprep.subr.bf16.mxu0 0
  %1859 = vmatpush1.bf16.msra.mxu0 %v1526
  %1860 = vmatprep.subr.bf16.mxu0 0
  %1861 = vmatpush1.bf16.msra.mxu0 %v1527
  %1862 = vmatprep.subr.bf16.mxu0 0
  %1863 = vmatpush1.bf16.msra.mxu0 %v1528
  %1864 = vmatprep.subr.bf16.mxu0 0
  %1865 = vmatpush1.bf16.msra.mxu0 %v1529
  %1866 = vmatprep.subr.bf16.mxu0 0
  %1867 = vmatpush1.bf16.msra.mxu0 %v1530
  %1868 = vmatprep.subr.bf16.mxu0 0
  %1869 = vmatpush1.bf16.msra.mxu0 %v1531
  %1870 = vmatprep.subr.bf16.mxu0 0
  %1871 = vmatpush1.bf16.msra.mxu0 %v1532
  %1872 = vmatprep.subr.bf16.mxu0 0
  %1873 = vmatpush1.bf16.msra.mxu0 %v1533
  %1874 = vmatprep.subr.bf16.mxu0 0
  %1875 = vmatpush1.bf16.msra.mxu0 %v1534
  %1876 = vmatprep.subr.bf16.mxu0 0
  %1877 = vmatpush1.bf16.msra.mxu0 %v1535
  %1878 = vmatprep.subr.bf16.mxu0 0
  %1879 = vmatpush1.bf16.msra.mxu0 %v1536
  %1880 = vmatprep.subr.bf16.mxu0 0
  %1881 = vmatpush1.bf16.msra.mxu0 %v1537
  %1882 = vmatprep.subr.bf16.mxu0 0
  %1883 = vmatpush1.bf16.msra.mxu0 %v1538
  %1884 = vmatprep.subr.bf16.mxu0 0
  %1885 = vmatpush1.bf16.msra.mxu0 %v1539
  %1886 = vmatprep.subr.bf16.mxu0 0
  %1887 = vmatpush1.bf16.msra.mxu0 %v1540
  %1888 = vmatprep.mubr.bf16.mxu0 %v693
  %1889 = vmatmul.mubr.bf16.gmra.mrb[0].mxu0 %v692
  %v1890 = vpop.f32.mrb[0].mxu0
  %v1891 = vadd.f32 %v1850, %v1890
  %v1892 = vpop.f32.mrb[0].mxu0
  %v1893 = vpop.f32.mrb[0].mxu0
  %v1894 = vadd.f32 %v1853, %v1893
  %v1895 = vpop.f32.mrb[0].mxu0
  %1896 = vdwg.mxu0
  %1897 = vmatprep.subr.bf16.mxu0 0
  %1898 = vmatpush1.bf16.msra.mxu0 %v1541
  %1899 = vmatprep.subr.bf16.mxu0 0
  %1900 = vmatpush1.bf16.msra.mxu0 %v1542
  %1901 = vmatprep.subr.bf16.mxu0 0
  %1902 = vmatpush1.bf16.msra.mxu0 %v1543
  %1903 = vmatprep.subr.bf16.mxu0 0
  %1904 = vmatpush1.bf16.msra.mxu0 %v1544
  %1905 = vmatprep.subr.bf16.mxu0 0
  %1906 = vmatpush1.bf16.msra.mxu0 %v1545
  %1907 = vmatprep.subr.bf16.mxu0 0
  %1908 = vmatpush1.bf16.msra.mxu0 %v1546
  %1909 = vmatprep.subr.bf16.mxu0 0
  %1910 = vmatpush1.bf16.msra.mxu0 %v1547
  %1911 = vmatprep.subr.bf16.mxu0 0
  %1912 = vmatpush1.bf16.msra.mxu0 %v1548
  %1913 = vmatprep.subr.bf16.mxu0 0
  %1914 = vmatpush1.bf16.msra.mxu0 %v1549
  %1915 = vmatprep.subr.bf16.mxu0 0
  %1916 = vmatpush1.bf16.msra.mxu0 %v1550
  %1917 = vmatprep.subr.bf16.mxu0 0
  %1918 = vmatpush1.bf16.msra.mxu0 %v1551
  %1919 = vmatprep.subr.bf16.mxu0 0
  %1920 = vmatpush1.bf16.msra.mxu0 %v1552
  %1921 = vmatprep.subr.bf16.mxu0 0
  %1922 = vmatpush1.bf16.msra.mxu0 %v1553
  %1923 = vmatprep.subr.bf16.mxu0 0
  %1924 = vmatpush1.bf16.msra.mxu0 %v1554
  %1925 = vmatprep.subr.bf16.mxu0 0
  %1926 = vmatpush1.bf16.msra.mxu0 %v1555
  %1927 = vmatprep.subr.bf16.mxu0 0
  %1928 = vmatpush1.bf16.msra.mxu0 %v1556
  %1929 = vmatprep.mubr.bf16.mxu0 %v695
  %1930 = vmatmul.mubr.bf16.gmra.mrb[0].mxu0 %v694
  %v1931 = vpop.f32.mrb[0].mxu0
  %v1932 = vadd.f32 %v1891, %v1931
  %v1933 = vpop.f32.mrb[0].mxu0
  %v1934 = vpop.f32.mrb[0].mxu0
  %v1935 = vadd.f32 %v1894, %v1934
  %v1936 = vpop.f32.mrb[0].mxu0
  %1937 = vdwg.mxu0
  %1938 = vmatprep.subr.bf16.mxu0 0
  %1939 = vmatpush1.bf16.msra.mxu0 %v1557
  %1940 = vmatprep.subr.bf16.mxu0 0
  %1941 = vmatpush1.bf16.msra.mxu0 %v1558
  %1942 = vmatprep.subr.bf16.mxu0 0
  %1943 = vmatpush1.bf16.msra.mxu0 %v1559
  %1944 = vmatprep.subr.bf16.mxu0 0
  %1945 = vmatpush1.bf16.msra.mxu0 %v1560
  %1946 = vmatprep.subr.bf16.mxu0 0
  %1947 = vmatpush1.bf16.msra.mxu0 %v1561
  %1948 = vmatprep.subr.bf16.mxu0 0
  %1949 = vmatpush1.bf16.msra.mxu0 %v1562
  %1950 = vmatprep.subr.bf16.mxu0 0
  %1951 = vmatpush1.bf16.msra.mxu0 %v1563
  %1952 = vmatprep.subr.bf16.mxu0 0
  %1953 = vmatpush1.bf16.msra.mxu0 %v1564
  %1954 = vmatprep.subr.bf16.mxu0 0
  %1955 = vmatpush1.bf16.msra.mxu0 %v1565
  %1956 = vmatprep.subr.bf16.mxu0 0
  %1957 = vmatpush1.bf16.msra.mxu0 %v1566
  %1958 = vmatprep.subr.bf16.mxu0 0
  %1959 = vmatpush1.bf16.msra.mxu0 %v1567
  %1960 = vmatprep.subr.bf16.mxu0 0
  %1961 = vmatpush1.bf16.msra.mxu0 %v1568
  %1962 = vmatprep.subr.bf16.mxu0 0
  %1963 = vmatpush1.bf16.msra.mxu0 %v1569
  %1964 = vmatprep.subr.bf16.mxu0 0
  %1965 = vmatpush1.bf16.msra.mxu0 %v1570
  %1966 = vmatprep.subr.bf16.mxu0 0
  %1967 = vmatpush1.bf16.msra.mxu0 %v1571
  %1968 = vmatprep.subr.bf16.mxu0 0
  %1969 = vmatpush1.bf16.msra.mxu0 %v1572
  %1970 = vmatprep.mubr.bf16.mxu0 %v697
  %1971 = vmatmul.mubr.bf16.gmra.mrb[0].mxu0 %v696
  %v1972 = vpop.f32.mrb[0].mxu0
  %v1973 = vadd.f32 %v1932, %v1972
  %v1974 = vpop.f32.mrb[0].mxu0
  %v1975 = vpop.f32.mrb[0].mxu0
  %v1976 = vadd.f32 %v1935, %v1975
  %v1977 = vpop.f32.mrb[0].mxu0
  %1978 = vdwg.mxu0
  %1979 = vmatprep.subr.bf16.mxu0 0
  %1980 = vmatpush1.bf16.msra.mxu0 %v1573
  %1981 = vmatprep.subr.bf16.mxu0 0
  %1982 = vmatpush1.bf16.msra.mxu0 %v1574
  %1983 = vmatprep.subr.bf16.mxu0 0
  %1984 = vmatpush1.bf16.msra.mxu0 %v1575
  %1985 = vmatprep.subr.bf16.mxu0 0
  %1986 = vmatpush1.bf16.msra.mxu0 %v1576
  %1987 = vmatprep.subr.bf16.mxu0 0
  %1988 = vmatpush1.bf16.msra.mxu0 %v1577
  %1989 = vmatprep.subr.bf16.mxu0 0
  %1990 = vmatpush1.bf16.msra.mxu0 %v1578
  %1991 = vmatprep.subr.bf16.mxu0 0
  %1992 = vmatpush1.bf16.msra.mxu0 %v1579
  %1993 = vmatprep.subr.bf16.mxu0 0
  %1994 = vmatpush1.bf16.msra.mxu0 %v1580
  %1995 = vmatprep.subr.bf16.mxu0 0
  %1996 = vmatpush1.bf16.msra.mxu0 %v1581
  %1997 = vmatprep.subr.bf16.mxu0 0
  %1998 = vmatpush1.bf16.msra.mxu0 %v1582
  %1999 = vmatprep.subr.bf16.mxu0 0
  %2000 = vmatpush1.bf16.msra.mxu0 %v1583
  %2001 = vmatprep.subr.bf16.mxu0 0
  %2002 = vmatpush1.bf16.msra.mxu0 %v1584
  %2003 = vmatprep.subr.bf16.mxu0 0
  %2004 = vmatpush1.bf16.msra.mxu0 %v1585
  %2005 = vmatprep.subr.bf16.mxu0 0
  %2006 = vmatpush1.bf16.msra.mxu0 %v1586
  %2007 = vmatprep.subr.bf16.mxu0 0
  %2008 = vmatpush1.bf16.msra.mxu0 %v1587
  %2009 = vmatprep.subr.bf16.mxu0 0
  %2010 = vmatpush1.bf16.msra.mxu0 %v1588
  %2011 = vmatprep.mubr.bf16.mxu0 %v699
  %2012 = vmatmul.mubr.bf16.gmra.mrb[0].mxu0 %v698
  %v2013 = vpop.f32.mrb[0].mxu0
  %v2014 = vadd.f32 %v1973, %v2013
  %v2015 = vpop.f32.mrb[0].mxu0
  %v2016 = vpop.f32.mrb[0].mxu0
  %v2017 = vadd.f32 %v1976, %v2016
  %v2018 = vpop.f32.mrb[0].mxu0
  %2019 = vdwg.mxu0
  %2020 = vmatprep.subr.bf16.mxu0 0
  %2021 = vmatpush1.bf16.msra.mxu0 %v1589
  %2022 = vmatprep.subr.bf16.mxu0 0
  %2023 = vmatpush1.bf16.msra.mxu0 %v1590
  %2024 = vmatprep.subr.bf16.mxu0 0
  %2025 = vmatpush1.bf16.msra.mxu0 %v1591
  %2026 = vmatprep.subr.bf16.mxu0 0
  %2027 = vmatpush1.bf16.msra.mxu0 %v1592
  %2028 = vmatprep.subr.bf16.mxu0 0
  %2029 = vmatpush1.bf16.msra.mxu0 %v1593
  %2030 = vmatprep.subr.bf16.mxu0 0
  %2031 = vmatpush1.bf16.msra.mxu0 %v1594
  %2032 = vmatprep.subr.bf16.mxu0 0
  %2033 = vmatpush1.bf16.msra.mxu0 %v1595
  %2034 = vmatprep.subr.bf16.mxu0 0
  %2035 = vmatpush1.bf16.msra.mxu0 %v1596
  %2036 = vmatprep.subr.bf16.mxu0 0
  %2037 = vmatpush1.bf16.msra.mxu0 %v1597
  %2038 = vmatprep.subr.bf16.mxu0 0
  %2039 = vmatpush1.bf16.msra.mxu0 %v1598
  %2040 = vmatprep.subr.bf16.mxu0 0
  %2041 = vmatpush1.bf16.msra.mxu0 %v1599
  %2042 = vmatprep.subr.bf16.mxu0 0
  %2043 = vmatpush1.bf16.msra.mxu0 %v1600
  %2044 = vmatprep.subr.bf16.mxu0 0
  %2045 = vmatpush1.bf16.msra.mxu0 %v1601
  %2046 = vmatprep.subr.bf16.mxu0 0
  %2047 = vmatpush1.bf16.msra.mxu0 %v1602
  %2048 = vmatprep.subr.bf16.mxu0 0
  %2049 = vmatpush1.bf16.msra.mxu0 %v1603
  %2050 = vmatprep.subr.bf16.mxu0 0
  %2051 = vmatpush1.bf16.msra.mxu0 %v1604
  %2052 = vmatprep.mubr.bf16.mxu0 %v701
  %2053 = vmatmul.mubr.bf16.gmra.mrb[0].mxu0 %v700
  %v2054 = vpop.f32.mrb[0].mxu0
  %v2055 = vadd.f32 %v2014, %v2054
  %v2056 = vpop.f32.mrb[0].mxu0
  %v2057 = vpop.f32.mrb[0].mxu0
  %v2058 = vadd.f32 %v2017, %v2057
  %v2059 = vpop.f32.mrb[0].mxu0
  %2060 = vdwg.mxu0
  %v2061 = vadd.f32 %v27, %v2055
  %v2062 = vadd.f32 %v28, %v2058
  %v2063 = vld [vmem:[%s5] sm:$0x1]
  %v2064 = vld [vmem:[%s6] sm:$0x1]
  %v2065 = vsel %vm306, %v2061, 0.0
  %2066 = vadd.xlane.f32.xlu0 %v2065
  %v2067 = vpop.xlane.xlu0 %2066
  %v2068 = vsel %vm306, %v2062, 0.0
  %2069 = vadd.xlane.f32.xlu0 %v2068
  %v2070 = vpop.xlane.xlu0 %2069
  %v2071 = vrcp.pop 32.0
  %v2072 = vmul.f32 %v2067, %v2071
  %v2073 = vmul.f32 %v2070, %v2071
  %v2074 = vsub.f32 %v2061, %v2072
  %v2075 = vsub.f32 %v2062, %v2073
  %v2076 = vmul.f32 %v2074, %v2074
  %v2077 = vmul.f32 %v2075, %v2075
  %v2078 = vsel %vm306, %v2076, 0.0
  %2079 = vadd.xlane.f32.xlu0 %v2078
  %v2080 = vpop.xlane.xlu0 %2079
  %v2081 = vsel %vm306, %v2077, 0.0
  %2082 = vadd.xlane.f32.xlu0 %v2081
  %v2083 = vpop.xlane.xlu0 %2082
  %v2084 = vmul.f32 %v2080, %v2071
  %v2085 = vmul.f32 %v2083, %v2071
  %v2086 = vadd.f32 %v2084, 1e-05
  %v2087 = vadd.f32 %v2085, 1e-05
  %v2088 = vrsqrt.pop %v2086
  %v2089 = vrsqrt.pop %v2087
  %v2090 = vmul.f32 %v2074, %v2088
  %v2091 = vmul.f32 %v2075, %v2089
  %v2093 = vlaneseq
  %v2094 = vshrl.u32 %v2093, 7
  %v2095 = vsub.s32 0, %v2094
  %v2096 = vrot.slane %v2063, %v2095
  %v2098 = vmul.f32 %v2090, %v2096
  %v2099 = vmul.f32 %v2091, %v2096
  %v2101 = vlaneseq
  %v2102 = vshrl.u32 %v2101, 7
  %v2103 = vsub.s32 0, %v2102
  %v2104 = vrot.slane %v2064, %v2103
  %v2106 = vadd.f32 %v2098, %v2104
  %v2107 = vadd.f32 %v2099, %v2104
  %2108 = vst.msk [vmem:[%s7] sm:$0xff] %vm306, %v2106
  %2109 = vst.msk [vmem:[%s7 + $0x8] sm:$0xff] %vm306, %v2107
  // Predicated region
  $region30: #{model_forward.13} parent=0 // pred_check
    _
  $region31: #{model_forward.13} parent=0 // pred_check_branch
    %2111 = sbr.rel (0) target = $region33
  $region32: #{model_forward.13} parent=0 // pred_region
    _
  $region33: #{model_forward.13} parent=0 // pred_fallthru
    _
  // Predicated region
  $region34: #{model_forward.13} parent=0 // pred_check
    _
  $region35: #{model_forward.13} parent=0 // pred_check_branch
    %2113 = sbr.rel (0) target = $region37
  $region36: #{model_forward.13} parent=0 // pred_region
    _
  $region37: #{model_forward.13} parent=0 // pred_fallthru
    _

// kernel: model_forward.18
$region0: #{model_forward.18}
  #allocation0 [shape = 'u32[]', space=smem, size = 0x4, offset = 0x4, fixed_abs, tag = 'smem constant byte address 0x4 - core index']
  #allocation1 [shape = 'u32[144,128]{1,0:T(1,128)}', space=vmem, size = 0x12000, scoped, tag = 'internal scratch']
  %s0 = inlined_call_operand.vmem [shape: f32[2,32], index: 0, kind: input, shape index: {}]
  %s1 = inlined_call_operand.vmem [shape: bf16[32,2048], index: 1, kind: input, shape index: {}]
  %s2 = inlined_call_operand.vmem [shape: f32[1,2048], index: 2, kind: input, shape index: {}]
  %s3 = inlined_call_operand.vmem [shape: bf16[2048,32], index: 3, kind: input, shape index: {}]
  %s4 = inlined_call_operand.vmem [shape: f32[1,32], index: 4, kind: input, shape index: {}]
  %s5 = inlined_call_operand.vmem [shape: f32[1,32], index: 5, kind: input, shape index: {}]
  %s6 = inlined_call_operand.vmem [shape: f32[1,32], index: 6, kind: input, shape index: {}]
  %s7 = inlined_call_operand.vmem [shape: f32[2,32], index: 7, kind: output, shape index: {}]
  %s8 = sld [smem:[#allocation0]]
  $region38: #{model_forward.18} parent=0
    _
  %s10 = ssub.s32 1, %s8
  %s11 = scalar_select 0, %s10, %s8
  // Predicated region
  $region2: #{model_forward.18} parent=0 // pred_check
    _
  $region3: #{model_forward.18} parent=0 // pred_check_branch
    %13 = sbr.rel (0) target = $region5
  $region4: #{model_forward.18} parent=0 // pred_region
    _
  $region5: #{model_forward.18} parent=0 // pred_fallthru
    _
  // Predicated region
  $region6: #{model_forward.18} parent=0 // pred_check
    _
  $region7: #{model_forward.18} parent=0 // pred_check_branch
    %15 = sbr.rel (0) target = $region9
  $region8: #{model_forward.18} parent=0 // pred_region
    _
  $region9: #{model_forward.18} parent=0 // pred_fallthru
    _
  // Predicated region
  $region10: #{model_forward.18} parent=0 // pred_check
    _
  $region11: #{model_forward.18} parent=0 // pred_check_branch
    %17 = sbr.rel (0) target = $region13
  $region12: #{model_forward.18} parent=0 // pred_region
    _
  $region13: #{model_forward.18} parent=0 // pred_fallthru
    _
  // Predicated region
  $region14: #{model_forward.18} parent=0 // pred_check
    _
  $region15: #{model_forward.18} parent=0 // pred_check_branch
    %19 = sbr.rel (0) target = $region17
  $region16: #{model_forward.18} parent=0 // pred_region
    _
  $region17: #{model_forward.18} parent=0 // pred_fallthru
    _
  // Predicated region
  $region18: #{model_forward.18} parent=0 // pred_check
    _
  $region19: #{model_forward.18} parent=0 // pred_check_branch
    %21 = sbr.rel (0) target = $region21
  $region20: #{model_forward.18} parent=0 // pred_region
    _
  $region21: #{model_forward.18} parent=0 // pred_fallthru
    _
  // Predicated region
  $region22: #{model_forward.18} parent=0 // pred_check
    _
  $region23: #{model_forward.18} parent=0 // pred_check_branch
    %23 = sbr.rel (0) target = $region25
  $region24: #{model_forward.18} parent=0 // pred_region
    _
  $region25: #{model_forward.18} parent=0 // pred_fallthru
    _
  // Predicated region
  $region26: #{model_forward.18} parent=0 // pred_check
    _
  $region27: #{model_forward.18} parent=0 // pred_check_branch
    %25 = sbr.rel (0) target = $region29
  $region28: #{model_forward.18} parent=0 // pred_region
    _
  $region29: #{model_forward.18} parent=0 // pred_fallthru
    _
  %v27 = vld [vmem:[%s0] sm:$0x3]
  %v28 = vpack.c.bf16 %v27, %v27
  %v29 = vld [vmem:[%s1] sm:$0xff]
  %v30 = vld [vmem:[%s1 + $0x8] sm:$0xff]
  %v31 = vld [vmem:[%s1 + $0x10] sm:$0xff]
  %v32 = vld [vmem:[%s1 + $0x18] sm:$0xff]
  %v33 = vld [vmem:[%s1 + $0x20] sm:$0xff]
  %v34 = vld [vmem:[%s1 + $0x28] sm:$0xff]
  %v35 = vld [vmem:[%s1 + $0x30] sm:$0xff]
  %v36 = vld [vmem:[%s1 + $0x38] sm:$0xff]
  %v37 = vld [vmem:[%s1 + $0x40] sm:$0xff]
  %v38 = vld [vmem:[%s1 + $0x48] sm:$0xff]
  %v39 = vld [vmem:[%s1 + $0x50] sm:$0xff]
  %v40 = vld [vmem:[%s1 + $0x58] sm:$0xff]
  %v41 = vld [vmem:[%s1 + $0x60] sm:$0xff]
  %v42 = vld [vmem:[%s1 + $0x68] sm:$0xff]
  %v43 = vld [vmem:[%s1 + $0x70] sm:$0xff]
  %v44 = vld [vmem:[%s1 + $0x78] sm:$0xff]
  %v45 = vld [vmem:[%s1 + $0x80] sm:$0xff]
  %v46 = vld [vmem:[%s1 + $0x88] sm:$0xff]
  %v47 = vld [vmem:[%s1 + $0x90] sm:$0xff]
  %v48 = vld [vmem:[%s1 + $0x98] sm:$0xff]
  %v49 = vld [vmem:[%s1 + $0xa0] sm:$0xff]
  %v50 = vld [vmem:[%s1 + $0xa8] sm:$0xff]
  %v51 = vld [vmem:[%s1 + $0xb0] sm:$0xff]
  %v52 = vld [vmem:[%s1 + $0xb8] sm:$0xff]
  %v53 = vld [vmem:[%s1 + $0xc0] sm:$0xff]
  %v54 = vld [vmem:[%s1 + $0xc8] sm:$0xff]
  %v55 = vld [vmem:[%s1 + $0xd0] sm:$0xff]
  %v56 = vld [vmem:[%s1 + $0xd8] sm:$0xff]
  %v57 = vld [vmem:[%s1 + $0xe0] sm:$0xff]
  %v58 = vld [vmem:[%s1 + $0xe8] sm:$0xff]
  %v59 = vld [vmem:[%s1 + $0xf0] sm:$0xff]
  %v60 = vld [vmem:[%s1 + $0xf8] sm:$0xff]
  %v61 = vld [vmem:[%s2] sm:$0xff]
  %v62 = vld [vmem:[%s2 + $0x8] sm:$0xff]
  %v65 = vlaneseq
  %v66 = vshrl.u32 %v65, 7
  %v67 = vsub.s32 0, %v66
  %v68 = vrot.slane %v61, %v67
  %v69 = vlaneseq
  %v70 = vshrl.u32 %v69, 7
  %v71 = vsub.s32 1, %v70
  %v72 = vrot.slane %v61, %v71
  %v73 = vlaneseq
  %v74 = vshrl.u32 %v73, 7
  %v75 = vsub.s32 2, %v74
  %v76 = vrot.slane %v61, %v75
  %v77 = vlaneseq
  %v78 = vshrl.u32 %v77, 7
  %v79 = vsub.s32 3, %v78
  %v80 = vrot.slane %v61, %v79
  %v81 = vlaneseq
  %v82 = vshrl.u32 %v81, 7
  %v83 = vsub.s32 4, %v82
  %v84 = vrot.slane %v61, %v83
  %v85 = vlaneseq
  %v86 = vshrl.u32 %v85, 7
  %v87 = vsub.s32 5, %v86
  %v88 = vrot.slane %v61, %v87
  %v89 = vlaneseq
  %v90 = vshrl.u32 %v89, 7
  %v91 = vsub.s32 6, %v90
  %v92 = vrot.slane %v61, %v91
  %v93 = vlaneseq
  %v94 = vshrl.u32 %v93, 7
  %v95 = vsub.s32 7, %v94
  %v96 = vrot.slane %v61, %v95
  %v97 = vlaneseq
  %v98 = vshrl.u32 %v97, 7
  %v99 = vsub.s32 0, %v98
  %v100 = vrot.slane %v62, %v99
  %v101 = vlaneseq
  %v102 = vshrl.u32 %v101, 7
  %v103 = vsub.s32 1, %v102
  %v104 = vrot.slane %v62, %v103
  %v105 = vlaneseq
  %v106 = vshrl.u32 %v105, 7
  %v107 = vsub.s32 2, %v106
  %v108 = vrot.slane %v62, %v107
  %v109 = vlaneseq
  %v110 = vshrl.u32 %v109, 7
  %v111 = vsub.s32 3, %v110
  %v112 = vrot.slane %v62, %v111
  %v113 = vlaneseq
  %v114 = vshrl.u32 %v113, 7
  %v115 = vsub.s32 4, %v114
  %v116 = vrot.slane %v62, %v115
  %v117 = vlaneseq
  %v118 = vshrl.u32 %v117, 7
  %v119 = vsub.s32 5, %v118
  %v120 = vrot.slane %v62, %v119
  %v121 = vlaneseq
  %v122 = vshrl.u32 %v121, 7
  %v123 = vsub.s32 6, %v122
  %v124 = vrot.slane %v62, %v123
  %v125 = vlaneseq
  %v126 = vshrl.u32 %v125, 7
  %v127 = vsub.s32 7, %v126
  %v128 = vrot.slane %v62, %v127
  %v177 = vunpack.c.l.b16 %v29
  %v178 = vunpack.c.h.b16 %v29
  %v179 = vunpack.c.l.b16 %v30
  %v180 = vunpack.c.h.b16 %v30
  %v181 = vunpack.c.l.b16 %v31
  %v182 = vunpack.c.h.b16 %v31
  %v183 = vunpack.c.l.b16 %v32
  %v184 = vunpack.c.h.b16 %v32
  %v185 = vunpack.c.l.b16 %v33
  %v186 = vunpack.c.h.b16 %v33
  %v187 = vunpack.c.l.b16 %v34
  %v188 = vunpack.c.h.b16 %v34
  %v189 = vunpack.c.l.b16 %v35
  %v190 = vunpack.c.h.b16 %v35
  %v191 = vunpack.c.l.b16 %v36
  %v192 = vunpack.c.h.b16 %v36
  %v193 = vunpack.c.l.b16 %v37
  %v194 = vunpack.c.h.b16 %v37
  %v195 = vunpack.c.l.b16 %v38
  %v196 = vunpack.c.h.b16 %v38
  %v197 = vunpack.c.l.b16 %v39
  %v198 = vunpack.c.h.b16 %v39
  %v199 = vunpack.c.l.b16 %v40
  %v200 = vunpack.c.h.b16 %v40
  %v201 = vunpack.c.l.b16 %v41
  %v202 = vunpack.c.h.b16 %v41
  %v203 = vunpack.c.l.b16 %v42
  %v204 = vunpack.c.h.b16 %v42
  %v205 = vunpack.c.l.b16 %v43
  %v206 = vunpack.c.h.b16 %v43
  %v207 = vunpack.c.l.b16 %v44
  %v208 = vunpack.c.h.b16 %v44
  %v209 = vunpack.c.l.b16 %v45
  %v210 = vunpack.c.h.b16 %v45
  %v211 = vunpack.c.l.b16 %v46
  %v212 = vunpack.c.h.b16 %v46
  %v213 = vunpack.c.l.b16 %v47
  %v214 = vunpack.c.h.b16 %v47
  %v215 = vunpack.c.l.b16 %v48
  %v216 = vunpack.c.h.b16 %v48
  %v217 = vunpack.c.l.b16 %v49
  %v218 = vunpack.c.h.b16 %v49
  %v219 = vunpack.c.l.b16 %v50
  %v220 = vunpack.c.h.b16 %v50
  %v221 = vunpack.c.l.b16 %v51
  %v222 = vunpack.c.h.b16 %v51
  %v223 = vunpack.c.l.b16 %v52
  %v224 = vunpack.c.h.b16 %v52
  %v225 = vunpack.c.l.b16 %v53
  %v226 = vunpack.c.h.b16 %v53
  %v227 = vunpack.c.l.b16 %v54
  %v228 = vunpack.c.h.b16 %v54
  %v229 = vunpack.c.l.b16 %v55
  %v230 = vunpack.c.h.b16 %v55
  %v231 = vunpack.c.l.b16 %v56
  %v232 = vunpack.c.h.b16 %v56
  %v233 = vunpack.c.l.b16 %v57
  %v234 = vunpack.c.h.b16 %v57
  %v235 = vunpack.c.l.b16 %v58
  %v236 = vunpack.c.h.b16 %v58
  %v237 = vunpack.c.l.b16 %v59
  %v238 = vunpack.c.h.b16 %v59
  %v239 = vunpack.c.l.b16 %v60
  %v240 = vunpack.c.h.b16 %v60
  %v241 = vpack.c.b16 %v193, %v177
  %v242 = vpack.c.b16 %v194, %v178
  %v243 = vpack.c.b16 %v195, %v179
  %v244 = vpack.c.b16 %v196, %v180
  %v245 = vpack.c.b16 %v197, %v181
  %v246 = vpack.c.b16 %v198, %v182
  %v247 = vpack.c.b16 %v199, %v183
  %v248 = vpack.c.b16 %v200, %v184
  %v249 = vpack.c.b16 %v201, %v185
  %v250 = vpack.c.b16 %v202, %v186
  %v251 = vpack.c.b16 %v203, %v187
  %v252 = vpack.c.b16 %v204, %v188
  %v253 = vpack.c.b16 %v205, %v189
  %v254 = vpack.c.b16 %v206, %v190
  %v255 = vpack.c.b16 %v207, %v191
  %v256 = vpack.c.b16 %v208, %v192
  %v257 = vpack.c.b16 %v225, %v209
  %v258 = vpack.c.b16 %v226, %v210
  %v259 = vpack.c.b16 %v227, %v211
  %v260 = vpack.c.b16 %v228, %v212
  %v261 = vpack.c.b16 %v229, %v213
  %v262 = vpack.c.b16 %v230, %v214
  %v263 = vpack.c.b16 %v231, %v215
  %v264 = vpack.c.b16 %v232, %v216
  %v265 = vpack.c.b16 %v233, %v217
  %v266 = vpack.c.b16 %v234, %v218
  %v267 = vpack.c.b16 %v235, %v219
  %v268 = vpack.c.b16 %v236, %v220
  %v269 = vpack.c.b16 %v237, %v221
  %v270 = vpack.c.b16 %v238, %v222
  %v271 = vpack.c.b16 %v239, %v223
  %v272 = vpack.c.b16 %v240, %v224
  %vm305 = vcmask 261120
  %v307 = vsel %vm305, %v28, 0
  %309 = vmatprep.subr.bf16.mxu0 %v242
  %310 = vmatpush1.bf16.msra.mxu0 %v241
  %311 = vmatprep.subr.bf16.mxu0 %v258
  %312 = vmatpush1.bf16.msra.mxu0 %v257
  %313 = vmatprep.subr.bf16.mxu0 0
  %314 = vmatpush1.bf16.msra.mxu0 0
  %315 = vmatprep.subr.bf16.mxu0 0
  %316 = vmatpush1.bf16.msra.mxu0 0
  %317 = vmatprep.subr.bf16.mxu0 0
  %318 = vmatpush1.bf16.msra.mxu0 0
  %319 = vmatprep.subr.bf16.mxu0 0
  %320 = vmatpush1.bf16.msra.mxu0 0
  %321 = vmatprep.subr.bf16.mxu0 0
  %322 = vmatpush1.bf16.msra.mxu0 0
  %323 = vmatprep.subr.bf16.mxu0 0
  %324 = vmatpush1.bf16.msra.mxu0 0
  %325 = vmatprep.subr.bf16.mxu0 0
  %326 = vmatpush1.bf16.msra.mxu0 0
  %327 = vmatprep.subr.bf16.mxu0 0
  %328 = vmatpush1.bf16.msra.mxu0 0
  %329 = vmatprep.subr.bf16.mxu0 0
  %330 = vmatpush1.bf16.msra.mxu0 0
  %331 = vmatprep.subr.bf16.mxu0 0
  %332 = vmatpush1.bf16.msra.mxu0 0
  %333 = vmatprep.subr.bf16.mxu0 0
  %334 = vmatpush1.bf16.msra.mxu0 0
  %335 = vmatprep.subr.bf16.mxu0 0
  %336 = vmatpush1.bf16.msra.mxu0 0
  %337 = vmatprep.subr.bf16.mxu0 0
  %338 = vmatpush1.bf16.msra.mxu0 0
  %339 = vmatprep.subr.bf16.mxu0 0
  %340 = vmatpush1.bf16.msra.mxu0 0
  %341 = vmatprep.mubr.bf16.mxu0 0
  %342 = vmatmul.mubr.bf16.gmra.mrb[0].mxu0 %v307
  %v343 = vpop.f32.mrb[0].mxu0
  %v344 = vadd.f32 %v68, %v343
  %v345 = vpop.f32.mrb[0].mxu0
  %v346 = vadd.f32 %v72, %v345
  %v347 = vpop.f32.mrb[0].mxu0
  %v348 = vpop.f32.mrb[0].mxu0
  %349 = vdwg.mxu0
  %350 = vmatprep.subr.bf16.mxu0 %v244
  %351 = vmatpush1.bf16.msra.mxu0 %v243
  %352 = vmatprep.subr.bf16.mxu0 %v260
  %353 = vmatpush1.bf16.msra.mxu0 %v259
  %354 = vmatprep.subr.bf16.mxu0 0
  %355 = vmatpush1.bf16.msra.mxu0 0
  %356 = vmatprep.subr.bf16.mxu0 0
  %357 = vmatpush1.bf16.msra.mxu0 0
  %358 = vmatprep.subr.bf16.mxu0 0
  %359 = vmatpush1.bf16.msra.mxu0 0
  %360 = vmatprep.subr.bf16.mxu0 0
  %361 = vmatpush1.bf16.msra.mxu0 0
  %362 = vmatprep.subr.bf16.mxu0 0
  %363 = vmatpush1.bf16.msra.mxu0 0
  %364 = vmatprep.subr.bf16.mxu0 0
  %365 = vmatpush1.bf16.msra.mxu0 0
  %366 = vmatprep.subr.bf16.mxu0 0
  %367 = vmatpush1.bf16.msra.mxu0 0
  %368 = vmatprep.subr.bf16.mxu0 0
  %369 = vmatpush1.bf16.msra.mxu0 0
  %370 = vmatprep.subr.bf16.mxu0 0
  %371 = vmatpush1.bf16.msra.mxu0 0
  %372 = vmatprep.subr.bf16.mxu0 0
  %373 = vmatpush1.bf16.msra.mxu0 0
  %374 = vmatprep.subr.bf16.mxu0 0
  %375 = vmatpush1.bf16.msra.mxu0 0
  %376 = vmatprep.subr.bf16.mxu0 0
  %377 = vmatpush1.bf16.msra.mxu0 0
  %378 = vmatprep.subr.bf16.mxu0 0
  %379 = vmatpush1.bf16.msra.mxu0 0
  %380 = vmatprep.subr.bf16.mxu0 0
  %381 = vmatpush1.bf16.msra.mxu0 0
  %382 = vmatprep.mubr.bf16.mxu0 0
  %383 = vmatmul.mubr.bf16.gmra.mrb[0].mxu0 %v307
  %v384 = vpop.f32.mrb[0].mxu0
  %v385 = vadd.f32 %v76, %v384
  %v386 = vpop.f32.mrb[0].mxu0
  %v387 = vadd.f32 %v80, %v386
  %v388 = vpop.f32.mrb[0].mxu0
  %v389 = vpop.f32.mrb[0].mxu0
  %390 = vdwg.mxu0
  %391 = vmatprep.subr.bf16.mxu0 %v246
  %392 = vmatpush1.bf16.msra.mxu0 %v245
  %393 = vmatprep.subr.bf16.mxu0 %v262
  %394 = vmatpush1.bf16.msra.mxu0 %v261
  %395 = vmatprep.subr.bf16.mxu0 0
  %396 = vmatpush1.bf16.msra.mxu0 0
  %397 = vmatprep.subr.bf16.mxu0 0
  %398 = vmatpush1.bf16.msra.mxu0 0
  %399 = vmatprep.subr.bf16.mxu0 0
  %400 = vmatpush1.bf16.msra.mxu0 0
  %401 = vmatprep.subr.bf16.mxu0 0
  %402 = vmatpush1.bf16.msra.mxu0 0
  %403 = vmatprep.subr.bf16.mxu0 0
  %404 = vmatpush1.bf16.msra.mxu0 0
  %405 = vmatprep.subr.bf16.mxu0 0
  %406 = vmatpush1.bf16.msra.mxu0 0
  %407 = vmatprep.subr.bf16.mxu0 0
  %408 = vmatpush1.bf16.msra.mxu0 0
  %409 = vmatprep.subr.bf16.mxu0 0
  %410 = vmatpush1.bf16.msra.mxu0 0
  %411 = vmatprep.subr.bf16.mxu0 0
  %412 = vmatpush1.bf16.msra.mxu0 0
  %413 = vmatprep.subr.bf16.mxu0 0
  %414 = vmatpush1.bf16.msra.mxu0 0
  %415 = vmatprep.subr.bf16.mxu0 0
  %416 = vmatpush1.bf16.msra.mxu0 0
  %417 = vmatprep.subr.bf16.mxu0 0
  %418 = vmatpush1.bf16.msra.mxu0 0
  %419 = vmatprep.subr.bf16.mxu0 0
  %420 = vmatpush1.bf16.msra.mxu0 0
  %421 = vmatprep.subr.bf16.mxu0 0
  %422 = vmatpush1.bf16.msra.mxu0 0
  %423 = vmatprep.mubr.bf16.mxu0 0
  %424 = vmatmul.mubr.bf16.gmra.mrb[0].mxu0 %v307
  %v425 = vpop.f32.mrb[0].mxu0
  %v426 = vadd.f32 %v84, %v425
  %v427 = vpop.f32.mrb[0].mxu0
  %v428 = vadd.f32 %v88, %v427
  %v429 = vpop.f32.mrb[0].mxu0
  %v430 = vpop.f32.mrb[0].mxu0
  %431 = vdwg.mxu0
  %432 = vmatprep.subr.bf16.mxu0 %v248
  %433 = vmatpush1.bf16.msra.mxu0 %v247
  %434 = vmatprep.subr.bf16.mxu0 %v264
  %435 = vmatpush1.bf16.msra.mxu0 %v263
  %436 = vmatprep.subr.bf16.mxu0 0
  %437 = vmatpush1.bf16.msra.mxu0 0
  %438 = vmatprep.subr.bf16.mxu0 0
  %439 = vmatpush1.bf16.msra.mxu0 0
  %440 = vmatprep.subr.bf16.mxu0 0
  %441 = vmatpush1.bf16.msra.mxu0 0
  %442 = vmatprep.subr.bf16.mxu0 0
  %443 = vmatpush1.bf16.msra.mxu0 0
  %444 = vmatprep.subr.bf16.mxu0 0
  %445 = vmatpush1.bf16.msra.mxu0 0
  %446 = vmatprep.subr.bf16.mxu0 0
  %447 = vmatpush1.bf16.msra.mxu0 0
  %448 = vmatprep.subr.bf16.mxu0 0
  %449 = vmatpush1.bf16.msra.mxu0 0
  %450 = vmatprep.subr.bf16.mxu0 0
  %451 = vmatpush1.bf16.msra.mxu0 0
  %452 = vmatprep.subr.bf16.mxu0 0
  %453 = vmatpush1.bf16.msra.mxu0 0
  %454 = vmatprep.subr.bf16.mxu0 0
  %455 = vmatpush1.bf16.msra.mxu0 0
  %456 = vmatprep.subr.bf16.mxu0 0
  %457 = vmatpush1.bf16.msra.mxu0 0
  %458 = vmatprep.subr.bf16.mxu0 0
  %459 = vmatpush1.bf16.msra.mxu0 0
  %460 = vmatprep.subr.bf16.mxu0 0
  %461 = vmatpush1.bf16.msra.mxu0 0
  %462 = vmatprep.subr.bf16.mxu0 0
  %463 = vmatpush1.bf16.msra.mxu0 0
  %464 = vmatprep.mubr.bf16.mxu0 0
  %465 = vmatmul.mubr.bf16.gmra.mrb[0].mxu0 %v307
  %v466 = vpop.f32.mrb[0].mxu0
  %v467 = vadd.f32 %v92, %v466
  %v468 = vpop.f32.mrb[0].mxu0
  %v469 = vadd.f32 %v96, %v468
  %v470 = vpop.f32.mrb[0].mxu0
  %v471 = vpop.f32.mrb[0].mxu0
  %472 = vdwg.mxu0
  %473 = vmatprep.subr.bf16.mxu0 %v250
  %474 = vmatpush1.bf16.msra.mxu0 %v249
  %475 = vmatprep.subr.bf16.mxu0 %v266
  %476 = vmatpush1.bf16.msra.mxu0 %v265
  %477 = vmatprep.subr.bf16.mxu0 0
  %478 = vmatpush1.bf16.msra.mxu0 0
  %479 = vmatprep.subr.bf16.mxu0 0
  %480 = vmatpush1.bf16.msra.mxu0 0
  %481 = vmatprep.subr.bf16.mxu0 0
  %482 = vmatpush1.bf16.msra.mxu0 0
  %483 = vmatprep.subr.bf16.mxu0 0
  %484 = vmatpush1.bf16.msra.mxu0 0
  %485 = vmatprep.subr.bf16.mxu0 0
  %486 = vmatpush1.bf16.msra.mxu0 0
  %487 = vmatprep.subr.bf16.mxu0 0
  %488 = vmatpush1.bf16.msra.mxu0 0
  %489 = vmatprep.subr.bf16.mxu0 0
  %490 = vmatpush1.bf16.msra.mxu0 0
  %491 = vmatprep.subr.bf16.mxu0 0
  %492 = vmatpush1.bf16.msra.mxu0 0
  %493 = vmatprep.subr.bf16.mxu0 0
  %494 = vmatpush1.bf16.msra.mxu0 0
  %495 = vmatprep.subr.bf16.mxu0 0
  %496 = vmatpush1.bf16.msra.mxu0 0
  %497 = vmatprep.subr.bf16.mxu0 0
  %498 = vmatpush1.bf16.msra.mxu0 0
  %499 = vmatprep.subr.bf16.mxu0 0
  %500 = vmatpush1.bf16.msra.mxu0 0
  %501 = vmatprep.subr.bf16.mxu0 0
  %502 = vmatpush1.bf16.msra.mxu0 0
  %503 = vmatprep.subr.bf16.mxu0 0
  %504 = vmatpush1.bf16.msra.mxu0 0
  %505 = vmatprep.mubr.bf16.mxu0 0
  %506 = vmatmul.mubr.bf16.gmra.mrb[0].mxu0 %v307
  %v507 = vpop.f32.mrb[0].mxu0
  %v508 = vadd.f32 %v100, %v507
  %v509 = vpop.f32.mrb[0].mxu0
  %v510 = vadd.f32 %v104, %v509
  %v511 = vpop.f32.mrb[0].mxu0
  %v512 = vpop.f32.mrb[0].mxu0
  %513 = vdwg.mxu0
  %514 = vmatprep.subr.bf16.mxu0 %v252
  %515 = vmatpush1.bf16.msra.mxu0 %v251
  %516 = vmatprep.subr.bf16.mxu0 %v268
  %517 = vmatpush1.bf16.msra.mxu0 %v267
  %518 = vmatprep.subr.bf16.mxu0 0
  %519 = vmatpush1.bf16.msra.mxu0 0
  %520 = vmatprep.subr.bf16.mxu0 0
  %521 = vmatpush1.bf16.msra.mxu0 0
  %522 = vmatprep.subr.bf16.mxu0 0
  %523 = vmatpush1.bf16.msra.mxu0 0
  %524 = vmatprep.subr.bf16.mxu0 0
  %525 = vmatpush1.bf16.msra.mxu0 0
  %526 = vmatprep.subr.bf16.mxu0 0
  %527 = vmatpush1.bf16.msra.mxu0 0
  %528 = vmatprep.subr.bf16.mxu0 0
  %529 = vmatpush1.bf16.msra.mxu0 0
  %530 = vmatprep.subr.bf16.mxu0 0
  %531 = vmatpush1.bf16.msra.mxu0 0
  %532 = vmatprep.subr.bf16.mxu0 0
  %533 = vmatpush1.bf16.msra.mxu0 0
  %534 = vmatprep.subr.bf16.mxu0 0
  %535 = vmatpush1.bf16.msra.mxu0 0
  %536 = vmatprep.subr.bf16.mxu0 0
  %537 = vmatpush1.bf16.msra.mxu0 0
  %538 = vmatprep.subr.bf16.mxu0 0
  %539 = vmatpush1.bf16.msra.mxu0 0
  %540 = vmatprep.subr.bf16.mxu0 0
  %541 = vmatpush1.bf16.msra.mxu0 0
  %542 = vmatprep.subr.bf16.mxu0 0
  %543 = vmatpush1.bf16.msra.mxu0 0
  %544 = vmatprep.subr.bf16.mxu0 0
  %545 = vmatpush1.bf16.msra.mxu0 0
  %546 = vmatprep.mubr.bf16.mxu0 0
  %547 = vmatmul.mubr.bf16.gmra.mrb[0].mxu0 %v307
  %v548 = vpop.f32.mrb[0].mxu0
  %v549 = vadd.f32 %v108, %v548
  %v550 = vpop.f32.mrb[0].mxu0
  %v551 = vadd.f32 %v112, %v550
  %v552 = vpop.f32.mrb[0].mxu0
  %v553 = vpop.f32.mrb[0].mxu0
  %554 = vdwg.mxu0
  %555 = vmatprep.subr.bf16.mxu0 %v254
  %556 = vmatpush1.bf16.msra.mxu0 %v253
  %557 = vmatprep.subr.bf16.mxu0 %v270
  %558 = vmatpush1.bf16.msra.mxu0 %v269
  %559 = vmatprep.subr.bf16.mxu0 0
  %560 = vmatpush1.bf16.msra.mxu0 0
  %561 = vmatprep.subr.bf16.mxu0 0
  %562 = vmatpush1.bf16.msra.mxu0 0
  %563 = vmatprep.subr.bf16.mxu0 0
  %564 = vmatpush1.bf16.msra.mxu0 0
  %565 = vmatprep.subr.bf16.mxu0 0
  %566 = vmatpush1.bf16.msra.mxu0 0
  %567 = vmatprep.subr.bf16.mxu0 0
  %568 = vmatpush1.bf16.msra.mxu0 0
  %569 = vmatprep.subr.bf16.mxu0 0
  %570 = vmatpush1.bf16.msra.mxu0 0
  %571 = vmatprep.subr.bf16.mxu0 0
  %572 = vmatpush1.bf16.msra.mxu0 0
  %573 = vmatprep.subr.bf16.mxu0 0
  %574 = vmatpush1.bf16.msra.mxu0 0
  %575 = vmatprep.subr.bf16.mxu0 0
  %576 = vmatpush1.bf16.msra.mxu0 0
  %577 = vmatprep.subr.bf16.mxu0 0
  %578 = vmatpush1.bf16.msra.mxu0 0
  %579 = vmatprep.subr.bf16.mxu0 0
  %580 = vmatpush1.bf16.msra.mxu0 0
  %581 = vmatprep.subr.bf16.mxu0 0
  %582 = vmatpush1.bf16.msra.mxu0 0
  %583 = vmatprep.subr.bf16.mxu0 0
  %584 = vmatpush1.bf16.msra.mxu0 0
  %585 = vmatprep.subr.bf16.mxu0 0
  %586 = vmatpush1.bf16.msra.mxu0 0
  %587 = vmatprep.mubr.bf16.mxu0 0
  %588 = vmatmul.mubr.bf16.gmra.mrb[0].mxu0 %v307
  %v589 = vpop.f32.mrb[0].mxu0
  %v590 = vadd.f32 %v116, %v589
  %v591 = vpop.f32.mrb[0].mxu0
  %v592 = vadd.f32 %v120, %v591
  %v593 = vpop.f32.mrb[0].mxu0
  %v594 = vpop.f32.mrb[0].mxu0
  %595 = vdwg.mxu0
  %596 = vmatprep.subr.bf16.mxu0 %v256
  %597 = vmatpush1.bf16.msra.mxu0 %v255
  %598 = vmatprep.subr.bf16.mxu0 %v272
  %599 = vmatpush1.bf16.msra.mxu0 %v271
  %600 = vmatprep.subr.bf16.mxu0 0
  %601 = vmatpush1.bf16.msra.mxu0 0
  %602 = vmatprep.subr.bf16.mxu0 0
  %603 = vmatpush1.bf16.msra.mxu0 0
  %604 = vmatprep.subr.bf16.mxu0 0
  %605 = vmatpush1.bf16.msra.mxu0 0
  %606 = vmatprep.subr.bf16.mxu0 0
  %607 = vmatpush1.bf16.msra.mxu0 0
  %608 = vmatprep.subr.bf16.mxu0 0
  %609 = vmatpush1.bf16.msra.mxu0 0
  %610 = vmatprep.subr.bf16.mxu0 0
  %611 = vmatpush1.bf16.msra.mxu0 0
  %612 = vmatprep.subr.bf16.mxu0 0
  %613 = vmatpush1.bf16.msra.mxu0 0
  %614 = vmatprep.subr.bf16.mxu0 0
  %615 = vmatpush1.bf16.msra.mxu0 0
  %616 = vmatprep.subr.bf16.mxu0 0
  %617 = vmatpush1.bf16.msra.mxu0 0
  %618 = vmatprep.subr.bf16.mxu0 0
  %619 = vmatpush1.bf16.msra.mxu0 0
  %620 = vmatprep.subr.bf16.mxu0 0
  %621 = vmatpush1.bf16.msra.mxu0 0
  %622 = vmatprep.subr.bf16.mxu0 0
  %623 = vmatpush1.bf16.msra.mxu0 0
  %624 = vmatprep.subr.bf16.mxu0 0
  %625 = vmatpush1.bf16.msra.mxu0 0
  %626 = vmatprep.subr.bf16.mxu0 0
  %627 = vmatpush1.bf16.msra.mxu0 0
  %628 = vmatprep.mubr.bf16.mxu0 0
  %629 = vmatmul.mubr.bf16.gmra.mrb[0].mxu0 %v307
  %v630 = vpop.f32.mrb[0].mxu0
  %v631 = vadd.f32 %v124, %v630
  %v632 = vpop.f32.mrb[0].mxu0
  %v633 = vadd.f32 %v128, %v632
  %v634 = vpop.f32.mrb[0].mxu0
  %v635 = vpop.f32.mrb[0].mxu0
  %636 = vdwg.mxu0
  %v637 = vmax.f32 %v344, 0.0
  %v638 = vmax.f32 %v346, 0.0
  %v639 = vmax.f32 %v385, 0.0
  %v640 = vmax.f32 %v387, 0.0
  %v641 = vmax.f32 %v426, 0.0
  %v642 = vmax.f32 %v428, 0.0
  %v643 = vmax.f32 %v467, 0.0
  %v644 = vmax.f32 %v469, 0.0
  %v645 = vmax.f32 %v508, 0.0
  %v646 = vmax.f32 %v510, 0.0
  %v647 = vmax.f32 %v549, 0.0
  %v648 = vmax.f32 %v551, 0.0
  %v649 = vmax.f32 %v590, 0.0
  %v650 = vmax.f32 %v592, 0.0
  %v651 = vmax.f32 %v631, 0.0
  %v652 = vmax.f32 %v633, 0.0
  %v653 = vpack.c.bf16 %v637, %v637
  %v654 = vpack.c.bf16 %v638, %v638
  %v655 = vpack.c.bf16 %v639, %v639
  %v656 = vpack.c.bf16 %v640, %v640
  %v657 = vpack.c.bf16 %v641, %v641
  %v658 = vpack.c.bf16 %v642, %v642
  %v659 = vpack.c.bf16 %v643, %v643
  %v660 = vpack.c.bf16 %v644, %v644
  %v661 = vpack.c.bf16 %v645, %v645
  %v662 = vpack.c.bf16 %v646, %v646
  %v663 = vpack.c.bf16 %v647, %v647
  %v664 = vpack.c.bf16 %v648, %v648
  %v665 = vpack.c.bf16 %v649, %v649
  %v666 = vpack.c.bf16 %v650, %v650
  %v667 = vpack.c.bf16 %v651, %v651
  %v668 = vpack.c.bf16 %v652, %v652
  %v669 = vld [vmem:[%s3] sm:$0xf]
  %v670 = vld [vmem:[%s3 + $0x4] sm:$0xf]
  %v671 = vld [vmem:[%s3 + $0x8] sm:$0xf]
  %v672 = vld [vmem:[%s3 + $0xc] sm:$0xf]
  %v673 = vld [vmem:[%s3 + $0x10] sm:$0xf]
  %v674 = vld [vmem:[%s3 + $0x14] sm:$0xf]
  %v675 = vld [vmem:[%s3 + $0x18] sm:$0xf]
  %v676 = vld [vmem:[%s3 + $0x1c] sm:$0xf]
  %v677 = vld [vmem:[%s3 + $0x20] sm:$0xf]
  %v678 = vld [vmem:[%s3 + $0x24] sm:$0xf]
  %v679 = vld [vmem:[%s3 + $0x28] sm:$0xf]
  %v680 = vld [vmem:[%s3 + $0x2c] sm:$0xf]
  %v681 = vld [vmem:[%s3 + $0x30] sm:$0xf]
  %v682 = vld [vmem:[%s3 + $0x34] sm:$0xf]
  %v683 = vld [vmem:[%s3 + $0x38] sm:$0xf]
  %v684 = vld [vmem:[%s3 + $0x3c] sm:$0xf]
  %v685 = vld [vmem:[%s3 + $0x40] sm:$0xf]
  %v686 = vld [vmem:[%s3 + $0x44] sm:$0xf]
  %v687 = vld [vmem:[%s3 + $0x48] sm:$0xf]
  %v688 = vld [vmem:[%s3 + $0x4c] sm:$0xf]
  %v689 = vld [vmem:[%s3 + $0x50] sm:$0xf]
  %v690 = vld [vmem:[%s3 + $0x54] sm:$0xf]
  %v691 = vld [vmem:[%s3 + $0x58] sm:$0xf]
  %v692 = vld [vmem:[%s3 + $0x5c] sm:$0xf]
  %v693 = vld [vmem:[%s3 + $0x60] sm:$0xf]
  %v694 = vld [vmem:[%s3 + $0x64] sm:$0xf]
  %v695 = vld [vmem:[%s3 + $0x68] sm:$0xf]
  %v696 = vld [vmem:[%s3 + $0x6c] sm:$0xf]
  %v697 = vld [vmem:[%s3 + $0x70] sm:$0xf]
  %v698 = vld [vmem:[%s3 + $0x74] sm:$0xf]
  %v699 = vld [vmem:[%s3 + $0x78] sm:$0xf]
  %v700 = vld [vmem:[%s3 + $0x7c] sm:$0xf]
  %v701 = vld [vmem:[%s3 + $0x80] sm:$0xf]
  %v702 = vld [vmem:[%s3 + $0x84] sm:$0xf]
  %v703 = vld [vmem:[%s3 + $0x88] sm:$0xf]
  %v704 = vld [vmem:[%s3 + $0x8c] sm:$0xf]
  %v705 = vld [vmem:[%s3 + $0x90] sm:$0xf]
  %v706 = vld [vmem:[%s3 + $0x94] sm:$0xf]
  %v707 = vld [vmem:[%s3 + $0x98] sm:$0xf]
  %v708 = vld [vmem:[%s3 + $0x9c] sm:$0xf]
  %v709 = vld [vmem:[%s3 + $0xa0] sm:$0xf]
  %v710 = vld [vmem:[%s3 + $0xa4] sm:$0xf]
  %v711 = vld [vmem:[%s3 + $0xa8] sm:$0xf]
  %v712 = vld [vmem:[%s3 + $0xac] sm:$0xf]
  %v713 = vld [vmem:[%s3 + $0xb0] sm:$0xf]
  %v714 = vld [vmem:[%s3 + $0xb4] sm:$0xf]
  %v715 = vld [vmem:[%s3 + $0xb8] sm:$0xf]
  %v716 = vld [vmem:[%s3 + $0xbc] sm:$0xf]
  %v717 = vld [vmem:[%s3 + $0xc0] sm:$0xf]
  %v718 = vld [vmem:[%s3 + $0xc4] sm:$0xf]
  %v719 = vld [vmem:[%s3 + $0xc8] sm:$0xf]
  %v720 = vld [vmem:[%s3 + $0xcc] sm:$0xf]
  %v721 = vld [vmem:[%s3 + $0xd0] sm:$0xf]
  %v722 = vld [vmem:[%s3 + $0xd4] sm:$0xf]
  %v723 = vld [vmem:[%s3 + $0xd8] sm:$0xf]
  %v724 = vld [vmem:[%s3 + $0xdc] sm:$0xf]
  %v725 = vld [vmem:[%s3 + $0xe0] sm:$0xf]
  %v726 = vld [vmem:[%s3 + $0xe4] sm:$0xf]
  %v727 = vld [vmem:[%s3 + $0xe8] sm:$0xf]
  %v728 = vld [vmem:[%s3 + $0xec] sm:$0xf]
  %v729 = vld [vmem:[%s3 + $0xf0] sm:$0xf]
  %v730 = vld [vmem:[%s3 + $0xf4] sm:$0xf]
  %v731 = vld [vmem:[%s3 + $0xf8] sm:$0xf]
  %v732 = vld [vmem:[%s3 + $0xfc] sm:$0xf]
  %v733 = vld [vmem:[%s3 + $0x100] sm:$0xf]
  %v734 = vld [vmem:[%s3 + $0x104] sm:$0xf]
  %v735 = vld [vmem:[%s3 + $0x108] sm:$0xf]
  %v736 = vld [vmem:[%s3 + $0x10c] sm:$0xf]
  %v737 = vld [vmem:[%s3 + $0x110] sm:$0xf]
  %v738 = vld [vmem:[%s3 + $0x114] sm:$0xf]
  %v739 = vld [vmem:[%s3 + $0x118] sm:$0xf]
  %v740 = vld [vmem:[%s3 + $0x11c] sm:$0xf]
  %v741 = vld [vmem:[%s3 + $0x120] sm:$0xf]
  %v742 = vld [vmem:[%s3 + $0x124] sm:$0xf]
  %v743 = vld [vmem:[%s3 + $0x128] sm:$0xf]
  %v744 = vld [vmem:[%s3 + $0x12c] sm:$0xf]
  %v745 = vld [vmem:[%s3 + $0x130] sm:$0xf]
  %v746 = vld [vmem:[%s3 + $0x134] sm:$0xf]
  %v747 = vld [vmem:[%s3 + $0x138] sm:$0xf]
  %v748 = vld [vmem:[%s3 + $0x13c] sm:$0xf]
  %v749 = vld [vmem:[%s3 + $0x140] sm:$0xf]
  %v750 = vld [vmem:[%s3 + $0x144] sm:$0xf]
  %v751 = vld [vmem:[%s3 + $0x148] sm:$0xf]
  %v752 = vld [vmem:[%s3 + $0x14c] sm:$0xf]
  %v753 = vld [vmem:[%s3 + $0x150] sm:$0xf]
  %v754 = vld [vmem:[%s3 + $0x154] sm:$0xf]
  %v755 = vld [vmem:[%s3 + $0x158] sm:$0xf]
  %v756 = vld [vmem:[%s3 + $0x15c] sm:$0xf]
  %v757 = vld [vmem:[%s3 + $0x160] sm:$0xf]
  %v758 = vld [vmem:[%s3 + $0x164] sm:$0xf]
  %v759 = vld [vmem:[%s3 + $0x168] sm:$0xf]
  %v760 = vld [vmem:[%s3 + $0x16c] sm:$0xf]
  %v761 = vld [vmem:[%s3 + $0x170] sm:$0xf]
  %v762 = vld [vmem:[%s3 + $0x174] sm:$0xf]
  %v763 = vld [vmem:[%s3 + $0x178] sm:$0xf]
  %v764 = vld [vmem:[%s3 + $0x17c] sm:$0xf]
  %v765 = vld [vmem:[%s3 + $0x180] sm:$0xf]
  %v766 = vld [vmem:[%s3 + $0x184] sm:$0xf]
  %v767 = vld [vmem:[%s3 + $0x188] sm:$0xf]
  %v768 = vld [vmem:[%s3 + $0x18c] sm:$0xf]
  %v769 = vld [vmem:[%s3 + $0x190] sm:$0xf]
  %v770 = vld [vmem:[%s3 + $0x194] sm:$0xf]
  %v771 = vld [vmem:[%s3 + $0x198] sm:$0xf]
  %v772 = vld [vmem:[%s3 + $0x19c] sm:$0xf]
  %v773 = vld [vmem:[%s3 + $0x1a0] sm:$0xf]
  %v774 = vld [vmem:[%s3 + $0x1a4] sm:$0xf]
  %v775 = vld [vmem:[%s3 + $0x1a8] sm:$0xf]
  %v776 = vld [vmem:[%s3 + $0x1ac] sm:$0xf]
  %v777 = vld [vmem:[%s3 + $0x1b0] sm:$0xf]
  %v778 = vld [vmem:[%s3 + $0x1b4] sm:$0xf]
  %v779 = vld [vmem:[%s3 + $0x1b8] sm:$0xf]
  %v780 = vld [vmem:[%s3 + $0x1bc] sm:$0xf]
  %v781 = vld [vmem:[%s3 + $0x1c0] sm:$0xf]
  %v782 = vld [vmem:[%s3 + $0x1c4] sm:$0xf]
  %v783 = vld [vmem:[%s3 + $0x1c8] sm:$0xf]
  %v784 = vld [vmem:[%s3 + $0x1cc] sm:$0xf]
  %v785 = vld [vmem:[%s3 + $0x1d0] sm:$0xf]
  %v786 = vld [vmem:[%s3 + $0x1d4] sm:$0xf]
  %v787 = vld [vmem:[%s3 + $0x1d8] sm:$0xf]
  %v788 = vld [vmem:[%s3 + $0x1dc] sm:$0xf]
  %v789 = vld [vmem:[%s3 + $0x1e0] sm:$0xf]
  %v790 = vld [vmem:[%s3 + $0x1e4] sm:$0xf]
  %v791 = vld [vmem:[%s3 + $0x1e8] sm:$0xf]
  %v792 = vld [vmem:[%s3 + $0x1ec] sm:$0xf]
  %v793 = vld [vmem:[%s3 + $0x1f0] sm:$0xf]
  %v794 = vld [vmem:[%s3 + $0x1f4] sm:$0xf]
  %v795 = vld [vmem:[%s3 + $0x1f8] sm:$0xf]
  %v796 = vld [vmem:[%s3 + $0x1fc] sm:$0xf]
  %v797 = vld [vmem:[%s3 + $0x200] sm:$0xf]
  %v798 = vld [vmem:[%s3 + $0x204] sm:$0xf]
  %v799 = vld [vmem:[%s3 + $0x208] sm:$0xf]
  %v800 = vld [vmem:[%s3 + $0x20c] sm:$0xf]
  %v801 = vld [vmem:[%s3 + $0x210] sm:$0xf]
  %v802 = vld [vmem:[%s3 + $0x214] sm:$0xf]
  %v803 = vld [vmem:[%s3 + $0x218] sm:$0xf]
  %v804 = vld [vmem:[%s3 + $0x21c] sm:$0xf]
  %v805 = vld [vmem:[%s3 + $0x220] sm:$0xf]
  %v806 = vld [vmem:[%s3 + $0x224] sm:$0xf]
  %v807 = vld [vmem:[%s3 + $0x228] sm:$0xf]
  %v808 = vld [vmem:[%s3 + $0x22c] sm:$0xf]
  %v809 = vld [vmem:[%s3 + $0x230] sm:$0xf]
  %v810 = vld [vmem:[%s3 + $0x234] sm:$0xf]
  %v811 = vld [vmem:[%s3 + $0x238] sm:$0xf]
  %v812 = vld [vmem:[%s3 + $0x23c] sm:$0xf]
  %v813 = vld [vmem:[%s3 + $0x240] sm:$0xf]
  %v814 = vld [vmem:[%s3 + $0x244] sm:$0xf]
  %v815 = vld [vmem:[%s3 + $0x248] sm:$0xf]
  %v816 = vld [vmem:[%s3 + $0x24c] sm:$0xf]
  %v817 = vld [vmem:[%s3 + $0x250] sm:$0xf]
  %v818 = vld [vmem:[%s3 + $0x254] sm:$0xf]
  %v819 = vld [vmem:[%s3 + $0x258] sm:$0xf]
  %v820 = vld [vmem:[%s3 + $0x25c] sm:$0xf]
  %v821 = vld [vmem:[%s3 + $0x260] sm:$0xf]
  %v822 = vld [vmem:[%s3 + $0x264] sm:$0xf]
  %v823 = vld [vmem:[%s3 + $0x268] sm:$0xf]
  %v824 = vld [vmem:[%s3 + $0x26c] sm:$0xf]
  %v825 = vld [vmem:[%s3 + $0x270] sm:$0xf]
  %v826 = vld [vmem:[%s3 + $0x274] sm:$0xf]
  %v827 = vld [vmem:[%s3 + $0x278] sm:$0xf]
  %v828 = vld [vmem:[%s3 + $0x27c] sm:$0xf]
  %v829 = vld [vmem:[%s3 + $0x280] sm:$0xf]
  %v830 = vld [vmem:[%s3 + $0x284] sm:$0xf]
  %v831 = vld [vmem:[%s3 + $0x288] sm:$0xf]
  %v832 = vld [vmem:[%s3 + $0x28c] sm:$0xf]
  %v833 = vld [vmem:[%s3 + $0x290] sm:$0xf]
  %v834 = vld [vmem:[%s3 + $0x294] sm:$0xf]
  %v835 = vld [vmem:[%s3 + $0x298] sm:$0xf]
  %v836 = vld [vmem:[%s3 + $0x29c] sm:$0xf]
  %v837 = vld [vmem:[%s3 + $0x2a0] sm:$0xf]
  %v838 = vld [vmem:[%s3 + $0x2a4] sm:$0xf]
  %v839 = vld [vmem:[%s3 + $0x2a8] sm:$0xf]
  %v840 = vld [vmem:[%s3 + $0x2ac] sm:$0xf]
  %v841 = vld [vmem:[%s3 + $0x2b0] sm:$0xf]
  %v842 = vld [vmem:[%s3 + $0x2b4] sm:$0xf]
  %v843 = vld [vmem:[%s3 + $0x2b8] sm:$0xf]
  %v844 = vld [vmem:[%s3 + $0x2bc] sm:$0xf]
  %v845 = vld [vmem:[%s3 + $0x2c0] sm:$0xf]
  %v846 = vld [vmem:[%s3 + $0x2c4] sm:$0xf]
  %v847 = vld [vmem:[%s3 + $0x2c8] sm:$0xf]
  %v848 = vld [vmem:[%s3 + $0x2cc] sm:$0xf]
  %v849 = vld [vmem:[%s3 + $0x2d0] sm:$0xf]
  %v850 = vld [vmem:[%s3 + $0x2d4] sm:$0xf]
  %v851 = vld [vmem:[%s3 + $0x2d8] sm:$0xf]
  %v852 = vld [vmem:[%s3 + $0x2dc] sm:$0xf]
  %v853 = vld [vmem:[%s3 + $0x2e0] sm:$0xf]
  %v854 = vld [vmem:[%s3 + $0x2e4] sm:$0xf]
  %v855 = vld [vmem:[%s3 + $0x2e8] sm:$0xf]
  %v856 = vld [vmem:[%s3 + $0x2ec] sm:$0xf]
  %v857 = vld [vmem:[%s3 + $0x2f0] sm:$0xf]
  %v858 = vld [vmem:[%s3 + $0x2f4] sm:$0xf]
  %v859 = vld [vmem:[%s3 + $0x2f8] sm:$0xf]
  %v860 = vld [vmem:[%s3 + $0x2fc] sm:$0xf]
  %v861 = vld [vmem:[%s3 + $0x300] sm:$0xf]
  %v862 = vld [vmem:[%s3 + $0x304] sm:$0xf]
  %v863 = vld [vmem:[%s3 + $0x308] sm:$0xf]
  %v864 = vld [vmem:[%s3 + $0x30c] sm:$0xf]
  %v865 = vld [vmem:[%s3 + $0x310] sm:$0xf]
  %v866 = vld [vmem:[%s3 + $0x314] sm:$0xf]
  %v867 = vld [vmem:[%s3 + $0x318] sm:$0xf]
  %v868 = vld [vmem:[%s3 + $0x31c] sm:$0xf]
  %v869 = vld [vmem:[%s3 + $0x320] sm:$0xf]
  %v870 = vld [vmem:[%s3 + $0x324] sm:$0xf]
  %v871 = vld [vmem:[%s3 + $0x328] sm:$0xf]
  %v872 = vld [vmem:[%s3 + $0x32c] sm:$0xf]
  %v873 = vld [vmem:[%s3 + $0x330] sm:$0xf]
  %v874 = vld [vmem:[%s3 + $0x334] sm:$0xf]
  %v875 = vld [vmem:[%s3 + $0x338] sm:$0xf]
  %v876 = vld [vmem:[%s3 + $0x33c] sm:$0xf]
  %v877 = vld [vmem:[%s3 + $0x340] sm:$0xf]
  %v878 = vld [vmem:[%s3 + $0x344] sm:$0xf]
  %v879 = vld [vmem:[%s3 + $0x348] sm:$0xf]
  %v880 = vld [vmem:[%s3 + $0x34c] sm:$0xf]
  %v881 = vld [vmem:[%s3 + $0x350] sm:$0xf]
  %v882 = vld [vmem:[%s3 + $0x354] sm:$0xf]
  %v883 = vld [vmem:[%s3 + $0x358] sm:$0xf]
  %v884 = vld [vmem:[%s3 + $0x35c] sm:$0xf]
  %v885 = vld [vmem:[%s3 + $0x360] sm:$0xf]
  %v886 = vld [vmem:[%s3 + $0x364] sm:$0xf]
  %v887 = vld [vmem:[%s3 + $0x368] sm:$0xf]
  %v888 = vld [vmem:[%s3 + $0x36c] sm:$0xf]
  %v889 = vld [vmem:[%s3 + $0x370] sm:$0xf]
  %v890 = vld [vmem:[%s3 + $0x374] sm:$0xf]
  %v891 = vld [vmem:[%s3 + $0x378] sm:$0xf]
  %v892 = vld [vmem:[%s3 + $0x37c] sm:$0xf]
  %v893 = vld [vmem:[%s3 + $0x380] sm:$0xf]
  %v894 = vld [vmem:[%s3 + $0x384] sm:$0xf]
  %v895 = vld [vmem:[%s3 + $0x388] sm:$0xf]
  %v896 = vld [vmem:[%s3 + $0x38c] sm:$0xf]
  %v897 = vld [vmem:[%s3 + $0x390] sm:$0xf]
  %v898 = vld [vmem:[%s3 + $0x394] sm:$0xf]
  %v899 = vld [vmem:[%s3 + $0x398] sm:$0xf]
  %v900 = vld [vmem:[%s3 + $0x39c] sm:$0xf]
  %v901 = vld [vmem:[%s3 + $0x3a0] sm:$0xf]
  %v902 = vld [vmem:[%s3 + $0x3a4] sm:$0xf]
  %v903 = vld [vmem:[%s3 + $0x3a8] sm:$0xf]
  %v904 = vld [vmem:[%s3 + $0x3ac] sm:$0xf]
  %v905 = vld [vmem:[%s3 + $0x3b0] sm:$0xf]
  %v906 = vld [vmem:[%s3 + $0x3b4] sm:$0xf]
  %v907 = vld [vmem:[%s3 + $0x3b8] sm:$0xf]
  %v908 = vld [vmem:[%s3 + $0x3bc] sm:$0xf]
  %v909 = vld [vmem:[%s3 + $0x3c0] sm:$0xf]
  %v910 = vld [vmem:[%s3 + $0x3c4] sm:$0xf]
  %v911 = vld [vmem:[%s3 + $0x3c8] sm:$0xf]
  %v912 = vld [vmem:[%s3 + $0x3cc] sm:$0xf]
  %v913 = vld [vmem:[%s3 + $0x3d0] sm:$0xf]
  %v914 = vld [vmem:[%s3 + $0x3d4] sm:$0xf]
  %v915 = vld [vmem:[%s3 + $0x3d8] sm:$0xf]
  %v916 = vld [vmem:[%s3 + $0x3dc] sm:$0xf]
  %v917 = vld [vmem:[%s3 + $0x3e0] sm:$0xf]
  %v918 = vld [vmem:[%s3 + $0x3e4] sm:$0xf]
  %v919 = vld [vmem:[%s3 + $0x3e8] sm:$0xf]
  %v920 = vld [vmem:[%s3 + $0x3ec] sm:$0xf]
  %v921 = vld [vmem:[%s3 + $0x3f0] sm:$0xf]
  %v922 = vld [vmem:[%s3 + $0x3f4] sm:$0xf]
  %v923 = vld [vmem:[%s3 + $0x3f8] sm:$0xf]
  %v924 = vld [vmem:[%s3 + $0x3fc] sm:$0xf]
  %v925 = vld [vmem:[%s4] sm:$0x1]
  %v927 = vlaneseq
  %v928 = vshrl.u32 %v927, 7
  %v929 = vsub.s32 0, %v928
  %v930 = vrot.slane %v925, %v929
  %v1188 = vunpack.c.l.b16 %v669
  %v1189 = vunpack.c.l.b16 %v670
  %v1190 = vunpack.c.l.b16 %v671
  %v1191 = vunpack.c.l.b16 %v672
  %v1192 = vunpack.c.l.b16 %v673
  %v1193 = vunpack.c.l.b16 %v674
  %v1194 = vunpack.c.l.b16 %v675
  %v1195 = vunpack.c.l.b16 %v676
  %v1196 = vunpack.c.l.b16 %v677
  %v1197 = vunpack.c.l.b16 %v678
  %v1198 = vunpack.c.l.b16 %v679
  %v1199 = vunpack.c.l.b16 %v680
  %v1200 = vunpack.c.l.b16 %v681
  %v1201 = vunpack.c.l.b16 %v682
  %v1202 = vunpack.c.l.b16 %v683
  %v1203 = vunpack.c.l.b16 %v684
  %v1204 = vunpack.c.l.b16 %v685
  %v1205 = vunpack.c.l.b16 %v686
  %v1206 = vunpack.c.l.b16 %v687
  %v1207 = vunpack.c.l.b16 %v688
  %v1208 = vunpack.c.l.b16 %v689
  %v1209 = vunpack.c.l.b16 %v690
  %v1210 = vunpack.c.l.b16 %v691
  %v1211 = vunpack.c.l.b16 %v692
  %v1212 = vunpack.c.l.b16 %v693
  %v1213 = vunpack.c.l.b16 %v694
  %v1214 = vunpack.c.l.b16 %v695
  %v1215 = vunpack.c.l.b16 %v696
  %v1216 = vunpack.c.l.b16 %v697
  %v1217 = vunpack.c.l.b16 %v698
  %v1218 = vunpack.c.l.b16 %v699
  %v1219 = vunpack.c.l.b16 %v700
  %v1220 = vunpack.c.l.b16 %v701
  %v1221 = vunpack.c.l.b16 %v702
  %v1222 = vunpack.c.l.b16 %v703
  %v1223 = vunpack.c.l.b16 %v704
  %v1224 = vunpack.c.l.b16 %v705
  %v1225 = vunpack.c.l.b16 %v706
  %v1226 = vunpack.c.l.b16 %v707
  %v1227 = vunpack.c.l.b16 %v708
  %v1228 = vunpack.c.l.b16 %v709
  %v1229 = vunpack.c.l.b16 %v710
  %v1230 = vunpack.c.l.b16 %v711
  %v1231 = vunpack.c.l.b16 %v712
  %v1232 = vunpack.c.l.b16 %v713
  %v1233 = vunpack.c.l.b16 %v714
  %v1234 = vunpack.c.l.b16 %v715
  %v1235 = vunpack.c.l.b16 %v716
  %v1236 = vunpack.c.l.b16 %v717
  %v1237 = vunpack.c.l.b16 %v718
  %v1238 = vunpack.c.l.b16 %v719
  %v1239 = vunpack.c.l.b16 %v720
  %v1240 = vunpack.c.l.b16 %v721
  %v1241 = vunpack.c.l.b16 %v722
  %v1242 = vunpack.c.l.b16 %v723
  %v1243 = vunpack.c.l.b16 %v724
  %v1244 = vunpack.c.l.b16 %v725
  %v1245 = vunpack.c.l.b16 %v726
  %v1246 = vunpack.c.l.b16 %v727
  %v1247 = vunpack.c.l.b16 %v728
  %v1248 = vunpack.c.l.b16 %v729
  %v1249 = vunpack.c.l.b16 %v730
  %v1250 = vunpack.c.l.b16 %v731
  %v1251 = vunpack.c.l.b16 %v732
  %v1252 = vunpack.c.l.b16 %v733
  %v1253 = vunpack.c.l.b16 %v734
  %v1254 = vunpack.c.l.b16 %v735
  %v1255 = vunpack.c.l.b16 %v736
  %v1256 = vunpack.c.l.b16 %v737
  %v1257 = vunpack.c.l.b16 %v738
  %v1258 = vunpack.c.l.b16 %v739
  %v1259 = vunpack.c.l.b16 %v740
  %v1260 = vunpack.c.l.b16 %v741
  %v1261 = vunpack.c.l.b16 %v742
  %v1262 = vunpack.c.l.b16 %v743
  %v1263 = vunpack.c.l.b16 %v744
  %v1264 = vunpack.c.l.b16 %v745
  %v1265 = vunpack.c.l.b16 %v746
  %v1266 = vunpack.c.l.b16 %v747
  %v1267 = vunpack.c.l.b16 %v748
  %v1268 = vunpack.c.l.b16 %v749
  %v1269 = vunpack.c.l.b16 %v750
  %v1270 = vunpack.c.l.b16 %v751
  %v1271 = vunpack.c.l.b16 %v752
  %v1272 = vunpack.c.l.b16 %v753
  %v1273 = vunpack.c.l.b16 %v754
  %v1274 = vunpack.c.l.b16 %v755
  %v1275 = vunpack.c.l.b16 %v756
  %v1276 = vunpack.c.l.b16 %v757
  %v1277 = vunpack.c.l.b16 %v758
  %v1278 = vunpack.c.l.b16 %v759
  %v1279 = vunpack.c.l.b16 %v760
  %v1280 = vunpack.c.l.b16 %v761
  %v1281 = vunpack.c.l.b16 %v762
  %v1282 = vunpack.c.l.b16 %v763
  %v1283 = vunpack.c.l.b16 %v764
  %v1284 = vunpack.c.l.b16 %v765
  %v1285 = vunpack.c.l.b16 %v766
  %v1286 = vunpack.c.l.b16 %v767
  %v1287 = vunpack.c.l.b16 %v768
  %v1288 = vunpack.c.l.b16 %v769
  %v1289 = vunpack.c.l.b16 %v770
  %v1290 = vunpack.c.l.b16 %v771
  %v1291 = vunpack.c.l.b16 %v772
  %v1292 = vunpack.c.l.b16 %v773
  %v1293 = vunpack.c.l.b16 %v774
  %v1294 = vunpack.c.l.b16 %v775
  %v1295 = vunpack.c.l.b16 %v776
  %v1296 = vunpack.c.l.b16 %v777
  %v1297 = vunpack.c.l.b16 %v778
  %v1298 = vunpack.c.l.b16 %v779
  %v1299 = vunpack.c.l.b16 %v780
  %v1300 = vunpack.c.l.b16 %v781
  %v1301 = vunpack.c.l.b16 %v782
  %v1302 = vunpack.c.l.b16 %v783
  %v1303 = vunpack.c.l.b16 %v784
  %v1304 = vunpack.c.l.b16 %v785
  %v1305 = vunpack.c.l.b16 %v786
  %v1306 = vunpack.c.l.b16 %v787
  %v1307 = vunpack.c.l.b16 %v788
  %v1308 = vunpack.c.l.b16 %v789
  %v1309 = vunpack.c.l.b16 %v790
  %v1310 = vunpack.c.l.b16 %v791
  %v1311 = vunpack.c.l.b16 %v792
  %v1312 = vunpack.c.l.b16 %v793
  %v1313 = vunpack.c.l.b16 %v794
  %v1314 = vunpack.c.l.b16 %v795
  %v1315 = vunpack.c.l.b16 %v796
  %v1316 = vunpack.c.l.b16 %v797
  %v1317 = vunpack.c.l.b16 %v798
  %v1318 = vunpack.c.l.b16 %v799
  %v1319 = vunpack.c.l.b16 %v800
  %v1320 = vunpack.c.l.b16 %v801
  %v1321 = vunpack.c.l.b16 %v802
  %v1322 = vunpack.c.l.b16 %v803
  %v1323 = vunpack.c.l.b16 %v804
  %v1324 = vunpack.c.l.b16 %v805
  %v1325 = vunpack.c.l.b16 %v806
  %v1326 = vunpack.c.l.b16 %v807
  %v1327 = vunpack.c.l.b16 %v808
  %v1328 = vunpack.c.l.b16 %v809
  %v1329 = vunpack.c.l.b16 %v810
  %v1330 = vunpack.c.l.b16 %v811
  %v1331 = vunpack.c.l.b16 %v812
  %v1332 = vunpack.c.l.b16 %v813
  %v1333 = vunpack.c.l.b16 %v814
  %v1334 = vunpack.c.l.b16 %v815
  %v1335 = vunpack.c.l.b16 %v816
  %v1336 = vunpack.c.l.b16 %v817
  %v1337 = vunpack.c.l.b16 %v818
  %v1338 = vunpack.c.l.b16 %v819
  %v1339 = vunpack.c.l.b16 %v820
  %v1340 = vunpack.c.l.b16 %v821
  %v1341 = vunpack.c.l.b16 %v822
  %v1342 = vunpack.c.l.b16 %v823
  %v1343 = vunpack.c.l.b16 %v824
  %v1344 = vunpack.c.l.b16 %v825
  %v1345 = vunpack.c.l.b16 %v826
  %v1346 = vunpack.c.l.b16 %v827
  %v1347 = vunpack.c.l.b16 %v828
  %v1348 = vunpack.c.l.b16 %v829
  %v1349 = vunpack.c.l.b16 %v830
  %v1350 = vunpack.c.l.b16 %v831
  %v1351 = vunpack.c.l.b16 %v832
  %v1352 = vunpack.c.l.b16 %v833
  %v1353 = vunpack.c.l.b16 %v834
  %v1354 = vunpack.c.l.b16 %v835
  %v1355 = vunpack.c.l.b16 %v836
  %v1356 = vunpack.c.l.b16 %v837
  %v1357 = vunpack.c.l.b16 %v838
  %v1358 = vunpack.c.l.b16 %v839
  %v1359 = vunpack.c.l.b16 %v840
  %v1360 = vunpack.c.l.b16 %v841
  %v1361 = vunpack.c.l.b16 %v842
  %v1362 = vunpack.c.l.b16 %v843
  %v1363 = vunpack.c.l.b16 %v844
  %v1364 = vunpack.c.l.b16 %v845
  %v1365 = vunpack.c.l.b16 %v846
  %v1366 = vunpack.c.l.b16 %v847
  %v1367 = vunpack.c.l.b16 %v848
  %v1368 = vunpack.c.l.b16 %v849
  %v1369 = vunpack.c.l.b16 %v850
  %v1370 = vunpack.c.l.b16 %v851
  %v1371 = vunpack.c.l.b16 %v852
  %v1372 = vunpack.c.l.b16 %v853
  %v1373 = vunpack.c.l.b16 %v854
  %v1374 = vunpack.c.l.b16 %v855
  %v1375 = vunpack.c.l.b16 %v856
  %v1376 = vunpack.c.l.b16 %v857
  %v1377 = vunpack.c.l.b16 %v858
  %v1378 = vunpack.c.l.b16 %v859
  %v1379 = vunpack.c.l.b16 %v860
  %v1380 = vunpack.c.l.b16 %v861
  %v1381 = vunpack.c.l.b16 %v862
  %v1382 = vunpack.c.l.b16 %v863
  %v1383 = vunpack.c.l.b16 %v864
  %v1384 = vunpack.c.l.b16 %v865
  %v1385 = vunpack.c.l.b16 %v866
  %v1386 = vunpack.c.l.b16 %v867
  %v1387 = vunpack.c.l.b16 %v868
  %v1388 = vunpack.c.l.b16 %v869
  %v1389 = vunpack.c.l.b16 %v870
  %v1390 = vunpack.c.l.b16 %v871
  %v1391 = vunpack.c.l.b16 %v872
  %v1392 = vunpack.c.l.b16 %v873
  %v1393 = vunpack.c.l.b16 %v874
  %v1394 = vunpack.c.l.b16 %v875
  %v1395 = vunpack.c.l.b16 %v876
  %v1396 = vunpack.c.l.b16 %v877
  %v1397 = vunpack.c.l.b16 %v878
  %v1398 = vunpack.c.l.b16 %v879
  %v1399 = vunpack.c.l.b16 %v880
  %v1400 = vunpack.c.l.b16 %v881
  %v1401 = vunpack.c.l.b16 %v882
  %v1402 = vunpack.c.l.b16 %v883
  %v1403 = vunpack.c.l.b16 %v884
  %v1404 = vunpack.c.l.b16 %v885
  %v1405 = vunpack.c.l.b16 %v886
  %v1406 = vunpack.c.l.b16 %v887
  %v1407 = vunpack.c.l.b16 %v888
  %v1408 = vunpack.c.l.b16 %v889
  %v1409 = vunpack.c.l.b16 %v890
  %v1410 = vunpack.c.l.b16 %v891
  %v1411 = vunpack.c.l.b16 %v892
  %v1412 = vunpack.c.l.b16 %v893
  %v1413 = vunpack.c.l.b16 %v894
  %v1414 = vunpack.c.l.b16 %v895
  %v1415 = vunpack.c.l.b16 %v896
  %v1416 = vunpack.c.l.b16 %v897
  %v1417 = vunpack.c.l.b16 %v898
  %v1418 = vunpack.c.l.b16 %v899
  %v1419 = vunpack.c.l.b16 %v900
  %v1420 = vunpack.c.l.b16 %v901
  %v1421 = vunpack.c.l.b16 %v902
  %v1422 = vunpack.c.l.b16 %v903
  %v1423 = vunpack.c.l.b16 %v904
  %v1424 = vunpack.c.l.b16 %v905
  %v1425 = vunpack.c.l.b16 %v906
  %v1426 = vunpack.c.l.b16 %v907
  %v1427 = vunpack.c.l.b16 %v908
  %v1428 = vunpack.c.l.b16 %v909
  %v1429 = vunpack.c.l.b16 %v910
  %v1430 = vunpack.c.l.b16 %v911
  %v1431 = vunpack.c.l.b16 %v912
  %v1432 = vunpack.c.l.b16 %v913
  %v1433 = vunpack.c.l.b16 %v914
  %v1434 = vunpack.c.l.b16 %v915
  %v1435 = vunpack.c.l.b16 %v916
  %v1436 = vunpack.c.l.b16 %v917
  %v1437 = vunpack.c.l.b16 %v918
  %v1438 = vunpack.c.l.b16 %v919
  %v1439 = vunpack.c.l.b16 %v920
  %v1440 = vunpack.c.l.b16 %v921
  %v1441 = vunpack.c.l.b16 %v922
  %v1442 = vunpack.c.l.b16 %v923
  %v1443 = vunpack.c.l.b16 %v924
  %v1444 = vpack.c.b16 %v1189, %v1188
  %v1445 = vpack.c.b16 %v1191, %v1190
  %v1446 = vpack.c.b16 %v1193, %v1192
  %v1447 = vpack.c.b16 %v1195, %v1194
  %v1448 = vpack.c.b16 %v1197, %v1196
  %v1449 = vpack.c.b16 %v1199, %v1198
  %v1450 = vpack.c.b16 %v1201, %v1200
  %v1451 = vpack.c.b16 %v1203, %v1202
  %v1452 = vpack.c.b16 %v1205, %v1204
  %v1453 = vpack.c.b16 %v1207, %v1206
  %v1454 = vpack.c.b16 %v1209, %v1208
  %v1455 = vpack.c.b16 %v1211, %v1210
  %v1456 = vpack.c.b16 %v1213, %v1212
  %v1457 = vpack.c.b16 %v1215, %v1214
  %v1458 = vpack.c.b16 %v1217, %v1216
  %v1459 = vpack.c.b16 %v1219, %v1218
  %v1460 = vpack.c.b16 %v1221, %v1220
  %v1461 = vpack.c.b16 %v1223, %v1222
  %v1462 = vpack.c.b16 %v1225, %v1224
  %v1463 = vpack.c.b16 %v1227, %v1226
  %v1464 = vpack.c.b16 %v1229, %v1228
  %v1465 = vpack.c.b16 %v1231, %v1230
  %v1466 = vpack.c.b16 %v1233, %v1232
  %v1467 = vpack.c.b16 %v1235, %v1234
  %v1468 = vpack.c.b16 %v1237, %v1236
  %v1469 = vpack.c.b16 %v1239, %v1238
  %v1470 = vpack.c.b16 %v1241, %v1240
  %v1471 = vpack.c.b16 %v1243, %v1242
  %v1472 = vpack.c.b16 %v1245, %v1244
  %v1473 = vpack.c.b16 %v1247, %v1246
  %v1474 = vpack.c.b16 %v1249, %v1248
  %v1475 = vpack.c.b16 %v1251, %v1250
  %v1476 = vpack.c.b16 %v1253, %v1252
  %v1477 = vpack.c.b16 %v1255, %v1254
  %v1478 = vpack.c.b16 %v1257, %v1256
  %v1479 = vpack.c.b16 %v1259, %v1258
  %v1480 = vpack.c.b16 %v1261, %v1260
  %v1481 = vpack.c.b16 %v1263, %v1262
  %v1482 = vpack.c.b16 %v1265, %v1264
  %v1483 = vpack.c.b16 %v1267, %v1266
  %v1484 = vpack.c.b16 %v1269, %v1268
  %v1485 = vpack.c.b16 %v1271, %v1270
  %v1486 = vpack.c.b16 %v1273, %v1272
  %v1487 = vpack.c.b16 %v1275, %v1274
  %v1488 = vpack.c.b16 %v1277, %v1276
  %v1489 = vpack.c.b16 %v1279, %v1278
  %v1490 = vpack.c.b16 %v1281, %v1280
  %v1491 = vpack.c.b16 %v1283, %v1282
  %v1492 = vpack.c.b16 %v1285, %v1284
  %v1493 = vpack.c.b16 %v1287, %v1286
  %v1494 = vpack.c.b16 %v1289, %v1288
  %v1495 = vpack.c.b16 %v1291, %v1290
  %v1496 = vpack.c.b16 %v1293, %v1292
  %v1497 = vpack.c.b16 %v1295, %v1294
  %v1498 = vpack.c.b16 %v1297, %v1296
  %v1499 = vpack.c.b16 %v1299, %v1298
  %v1500 = vpack.c.b16 %v1301, %v1300
  %v1501 = vpack.c.b16 %v1303, %v1302
  %v1502 = vpack.c.b16 %v1305, %v1304
  %v1503 = vpack.c.b16 %v1307, %v1306
  %v1504 = vpack.c.b16 %v1309, %v1308
  %v1505 = vpack.c.b16 %v1311, %v1310
  %v1506 = vpack.c.b16 %v1313, %v1312
  %v1507 = vpack.c.b16 %v1315, %v1314
  %v1508 = vpack.c.b16 %v1317, %v1316
  %v1509 = vpack.c.b16 %v1319, %v1318
  %v1510 = vpack.c.b16 %v1321, %v1320
  %v1511 = vpack.c.b16 %v1323, %v1322
  %v1512 = vpack.c.b16 %v1325, %v1324
  %v1513 = vpack.c.b16 %v1327, %v1326
  %v1514 = vpack.c.b16 %v1329, %v1328
  %v1515 = vpack.c.b16 %v1331, %v1330
  %v1516 = vpack.c.b16 %v1333, %v1332
  %v1517 = vpack.c.b16 %v1335, %v1334
  %v1518 = vpack.c.b16 %v1337, %v1336
  %v1519 = vpack.c.b16 %v1339, %v1338
  %v1520 = vpack.c.b16 %v1341, %v1340
  %v1521 = vpack.c.b16 %v1343, %v1342
  %v1522 = vpack.c.b16 %v1345, %v1344
  %v1523 = vpack.c.b16 %v1347, %v1346
  %v1524 = vpack.c.b16 %v1349, %v1348
  %v1525 = vpack.c.b16 %v1351, %v1350
  %v1526 = vpack.c.b16 %v1353, %v1352
  %v1527 = vpack.c.b16 %v1355, %v1354
  %v1528 = vpack.c.b16 %v1357, %v1356
  %v1529 = vpack.c.b16 %v1359, %v1358
  %v1530 = vpack.c.b16 %v1361, %v1360
  %v1531 = vpack.c.b16 %v1363, %v1362
  %v1532 = vpack.c.b16 %v1365, %v1364
  %v1533 = vpack.c.b16 %v1367, %v1366
  %v1534 = vpack.c.b16 %v1369, %v1368
  %v1535 = vpack.c.b16 %v1371, %v1370
  %v1536 = vpack.c.b16 %v1373, %v1372
  %v1537 = vpack.c.b16 %v1375, %v1374
  %v1538 = vpack.c.b16 %v1377, %v1376
  %v1539 = vpack.c.b16 %v1379, %v1378
  %v1540 = vpack.c.b16 %v1381, %v1380
  %v1541 = vpack.c.b16 %v1383, %v1382
  %v1542 = vpack.c.b16 %v1385, %v1384
  %v1543 = vpack.c.b16 %v1387, %v1386
  %v1544 = vpack.c.b16 %v1389, %v1388
  %v1545 = vpack.c.b16 %v1391, %v1390
  %v1546 = vpack.c.b16 %v1393, %v1392
  %v1547 = vpack.c.b16 %v1395, %v1394
  %v1548 = vpack.c.b16 %v1397, %v1396
  %v1549 = vpack.c.b16 %v1399, %v1398
  %v1550 = vpack.c.b16 %v1401, %v1400
  %v1551 = vpack.c.b16 %v1403, %v1402
  %v1552 = vpack.c.b16 %v1405, %v1404
  %v1553 = vpack.c.b16 %v1407, %v1406
  %v1554 = vpack.c.b16 %v1409, %v1408
  %v1555 = vpack.c.b16 %v1411, %v1410
  %v1556 = vpack.c.b16 %v1413, %v1412
  %v1557 = vpack.c.b16 %v1415, %v1414
  %v1558 = vpack.c.b16 %v1417, %v1416
  %v1559 = vpack.c.b16 %v1419, %v1418
  %v1560 = vpack.c.b16 %v1421, %v1420
  %v1561 = vpack.c.b16 %v1423, %v1422
  %v1562 = vpack.c.b16 %v1425, %v1424
  %v1563 = vpack.c.b16 %v1427, %v1426
  %v1564 = vpack.c.b16 %v1429, %v1428
  %v1565 = vpack.c.b16 %v1431, %v1430
  %v1566 = vpack.c.b16 %v1433, %v1432
  %v1567 = vpack.c.b16 %v1435, %v1434
  %v1568 = vpack.c.b16 %v1437, %v1436
  %v1569 = vpack.c.b16 %v1439, %v1438
  %v1570 = vpack.c.b16 %v1441, %v1440
  %v1571 = vpack.c.b16 %v1443, %v1442
  %1700 = vmatprep.subr.bf16.mxu0 0
  %1701 = vmatpush1.bf16.msra.mxu0 %v1444
  %1702 = vmatprep.subr.bf16.mxu0 0
  %1703 = vmatpush1.bf16.msra.mxu0 %v1445
  %1704 = vmatprep.subr.bf16.mxu0 0
  %1705 = vmatpush1.bf16.msra.mxu0 %v1446
  %1706 = vmatprep.subr.bf16.mxu0 0
  %1707 = vmatpush1.bf16.msra.mxu0 %v1447
  %1708 = vmatprep.subr.bf16.mxu0 0
  %1709 = vmatpush1.bf16.msra.mxu0 %v1448
  %1710 = vmatprep.subr.bf16.mxu0 0
  %1711 = vmatpush1.bf16.msra.mxu0 %v1449
  %1712 = vmatprep.subr.bf16.mxu0 0
  %1713 = vmatpush1.bf16.msra.mxu0 %v1450
  %1714 = vmatprep.subr.bf16.mxu0 0
  %1715 = vmatpush1.bf16.msra.mxu0 %v1451
  %1716 = vmatprep.subr.bf16.mxu0 0
  %1717 = vmatpush1.bf16.msra.mxu0 %v1452
  %1718 = vmatprep.subr.bf16.mxu0 0
  %1719 = vmatpush1.bf16.msra.mxu0 %v1453
  %1720 = vmatprep.subr.bf16.mxu0 0
  %1721 = vmatpush1.bf16.msra.mxu0 %v1454
  %1722 = vmatprep.subr.bf16.mxu0 0
  %1723 = vmatpush1.bf16.msra.mxu0 %v1455
  %1724 = vmatprep.subr.bf16.mxu0 0
  %1725 = vmatpush1.bf16.msra.mxu0 %v1456
  %1726 = vmatprep.subr.bf16.mxu0 0
  %1727 = vmatpush1.bf16.msra.mxu0 %v1457
  %1728 = vmatprep.subr.bf16.mxu0 0
  %1729 = vmatpush1.bf16.msra.mxu0 %v1458
  %1730 = vmatprep.subr.bf16.mxu0 0
  %1731 = vmatpush1.bf16.msra.mxu0 %v1459
  %1732 = vmatprep.mubr.bf16.mxu0 %v654
  %1733 = vmatmul.mubr.bf16.gmra.mrb[0].mxu0 %v653
  %v1734 = vpop.f32.mrb[0].mxu0
  %v1735 = vadd.f32 %v930, %v1734
  %v1736 = vpop.f32.mrb[0].mxu0
  %v1737 = vpop.f32.mrb[0].mxu0
  %v1738 = vpop.f32.mrb[0].mxu0
  %1739 = vdwg.mxu0
  %1740 = vmatprep.subr.bf16.mxu0 0
  %1741 = vmatpush1.bf16.msra.mxu0 %v1460
  %1742 = vmatprep.subr.bf16.mxu0 0
  %1743 = vmatpush1.bf16.msra.mxu0 %v1461
  %1744 = vmatprep.subr.bf16.mxu0 0
  %1745 = vmatpush1.bf16.msra.mxu0 %v1462
  %1746 = vmatprep.subr.bf16.mxu0 0
  %1747 = vmatpush1.bf16.msra.mxu0 %v1463
  %1748 = vmatprep.subr.bf16.mxu0 0
  %1749 = vmatpush1.bf16.msra.mxu0 %v1464
  %1750 = vmatprep.subr.bf16.mxu0 0
  %1751 = vmatpush1.bf16.msra.mxu0 %v1465
  %1752 = vmatprep.subr.bf16.mxu0 0
  %1753 = vmatpush1.bf16.msra.mxu0 %v1466
  %1754 = vmatprep.subr.bf16.mxu0 0
  %1755 = vmatpush1.bf16.msra.mxu0 %v1467
  %1756 = vmatprep.subr.bf16.mxu0 0
  %1757 = vmatpush1.bf16.msra.mxu0 %v1468
  %1758 = vmatprep.subr.bf16.mxu0 0
  %1759 = vmatpush1.bf16.msra.mxu0 %v1469
  %1760 = vmatprep.subr.bf16.mxu0 0
  %1761 = vmatpush1.bf16.msra.mxu0 %v1470
  %1762 = vmatprep.subr.bf16.mxu0 0
  %1763 = vmatpush1.bf16.msra.mxu0 %v1471
  %1764 = vmatprep.subr.bf16.mxu0 0
  %1765 = vmatpush1.bf16.msra.mxu0 %v1472
  %1766 = vmatprep.subr.bf16.mxu0 0
  %1767 = vmatpush1.bf16.msra.mxu0 %v1473
  %1768 = vmatprep.subr.bf16.mxu0 0
  %1769 = vmatpush1.bf16.msra.mxu0 %v1474
  %1770 = vmatprep.subr.bf16.mxu0 0
  %1771 = vmatpush1.bf16.msra.mxu0 %v1475
  %1772 = vmatprep.mubr.bf16.mxu0 %v656
  %1773 = vmatmul.mubr.bf16.gmra.mrb[0].mxu0 %v655
  %v1774 = vpop.f32.mrb[0].mxu0
  %v1775 = vadd.f32 %v1735, %v1774
  %v1776 = vpop.f32.mrb[0].mxu0
  %v1777 = vpop.f32.mrb[0].mxu0
  %v1778 = vpop.f32.mrb[0].mxu0
  %1779 = vdwg.mxu0
  %1780 = vmatprep.subr.bf16.mxu0 0
  %1781 = vmatpush1.bf16.msra.mxu0 %v1476
  %1782 = vmatprep.subr.bf16.mxu0 0
  %1783 = vmatpush1.bf16.msra.mxu0 %v1477
  %1784 = vmatprep.subr.bf16.mxu0 0
  %1785 = vmatpush1.bf16.msra.mxu0 %v1478
  %1786 = vmatprep.subr.bf16.mxu0 0
  %1787 = vmatpush1.bf16.msra.mxu0 %v1479
  %1788 = vmatprep.subr.bf16.mxu0 0
  %1789 = vmatpush1.bf16.msra.mxu0 %v1480
  %1790 = vmatprep.subr.bf16.mxu0 0
  %1791 = vmatpush1.bf16.msra.mxu0 %v1481
  %1792 = vmatprep.subr.bf16.mxu0 0
  %1793 = vmatpush1.bf16.msra.mxu0 %v1482
  %1794 = vmatprep.subr.bf16.mxu0 0
  %1795 = vmatpush1.bf16.msra.mxu0 %v1483
  %1796 = vmatprep.subr.bf16.mxu0 0
  %1797 = vmatpush1.bf16.msra.mxu0 %v1484
  %1798 = vmatprep.subr.bf16.mxu0 0
  %1799 = vmatpush1.bf16.msra.mxu0 %v1485
  %1800 = vmatprep.subr.bf16.mxu0 0
  %1801 = vmatpush1.bf16.msra.mxu0 %v1486
  %1802 = vmatprep.subr.bf16.mxu0 0
  %1803 = vmatpush1.bf16.msra.mxu0 %v1487
  %1804 = vmatprep.subr.bf16.mxu0 0
  %1805 = vmatpush1.bf16.msra.mxu0 %v1488
  %1806 = vmatprep.subr.bf16.mxu0 0
  %1807 = vmatpush1.bf16.msra.mxu0 %v1489
  %1808 = vmatprep.subr.bf16.mxu0 0
  %1809 = vmatpush1.bf16.msra.mxu0 %v1490
  %1810 = vmatprep.subr.bf16.mxu0 0
  %1811 = vmatpush1.bf16.msra.mxu0 %v1491
  %1812 = vmatprep.mubr.bf16.mxu0 %v658
  %1813 = vmatmul.mubr.bf16.gmra.mrb[0].mxu0 %v657
  %v1814 = vpop.f32.mrb[0].mxu0
  %v1815 = vadd.f32 %v1775, %v1814
  %v1816 = vpop.f32.mrb[0].mxu0
  %v1817 = vpop.f32.mrb[0].mxu0
  %v1818 = vpop.f32.mrb[0].mxu0
  %1819 = vdwg.mxu0
  %1820 = vmatprep.subr.bf16.mxu0 0
  %1821 = vmatpush1.bf16.msra.mxu0 %v1492
  %1822 = vmatprep.subr.bf16.mxu0 0
  %1823 = vmatpush1.bf16.msra.mxu0 %v1493
  %1824 = vmatprep.subr.bf16.mxu0 0
  %1825 = vmatpush1.bf16.msra.mxu0 %v1494
  %1826 = vmatprep.subr.bf16.mxu0 0
  %1827 = vmatpush1.bf16.msra.mxu0 %v1495
  %1828 = vmatprep.subr.bf16.mxu0 0
  %1829 = vmatpush1.bf16.msra.mxu0 %v1496
  %1830 = vmatprep.subr.bf16.mxu0 0
  %1831 = vmatpush1.bf16.msra.mxu0 %v1497
  %1832 = vmatprep.subr.bf16.mxu0 0
  %1833 = vmatpush1.bf16.msra.mxu0 %v1498
  %1834 = vmatprep.subr.bf16.mxu0 0
  %1835 = vmatpush1.bf16.msra.mxu0 %v1499
  %1836 = vmatprep.subr.bf16.mxu0 0
  %1837 = vmatpush1.bf16.msra.mxu0 %v1500
  %1838 = vmatprep.subr.bf16.mxu0 0
  %1839 = vmatpush1.bf16.msra.mxu0 %v1501
  %1840 = vmatprep.subr.bf16.mxu0 0
  %1841 = vmatpush1.bf16.msra.mxu0 %v1502
  %1842 = vmatprep.subr.bf16.mxu0 0
  %1843 = vmatpush1.bf16.msra.mxu0 %v1503
  %1844 = vmatprep.subr.bf16.mxu0 0
  %1845 = vmatpush1.bf16.msra.mxu0 %v1504
  %1846 = vmatprep.subr.bf16.mxu0 0
  %1847 = vmatpush1.bf16.msra.mxu0 %v1505
  %1848 = vmatprep.subr.bf16.mxu0 0
  %1849 = vmatpush1.bf16.msra.mxu0 %v1506
  %1850 = vmatprep.subr.bf16.mxu0 0
  %1851 = vmatpush1.bf16.msra.mxu0 %v1507
  %1852 = vmatprep.mubr.bf16.mxu0 %v660
  %1853 = vmatmul.mubr.bf16.gmra.mrb[0].mxu0 %v659
  %v1854 = vpop.f32.mrb[0].mxu0
  %v1855 = vadd.f32 %v1815, %v1854
  %v1856 = vpop.f32.mrb[0].mxu0
  %v1857 = vpop.f32.mrb[0].mxu0
  %v1858 = vpop.f32.mrb[0].mxu0
  %1859 = vdwg.mxu0
  %1860 = vmatprep.subr.bf16.mxu0 0
  %1861 = vmatpush1.bf16.msra.mxu0 %v1508
  %1862 = vmatprep.subr.bf16.mxu0 0
  %1863 = vmatpush1.bf16.msra.mxu0 %v1509
  %1864 = vmatprep.subr.bf16.mxu0 0
  %1865 = vmatpush1.bf16.msra.mxu0 %v1510
  %1866 = vmatprep.subr.bf16.mxu0 0
  %1867 = vmatpush1.bf16.msra.mxu0 %v1511
  %1868 = vmatprep.subr.bf16.mxu0 0
  %1869 = vmatpush1.bf16.msra.mxu0 %v1512
  %1870 = vmatprep.subr.bf16.mxu0 0
  %1871 = vmatpush1.bf16.msra.mxu0 %v1513
  %1872 = vmatprep.subr.bf16.mxu0 0
  %1873 = vmatpush1.bf16.msra.mxu0 %v1514
  %1874 = vmatprep.subr.bf16.mxu0 0
  %1875 = vmatpush1.bf16.msra.mxu0 %v1515
  %1876 = vmatprep.subr.bf16.mxu0 0
  %1877 = vmatpush1.bf16.msra.mxu0 %v1516
  %1878 = vmatprep.subr.bf16.mxu0 0
  %1879 = vmatpush1.bf16.msra.mxu0 %v1517
  %1880 = vmatprep.subr.bf16.mxu0 0
  %1881 = vmatpush1.bf16.msra.mxu0 %v1518
  %1882 = vmatprep.subr.bf16.mxu0 0
  %1883 = vmatpush1.bf16.msra.mxu0 %v1519
  %1884 = vmatprep.subr.bf16.mxu0 0
  %1885 = vmatpush1.bf16.msra.mxu0 %v1520
  %1886 = vmatprep.subr.bf16.mxu0 0
  %1887 = vmatpush1.bf16.msra.mxu0 %v1521
  %1888 = vmatprep.subr.bf16.mxu0 0
  %1889 = vmatpush1.bf16.msra.mxu0 %v1522
  %1890 = vmatprep.subr.bf16.mxu0 0
  %1891 = vmatpush1.bf16.msra.mxu0 %v1523
  %1892 = vmatprep.mubr.bf16.mxu0 %v662
  %1893 = vmatmul.mubr.bf16.gmra.mrb[0].mxu0 %v661
  %v1894 = vpop.f32.mrb[0].mxu0
  %v1895 = vadd.f32 %v1855, %v1894
  %v1896 = vpop.f32.mrb[0].mxu0
  %v1897 = vpop.f32.mrb[0].mxu0
  %v1898 = vpop.f32.mrb[0].mxu0
  %1899 = vdwg.mxu0
  %1900 = vmatprep.subr.bf16.mxu0 0
  %1901 = vmatpush1.bf16.msra.mxu0 %v1524
  %1902 = vmatprep.subr.bf16.mxu0 0
  %1903 = vmatpush1.bf16.msra.mxu0 %v1525
  %1904 = vmatprep.subr.bf16.mxu0 0
  %1905 = vmatpush1.bf16.msra.mxu0 %v1526
  %1906 = vmatprep.subr.bf16.mxu0 0
  %1907 = vmatpush1.bf16.msra.mxu0 %v1527
  %1908 = vmatprep.subr.bf16.mxu0 0
  %1909 = vmatpush1.bf16.msra.mxu0 %v1528
  %1910 = vmatprep.subr.bf16.mxu0 0
  %1911 = vmatpush1.bf16.msra.mxu0 %v1529
  %1912 = vmatprep.subr.bf16.mxu0 0
  %1913 = vmatpush1.bf16.msra.mxu0 %v1530
  %1914 = vmatprep.subr.bf16.mxu0 0
  %1915 = vmatpush1.bf16.msra.mxu0 %v1531
  %1916 = vmatprep.subr.bf16.mxu0 0
  %1917 = vmatpush1.bf16.msra.mxu0 %v1532
  %1918 = vmatprep.subr.bf16.mxu0 0
  %1919 = vmatpush1.bf16.msra.mxu0 %v1533
  %1920 = vmatprep.subr.bf16.mxu0 0
  %1921 = vmatpush1.bf16.msra.mxu0 %v1534
  %1922 = vmatprep.subr.bf16.mxu0 0
  %1923 = vmatpush1.bf16.msra.mxu0 %v1535
  %1924 = vmatprep.subr.bf16.mxu0 0
  %1925 = vmatpush1.bf16.msra.mxu0 %v1536
  %1926 = vmatprep.subr.bf16.mxu0 0
  %1927 = vmatpush1.bf16.msra.mxu0 %v1537
  %1928 = vmatprep.subr.bf16.mxu0 0
  %1929 = vmatpush1.bf16.msra.mxu0 %v1538
  %1930 = vmatprep.subr.bf16.mxu0 0
  %1931 = vmatpush1.bf16.msra.mxu0 %v1539
  %1932 = vmatprep.mubr.bf16.mxu0 %v664
  %1933 = vmatmul.mubr.bf16.gmra.mrb[0].mxu0 %v663
  %v1934 = vpop.f32.mrb[0].mxu0
  %v1935 = vadd.f32 %v1895, %v1934
  %v1936 = vpop.f32.mrb[0].mxu0
  %v1937 = vpop.f32.mrb[0].mxu0
  %v1938 = vpop.f32.mrb[0].mxu0
  %1939 = vdwg.mxu0
  %1940 = vmatprep.subr.bf16.mxu0 0
  %1941 = vmatpush1.bf16.msra.mxu0 %v1540
  %1942 = vmatprep.subr.bf16.mxu0 0
  %1943 = vmatpush1.bf16.msra.mxu0 %v1541
  %1944 = vmatprep.subr.bf16.mxu0 0
  %1945 = vmatpush1.bf16.msra.mxu0 %v1542
  %1946 = vmatprep.subr.bf16.mxu0 0
  %1947 = vmatpush1.bf16.msra.mxu0 %v1543
  %1948 = vmatprep.subr.bf16.mxu0 0
  %1949 = vmatpush1.bf16.msra.mxu0 %v1544
  %1950 = vmatprep.subr.bf16.mxu0 0
  %1951 = vmatpush1.bf16.msra.mxu0 %v1545
  %1952 = vmatprep.subr.bf16.mxu0 0
  %1953 = vmatpush1.bf16.msra.mxu0 %v1546
  %1954 = vmatprep.subr.bf16.mxu0 0
  %1955 = vmatpush1.bf16.msra.mxu0 %v1547
  %1956 = vmatprep.subr.bf16.mxu0 0
  %1957 = vmatpush1.bf16.msra.mxu0 %v1548
  %1958 = vmatprep.subr.bf16.mxu0 0
  %1959 = vmatpush1.bf16.msra.mxu0 %v1549
  %1960 = vmatprep.subr.bf16.mxu0 0
  %1961 = vmatpush1.bf16.msra.mxu0 %v1550
  %1962 = vmatprep.subr.bf16.mxu0 0
  %1963 = vmatpush1.bf16.msra.mxu0 %v1551
  %1964 = vmatprep.subr.bf16.mxu0 0
  %1965 = vmatpush1.bf16.msra.mxu0 %v1552
  %1966 = vmatprep.subr.bf16.mxu0 0
  %1967 = vmatpush1.bf16.msra.mxu0 %v1553
  %1968 = vmatprep.subr.bf16.mxu0 0
  %1969 = vmatpush1.bf16.msra.mxu0 %v1554
  %1970 = vmatprep.subr.bf16.mxu0 0
  %1971 = vmatpush1.bf16.msra.mxu0 %v1555
  %1972 = vmatprep.mubr.bf16.mxu0 %v666
  %1973 = vmatmul.mubr.bf16.gmra.mrb[0].mxu0 %v665
  %v1974 = vpop.f32.mrb[0].mxu0
  %v1975 = vadd.f32 %v1935, %v1974
  %v1976 = vpop.f32.mrb[0].mxu0
  %v1977 = vpop.f32.mrb[0].mxu0
  %v1978 = vpop.f32.mrb[0].mxu0
  %1979 = vdwg.mxu0
  %1980 = vmatprep.subr.bf16.mxu0 0
  %1981 = vmatpush1.bf16.msra.mxu0 %v1556
  %1982 = vmatprep.subr.bf16.mxu0 0
  %1983 = vmatpush1.bf16.msra.mxu0 %v1557
  %1984 = vmatprep.subr.bf16.mxu0 0
  %1985 = vmatpush1.bf16.msra.mxu0 %v1558
  %1986 = vmatprep.subr.bf16.mxu0 0
  %1987 = vmatpush1.bf16.msra.mxu0 %v1559
  %1988 = vmatprep.subr.bf16.mxu0 0
  %1989 = vmatpush1.bf16.msra.mxu0 %v1560
  %1990 = vmatprep.subr.bf16.mxu0 0
  %1991 = vmatpush1.bf16.msra.mxu0 %v1561
  %1992 = vmatprep.subr.bf16.mxu0 0
  %1993 = vmatpush1.bf16.msra.mxu0 %v1562
  %1994 = vmatprep.subr.bf16.mxu0 0
  %1995 = vmatpush1.bf16.msra.mxu0 %v1563
  %1996 = vmatprep.subr.bf16.mxu0 0
  %1997 = vmatpush1.bf16.msra.mxu0 %v1564
  %1998 = vmatprep.subr.bf16.mxu0 0
  %1999 = vmatpush1.bf16.msra.mxu0 %v1565
  %2000 = vmatprep.subr.bf16.mxu0 0
  %2001 = vmatpush1.bf16.msra.mxu0 %v1566
  %2002 = vmatprep.subr.bf16.mxu0 0
  %2003 = vmatpush1.bf16.msra.mxu0 %v1567
  %2004 = vmatprep.subr.bf16.mxu0 0
  %2005 = vmatpush1.bf16.msra.mxu0 %v1568
  %2006 = vmatprep.subr.bf16.mxu0 0
  %2007 = vmatpush1.bf16.msra.mxu0 %v1569
  %2008 = vmatprep.subr.bf16.mxu0 0
  %2009 = vmatpush1.bf16.msra.mxu0 %v1570
  %2010 = vmatprep.subr.bf16.mxu0 0
  %2011 = vmatpush1.bf16.msra.mxu0 %v1571
  %2012 = vmatprep.mubr.bf16.mxu0 %v668
  %2013 = vmatmul.mubr.bf16.gmra.mrb[0].mxu0 %v667
  %v2014 = vpop.f32.mrb[0].mxu0
  %v2015 = vadd.f32 %v1975, %v2014
  %v2016 = vpop.f32.mrb[0].mxu0
  %v2017 = vpop.f32.mrb[0].mxu0
  %v2018 = vpop.f32.mrb[0].mxu0
  %2019 = vdwg.mxu0
  %v2020 = vadd.f32 %v27, %v2015
  %v2021 = vld [vmem:[%s5] sm:$0x1]
  %v2022 = vld [vmem:[%s6] sm:$0x1]
  %vm2023 = vcmask 254976
  %v2024 = vsel %vm2023, %v2020, 0.0
  %2025 = vadd.xlane.f32.xlu0 %v2024
  %v2026 = vpop.xlane.xlu0 %2025
  %v2027 = vrcp.pop 32.0
  %v2028 = vmul.f32 %v2026, %v2027
  %v2029 = vsub.f32 %v2020, %v2028
  %v2030 = vmul.f32 %v2029, %v2029
  %v2031 = vsel %vm2023, %v2030, 0.0
  %2032 = vadd.xlane.f32.xlu0 %v2031
  %v2033 = vpop.xlane.xlu0 %2032
  %v2034 = vmul.f32 %v2033, %v2027
  %v2035 = vadd.f32 %v2034, 1e-05
  %v2036 = vrsqrt.pop %v2035
  %v2037 = vmul.f32 %v2029, %v2036
  %v2039 = vlaneseq
  %v2040 = vshrl.u32 %v2039, 7
  %v2041 = vsub.s32 0, %v2040
  %v2042 = vrot.slane %v2021, %v2041
  %v2044 = vmul.f32 %v2037, %v2042
  %v2046 = vlaneseq
  %v2047 = vshrl.u32 %v2046, 7
  %v2048 = vsub.s32 0, %v2047
  %v2049 = vrot.slane %v2022, %v2048
  %v2051 = vadd.f32 %v2044, %v2049
  %2052 = vst.msk [vmem:[%s7] sm:$0x3] %vm2023, %v2051
  // Predicated region
  $region30: #{model_forward.18} parent=0 // pred_check
    _
  $region31: #{model_forward.18} parent=0 // pred_check_branch
    %2054 = sbr.rel (0) target = $region33
  $region32: #{model_forward.18} parent=0 // pred_region
    _
  $region33: #{model_forward.18} parent=0 // pred_fallthru
    _
  // Predicated region
  $region34: #{model_forward.18} parent=0 // pred_check
    _
  $region35: #{model_forward.18} parent=0 // pred_check_branch
    %2056 = sbr.rel (0) target = $region37
  $region36: #{model_forward.18} parent=0 // pred_region
    _
  $region37: #{model_forward.18} parent=0 // pred_fallthru
    _

</llo_original>
